<compile_context>
chip_gen: v7x
topology: tpu7x:2x2x1
jax: 0.10.0
libtpu: 0.0.40
codegen_flags: <defaults>
</compile_context>

<pallas_src>
import functools

import jax
import jax.numpy as jnp
import numpy as np
from jax.experimental import pallas as pl
from jax.experimental.pallas import tpu as pltpu


# ---------------------------------------------------------------------------
# Shared math helper (pure jnp; usable in-kernel and in the reference)
# ---------------------------------------------------------------------------
def _layer_norm(x, g, b, eps=1e-5):
    # x: (M, D), g/b: (1, D) -- all f32
    mu = jnp.mean(x, axis=-1, keepdims=True)
    xc = x - mu
    var = jnp.mean(xc * xc, axis=-1, keepdims=True)
    return xc * jax.lax.rsqrt(var + eps) * g + b


# ---------------------------------------------------------------------------
# Per-layer Pallas kernel: grid = (batch_tiles, n_layers), residual carried in VMEM
# ---------------------------------------------------------------------------
def decoder_layer_kernel(x_ref, cross_ref,
                         wsa_ref, bsa_ref, wso_ref, bso_ref,
                         wca_ref, bca_ref, wco_ref, bco_ref,
                         w1_ref, b1_ref, w2_ref, b2_ref,
                         lng_ref, lnb_ref, fng_ref, fnb_ref,
                         o_ref, x_scr,
                         *, n_heads, has_norm, compute_dtype, approx_softmax):
    layer = pl.program_id(1)
    n_layers = pl.num_programs(1)
    Bt, L, D = x_ref.shape
    S = cross_ref.shape[1]
    H = n_heads
    Dh = D // H
    M = Bt * L
    scale = 1.0 / (float(Dh) ** 0.5)

    # ---- init residual carry from the input block at the first layer ----
    @pl.when(layer == 0)
    def _():
        x_scr[...] = x_ref[...].astype(jnp.float32)

    x = x_scr[...].reshape(M, D)                              # (M, D) f32 residual
    cross = cross_ref[...].reshape(Bt * S, D).astype(compute_dtype)

    def proj(t, w, b):                                        # (rows,K)@(K,N)+(1,N)
        return jnp.dot(t.astype(compute_dtype), w,
                       preferred_element_type=jnp.float32) + b

    def split_heads(t, rows):                                 # (rows,D)->(H,rows,Dh)
        return t.reshape(rows, H, Dh).transpose(1, 0, 2).astype(compute_dtype)

    def attention(q, k, v, kv_rows, wo, bo):
        # q: (M, D); k, v: (Bt*kv_rows, D).  Attention per batch element (small
        # static unroll over the batch tile); heads merged in vregs (no scratch
        # stores), then ONE (M, D) @ (D, D) output projection over all rows.
        outs = []
        for b in range(Bt):
            qh = split_heads(q[b * L:(b + 1) * L], L)
            kh = split_heads(k[b * kv_rows:(b + 1) * kv_rows], kv_rows)
            vh = split_heads(v[b * kv_rows:(b + 1) * kv_rows], kv_rows)
            s = jnp.einsum("hqd,hkd->hqk", qh, kh,
                           preferred_element_type=jnp.float32) * scale
            s = s - jnp.max(s, axis=-1, keepdims=True)
            p = jnp.exp(s)
            den = jnp.sum(p, axis=-1, keepdims=True)
            if approx_softmax:
                p = p * pl.reciprocal(den, approx=True)       # EUP slot (bf16 path)
            else:
                p = p / den                                   # exact (f32 path)
            oh = jnp.einsum("hqk,hkd->hqd", p.astype(compute_dtype), vh,
                            preferred_element_type=jnp.float32)   # (H, L, Dh)
            outs.append(oh.transpose(1, 0, 2).reshape(L, D))      # concat in vregs
        o = jnp.concatenate(outs, axis=0)                         # (M, D) f32
        return proj(o, wo, bo)

    lng = lng_ref[0]                                          # (3, D) f32
    lnb = lnb_ref[0]

    # ---- self-attention + residual + norm1 ----
    q = proj(x, wsa_ref[0, 0], bsa_ref[0, 0])
    k = proj(x, wsa_ref[0, 1], bsa_ref[0, 1])
    v = proj(x, wsa_ref[0, 2], bsa_ref[0, 2])
    x = _layer_norm(x + attention(q, k, v, L, wso_ref[0], bso_ref[0]),
                    lng[0:1], lnb[0:1])

    # ---- cross-attention + residual + norm2 ----
    q = proj(x, wca_ref[0, 0], bca_ref[0, 0])
    k = proj(cross, wca_ref[0, 1], bca_ref[0, 1])
    v = proj(cross, wca_ref[0, 2], bca_ref[0, 2])
    x = _layer_norm(x + attention(q, k, v, S, wco_ref[0], bco_ref[0]),
                    lng[1:2], lnb[1:2])

    # ---- FFN (Conv1d k=1 == per-token linear) + relu + residual + norm3 ----
    y = proj(x, w1_ref[0], b1_ref[0])
    y = jnp.maximum(y, 0.0)
    y = proj(y, w2_ref[0], b2_ref[0])
    x = _layer_norm(x + y, lng[2:3], lnb[2:3])

    x_scr[...] = x.reshape(Bt, L, D)                          # carry to next layer

    # ---- finalize: optional final LayerNorm + write-out at the last layer ----
    @pl.when(layer == n_layers - 1)
    def _():
        xf = x
        if has_norm:
            xf = _layer_norm(xf, fng_ref[...], fnb_ref[...])
        o_ref[...] = xf.reshape(Bt, L, D).astype(o_ref.dtype)


# ---------------------------------------------------------------------------
# Wrapper: weight repacking (layout plumbing) + single pallas_call
# ---------------------------------------------------------------------------
def decoder_forward(x, cross, layer_params, norm_params, n_heads,
                    x_mask=None, cross_mask=None, compute_dtype=jnp.float32):
    # Mirrors Decoder.forward: loop over layers, then optional norm -- all fused.
    del x_mask, cross_mask  # TODO(synk): masks are None in this exercise
    B, L, D = x.shape
    S = cross.shape[1]
    NL = len(layer_params)
    assert D % n_heads == 0
    cd = compute_dtype

    def stack(fn, cast=False):
        a = jnp.stack([fn(p) for p in layer_params], axis=0)
        return a.astype(cd) if cast else a

    # Matmul weights in compute_dtype; biases / LN params stay f32.
    wsa = stack(lambda p: p["w_self"][0:3], True)             # (NL, 3, D, D)
    bsa = stack(lambda p: p["b_self"][0:3].reshape(3, 1, D))  # (NL, 3, 1, D)
    wso = stack(lambda p: p["w_self"][3], True)               # (NL, D, D)
    bso = stack(lambda p: p["b_self"][3:4])                   # (NL, 1, D)
    wca = stack(lambda p: p["w_cross"][0:3], True)
    bca = stack(lambda p: p["b_cross"][0:3].reshape(3, 1, D))
    wco = stack(lambda p: p["w_cross"][3], True)
    bco = stack(lambda p: p["b_cross"][3:4])
    w1 = stack(lambda p: p["w1"], True)                       # (NL, D, d_ff)
    b1 = stack(lambda p: p["b1"])                             # (NL, 1, d_ff)
    w2 = stack(lambda p: p["w2"], True)                       # (NL, d_ff, D)
    b2 = stack(lambda p: p["b2"])                             # (NL, 1, D)
    lng = stack(lambda p: p["ln_g"])                          # (NL, 3, D)
    lnb = stack(lambda p: p["ln_b"])

    has_norm = norm_params is not None
    fng = norm_params["g"] if has_norm else jnp.ones((1, D), jnp.float32)
    fnb = norm_params["b"] if has_norm else jnp.zeros((1, D), jnp.float32)

    # Batch-tile size: pack batch rows into the matmul M dimension (MXU row fill),
    # capped so the in-kernel static attention unroll over the tile stays small.
    Bt = max(1, min(B, max(1, 128 // max(L, 1)), 8))
    while B % Bt:
        Bt -= 1

    weights = [wsa, bsa, wso, bso, wca, bca, wco, bco, w1, b1, w2, b2, lng, lnb]

    # Explicit scoped-VMEM budget: 2x (double-buffered) per-layer weight blocks +
    # double-buffered IO blocks + residual scratch + final-norm params, with headroom.
    per_layer = sum(int(np.prod(w.shape[1:])) * w.dtype.itemsize for w in weights)
    io_bytes = (2 * Bt * L * D + Bt * S * D) * x.dtype.itemsize
    est = 2 * per_layer + 2 * io_bytes + Bt * L * D * 4 + 2 * D * 4
    vmem_limit = int(min(max(2 * est, 32 * 2 ** 20), 96 * 2 ** 20))

    kernel = functools.partial(
        decoder_layer_kernel,
        n_heads=n_heads, has_norm=has_norm, compute_dtype=cd,
        approx_softmax=(cd != jnp.float32))

    def wspec(arr):
        bs = (1,) + tuple(arr.shape[1:])
        zeros = (0,) * (arr.ndim - 1)
        return pl.BlockSpec(bs, lambda bt, l, _z=zeros: (l,) + _z)

    vmem_full = pl.BlockSpec(memory_space=pltpu.MemorySpace.VMEM)

    return pl.pallas_call(
        kernel,
        out_shape=jax.ShapeDtypeStruct((B, L, D), x.dtype),
        grid=(B // Bt, NL),                                   # layers innermost
        in_specs=[pl.BlockSpec((Bt, L, D), lambda bt, l: (bt, 0, 0)),
                  pl.BlockSpec((Bt, S, D), lambda bt, l: (bt, 0, 0))]
                 + [wspec(w) for w in weights]
                 + [vmem_full, vmem_full],                    # final-norm params
        out_specs=pl.BlockSpec((Bt, L, D), lambda bt, l: (bt, 0, 0)),
        scratch_shapes=[pltpu.VMEM((Bt, L, D), jnp.float32)], # residual carry
        compiler_params=pltpu.CompilerParams(
            dimension_semantics=("parallel", "arbitrary"),
            vmem_limit_bytes=vmem_limit),
    )(x, cross, *weights, fng, fnb)


# ---------------------------------------------------------------------------
# Deterministic parameter initialization (raw / "PyTorch-like" layout)
# ---------------------------------------------------------------------------
def init_layer_params(key, D, d_ff):
    ks = jax.random.split(key, 6)
    s = 0.05
    return {
        "w_self": jax.random.normal(ks[0], (4, D, D), jnp.float32) * s,
        "b_self": jnp.zeros((4, D), jnp.float32),
        "w_cross": jax.random.normal(ks[1], (4, D, D), jnp.float32) * s,
        "b_cross": jnp.zeros((4, D), jnp.float32),
        "w1": jax.random.normal(ks[2], (D, d_ff), jnp.float32) * s,
        "b1": jax.random.normal(ks[3], (1, d_ff), jnp.float32) * s,
        "w2": jax.random.normal(ks[4], (d_ff, D), jnp.float32) * s,
        "b2": jax.random.normal(ks[5], (1, D), jnp.float32) * s,
        "ln_g": jnp.ones((3, D), jnp.float32),
        "ln_b": jnp.zeros((3, D), jnp.float32),
    }


# ---------------------------------------------------------------------------
# Pure-JAX f32 reference (same semantics, no Pallas)
# ---------------------------------------------------------------------------
def _ref_mha(xq, xkv, W, b, n_heads):
    Lq, D = xq.shape
    Dh = D // n_heads
    q = jnp.dot(xq, W[0]) + b[0:1]
    k = jnp.dot(xkv, W[1]) + b[1:2]
    v = jnp.dot(xkv, W[2]) + b[2:3]
    qh = q.reshape(Lq, n_heads, Dh).transpose(1, 0, 2)
    kh = k.reshape(-1, n_heads, Dh).transpose(1, 0, 2)
    vh = v.reshape(-1, n_heads, Dh).transpose(1, 0, 2)
    s = jnp.einsum("hqd,hkd->hqk", qh, kh) * (1.0 / (float(Dh) ** 0.5))
    s = s - jnp.max(s, axis=-1, keepdims=True)
    p = jnp.exp(s)
    p = p / jnp.sum(p, axis=-1, keepdims=True)
    o = jnp.einsum("hqk,hkd->hqd", p, vh)
    o = o.transpose(1, 0, 2).reshape(Lq, D)
    return jnp.dot(o, W[3]) + b[3:4]


def _ref_layer(xb, cb, p, n_heads):
    xb = xb + _ref_mha(xb, xb, p["w_self"], p["b_self"], n_heads)
    xb = _layer_norm(xb, p["ln_g"][0:1], p["ln_b"][0:1])
    xb = xb + _ref_mha(xb, cb, p["w_cross"], p["b_cross"], n_heads)
    xb = _layer_norm(xb, p["ln_g"][1:2], p["ln_b"][1:2])
    y = jnp.maximum(jnp.dot(xb, p["w1"]) + p["b1"], 0.0)
    y = jnp.dot(y, p["w2"]) + p["b2"]
    return _layer_norm(xb + y, p["ln_g"][2:3], p["ln_b"][2:3])


def reference_decoder(x, cross, layer_params, norm_params, n_heads):
    out = x
    for p in layer_params:
        out = jax.vmap(lambda xb, cb, _p=p: _ref_layer(xb, cb, _p, n_heads))(out, cross)
    if norm_params is not None:
        out = jax.vmap(lambda xb: _layer_norm(xb, norm_params["g"], norm_params["b"]))(out)
    return out


if __name__ == "__main__":
    B, L, S, D, H, d_ff, n_layers = 2, 8, 16, 32, 4, 64, 2

    key = jax.random.PRNGKey(0)
    keys = jax.random.split(key, 2 + n_layers)
    x = jax.random.normal(keys[0], (B, L, D), jnp.float32)
    cross = jax.random.normal(keys[1], (B, S, D), jnp.float32)

    layer_params = [init_layer_params(keys[2 + i], D, d_ff) for i in range(n_layers)]
    norm_params = {"g": jnp.ones((1, D), jnp.float32),
                   "b": jnp.zeros((1, D), jnp.float32)}

    # f32 path (exact semantics) vs f32 reference — tight tolerance.
    out_f32 = jax.block_until_ready(
        decoder_forward(x, cross, layer_params, norm_params, H,
                        compute_dtype=jnp.float32))
    with jax.default_matmul_precision("float32"):
        ref = jax.block_until_ready(
            reference_decoder(x, cross, layer_params, norm_params, H))
    np.testing.assert_allclose(np.asarray(out_f32), np.asarray(ref),
                               atol=2e-3, rtol=2e-3)
    assert out_f32.shape == (B, L, D)

    # bf16 matmul path (MXU bf16 throughput; LN/softmax/residual stay f32).
    out_bf16 = jax.block_until_ready(
        decoder_forward(x, cross, layer_params, norm_params, H,
                        compute_dtype=jnp.bfloat16))
    np.testing.assert_allclose(np.asarray(out_bf16), np.asarray(ref),
                               atol=3e-2, rtol=3e-2)

    print("KERNEL_OK")
</pallas_src>

<mosaic_0001>
module attributes {stable_mosaic.version = 11 : i64} {
  func.func @decoder_layer_kernel(%arg0: i32, %arg1: i32, %arg2: memref<2x8x32xf32, #tpu.memory_space<vmem>>, %arg3: memref<2x16x32xf32, #tpu.memory_space<vmem>>, %arg4: memref<1x3x32x32xf32, #tpu.memory_space<vmem>>, %arg5: memref<1x3x1x32xf32, #tpu.memory_space<vmem>>, %arg6: memref<1x32x32xf32, #tpu.memory_space<vmem>>, %arg7: memref<1x1x32xf32, #tpu.memory_space<vmem>>, %arg8: memref<1x3x32x32xf32, #tpu.memory_space<vmem>>, %arg9: memref<1x3x1x32xf32, #tpu.memory_space<vmem>>, %arg10: memref<1x32x32xf32, #tpu.memory_space<vmem>>, %arg11: memref<1x1x32xf32, #tpu.memory_space<vmem>>, %arg12: memref<1x32x64xf32, #tpu.memory_space<vmem>>, %arg13: memref<1x1x64xf32, #tpu.memory_space<vmem>>, %arg14: memref<1x64x32xf32, #tpu.memory_space<vmem>>, %arg15: memref<1x1x32xf32, #tpu.memory_space<vmem>>, %arg16: memref<1x3x32xf32, #tpu.memory_space<vmem>>, %arg17: memref<1x3x32xf32, #tpu.memory_space<vmem>>, %arg18: memref<1x32xf32, #tpu.memory_space<vmem>>, %arg19: memref<1x32xf32, #tpu.memory_space<vmem>>, %arg20: memref<2x8x32xf32, #tpu.memory_space<vmem>>, %arg21: memref<2x8x32xf32, #tpu.memory_space<vmem>>) attributes {dimension_semantics = [#tpu.dimension_semantics<parallel>, #tpu.dimension_semantics<arbitrary>], iteration_bounds = array<i64: 1, 2>, scalar_prefetch = 0 : i64, scratch_operands = 1 : i64, tpu.core_type = #tpu.core_type<tc>, window_params = [{transform_indices = @transform_0, window_bounds = array<i64: 2, 8, 32>}, {transform_indices = @transform_1, window_bounds = array<i64: 2, 16, 32>}, {transform_indices = @transform_2, window_bounds = array<i64: 1, 3, 32, 32>}, {transform_indices = @transform_3, window_bounds = array<i64: 1, 3, 1, 32>}, {transform_indices = @transform_4, window_bounds = array<i64: 1, 32, 32>}, {transform_indices = @transform_5, window_bounds = array<i64: 1, 1, 32>}, {transform_indices = @transform_6, window_bounds = array<i64: 1, 3, 32, 32>}, {transform_indices = @transform_7, window_bounds = array<i64: 1, 3, 1, 32>}, {transform_indices = @transform_8, window_bounds = array<i64: 1, 32, 32>}, {transform_indices = @transform_9, window_bounds = array<i64: 1, 1, 32>}, {transform_indices = @transform_10, window_bounds = array<i64: 1, 32, 64>}, {transform_indices = @transform_11, window_bounds = array<i64: 1, 1, 64>}, {transform_indices = @transform_12, window_bounds = array<i64: 1, 64, 32>}, {transform_indices = @transform_13, window_bounds = array<i64: 1, 1, 32>}, {transform_indices = @transform_14, window_bounds = array<i64: 1, 3, 32>}, {transform_indices = @transform_15, window_bounds = array<i64: 1, 3, 32>}, {pipeline_mode = #tpu.pipeline_mode<synchronous>, transform_indices = @transform_16, window_bounds = array<i64: 1, 32>}, {pipeline_mode = #tpu.pipeline_mode<synchronous>, transform_indices = @transform_17, window_bounds = array<i64: 1, 32>}, {transform_indices = @transform_18, window_bounds = array<i64: 2, 8, 32>}]} {
    %c0_i32 = arith.constant 0 : i32
    %0 = arith.cmpi eq, %arg1, %c0_i32 : i32
    %1 = arith.extui %0 : i1 to i32
    %c0_i32_0 = arith.constant 0 : i32
    %2 = arith.cmpi ne, %1, %c0_i32_0 : i32
    scf.if %2 {
      %c0_131 = arith.constant 0 : index
      %c0_132 = arith.constant 0 : index
      %c0_133 = arith.constant 0 : index
      %255 = vector.load %arg2[%c0_131, %c0_132, %c0_133] : memref<2x8x32xf32, #tpu.memory_space<vmem>>, vector<2x8x32xf32>
      %c0_134 = arith.constant 0 : index
      %c0_135 = arith.constant 0 : index
      %c0_136 = arith.constant 0 : index
      %256 = vector.load %arg21[%c0_134, %c0_135, %c0_136] : memref<2x8x32xf32, #tpu.memory_space<vmem>>, vector<2x8x32xf32>
      tpu.vector_store %arg21[%c0_134, %c0_135, %c0_136], %255 {strides = array<i32>} : memref<2x8x32xf32, #tpu.memory_space<vmem>>, vector<2x8x32xf32>,
    } else {
    }
    %c0 = arith.constant 0 : index
    %c0_1 = arith.constant 0 : index
    %c0_2 = arith.constant 0 : index
    %3 = vector.load %arg21[%c0, %c0_1, %c0_2] : memref<2x8x32xf32, #tpu.memory_space<vmem>>, vector<2x8x32xf32>
    %4 = vector.shape_cast %3 : vector<2x8x32xf32> to vector<16x32xf32>
    %c0_3 = arith.constant 0 : index
    %c0_4 = arith.constant 0 : index
    %c0_5 = arith.constant 0 : index
    %5 = vector.load %arg3[%c0_3, %c0_4, %c0_5] : memref<2x16x32xf32, #tpu.memory_space<vmem>>, vector<2x16x32xf32>
    %6 = vector.shape_cast %5 : vector<2x16x32xf32> to vector<32x32xf32>
    %c0_6 = arith.constant 0 : index
    %c0_7 = arith.constant 0 : index
    %c0_8 = arith.constant 0 : index
    %7 = vector.load %arg16[%c0_6, %c0_7, %c0_8] : memref<1x3x32xf32, #tpu.memory_space<vmem>>, vector<1x3x32xf32>
    %8 = vector.shape_cast %7 : vector<1x3x32xf32> to vector<3x32xf32>
    %c0_9 = arith.constant 0 : index
    %c0_10 = arith.constant 0 : index
    %c0_11 = arith.constant 0 : index
    %9 = vector.load %arg17[%c0_9, %c0_10, %c0_11] : memref<1x3x32xf32, #tpu.memory_space<vmem>>, vector<1x3x32xf32>
    %10 = vector.shape_cast %9 : vector<1x3x32xf32> to vector<3x32xf32>
    %c0_12 = arith.constant 0 : index
    %c0_13 = arith.constant 0 : index
    %c0_14 = arith.constant 0 : index
    %c0_15 = arith.constant 0 : index
    %11 = vector.load %arg4[%c0_12, %c0_13, %c0_14, %c0_15] : memref<1x3x32x32xf32, #tpu.memory_space<vmem>>, vector<1x1x32x32xf32>
    %12 = vector.shape_cast %11 : vector<1x1x32x32xf32> to vector<32x32xf32>
    %c0_16 = arith.constant 0 : index
    %c0_17 = arith.constant 0 : index
    %c0_18 = arith.constant 0 : index
    %c0_19 = arith.constant 0 : index
    %13 = vector.load %arg5[%c0_16, %c0_17, %c0_18, %c0_19] : memref<1x3x1x32xf32, #tpu.memory_space<vmem>>, vector<1x1x1x32xf32>
    %14 = vector.shape_cast %13 : vector<1x1x1x32xf32> to vector<1x32xf32>
    %cst = arith.constant dense<0.000000e+00> : vector<16x32xf32>
    %15 = tpu.matmul %4, %12, %cst {dimension_numbers = #tpu.dot_dimension_numbers<[1], [0], [0], [1], [0, 0, 1, 1], [], []>} : vector<16x32xf32>, vector<32x32xf32>, vector<16x32xf32> -> vector<16x32xf32>
    %16 = vector.broadcast %14 : vector<1x32xf32> to vector<16x32xf32>
    %17 = arith.addf %15, %16 : vector<16x32xf32>
    %c0_20 = arith.constant 0 : index
    %c1 = arith.constant 1 : index
    %c0_21 = arith.constant 0 : index
    %c0_22 = arith.constant 0 : index
    %18 = vector.load %arg4[%c0_20, %c1, %c0_21, %c0_22] : memref<1x3x32x32xf32, #tpu.memory_space<vmem>>, vector<1x1x32x32xf32>
    %19 = vector.shape_cast %18 : vector<1x1x32x32xf32> to vector<32x32xf32>
    %c0_23 = arith.constant 0 : index
    %c1_24 = arith.constant 1 : index
    %c0_25 = arith.constant 0 : index
    %c0_26 = arith.constant 0 : index
    %20 = vector.load %arg5[%c0_23, %c1_24, %c0_25, %c0_26] : memref<1x3x1x32xf32, #tpu.memory_space<vmem>>, vector<1x1x1x32xf32>
    %21 = vector.shape_cast %20 : vector<1x1x1x32xf32> to vector<1x32xf32>
    %cst_27 = arith.constant dense<0.000000e+00> : vector<16x32xf32>
    %22 = tpu.matmul %4, %19, %cst_27 {dimension_numbers = #tpu.dot_dimension_numbers<[1], [0], [0], [1], [0, 0, 1, 1], [], []>} : vector<16x32xf32>, vector<32x32xf32>, vector<16x32xf32> -> vector<16x32xf32>
    %23 = vector.broadcast %21 : vector<1x32xf32> to vector<16x32xf32>
    %24 = arith.addf %22, %23 : vector<16x32xf32>
    %c0_28 = arith.constant 0 : index
    %c2 = arith.constant 2 : index
    %c0_29 = arith.constant 0 : index
    %c0_30 = arith.constant 0 : index
    %25 = vector.load %arg4[%c0_28, %c2, %c0_29, %c0_30] : memref<1x3x32x32xf32, #tpu.memory_space<vmem>>, vector<1x1x32x32xf32>
    %26 = vector.shape_cast %25 : vector<1x1x32x32xf32> to vector<32x32xf32>
    %c0_31 = arith.constant 0 : index
    %c2_32 = arith.constant 2 : index
    %c0_33 = arith.constant 0 : index
    %c0_34 = arith.constant 0 : index
    %27 = vector.load %arg5[%c0_31, %c2_32, %c0_33, %c0_34] : memref<1x3x1x32xf32, #tpu.memory_space<vmem>>, vector<1x1x1x32xf32>
    %28 = vector.shape_cast %27 : vector<1x1x1x32xf32> to vector<1x32xf32>
    %cst_35 = arith.constant dense<0.000000e+00> : vector<16x32xf32>
    %29 = tpu.matmul %4, %26, %cst_35 {dimension_numbers = #tpu.dot_dimension_numbers<[1], [0], [0], [1], [0, 0, 1, 1], [], []>} : vector<16x32xf32>, vector<32x32xf32>, vector<16x32xf32> -> vector<16x32xf32>
    %30 = vector.broadcast %28 : vector<1x32xf32> to vector<16x32xf32>
    %31 = arith.addf %29, %30 : vector<16x32xf32>
    %c0_36 = arith.constant 0 : index
    %c0_37 = arith.constant 0 : index
    %c0_38 = arith.constant 0 : index
    %32 = vector.load %arg6[%c0_36, %c0_37, %c0_38] : memref<1x32x32xf32, #tpu.memory_space<vmem>>, vector<1x32x32xf32>
    %33 = vector.shape_cast %32 : vector<1x32x32xf32> to vector<32x32xf32>
    %c0_39 = arith.constant 0 : index
    %c0_40 = arith.constant 0 : index
    %c0_41 = arith.constant 0 : index
    %34 = vector.load %arg7[%c0_39, %c0_40, %c0_41] : memref<1x1x32xf32, #tpu.memory_space<vmem>>, vector<1x1x32xf32>
    %35 = vector.shape_cast %34 : vector<1x1x32xf32> to vector<1x32xf32>
    %36 = vector.extract_strided_slice %17 {offsets = [0, 0], sizes = [8, 32], strides = [1, 1]} : vector<16x32xf32> to vector<8x32xf32>
    %37 = vector.shape_cast %36 : vector<8x32xf32> to vector<8x4x8xf32>
    %38 = tpu.transpose %37, [1, 0, 2] : vector<8x4x8xf32> -> vector<4x8x8xf32>
    %39 = vector.extract_strided_slice %24 {offsets = [0, 0], sizes = [8, 32], strides = [1, 1]} : vector<16x32xf32> to vector<8x32xf32>
    %40 = vector.shape_cast %39 : vector<8x32xf32> to vector<8x4x8xf32>
    %41 = tpu.transpose %40, [1, 0, 2] : vector<8x4x8xf32> -> vector<4x8x8xf32>
    %42 = vector.extract_strided_slice %31 {offsets = [0, 0], sizes = [8, 32], strides = [1, 1]} : vector<16x32xf32> to vector<8x32xf32>
    %43 = vector.shape_cast %42 : vector<8x32xf32> to vector<8x4x8xf32>
    %44 = tpu.transpose %43, [1, 0, 2] : vector<8x4x8xf32> -> vector<4x8x8xf32>
    "tpu.trace_start"() <{level = 10 : i32, message = "hqd,hkd->hqk"}> : () -> ()
    %cst_42 = arith.constant dense<0.000000e+00> : vector<4x8x8xf32>
    %45 = tpu.matmul %38, %41, %cst_42 {dimension_numbers = #tpu.dot_dimension_numbers<[2], [2], [1], [1], [0, 0, 0, 1, 1, 1], [0], [0]>} : vector<4x8x8xf32>, vector<4x8x8xf32>, vector<4x8x8xf32> -> vector<4x8x8xf32>
    "tpu.trace_stop"() : () -> ()
    %cst_43 = arith.constant 0.353553385 : f32
    %46 = vector.broadcast %cst_43 : f32 to vector<4x8x8xf32>
    %47 = arith.mulf %45, %46 : vector<4x8x8xf32>
    %cst_44 = arith.constant dense<0xFF800000> : vector<4x8xf32>
    %48 = vector.multi_reduction <maximumf>, %47, %cst_44 [2] : vector<4x8x8xf32> to vector<4x8xf32>
    %49 = vector.shape_cast %48 : vector<4x8xf32> to vector<4x8x1xf32>
    %50 = vector.broadcast %49 : vector<4x8x1xf32> to vector<4x8x8xf32>
    %51 = arith.subf %47, %50 : vector<4x8x8xf32>
    %52 = math.exp %51 : vector<4x8x8xf32>
    %cst_45 = arith.constant dense<0.000000e+00> : vector<4x8xf32>
    %53 = vector.multi_reduction <add>, %52, %cst_45 [2] : vector<4x8x8xf32> to vector<4x8xf32>
    %54 = vector.shape_cast %53 : vector<4x8xf32> to vector<4x8x1xf32>
    %55 = vector.broadcast %54 : vector<4x8x1xf32> to vector<4x8x8xf32>
    %56 = arith.divf %52, %55 : vector<4x8x8xf32>
    "tpu.trace_start"() <{level = 10 : i32, message = "hqk,hkd->hqd"}> : () -> ()
    %cst_46 = arith.constant dense<0.000000e+00> : vector<4x8x8xf32>
    %57 = tpu.matmul %56, %44, %cst_46 {dimension_numbers = #tpu.dot_dimension_numbers<[2], [1], [1], [2], [0, 0, 0, 1, 1, 2], [0], [0]>} : vector<4x8x8xf32>, vector<4x8x8xf32>, vector<4x8x8xf32> -> vector<4x8x8xf32>
    "tpu.trace_stop"() : () -> ()
    %58 = tpu.transpose %57, [1, 0, 2] : vector<4x8x8xf32> -> vector<8x4x8xf32>
    %59 = vector.shape_cast %58 : vector<8x4x8xf32> to vector<8x32xf32>
    %60 = vector.extract_strided_slice %17 {offsets = [8, 0], sizes = [8, 32], strides = [1, 1]} : vector<16x32xf32> to vector<8x32xf32>
    %61 = vector.shape_cast %60 : vector<8x32xf32> to vector<8x4x8xf32>
    %62 = tpu.transpose %61, [1, 0, 2] : vector<8x4x8xf32> -> vector<4x8x8xf32>
    %63 = vector.extract_strided_slice %24 {offsets = [8, 0], sizes = [8, 32], strides = [1, 1]} : vector<16x32xf32> to vector<8x32xf32>
    %64 = vector.shape_cast %63 : vector<8x32xf32> to vector<8x4x8xf32>
    %65 = tpu.transpose %64, [1, 0, 2] : vector<8x4x8xf32> -> vector<4x8x8xf32>
    %66 = vector.extract_strided_slice %31 {offsets = [8, 0], sizes = [8, 32], strides = [1, 1]} : vector<16x32xf32> to vector<8x32xf32>
    %67 = vector.shape_cast %66 : vector<8x32xf32> to vector<8x4x8xf32>
    %68 = tpu.transpose %67, [1, 0, 2] : vector<8x4x8xf32> -> vector<4x8x8xf32>
    "tpu.trace_start"() <{level = 10 : i32, message = "hqd,hkd->hqk"}> : () -> ()
    %cst_47 = arith.constant dense<0.000000e+00> : vector<4x8x8xf32>
    %69 = tpu.matmul %62, %65, %cst_47 {dimension_numbers = #tpu.dot_dimension_numbers<[2], [2], [1], [1], [0, 0, 0, 1, 1, 1], [0], [0]>} : vector<4x8x8xf32>, vector<4x8x8xf32>, vector<4x8x8xf32> -> vector<4x8x8xf32>
    "tpu.trace_stop"() : () -> ()
    %cst_48 = arith.constant 0.353553385 : f32
    %70 = vector.broadcast %cst_48 : f32 to vector<4x8x8xf32>
    %71 = arith.mulf %69, %70 : vector<4x8x8xf32>
    %cst_49 = arith.constant dense<0xFF800000> : vector<4x8xf32>
    %72 = vector.multi_reduction <maximumf>, %71, %cst_49 [2] : vector<4x8x8xf32> to vector<4x8xf32>
    %73 = vector.shape_cast %72 : vector<4x8xf32> to vector<4x8x1xf32>
    %74 = vector.broadcast %73 : vector<4x8x1xf32> to vector<4x8x8xf32>
    %75 = arith.subf %71, %74 : vector<4x8x8xf32>
    %76 = math.exp %75 : vector<4x8x8xf32>
    %cst_50 = arith.constant dense<0.000000e+00> : vector<4x8xf32>
    %77 = vector.multi_reduction <add>, %76, %cst_50 [2] : vector<4x8x8xf32> to vector<4x8xf32>
    %78 = vector.shape_cast %77 : vector<4x8xf32> to vector<4x8x1xf32>
    %79 = vector.broadcast %78 : vector<4x8x1xf32> to vector<4x8x8xf32>
    %80 = arith.divf %76, %79 : vector<4x8x8xf32>
    "tpu.trace_start"() <{level = 10 : i32, message = "hqk,hkd->hqd"}> : () -> ()
    %cst_51 = arith.constant dense<0.000000e+00> : vector<4x8x8xf32>
    %81 = tpu.matmul %80, %68, %cst_51 {dimension_numbers = #tpu.dot_dimension_numbers<[2], [1], [1], [2], [0, 0, 0, 1, 1, 2], [0], [0]>} : vector<4x8x8xf32>, vector<4x8x8xf32>, vector<4x8x8xf32> -> vector<4x8x8xf32>
    "tpu.trace_stop"() : () -> ()
    %82 = tpu.transpose %81, [1, 0, 2] : vector<4x8x8xf32> -> vector<8x4x8xf32>
    %83 = vector.shape_cast %82 : vector<8x4x8xf32> to vector<8x32xf32>
    %84 = tpu.concatenate %59, %83 in 0 : vector<8x32xf32>, vector<8x32xf32> -> vector<16x32xf32>
    %cst_52 = arith.constant dense<0.000000e+00> : vector<16x32xf32>
    %85 = tpu.matmul %84, %33, %cst_52 {dimension_numbers = #tpu.dot_dimension_numbers<[1], [0], [0], [1], [0, 0, 1, 1], [], []>} : vector<16x32xf32>, vector<32x32xf32>, vector<16x32xf32> -> vector<16x32xf32>
    %86 = vector.broadcast %35 : vector<1x32xf32> to vector<16x32xf32>
    %87 = arith.addf %85, %86 : vector<16x32xf32>
    %88 = arith.addf %4, %87 : vector<16x32xf32>
    %89 = vector.extract_strided_slice %8 {offsets = [0, 0], sizes = [1, 32], strides = [1, 1]} : vector<3x32xf32> to vector<1x32xf32>
    %90 = vector.extract_strided_slice %10 {offsets = [0, 0], sizes = [1, 32], strides = [1, 1]} : vector<3x32xf32> to vector<1x32xf32>
    %cst_53 = arith.constant dense<0.000000e+00> : vector<16xf32>
    %91 = vector.multi_reduction <add>, %88, %cst_53 [1] : vector<16x32xf32> to vector<16xf32>
    %92 = vector.shape_cast %91 : vector<16xf32> to vector<16x1xf32>
    %cst_54 = arith.constant 3.200000e+01 : f32
    %93 = vector.broadcast %cst_54 : f32 to vector<16x1xf32>
    %94 = arith.divf %92, %93 : vector<16x1xf32>
    %95 = vector.broadcast %94 : vector<16x1xf32> to vector<16x32xf32>
    %96 = arith.subf %88, %95 : vector<16x32xf32>
    %97 = arith.mulf %96, %96 : vector<16x32xf32>
    %cst_55 = arith.constant dense<0.000000e+00> : vector<16xf32>
    %98 = vector.multi_reduction <add>, %97, %cst_55 [1] : vector<16x32xf32> to vector<16xf32>
    %99 = vector.shape_cast %98 : vector<16xf32> to vector<16x1xf32>
    %cst_56 = arith.constant 3.200000e+01 : f32
    %100 = vector.broadcast %cst_56 : f32 to vector<16x1xf32>
    %101 = arith.divf %99, %100 : vector<16x1xf32>
    %cst_57 = arith.constant 9.99999974E-6 : f32
    %102 = vector.broadcast %cst_57 : f32 to vector<16x1xf32>
    %103 = arith.addf %101, %102 : vector<16x1xf32>
    %104 = math.rsqrt %103 : vector<16x1xf32>
    %105 = vector.broadcast %104 : vector<16x1xf32> to vector<16x32xf32>
    %106 = arith.mulf %96, %105 : vector<16x32xf32>
    %107 = vector.broadcast %89 : vector<1x32xf32> to vector<16x32xf32>
    %108 = arith.mulf %106, %107 : vector<16x32xf32>
    %109 = vector.broadcast %90 : vector<1x32xf32> to vector<16x32xf32>
    %110 = arith.addf %108, %109 : vector<16x32xf32>
    %c0_58 = arith.constant 0 : index
    %c0_59 = arith.constant 0 : index
    %c0_60 = arith.constant 0 : index
    %c0_61 = arith.constant 0 : index
    %111 = vector.load %arg8[%c0_58, %c0_59, %c0_60, %c0_61] : memref<1x3x32x32xf32, #tpu.memory_space<vmem>>, vector<1x1x32x32xf32>
    %112 = vector.shape_cast %111 : vector<1x1x32x32xf32> to vector<32x32xf32>
    %c0_62 = arith.constant 0 : index
    %c0_63 = arith.constant 0 : index
    %c0_64 = arith.constant 0 : index
    %c0_65 = arith.constant 0 : index
    %113 = vector.load %arg9[%c0_62, %c0_63, %c0_64, %c0_65] : memref<1x3x1x32xf32, #tpu.memory_space<vmem>>, vector<1x1x1x32xf32>
    %114 = vector.shape_cast %113 : vector<1x1x1x32xf32> to vector<1x32xf32>
    %cst_66 = arith.constant dense<0.000000e+00> : vector<16x32xf32>
    %115 = tpu.matmul %110, %112, %cst_66 {dimension_numbers = #tpu.dot_dimension_numbers<[1], [0], [0], [1], [0, 0, 1, 1], [], []>} : vector<16x32xf32>, vector<32x32xf32>, vector<16x32xf32> -> vector<16x32xf32>
    %116 = vector.broadcast %114 : vector<1x32xf32> to vector<16x32xf32>
    %117 = arith.addf %115, %116 : vector<16x32xf32>
    %c0_67 = arith.constant 0 : index
    %c1_68 = arith.constant 1 : index
    %c0_69 = arith.constant 0 : index
    %c0_70 = arith.constant 0 : index
    %118 = vector.load %arg8[%c0_67, %c1_68, %c0_69, %c0_70] : memref<1x3x32x32xf32, #tpu.memory_space<vmem>>, vector<1x1x32x32xf32>
    %119 = vector.shape_cast %118 : vector<1x1x32x32xf32> to vector<32x32xf32>
    %c0_71 = arith.constant 0 : index
    %c1_72 = arith.constant 1 : index
    %c0_73 = arith.constant 0 : index
    %c0_74 = arith.constant 0 : index
    %120 = vector.load %arg9[%c0_71, %c1_72, %c0_73, %c0_74] : memref<1x3x1x32xf32, #tpu.memory_space<vmem>>, vector<1x1x1x32xf32>
    %121 = vector.shape_cast %120 : vector<1x1x1x32xf32> to vector<1x32xf32>
    %cst_75 = arith.constant dense<0.000000e+00> : vector<32x32xf32>
    %122 = tpu.matmul %6, %119, %cst_75 {dimension_numbers = #tpu.dot_dimension_numbers<[1], [0], [0], [1], [0, 0, 1, 1], [], []>} : vector<32x32xf32>, vector<32x32xf32>, vector<32x32xf32> -> vector<32x32xf32>
    %123 = vector.broadcast %121 : vector<1x32xf32> to vector<32x32xf32>
    %124 = arith.addf %122, %123 : vector<32x32xf32>
    %c0_76 = arith.constant 0 : index
    %c2_77 = arith.constant 2 : index
    %c0_78 = arith.constant 0 : index
    %c0_79 = arith.constant 0 : index
    %125 = vector.load %arg8[%c0_76, %c2_77, %c0_78, %c0_79] : memref<1x3x32x32xf32, #tpu.memory_space<vmem>>, vector<1x1x32x32xf32>
    %126 = vector.shape_cast %125 : vector<1x1x32x32xf32> to vector<32x32xf32>
    %c0_80 = arith.constant 0 : index
    %c2_81 = arith.constant 2 : index
    %c0_82 = arith.constant 0 : index
    %c0_83 = arith.constant 0 : index
    %127 = vector.load %arg9[%c0_80, %c2_81, %c0_82, %c0_83] : memref<1x3x1x32xf32, #tpu.memory_space<vmem>>, vector<1x1x1x32xf32>
    %128 = vector.shape_cast %127 : vector<1x1x1x32xf32> to vector<1x32xf32>
    %cst_84 = arith.constant dense<0.000000e+00> : vector<32x32xf32>
    %129 = tpu.matmul %6, %126, %cst_84 {dimension_numbers = #tpu.dot_dimension_numbers<[1], [0], [0], [1], [0, 0, 1, 1], [], []>} : vector<32x32xf32>, vector<32x32xf32>, vector<32x32xf32> -> vector<32x32xf32>
    %130 = vector.broadcast %128 : vector<1x32xf32> to vector<32x32xf32>
    %131 = arith.addf %129, %130 : vector<32x32xf32>
    %c0_85 = arith.constant 0 : index
    %c0_86 = arith.constant 0 : index
    %c0_87 = arith.constant 0 : index
    %132 = vector.load %arg10[%c0_85, %c0_86, %c0_87] : memref<1x32x32xf32, #tpu.memory_space<vmem>>, vector<1x32x32xf32>
    %133 = vector.shape_cast %132 : vector<1x32x32xf32> to vector<32x32xf32>
    %c0_88 = arith.constant 0 : index
    %c0_89 = arith.constant 0 : index
    %c0_90 = arith.constant 0 : index
    %134 = vector.load %arg11[%c0_88, %c0_89, %c0_90] : memref<1x1x32xf32, #tpu.memory_space<vmem>>, vector<1x1x32xf32>
    %135 = vector.shape_cast %134 : vector<1x1x32xf32> to vector<1x32xf32>
    %136 = vector.extract_strided_slice %117 {offsets = [0, 0], sizes = [8, 32], strides = [1, 1]} : vector<16x32xf32> to vector<8x32xf32>
    %137 = vector.shape_cast %136 : vector<8x32xf32> to vector<8x4x8xf32>
    %138 = tpu.transpose %137, [1, 0, 2] : vector<8x4x8xf32> -> vector<4x8x8xf32>
    %139 = vector.extract_strided_slice %124 {offsets = [0, 0], sizes = [16, 32], strides = [1, 1]} : vector<32x32xf32> to vector<16x32xf32>
    %140 = vector.shape_cast %139 : vector<16x32xf32> to vector<16x4x8xf32>
    %141 = tpu.transpose %140, [1, 0, 2] : vector<16x4x8xf32> -> vector<4x16x8xf32>
    %142 = vector.extract_strided_slice %131 {offsets = [0, 0], sizes = [16, 32], strides = [1, 1]} : vector<32x32xf32> to vector<16x32xf32>
    %143 = vector.shape_cast %142 : vector<16x32xf32> to vector<16x4x8xf32>
    %144 = tpu.transpose %143, [1, 0, 2] : vector<16x4x8xf32> -> vector<4x16x8xf32>
    "tpu.trace_start"() <{level = 10 : i32, message = "hqd,hkd->hqk"}> : () -> ()
    %cst_91 = arith.constant dense<0.000000e+00> : vector<4x8x16xf32>
    %145 = tpu.matmul %138, %141, %cst_91 {dimension_numbers = #tpu.dot_dimension_numbers<[2], [2], [1], [1], [0, 0, 0, 1, 1, 1], [0], [0]>} : vector<4x8x8xf32>, vector<4x16x8xf32>, vector<4x8x16xf32> -> vector<4x8x16xf32>
    "tpu.trace_stop"() : () -> ()
    %cst_92 = arith.constant 0.353553385 : f32
    %146 = vector.broadcast %cst_92 : f32 to vector<4x8x16xf32>
    %147 = arith.mulf %145, %146 : vector<4x8x16xf32>
    %cst_93 = arith.constant dense<0xFF800000> : vector<4x8xf32>
    %148 = vector.multi_reduction <maximumf>, %147, %cst_93 [2] : vector<4x8x16xf32> to vector<4x8xf32>
    %149 = vector.shape_cast %148 : vector<4x8xf32> to vector<4x8x1xf32>
    %150 = vector.broadcast %149 : vector<4x8x1xf32> to vector<4x8x16xf32>
    %151 = arith.subf %147, %150 : vector<4x8x16xf32>
    %152 = math.exp %151 : vector<4x8x16xf32>
    %cst_94 = arith.constant dense<0.000000e+00> : vector<4x8xf32>
    %153 = vector.multi_reduction <add>, %152, %cst_94 [2] : vector<4x8x16xf32> to vector<4x8xf32>
    %154 = vector.shape_cast %153 : vector<4x8xf32> to vector<4x8x1xf32>
    %155 = vector.broadcast %154 : vector<4x8x1xf32> to vector<4x8x16xf32>
    %156 = arith.divf %152, %155 : vector<4x8x16xf32>
    "tpu.trace_start"() <{level = 10 : i32, message = "hqk,hkd->hqd"}> : () -> ()
    %cst_95 = arith.constant dense<0.000000e+00> : vector<4x8x8xf32>
    %157 = tpu.matmul %156, %144, %cst_95 {dimension_numbers = #tpu.dot_dimension_numbers<[2], [1], [1], [2], [0, 0, 0, 1, 1, 2], [0], [0]>} : vector<4x8x16xf32>, vector<4x16x8xf32>, vector<4x8x8xf32> -> vector<4x8x8xf32>
    "tpu.trace_stop"() : () -> ()
    %158 = tpu.transpose %157, [1, 0, 2] : vector<4x8x8xf32> -> vector<8x4x8xf32>
    %159 = vector.shape_cast %158 : vector<8x4x8xf32> to vector<8x32xf32>
    %160 = vector.extract_strided_slice %117 {offsets = [8, 0], sizes = [8, 32], strides = [1, 1]} : vector<16x32xf32> to vector<8x32xf32>
    %161 = vector.shape_cast %160 : vector<8x32xf32> to vector<8x4x8xf32>
    %162 = tpu.transpose %161, [1, 0, 2] : vector<8x4x8xf32> -> vector<4x8x8xf32>
    %163 = vector.extract_strided_slice %124 {offsets = [16, 0], sizes = [16, 32], strides = [1, 1]} : vector<32x32xf32> to vector<16x32xf32>
    %164 = vector.shape_cast %163 : vector<16x32xf32> to vector<16x4x8xf32>
    %165 = tpu.transpose %164, [1, 0, 2] : vector<16x4x8xf32> -> vector<4x16x8xf32>
    %166 = vector.extract_strided_slice %131 {offsets = [16, 0], sizes = [16, 32], strides = [1, 1]} : vector<32x32xf32> to vector<16x32xf32>
    %167 = vector.shape_cast %166 : vector<16x32xf32> to vector<16x4x8xf32>
    %168 = tpu.transpose %167, [1, 0, 2] : vector<16x4x8xf32> -> vector<4x16x8xf32>
    "tpu.trace_start"() <{level = 10 : i32, message = "hqd,hkd->hqk"}> : () -> ()
    %cst_96 = arith.constant dense<0.000000e+00> : vector<4x8x16xf32>
    %169 = tpu.matmul %162, %165, %cst_96 {dimension_numbers = #tpu.dot_dimension_numbers<[2], [2], [1], [1], [0, 0, 0, 1, 1, 1], [0], [0]>} : vector<4x8x8xf32>, vector<4x16x8xf32>, vector<4x8x16xf32> -> vector<4x8x16xf32>
    "tpu.trace_stop"() : () -> ()
    %cst_97 = arith.constant 0.353553385 : f32
    %170 = vector.broadcast %cst_97 : f32 to vector<4x8x16xf32>
    %171 = arith.mulf %169, %170 : vector<4x8x16xf32>
    %cst_98 = arith.constant dense<0xFF800000> : vector<4x8xf32>
    %172 = vector.multi_reduction <maximumf>, %171, %cst_98 [2] : vector<4x8x16xf32> to vector<4x8xf32>
    %173 = vector.shape_cast %172 : vector<4x8xf32> to vector<4x8x1xf32>
    %174 = vector.broadcast %173 : vector<4x8x1xf32> to vector<4x8x16xf32>
    %175 = arith.subf %171, %174 : vector<4x8x16xf32>
    %176 = math.exp %175 : vector<4x8x16xf32>
    %cst_99 = arith.constant dense<0.000000e+00> : vector<4x8xf32>
    %177 = vector.multi_reduction <add>, %176, %cst_99 [2] : vector<4x8x16xf32> to vector<4x8xf32>
    %178 = vector.shape_cast %177 : vector<4x8xf32> to vector<4x8x1xf32>
    %179 = vector.broadcast %178 : vector<4x8x1xf32> to vector<4x8x16xf32>
    %180 = arith.divf %176, %179 : vector<4x8x16xf32>
    "tpu.trace_start"() <{level = 10 : i32, message = "hqk,hkd->hqd"}> : () -> ()
    %cst_100 = arith.constant dense<0.000000e+00> : vector<4x8x8xf32>
    %181 = tpu.matmul %180, %168, %cst_100 {dimension_numbers = #tpu.dot_dimension_numbers<[2], [1], [1], [2], [0, 0, 0, 1, 1, 2], [0], [0]>} : vector<4x8x16xf32>, vector<4x16x8xf32>, vector<4x8x8xf32> -> vector<4x8x8xf32>
    "tpu.trace_stop"() : () -> ()
    %182 = tpu.transpose %181, [1, 0, 2] : vector<4x8x8xf32> -> vector<8x4x8xf32>
    %183 = vector.shape_cast %182 : vector<8x4x8xf32> to vector<8x32xf32>
    %184 = tpu.concatenate %159, %183 in 0 : vector<8x32xf32>, vector<8x32xf32> -> vector<16x32xf32>
    %cst_101 = arith.constant dense<0.000000e+00> : vector<16x32xf32>
    %185 = tpu.matmul %184, %133, %cst_101 {dimension_numbers = #tpu.dot_dimension_numbers<[1], [0], [0], [1], [0, 0, 1, 1], [], []>} : vector<16x32xf32>, vector<32x32xf32>, vector<16x32xf32> -> vector<16x32xf32>
    %186 = vector.broadcast %135 : vector<1x32xf32> to vector<16x32xf32>
    %187 = arith.addf %185, %186 : vector<16x32xf32>
    %188 = arith.addf %110, %187 : vector<16x32xf32>
    %189 = vector.extract_strided_slice %8 {offsets = [1, 0], sizes = [1, 32], strides = [1, 1]} : vector<3x32xf32> to vector<1x32xf32>
    %190 = vector.extract_strided_slice %10 {offsets = [1, 0], sizes = [1, 32], strides = [1, 1]} : vector<3x32xf32> to vector<1x32xf32>
    %cst_102 = arith.constant dense<0.000000e+00> : vector<16xf32>
    %191 = vector.multi_reduction <add>, %188, %cst_102 [1] : vector<16x32xf32> to vector<16xf32>
    %192 = vector.shape_cast %191 : vector<16xf32> to vector<16x1xf32>
    %cst_103 = arith.constant 3.200000e+01 : f32
    %193 = vector.broadcast %cst_103 : f32 to vector<16x1xf32>
    %194 = arith.divf %192, %193 : vector<16x1xf32>
    %195 = vector.broadcast %194 : vector<16x1xf32> to vector<16x32xf32>
    %196 = arith.subf %188, %195 : vector<16x32xf32>
    %197 = arith.mulf %196, %196 : vector<16x32xf32>
    %cst_104 = arith.constant dense<0.000000e+00> : vector<16xf32>
    %198 = vector.multi_reduction <add>, %197, %cst_104 [1] : vector<16x32xf32> to vector<16xf32>
    %199 = vector.shape_cast %198 : vector<16xf32> to vector<16x1xf32>
    %cst_105 = arith.constant 3.200000e+01 : f32
    %200 = vector.broadcast %cst_105 : f32 to vector<16x1xf32>
    %201 = arith.divf %199, %200 : vector<16x1xf32>
    %cst_106 = arith.constant 9.99999974E-6 : f32
    %202 = vector.broadcast %cst_106 : f32 to vector<16x1xf32>
    %203 = arith.addf %201, %202 : vector<16x1xf32>
    %204 = math.rsqrt %203 : vector<16x1xf32>
    %205 = vector.broadcast %204 : vector<16x1xf32> to vector<16x32xf32>
    %206 = arith.mulf %196, %205 : vector<16x32xf32>
    %207 = vector.broadcast %189 : vector<1x32xf32> to vector<16x32xf32>
    %208 = arith.mulf %206, %207 : vector<16x32xf32>
    %209 = vector.broadcast %190 : vector<1x32xf32> to vector<16x32xf32>
    %210 = arith.addf %208, %209 : vector<16x32xf32>
    %c0_107 = arith.constant 0 : index
    %c0_108 = arith.constant 0 : index
    %c0_109 = arith.constant 0 : index
    %211 = vector.load %arg12[%c0_107, %c0_108, %c0_109] : memref<1x32x64xf32, #tpu.memory_space<vmem>>, vector<1x32x64xf32>
    %212 = vector.shape_cast %211 : vector<1x32x64xf32> to vector<32x64xf32>
    %c0_110 = arith.constant 0 : index
    %c0_111 = arith.constant 0 : index
    %c0_112 = arith.constant 0 : index
    %213 = vector.load %arg13[%c0_110, %c0_111, %c0_112] : memref<1x1x64xf32, #tpu.memory_space<vmem>>, vector<1x1x64xf32>
    %214 = vector.shape_cast %213 : vector<1x1x64xf32> to vector<1x64xf32>
    %cst_113 = arith.constant dense<0.000000e+00> : vector<16x64xf32>
    %215 = tpu.matmul %210, %212, %cst_113 {dimension_numbers = #tpu.dot_dimension_numbers<[1], [0], [0], [1], [0, 0, 1, 1], [], []>} : vector<16x32xf32>, vector<32x64xf32>, vector<16x64xf32> -> vector<16x64xf32>
    %216 = vector.broadcast %214 : vector<1x64xf32> to vector<16x64xf32>
    %217 = arith.addf %215, %216 : vector<16x64xf32>
    %cst_114 = arith.constant 0.000000e+00 : f32
    %218 = vector.broadcast %cst_114 : f32 to vector<16x64xf32>
    %219 = arith.maximumf %217, %218 : vector<16x64xf32>
    %c0_115 = arith.constant 0 : index
    %c0_116 = arith.constant 0 : index
    %c0_117 = arith.constant 0 : index
    %220 = vector.load %arg14[%c0_115, %c0_116, %c0_117] : memref<1x64x32xf32, #tpu.memory_space<vmem>>, vector<1x64x32xf32>
    %221 = vector.shape_cast %220 : vector<1x64x32xf32> to vector<64x32xf32>
    %c0_118 = arith.constant 0 : index
    %c0_119 = arith.constant 0 : index
    %c0_120 = arith.constant 0 : index
    %222 = vector.load %arg15[%c0_118, %c0_119, %c0_120] : memref<1x1x32xf32, #tpu.memory_space<vmem>>, vector<1x1x32xf32>
    %223 = vector.shape_cast %222 : vector<1x1x32xf32> to vector<1x32xf32>
    %cst_121 = arith.constant dense<0.000000e+00> : vector<16x32xf32>
    %224 = tpu.matmul %219, %221, %cst_121 {dimension_numbers = #tpu.dot_dimension_numbers<[1], [0], [0], [1], [0, 0, 1, 1], [], []>} : vector<16x64xf32>, vector<64x32xf32>, vector<16x32xf32> -> vector<16x32xf32>
    %225 = vector.broadcast %223 : vector<1x32xf32> to vector<16x32xf32>
    %226 = arith.addf %224, %225 : vector<16x32xf32>
    %227 = arith.addf %210, %226 : vector<16x32xf32>
    %228 = vector.extract_strided_slice %8 {offsets = [2, 0], sizes = [1, 32], strides = [1, 1]} : vector<3x32xf32> to vector<1x32xf32>
    %229 = vector.extract_strided_slice %10 {offsets = [2, 0], sizes = [1, 32], strides = [1, 1]} : vector<3x32xf32> to vector<1x32xf32>
    %cst_122 = arith.constant dense<0.000000e+00> : vector<16xf32>
    %230 = vector.multi_reduction <add>, %227, %cst_122 [1] : vector<16x32xf32> to vector<16xf32>
    %231 = vector.shape_cast %230 : vector<16xf32> to vector<16x1xf32>
    %cst_123 = arith.constant 3.200000e+01 : f32
    %232 = vector.broadcast %cst_123 : f32 to vector<16x1xf32>
    %233 = arith.divf %231, %232 : vector<16x1xf32>
    %234 = vector.broadcast %233 : vector<16x1xf32> to vector<16x32xf32>
    %235 = arith.subf %227, %234 : vector<16x32xf32>
    %236 = arith.mulf %235, %235 : vector<16x32xf32>
    %cst_124 = arith.constant dense<0.000000e+00> : vector<16xf32>
    %237 = vector.multi_reduction <add>, %236, %cst_124 [1] : vector<16x32xf32> to vector<16xf32>
    %238 = vector.shape_cast %237 : vector<16xf32> to vector<16x1xf32>
    %cst_125 = arith.constant 3.200000e+01 : f32
    %239 = vector.broadcast %cst_125 : f32 to vector<16x1xf32>
    %240 = arith.divf %238, %239 : vector<16x1xf32>
    %cst_126 = arith.constant 9.99999974E-6 : f32
    %241 = vector.broadcast %cst_126 : f32 to vector<16x1xf32>
    %242 = arith.addf %240, %241 : vector<16x1xf32>
    %243 = math.rsqrt %242 : vector<16x1xf32>
    %244 = vector.broadcast %243 : vector<16x1xf32> to vector<16x32xf32>
    %245 = arith.mulf %235, %244 : vector<16x32xf32>
    %246 = vector.broadcast %228 : vector<1x32xf32> to vector<16x32xf32>
    %247 = arith.mulf %245, %246 : vector<16x32xf32>
    %248 = vector.broadcast %229 : vector<1x32xf32> to vector<16x32xf32>
    %249 = arith.addf %247, %248 : vector<16x32xf32>
    %250 = vector.shape_cast %249 : vector<16x32xf32> to vector<2x8x32xf32>
    %c0_127 = arith.constant 0 : index
    %c0_128 = arith.constant 0 : index
    %c0_129 = arith.constant 0 : index
    %251 = vector.load %arg21[%c0_127, %c0_128, %c0_129] : memref<2x8x32xf32, #tpu.memory_space<vmem>>, vector<2x8x32xf32>
    tpu.vector_store %arg21[%c0_127, %c0_128, %c0_129], %250 {strides = array<i32>} : memref<2x8x32xf32, #tpu.memory_space<vmem>>, vector<2x8x32xf32>,
    %c1_i32 = arith.constant 1 : i32
    %252 = arith.cmpi eq, %arg1, %c1_i32 : i32
    %253 = arith.extui %252 : i1 to i32
    %c0_i32_130 = arith.constant 0 : i32
    %254 = arith.cmpi ne, %253, %c0_i32_130 : i32
    scf.if %254 {
      %c0_131 = arith.constant 0 : index
      %c0_132 = arith.constant 0 : index
      %255 = vector.load %arg18[%c0_131, %c0_132] : memref<1x32xf32, #tpu.memory_space<vmem>>, vector<1x32xf32>
      %c0_133 = arith.constant 0 : index
      %c0_134 = arith.constant 0 : index
      %256 = vector.load %arg19[%c0_133, %c0_134] : memref<1x32xf32, #tpu.memory_space<vmem>>, vector<1x32xf32>
      %cst_135 = arith.constant dense<0.000000e+00> : vector<16xf32>
      %257 = vector.multi_reduction <add>, %249, %cst_135 [1] : vector<16x32xf32> to vector<16xf32>
      %258 = vector.shape_cast %257 : vector<16xf32> to vector<16x1xf32>
      %cst_136 = arith.constant 3.200000e+01 : f32
      %259 = vector.broadcast %cst_136 : f32 to vector<16x1xf32>
      %260 = arith.divf %258, %259 : vector<16x1xf32>
      %261 = vector.broadcast %260 : vector<16x1xf32> to vector<16x32xf32>
      %262 = arith.subf %249, %261 : vector<16x32xf32>
      %263 = arith.mulf %262, %262 : vector<16x32xf32>
      %cst_137 = arith.constant dense<0.000000e+00> : vector<16xf32>
      %264 = vector.multi_reduction <add>, %263, %cst_137 [1] : vector<16x32xf32> to vector<16xf32>
      %265 = vector.shape_cast %264 : vector<16xf32> to vector<16x1xf32>
      %cst_138 = arith.constant 3.200000e+01 : f32
      %266 = vector.broadcast %cst_138 : f32 to vector<16x1xf32>
      %267 = arith.divf %265, %266 : vector<16x1xf32>
      %cst_139 = arith.constant 9.99999974E-6 : f32
      %268 = vector.broadcast %cst_139 : f32 to vector<16x1xf32>
      %269 = arith.addf %267, %268 : vector<16x1xf32>
      %270 = math.rsqrt %269 : vector<16x1xf32>
      %271 = vector.broadcast %270 : vector<16x1xf32> to vector<16x32xf32>
      %272 = arith.mulf %262, %271 : vector<16x32xf32>
      %273 = vector.broadcast %255 : vector<1x32xf32> to vector<16x32xf32>
      %274 = arith.mulf %272, %273 : vector<16x32xf32>
      %275 = vector.broadcast %256 : vector<1x32xf32> to vector<16x32xf32>
      %276 = arith.addf %274, %275 : vector<16x32xf32>
      %277 = vector.shape_cast %276 : vector<16x32xf32> to vector<2x8x32xf32>
      %c0_140 = arith.constant 0 : index
      %c0_141 = arith.constant 0 : index
      %c0_142 = arith.constant 0 : index
      %278 = vector.load %arg20[%c0_140, %c0_141, %c0_142] : memref<2x8x32xf32, #tpu.memory_space<vmem>>, vector<2x8x32xf32>
      tpu.vector_store %arg20[%c0_140, %c0_141, %c0_142], %277 {strides = array<i32>} : memref<2x8x32xf32, #tpu.memory_space<vmem>>, vector<2x8x32xf32>,
    } else {
    }
    return
  }
  func.func @transform_0(%arg0: i32, %arg1: i32) -> (i32, i32, i32) {
    %c0_i32 = arith.constant 0 : i32
    %c0_i32_0 = arith.constant 0 : i32
    %c0_i32_1 = arith.constant 0 : i32
    return %arg0, %c0_i32, %c0_i32_0 : i32, i32, i32
  }
  func.func @transform_1(%arg0: i32, %arg1: i32) -> (i32, i32, i32) {
    %c0_i32 = arith.constant 0 : i32
    %c0_i32_0 = arith.constant 0 : i32
    %c0_i32_1 = arith.constant 0 : i32
    return %arg0, %c0_i32, %c0_i32_0 : i32, i32, i32
  }
  func.func @transform_2(%arg0: i32, %arg1: i32) -> (i32, i32, i32, i32) {
    %c0_i32 = arith.constant 0 : i32
    %c0_i32_0 = arith.constant 0 : i32
    %c0_i32_1 = arith.constant 0 : i32
    %c0_i32_2 = arith.constant 0 : i32
    return %arg1, %c0_i32, %c0_i32_0, %c0_i32_1 : i32, i32, i32, i32
  }
  func.func @transform_3(%arg0: i32, %arg1: i32) -> (i32, i32, i32, i32) {
    %c0_i32 = arith.constant 0 : i32
    %c0_i32_0 = arith.constant 0 : i32
    %c0_i32_1 = arith.constant 0 : i32
    %c0_i32_2 = arith.constant 0 : i32
    return %arg1, %c0_i32, %c0_i32_0, %c0_i32_1 : i32, i32, i32, i32
  }
  func.func @transform_4(%arg0: i32, %arg1: i32) -> (i32, i32, i32) {
    %c0_i32 = arith.constant 0 : i32
    %c0_i32_0 = arith.constant 0 : i32
    %c0_i32_1 = arith.constant 0 : i32
    return %arg1, %c0_i32, %c0_i32_0 : i32, i32, i32
  }
  func.func @transform_5(%arg0: i32, %arg1: i32) -> (i32, i32, i32) {
    %c0_i32 = arith.constant 0 : i32
    %c0_i32_0 = arith.constant 0 : i32
    %c0_i32_1 = arith.constant 0 : i32
    return %arg1, %c0_i32, %c0_i32_0 : i32, i32, i32
  }
  func.func @transform_6(%arg0: i32, %arg1: i32) -> (i32, i32, i32, i32) {
    %c0_i32 = arith.constant 0 : i32
    %c0_i32_0 = arith.constant 0 : i32
    %c0_i32_1 = arith.constant 0 : i32
    %c0_i32_2 = arith.constant 0 : i32
    return %arg1, %c0_i32, %c0_i32_0, %c0_i32_1 : i32, i32, i32, i32
  }
  func.func @transform_7(%arg0: i32, %arg1: i32) -> (i32, i32, i32, i32) {
    %c0_i32 = arith.constant 0 : i32
    %c0_i32_0 = arith.constant 0 : i32
    %c0_i32_1 = arith.constant 0 : i32
    %c0_i32_2 = arith.constant 0 : i32
    return %arg1, %c0_i32, %c0_i32_0, %c0_i32_1 : i32, i32, i32, i32
  }
  func.func @transform_8(%arg0: i32, %arg1: i32) -> (i32, i32, i32) {
    %c0_i32 = arith.constant 0 : i32
    %c0_i32_0 = arith.constant 0 : i32
    %c0_i32_1 = arith.constant 0 : i32
    return %arg1, %c0_i32, %c0_i32_0 : i32, i32, i32
  }
  func.func @transform_9(%arg0: i32, %arg1: i32) -> (i32, i32, i32) {
    %c0_i32 = arith.constant 0 : i32
    %c0_i32_0 = arith.constant 0 : i32
    %c0_i32_1 = arith.constant 0 : i32
    return %arg1, %c0_i32, %c0_i32_0 : i32, i32, i32
  }
  func.func @transform_10(%arg0: i32, %arg1: i32) -> (i32, i32, i32) {
    %c0_i32 = arith.constant 0 : i32
    %c0_i32_0 = arith.constant 0 : i32
    %c0_i32_1 = arith.constant 0 : i32
    return %arg1, %c0_i32, %c0_i32_0 : i32, i32, i32
  }
  func.func @transform_11(%arg0: i32, %arg1: i32) -> (i32, i32, i32) {
    %c0_i32 = arith.constant 0 : i32
    %c0_i32_0 = arith.constant 0 : i32
    %c0_i32_1 = arith.constant 0 : i32
    return %arg1, %c0_i32, %c0_i32_0 : i32, i32, i32
  }
  func.func @transform_12(%arg0: i32, %arg1: i32) -> (i32, i32, i32) {
    %c0_i32 = arith.constant 0 : i32
    %c0_i32_0 = arith.constant 0 : i32
    %c0_i32_1 = arith.constant 0 : i32
    return %arg1, %c0_i32, %c0_i32_0 : i32, i32, i32
  }
  func.func @transform_13(%arg0: i32, %arg1: i32) -> (i32, i32, i32) {
    %c0_i32 = arith.constant 0 : i32
    %c0_i32_0 = arith.constant 0 : i32
    %c0_i32_1 = arith.constant 0 : i32
    return %arg1, %c0_i32, %c0_i32_0 : i32, i32, i32
  }
  func.func @transform_14(%arg0: i32, %arg1: i32) -> (i32, i32, i32) {
    %c0_i32 = arith.constant 0 : i32
    %c0_i32_0 = arith.constant 0 : i32
    %c0_i32_1 = arith.constant 0 : i32
    return %arg1, %c0_i32, %c0_i32_0 : i32, i32, i32
  }
  func.func @transform_15(%arg0: i32, %arg1: i32) -> (i32, i32, i32) {
    %c0_i32 = arith.constant 0 : i32
    %c0_i32_0 = arith.constant 0 : i32
    %c0_i32_1 = arith.constant 0 : i32
    return %arg1, %c0_i32, %c0_i32_0 : i32, i32, i32
  }
  func.func @transform_16(%arg0: i32, %arg1: i32) -> (i32, i32) {
    %c0_i32 = arith.constant 0 : i32
    %c0_i32_0 = arith.constant 0 : i32
    %c0_i32_1 = arith.constant 0 : i32
    return %c0_i32, %c0_i32_0 : i32, i32
  }
  func.func @transform_17(%arg0: i32, %arg1: i32) -> (i32, i32) {
    %c0_i32 = arith.constant 0 : i32
    %c0_i32_0 = arith.constant 0 : i32
    %c0_i32_1 = arith.constant 0 : i32
    return %c0_i32, %c0_i32_0 : i32, i32
  }
  func.func @transform_18(%arg0: i32, %arg1: i32) -> (i32, i32, i32) {
    %c0_i32 = arith.constant 0 : i32
    %c0_i32_0 = arith.constant 0 : i32
    %c0_i32_1 = arith.constant 0 : i32
    return %arg0, %c0_i32, %c0_i32_0 : i32, i32, i32
  }
}

</mosaic_0001>

<llo_original>
// kernel: tpu_custom_call.1
$region0: #{tpu_custom_call.1}
  #allocation0 [shape = 'u32[]', space=smem, size = 0x4, offset = 0x4, fixed_abs, tag = 'smem constant byte address 0x4 - core index']
  #allocation1 [shape = 'u32[144,128]{1,0:T(1,128)}', space=vmem, size = 0x12000, scoped, tag = 'internal scratch']
  #allocation2 [shape = 'f32[2,8,32]{2,1,0:T(8,128)}', space=vmem, size = 0x2000, scoped, tag = 'scratch operand']
  %s0 = inlined_call_operand.hbm [shape: f32[2,8,32], index: 0, kind: input, shape index: {}]
  %s1 = inlined_call_operand.hbm [shape: f32[2,16,32], index: 1, kind: input, shape index: {}]
  %s2 = inlined_call_operand.vmem [shape: f32[2,3,32,32], index: 2, kind: input, shape index: {}]
  %s3 = inlined_call_operand.vmem [shape: f32[2,3,1,32], index: 3, kind: input, shape index: {}]
  %s4 = inlined_call_operand.hbm [shape: f32[2,32,32], index: 4, kind: input, shape index: {}]
  %s5 = inlined_call_operand.hbm [shape: f32[2,1,32], index: 5, kind: input, shape index: {}]
  %s6 = inlined_call_operand.hbm [shape: f32[2,3,32,32], index: 6, kind: input, shape index: {}]
  %s7 = inlined_call_operand.hbm [shape: f32[2,3,1,32], index: 7, kind: input, shape index: {}]
  %s8 = inlined_call_operand.hbm [shape: f32[2,32,32], index: 8, kind: input, shape index: {}]
  %s9 = inlined_call_operand.hbm [shape: f32[2,1,32], index: 9, kind: input, shape index: {}]
  %s10 = inlined_call_operand.hbm [shape: f32[2,32,64], index: 10, kind: input, shape index: {}]
  %s11 = inlined_call_operand.hbm [shape: f32[2,1,64], index: 11, kind: input, shape index: {}]
  %s12 = inlined_call_operand.vmem [shape: f32[2,64,32], index: 12, kind: input, shape index: {}]
  %s13 = inlined_call_operand.hbm [shape: f32[2,1,32], index: 13, kind: input, shape index: {}]
  %s14 = inlined_call_operand.vmem [shape: f32[2,3,32], index: 14, kind: input, shape index: {}]
  %s15 = inlined_call_operand.vmem [shape: f32[2,3,32], index: 15, kind: input, shape index: {}]
  %s16 = inlined_call_operand.vmem [shape: f32[1,32], index: 16, kind: input, shape index: {}]
  %s17 = inlined_call_operand.vmem [shape: f32[1,32], index: 17, kind: input, shape index: {}]
  %s18 = inlined_call_operand.hbm [shape: f32[2,8,32], index: 18, kind: output, shape index: {}]
  %s19 = sld [smem:[#allocation0]]
  $region157: #{tpu_custom_call.1} parent=0
    _
  %s21 = ssub.s32 1, %s19
  %s22 = scalar_select 0, %s21, %s19
  $region1: #{tpu_custom_call.1} parent=0
    #allocation3 [shape = 'u8[8192]{0}', space=vmem, size = 0x2000, scoped, tag = 'input window, operand 0, single buffered']
    #allocation4 [shape = 's32[2]{0}', space=sflag, size = 0x8, scoped, tag = 'scoped memory for tpu_custom_call.1']
    #allocation5 [shape = 's32[2]{0}', space=sflag, size = 0x8, scoped, tag = 'scoped memory for tpu_custom_call.1']
    #allocation6 [shape = 'u8[16384]{0}', space=vmem, size = 0x4000, scoped, tag = 'input window, operand 1, single buffered']
    #allocation7 [shape = 's32[1]{0}', space=sflag, size = 0x4, scoped, tag = 'scoped memory for tpu_custom_call.1']
    #allocation8 [shape = 'u8[32768]{0}', space=vmem, size = 0x8000, scoped, tag = 'input window, operand 4']
    #allocation9 [shape = 'u8[1024]{0}', space=vmem, size = 0x400, scoped, tag = 'input window, operand 5']
    #allocation10 [shape = 'u8[98304]{0}', space=vmem, size = 0x18000, scoped, tag = 'input window, operand 6']
    #allocation11 [shape = 'u8[3072]{0}', space=vmem, size = 0xc00, scoped, tag = 'input window, operand 7']
    #allocation12 [shape = 'u8[32768]{0}', space=vmem, size = 0x8000, scoped, tag = 'input window, operand 8']
    #allocation13 [shape = 'u8[1024]{0}', space=vmem, size = 0x400, scoped, tag = 'input window, operand 9']
    #allocation14 [shape = 'u8[32768]{0}', space=vmem, size = 0x8000, scoped, tag = 'input window, operand 10']
    #allocation15 [shape = 'u8[1024]{0}', space=vmem, size = 0x400, scoped, tag = 'input window, operand 11']
    #allocation16 [shape = 'u8[1024]{0}', space=vmem, size = 0x400, scoped, tag = 'input window, operand 13']
    #allocation17 [shape = 'u8[8192]{0}', space=vmem, size = 0x2000, scoped, tag = 'output window, operand 0, single buffered']
    %23 = vsyncpa [#allocation4], 0
    %24 = vsyncpa [#allocation7], 0
    %25 = vsyncpa [#allocation5], 0
    loop: start=0, step=1, limit=4
    $region2: #{tpu_custom_call.1} parent=1 // loop_pre_header
      _
    $region3: #{tpu_custom_call.1} parent=1 // loop_header
      %s27 = sphi 0, %s31
      %p28 = scmp.ge.s32.totalorder %s27, 4
      %s34 = sphi 0, %s46
      %s35 = sphi 0, %s42
      %s36 = sphi 0, %s34
      %s37 = sphi 0, %s35
      %s38 = sphi 0, %s36
      %s39 = sphi 0, %s37
      %s49 = sphi 0, %s51
      %s52 = sphi 0, %s49
      %s53 = sphi 0, %s52
      %s69 = sphi 0, %s53
      %s75 = sphi 0, %s77
      %s78 = sphi 0, %s75
      %s79 = sphi 0, %s78
      %s95 = sphi 0, %s79
      %s101 = sphi 0, %s103
      %s104 = sphi 0, %s101
      %s105 = sphi 0, %s104
      %s121 = sphi 0, %s105
      %s127 = sphi 0, %s129
      %s130 = sphi 0, %s127
      %s131 = sphi 0, %s130
      %s147 = sphi 0, %s131
      %s153 = sphi 0, %s155
      %s156 = sphi 0, %s153
      %s157 = sphi 0, %s156
      %s173 = sphi 0, %s157
      %s179 = sphi 0, %s181
      %s182 = sphi 0, %s179
      %s183 = sphi 0, %s182
      %s199 = sphi 0, %s183
      %s205 = sphi 0, %s207
      %s208 = sphi 0, %s205
      %s209 = sphi 0, %s208
      %s225 = sphi 0, %s209
      %s231 = sphi 0, %s233
      %s234 = sphi 0, %s231
      %s235 = sphi 0, %s234
      %s251 = sphi 0, %s235
      %s257 = sphi 0, %s259
      %s260 = sphi 0, %s257
      %s261 = sphi 0, %s260
      %s277 = sphi 0, %s261
      %s283 = sphi 0, %s285
      %s286 = sphi 0, %s283
      %s287 = sphi 0, %s286
      %s303 = sphi 0, %s287
      %s309 = sphi 0, %s311
      %s312 = sphi 0, %s309
      %s313 = sphi 0, %s312
      %s329 = sphi 0, %s313
      %s335 = sphi 0, %s337
      %s338 = sphi 0, %s335
      %s339 = sphi 0, %s338
      %s355 = sphi 0, %s339
      %s361 = sphi 0, %s363
      %s364 = sphi 0, %s361
      %s365 = sphi 0, %s364
      %s381 = sphi 0, %s365
      %s387 = sphi 0, %s389
      %s390 = sphi 0, %s387
      %s391 = sphi 0, %s390
      %s407 = sphi 0, %s391
      %s413 = sphi 0, %s415
      %s416 = sphi 0, %s413
      %s417 = sphi 0, %s416
      %s433 = sphi 0, %s417
      %s439 = sphi 0, %s441
      %s442 = sphi 0, %s439
      %s443 = sphi 0, %s442
      %s459 = sphi 0, %s443
      %s463 = sphi 0, %s463
      %s465 = sphi 0, %s463
      %s466 = sphi 0, %s465
      %s480 = sphi 0, %s466
      %s484 = sphi 0, %s484
      %s486 = sphi 0, %s484
      %s487 = sphi 0, %s486
      %s501 = sphi 0, %s487
      %s507 = sphi 0, %s509
      %s510 = sphi 0, %s507
      %s511 = sphi 0, %s510
      %s527 = sphi 0, %s511
    $region4: #{tpu_custom_call.1} parent=1 // loop_header_branch
      %30 = sbr.rel (%p28) target = $region8
    $region5: #{tpu_custom_call.1} parent=1 // loop_body
      %s32 = ssub.s32 %s27, 1
      %s33 = ssub.s32 %s27, 2
      %s40 = sadd.s32 1, %s35
      %p41 = scmp.ge.s32.totalorder %s40, 2
      %s42 = scalar_select %p41, 0, %s40
      %s43 = sadd.s32 1, %s34
      %s44 = scalar_select %p41, %s43, %s34
      %p45 = scmp.ge.s32.totalorder %s44, 1
      %s46 = scalar_select %p45, 0, %s44
      %s47 = ssub.s32 %s34, %s46
      %p48 = scmp.eq.s32.totalorder %s47, 0
      %s50 = sadd.s32 %s49, 1
      %s51 = scalar_select %p48, %s49, %s50
      %p54 = pneg %p48
      %p55 = scmp.eq.s32.totalorder %s27, 1
      %p56 = por %p54, %p55
      %p57 = scmp.ne.s32.totalorder %s49, %s52
      %p58 = scmp.eq.s32.totalorder %s27, 0
      %p59 = por %p57, %p58
      %p60 = scmp.ne.s32.totalorder %s49, %s52
      %p61 = scmp.eq.s32.totalorder %s32, 1
      %p62 = por %p60, %p61
      %p63 = scmp.ne.s32.totalorder %s52, %s53
      %p64 = scmp.eq.s32.totalorder %s32, 0
      %p65 = por %p63, %p64
      %p66 = scmp.ne.s32.totalorder %s52, %s53
      %p67 = scmp.eq.s32.totalorder %s33, 1
      %p68 = por %p66, %p67
      %p70 = scmp.ne.s32.totalorder %s53, %s69
      %p71 = scmp.eq.s32.totalorder %s33, 0
      %p72 = por %p70, %p71
      %s73 = ssub.s32 %s34, %s46
      %p74 = scmp.eq.s32.totalorder %s73, 0
      %s76 = sadd.s32 %s75, 1
      %s77 = scalar_select %p74, %s75, %s76
      %p80 = pneg %p74
      %p81 = scmp.eq.s32.totalorder %s27, 1
      %p82 = por %p80, %p81
      %p83 = scmp.ne.s32.totalorder %s75, %s78
      %p84 = scmp.eq.s32.totalorder %s27, 0
      %p85 = por %p83, %p84
      %p86 = scmp.ne.s32.totalorder %s75, %s78
      %p87 = scmp.eq.s32.totalorder %s32, 1
      %p88 = por %p86, %p87
      %p89 = scmp.ne.s32.totalorder %s78, %s79
      %p90 = scmp.eq.s32.totalorder %s32, 0
      %p91 = por %p89, %p90
      %p92 = scmp.ne.s32.totalorder %s78, %s79
      %p93 = scmp.eq.s32.totalorder %s33, 1
      %p94 = por %p92, %p93
      %p96 = scmp.ne.s32.totalorder %s79, %s95
      %p97 = scmp.eq.s32.totalorder %s33, 0
      %p98 = por %p96, %p97
      %s99 = ssub.s32 %s35, %s42
      %p100 = scmp.eq.s32.totalorder %s99, 0
      %s102 = sadd.s32 %s101, 1
      %s103 = scalar_select %p100, %s101, %s102
      %p106 = pneg %p100
      %p107 = scmp.eq.s32.totalorder %s27, 1
      %p108 = por %p106, %p107
      %p109 = scmp.ne.s32.totalorder %s101, %s104
      %p110 = scmp.eq.s32.totalorder %s27, 0
      %p111 = por %p109, %p110
      %p112 = scmp.ne.s32.totalorder %s101, %s104
      %p113 = scmp.eq.s32.totalorder %s32, 1
      %p114 = por %p112, %p113
      %p115 = scmp.ne.s32.totalorder %s104, %s105
      %p116 = scmp.eq.s32.totalorder %s32, 0
      %p117 = por %p115, %p116
      %p118 = scmp.ne.s32.totalorder %s104, %s105
      %p119 = scmp.eq.s32.totalorder %s33, 1
      %p120 = por %p118, %p119
      %p122 = scmp.ne.s32.totalorder %s105, %s121
      %p123 = scmp.eq.s32.totalorder %s33, 0
      %p124 = por %p122, %p123
      %s125 = ssub.s32 %s35, %s42
      %p126 = scmp.eq.s32.totalorder %s125, 0
      %s128 = sadd.s32 %s127, 1
      %s129 = scalar_select %p126, %s127, %s128
      %p132 = pneg %p126
      %p133 = scmp.eq.s32.totalorder %s27, 1
      %p134 = por %p132, %p133
      %p135 = scmp.ne.s32.totalorder %s127, %s130
      %p136 = scmp.eq.s32.totalorder %s27, 0
      %p137 = por %p135, %p136
      %p138 = scmp.ne.s32.totalorder %s127, %s130
      %p139 = scmp.eq.s32.totalorder %s32, 1
      %p140 = por %p138, %p139
      %p141 = scmp.ne.s32.totalorder %s130, %s131
      %p142 = scmp.eq.s32.totalorder %s32, 0
      %p143 = por %p141, %p142
      %p144 = scmp.ne.s32.totalorder %s130, %s131
      %p145 = scmp.eq.s32.totalorder %s33, 1
      %p146 = por %p144, %p145
      %p148 = scmp.ne.s32.totalorder %s131, %s147
      %p149 = scmp.eq.s32.totalorder %s33, 0
      %p150 = por %p148, %p149
      %s151 = ssub.s32 %s35, %s42
      %p152 = scmp.eq.s32.totalorder %s151, 0
      %s154 = sadd.s32 %s153, 1
      %s155 = scalar_select %p152, %s153, %s154
      %p158 = pneg %p152
      %p159 = scmp.eq.s32.totalorder %s27, 1
      %p160 = por %p158, %p159
      %p161 = scmp.ne.s32.totalorder %s153, %s156
      %p162 = scmp.eq.s32.totalorder %s27, 0
      %p163 = por %p161, %p162
      %p164 = scmp.ne.s32.totalorder %s153, %s156
      %p165 = scmp.eq.s32.totalorder %s32, 1
      %p166 = por %p164, %p165
      %p167 = scmp.ne.s32.totalorder %s156, %s157
      %p168 = scmp.eq.s32.totalorder %s32, 0
      %p169 = por %p167, %p168
      %p170 = scmp.ne.s32.totalorder %s156, %s157
      %p171 = scmp.eq.s32.totalorder %s33, 1
      %p172 = por %p170, %p171
      %p174 = scmp.ne.s32.totalorder %s157, %s173
      %p175 = scmp.eq.s32.totalorder %s33, 0
      %p176 = por %p174, %p175
      %s177 = ssub.s32 %s35, %s42
      %p178 = scmp.eq.s32.totalorder %s177, 0
      %s180 = sadd.s32 %s179, 1
      %s181 = scalar_select %p178, %s179, %s180
      %p184 = pneg %p178
      %p185 = scmp.eq.s32.totalorder %s27, 1
      %p186 = por %p184, %p185
      %p187 = scmp.ne.s32.totalorder %s179, %s182
      %p188 = scmp.eq.s32.totalorder %s27, 0
      %p189 = por %p187, %p188
      %p190 = scmp.ne.s32.totalorder %s179, %s182
      %p191 = scmp.eq.s32.totalorder %s32, 1
      %p192 = por %p190, %p191
      %p193 = scmp.ne.s32.totalorder %s182, %s183
      %p194 = scmp.eq.s32.totalorder %s32, 0
      %p195 = por %p193, %p194
      %p196 = scmp.ne.s32.totalorder %s182, %s183
      %p197 = scmp.eq.s32.totalorder %s33, 1
      %p198 = por %p196, %p197
      %p200 = scmp.ne.s32.totalorder %s183, %s199
      %p201 = scmp.eq.s32.totalorder %s33, 0
      %p202 = por %p200, %p201
      %s203 = ssub.s32 %s35, %s42
      %p204 = scmp.eq.s32.totalorder %s203, 0
      %s206 = sadd.s32 %s205, 1
      %s207 = scalar_select %p204, %s205, %s206
      %p210 = pneg %p204
      %p211 = scmp.eq.s32.totalorder %s27, 1
      %p212 = por %p210, %p211
      %p213 = scmp.ne.s32.totalorder %s205, %s208
      %p214 = scmp.eq.s32.totalorder %s27, 0
      %p215 = por %p213, %p214
      %p216 = scmp.ne.s32.totalorder %s205, %s208
      %p217 = scmp.eq.s32.totalorder %s32, 1
      %p218 = por %p216, %p217
      %p219 = scmp.ne.s32.totalorder %s208, %s209
      %p220 = scmp.eq.s32.totalorder %s32, 0
      %p221 = por %p219, %p220
      %p222 = scmp.ne.s32.totalorder %s208, %s209
      %p223 = scmp.eq.s32.totalorder %s33, 1
      %p224 = por %p222, %p223
      %p226 = scmp.ne.s32.totalorder %s209, %s225
      %p227 = scmp.eq.s32.totalorder %s33, 0
      %p228 = por %p226, %p227
      %s229 = ssub.s32 %s35, %s42
      %p230 = scmp.eq.s32.totalorder %s229, 0
      %s232 = sadd.s32 %s231, 1
      %s233 = scalar_select %p230, %s231, %s232
      %p236 = pneg %p230
      %p237 = scmp.eq.s32.totalorder %s27, 1
      %p238 = por %p236, %p237
      %p239 = scmp.ne.s32.totalorder %s231, %s234
      %p240 = scmp.eq.s32.totalorder %s27, 0
      %p241 = por %p239, %p240
      %p242 = scmp.ne.s32.totalorder %s231, %s234
      %p243 = scmp.eq.s32.totalorder %s32, 1
      %p244 = por %p242, %p243
      %p245 = scmp.ne.s32.totalorder %s234, %s235
      %p246 = scmp.eq.s32.totalorder %s32, 0
      %p247 = por %p245, %p246
      %p248 = scmp.ne.s32.totalorder %s234, %s235
      %p249 = scmp.eq.s32.totalorder %s33, 1
      %p250 = por %p248, %p249
      %p252 = scmp.ne.s32.totalorder %s235, %s251
      %p253 = scmp.eq.s32.totalorder %s33, 0
      %p254 = por %p252, %p253
      %s255 = ssub.s32 %s35, %s42
      %p256 = scmp.eq.s32.totalorder %s255, 0
      %s258 = sadd.s32 %s257, 1
      %s259 = scalar_select %p256, %s257, %s258
      %p262 = pneg %p256
      %p263 = scmp.eq.s32.totalorder %s27, 1
      %p264 = por %p262, %p263
      %p265 = scmp.ne.s32.totalorder %s257, %s260
      %p266 = scmp.eq.s32.totalorder %s27, 0
      %p267 = por %p265, %p266
      %p268 = scmp.ne.s32.totalorder %s257, %s260
      %p269 = scmp.eq.s32.totalorder %s32, 1
      %p270 = por %p268, %p269
      %p271 = scmp.ne.s32.totalorder %s260, %s261
      %p272 = scmp.eq.s32.totalorder %s32, 0
      %p273 = por %p271, %p272
      %p274 = scmp.ne.s32.totalorder %s260, %s261
      %p275 = scmp.eq.s32.totalorder %s33, 1
      %p276 = por %p274, %p275
      %p278 = scmp.ne.s32.totalorder %s261, %s277
      %p279 = scmp.eq.s32.totalorder %s33, 0
      %p280 = por %p278, %p279
      %s281 = ssub.s32 %s35, %s42
      %p282 = scmp.eq.s32.totalorder %s281, 0
      %s284 = sadd.s32 %s283, 1
      %s285 = scalar_select %p282, %s283, %s284
      %p288 = pneg %p282
      %p289 = scmp.eq.s32.totalorder %s27, 1
      %p290 = por %p288, %p289
      %p291 = scmp.ne.s32.totalorder %s283, %s286
      %p292 = scmp.eq.s32.totalorder %s27, 0
      %p293 = por %p291, %p292
      %p294 = scmp.ne.s32.totalorder %s283, %s286
      %p295 = scmp.eq.s32.totalorder %s32, 1
      %p296 = por %p294, %p295
      %p297 = scmp.ne.s32.totalorder %s286, %s287
      %p298 = scmp.eq.s32.totalorder %s32, 0
      %p299 = por %p297, %p298
      %p300 = scmp.ne.s32.totalorder %s286, %s287
      %p301 = scmp.eq.s32.totalorder %s33, 1
      %p302 = por %p300, %p301
      %p304 = scmp.ne.s32.totalorder %s287, %s303
      %p305 = scmp.eq.s32.totalorder %s33, 0
      %p306 = por %p304, %p305
      %s307 = ssub.s32 %s35, %s42
      %p308 = scmp.eq.s32.totalorder %s307, 0
      %s310 = sadd.s32 %s309, 1
      %s311 = scalar_select %p308, %s309, %s310
      %p314 = pneg %p308
      %p315 = scmp.eq.s32.totalorder %s27, 1
      %p316 = por %p314, %p315
      %p317 = scmp.ne.s32.totalorder %s309, %s312
      %p318 = scmp.eq.s32.totalorder %s27, 0
      %p319 = por %p317, %p318
      %p320 = scmp.ne.s32.totalorder %s309, %s312
      %p321 = scmp.eq.s32.totalorder %s32, 1
      %p322 = por %p320, %p321
      %p323 = scmp.ne.s32.totalorder %s312, %s313
      %p324 = scmp.eq.s32.totalorder %s32, 0
      %p325 = por %p323, %p324
      %p326 = scmp.ne.s32.totalorder %s312, %s313
      %p327 = scmp.eq.s32.totalorder %s33, 1
      %p328 = por %p326, %p327
      %p330 = scmp.ne.s32.totalorder %s313, %s329
      %p331 = scmp.eq.s32.totalorder %s33, 0
      %p332 = por %p330, %p331
      %s333 = ssub.s32 %s35, %s42
      %p334 = scmp.eq.s32.totalorder %s333, 0
      %s336 = sadd.s32 %s335, 1
      %s337 = scalar_select %p334, %s335, %s336
      %p340 = pneg %p334
      %p341 = scmp.eq.s32.totalorder %s27, 1
      %p342 = por %p340, %p341
      %p343 = scmp.ne.s32.totalorder %s335, %s338
      %p344 = scmp.eq.s32.totalorder %s27, 0
      %p345 = por %p343, %p344
      %p346 = scmp.ne.s32.totalorder %s335, %s338
      %p347 = scmp.eq.s32.totalorder %s32, 1
      %p348 = por %p346, %p347
      %p349 = scmp.ne.s32.totalorder %s338, %s339
      %p350 = scmp.eq.s32.totalorder %s32, 0
      %p351 = por %p349, %p350
      %p352 = scmp.ne.s32.totalorder %s338, %s339
      %p353 = scmp.eq.s32.totalorder %s33, 1
      %p354 = por %p352, %p353
      %p356 = scmp.ne.s32.totalorder %s339, %s355
      %p357 = scmp.eq.s32.totalorder %s33, 0
      %p358 = por %p356, %p357
      %s359 = ssub.s32 %s35, %s42
      %p360 = scmp.eq.s32.totalorder %s359, 0
      %s362 = sadd.s32 %s361, 1
      %s363 = scalar_select %p360, %s361, %s362
      %p366 = pneg %p360
      %p367 = scmp.eq.s32.totalorder %s27, 1
      %p368 = por %p366, %p367
      %p369 = scmp.ne.s32.totalorder %s361, %s364
      %p370 = scmp.eq.s32.totalorder %s27, 0
      %p371 = por %p369, %p370
      %p372 = scmp.ne.s32.totalorder %s361, %s364
      %p373 = scmp.eq.s32.totalorder %s32, 1
      %p374 = por %p372, %p373
      %p375 = scmp.ne.s32.totalorder %s364, %s365
      %p376 = scmp.eq.s32.totalorder %s32, 0
      %p377 = por %p375, %p376
      %p378 = scmp.ne.s32.totalorder %s364, %s365
      %p379 = scmp.eq.s32.totalorder %s33, 1
      %p380 = por %p378, %p379
      %p382 = scmp.ne.s32.totalorder %s365, %s381
      %p383 = scmp.eq.s32.totalorder %s33, 0
      %p384 = por %p382, %p383
      %s385 = ssub.s32 %s35, %s42
      %p386 = scmp.eq.s32.totalorder %s385, 0
      %s388 = sadd.s32 %s387, 1
      %s389 = scalar_select %p386, %s387, %s388
      %p392 = pneg %p386
      %p393 = scmp.eq.s32.totalorder %s27, 1
      %p394 = por %p392, %p393
      %p395 = scmp.ne.s32.totalorder %s387, %s390
      %p396 = scmp.eq.s32.totalorder %s27, 0
      %p397 = por %p395, %p396
      %p398 = scmp.ne.s32.totalorder %s387, %s390
      %p399 = scmp.eq.s32.totalorder %s32, 1
      %p400 = por %p398, %p399
      %p401 = scmp.ne.s32.totalorder %s390, %s391
      %p402 = scmp.eq.s32.totalorder %s32, 0
      %p403 = por %p401, %p402
      %p404 = scmp.ne.s32.totalorder %s390, %s391
      %p405 = scmp.eq.s32.totalorder %s33, 1
      %p406 = por %p404, %p405
      %p408 = scmp.ne.s32.totalorder %s391, %s407
      %p409 = scmp.eq.s32.totalorder %s33, 0
      %p410 = por %p408, %p409
      %s411 = ssub.s32 %s35, %s42
      %p412 = scmp.eq.s32.totalorder %s411, 0
      %s414 = sadd.s32 %s413, 1
      %s415 = scalar_select %p412, %s413, %s414
      %p418 = pneg %p412
      %p419 = scmp.eq.s32.totalorder %s27, 1
      %p420 = por %p418, %p419
      %p421 = scmp.ne.s32.totalorder %s413, %s416
      %p422 = scmp.eq.s32.totalorder %s27, 0
      %p423 = por %p421, %p422
      %p424 = scmp.ne.s32.totalorder %s413, %s416
      %p425 = scmp.eq.s32.totalorder %s32, 1
      %p426 = por %p424, %p425
      %p427 = scmp.ne.s32.totalorder %s416, %s417
      %p428 = scmp.eq.s32.totalorder %s32, 0
      %p429 = por %p427, %p428
      %p430 = scmp.ne.s32.totalorder %s416, %s417
      %p431 = scmp.eq.s32.totalorder %s33, 1
      %p432 = por %p430, %p431
      %p434 = scmp.ne.s32.totalorder %s417, %s433
      %p435 = scmp.eq.s32.totalorder %s33, 0
      %p436 = por %p434, %p435
      %s437 = ssub.s32 %s35, %s42
      %p438 = scmp.eq.s32.totalorder %s437, 0
      %s440 = sadd.s32 %s439, 1
      %s441 = scalar_select %p438, %s439, %s440
      %p444 = pneg %p438
      %p445 = scmp.eq.s32.totalorder %s27, 1
      %p446 = por %p444, %p445
      %p447 = scmp.ne.s32.totalorder %s439, %s442
      %p448 = scmp.eq.s32.totalorder %s27, 0
      %p449 = por %p447, %p448
      %p450 = scmp.ne.s32.totalorder %s439, %s442
      %p451 = scmp.eq.s32.totalorder %s32, 1
      %p452 = por %p450, %p451
      %p453 = scmp.ne.s32.totalorder %s442, %s443
      %p454 = scmp.eq.s32.totalorder %s32, 0
      %p455 = por %p453, %p454
      %p456 = scmp.ne.s32.totalorder %s442, %s443
      %p457 = scmp.eq.s32.totalorder %s33, 1
      %p458 = por %p456, %p457
      %p460 = scmp.ne.s32.totalorder %s443, %s459
      %p461 = scmp.eq.s32.totalorder %s33, 0
      %p462 = por %p460, %p461
      %s464 = sadd.s32 %s463, 1
      %p467 = scmp.eq.s32.totalorder %s27, 1
      %p468 = scmp.ne.s32.totalorder %s463, %s465
      %p469 = scmp.eq.s32.totalorder %s27, 0
      %p470 = por %p468, %p469
      %p471 = scmp.ne.s32.totalorder %s463, %s465
      %p472 = scmp.eq.s32.totalorder %s32, 1
      %p473 = por %p471, %p472
      %p474 = scmp.ne.s32.totalorder %s465, %s466
      %p475 = scmp.eq.s32.totalorder %s32, 0
      %p476 = por %p474, %p475
      %p477 = scmp.ne.s32.totalorder %s465, %s466
      %p478 = scmp.eq.s32.totalorder %s33, 1
      %p479 = por %p477, %p478
      %p481 = scmp.ne.s32.totalorder %s466, %s480
      %p482 = scmp.eq.s32.totalorder %s33, 0
      %p483 = por %p481, %p482
      %s485 = sadd.s32 %s484, 1
      %p488 = scmp.eq.s32.totalorder %s27, 1
      %p489 = scmp.ne.s32.totalorder %s484, %s486
      %p490 = scmp.eq.s32.totalorder %s27, 0
      %p491 = por %p489, %p490
      %p492 = scmp.ne.s32.totalorder %s484, %s486
      %p493 = scmp.eq.s32.totalorder %s32, 1
      %p494 = por %p492, %p493
      %p495 = scmp.ne.s32.totalorder %s486, %s487
      %p496 = scmp.eq.s32.totalorder %s32, 0
      %p497 = por %p495, %p496
      %p498 = scmp.ne.s32.totalorder %s486, %s487
      %p499 = scmp.eq.s32.totalorder %s33, 1
      %p500 = por %p498, %p499
      %p502 = scmp.ne.s32.totalorder %s487, %s501
      %p503 = scmp.eq.s32.totalorder %s33, 0
      %p504 = por %p502, %p503
      %s505 = ssub.s32 %s34, %s46
      %p506 = scmp.eq.s32.totalorder %s505, 0
      %s508 = sadd.s32 %s507, 1
      %s509 = scalar_select %p506, %s507, %s508
      %p512 = pneg %p506
      %p513 = scmp.eq.s32.totalorder %s27, 1
      %p514 = por %p512, %p513
      %p515 = scmp.ne.s32.totalorder %s507, %s510
      %p516 = scmp.eq.s32.totalorder %s27, 0
      %p517 = por %p515, %p516
      %p518 = scmp.ne.s32.totalorder %s507, %s510
      %p519 = scmp.eq.s32.totalorder %s32, 1
      %p520 = por %p518, %p519
      %p521 = scmp.ne.s32.totalorder %s510, %s511
      %p522 = scmp.eq.s32.totalorder %s32, 0
      %p523 = por %p521, %p522
      %p524 = scmp.ne.s32.totalorder %s510, %s511
      %p525 = scmp.eq.s32.totalorder %s33, 1
      %p526 = por %p524, %p525
      %p528 = scmp.ne.s32.totalorder %s511, %s527
      %p529 = scmp.eq.s32.totalorder %s33, 0
      %p530 = por %p528, %p529
      %p531 = scmp.le.s32.totalorder 1, %s27
      %p532 = scmp.lt.s32.totalorder %s27, 3
      %p533 = pnand %p531, %p532
      %p534 = pneg %p533
      // Predicated region
      $region9: #{tpu_custom_call.1} parent=5 // pred_check
        _
      $region10: #{tpu_custom_call.1} parent=5 // pred_check_branch
        %536 = sbr.rel (%p533) target = $region12
      $region11: #{tpu_custom_call.1} parent=5 // pred_region
        %s537 = ssub.s32 %s27, 1
        // Predicated region
        $region13: #{tpu_custom_call.1} parent=11 // pred_check
          %p538 = pneg %p65
        $region14: #{tpu_custom_call.1} parent=11 // pred_check_branch
          %540 = sbr.rel (%p538) target = $region16
        $region15: #{tpu_custom_call.1} parent=11 // pred_region
          %s541 = smul.u32 2, %s36
          %s543 = ssub.s32 256, 256
          %544 = vsyncadd [#allocation4], %s543
          %s545 = smul.addr %s541, 128
          %s546 = scalar_lea.hbm %s0, %s545
          %s547 = sshll.u32 [#allocation3], 4
          %s548 = int_to_ptr.vmem [resolvable:$true] %s547
          %553 = dma.hbm_to_vmem [thread:$0]  %s546, 256, %s548, [#allocation4], 128, 128, 8
        $region16: #{tpu_custom_call.1} parent=11 // pred_fallthru
          _
        // Predicated region
        $region17: #{tpu_custom_call.1} parent=11 // pred_check
          %p554 = pneg %p91
        $region18: #{tpu_custom_call.1} parent=11 // pred_check_branch
          %556 = sbr.rel (%p554) target = $region20
        $region19: #{tpu_custom_call.1} parent=11 // pred_region
          %s557 = smul.u32 2, %s36
          %s559 = ssub.s32 512, 512
          %560 = vsyncadd [#allocation7], %s559
          %s561 = smul.addr %s557, 2
          %s562 = smul.addr %s561, 128
          %s563 = scalar_lea.hbm %s1, %s562
          %s564 = sshll.u32 [#allocation6], 4
          %s565 = int_to_ptr.vmem [resolvable:$true] %s564
          %570 = dma.hbm_to_vmem [thread:$0]  %s563, 512, %s565, [#allocation7], 128, 128, 8
        $region20: #{tpu_custom_call.1} parent=11 // pred_fallthru
          _
        // Predicated region
        $region21: #{tpu_custom_call.1} parent=11 // pred_check
          %p571 = pneg %p476
        $region22: #{tpu_custom_call.1} parent=11 // pred_check_branch
          %573 = sbr.rel (%p571) target = $region24
        $region23: #{tpu_custom_call.1} parent=11 // pred_region
          _
        $region24: #{tpu_custom_call.1} parent=11 // pred_fallthru
          _
        // Predicated region
        $region25: #{tpu_custom_call.1} parent=11 // pred_check
          %p574 = pneg %p497
        $region26: #{tpu_custom_call.1} parent=11 // pred_check_branch
          %576 = sbr.rel (%p574) target = $region28
        $region27: #{tpu_custom_call.1} parent=11 // pred_region
          _
        $region28: #{tpu_custom_call.1} parent=11 // pred_fallthru
          _
      $region12: #{tpu_custom_call.1} parent=5 // pred_fallthru
        _
      %p577 = scmp.lt.s32.totalorder %s27, 2
      // Predicated region
      $region29: #{tpu_custom_call.1} parent=5 // pred_check
        %p578 = pneg %p577
      $region30: #{tpu_custom_call.1} parent=5 // pred_check_branch
        %580 = sbr.rel (%p578) target = $region32
      $region31: #{tpu_custom_call.1} parent=5 // pred_region
        // Predicated region
        $region33: #{tpu_custom_call.1} parent=31 // pred_check
          %p581 = pneg %p111
        $region34: #{tpu_custom_call.1} parent=31 // pred_check_branch
          %583 = sbr.rel (%p581) target = $region36
        $region35: #{tpu_custom_call.1} parent=31 // pred_region
          %p584 = scmp.lt.s32.totalorder %s35, 1
          %s585 = scalar_select %p584, %s35, 1
          %s586 = smul.addr %s585, 12
          %s587 = smul.addr %s586, 8
          %s588 = scalar_lea.vmem %s2, %s587
        $region36: #{tpu_custom_call.1} parent=31 // pred_fallthru
          _
        // Predicated region
        $region37: #{tpu_custom_call.1} parent=31 // pred_check
          %p589 = pneg %p137
        $region38: #{tpu_custom_call.1} parent=31 // pred_check_branch
          %591 = sbr.rel (%p589) target = $region40
        $region39: #{tpu_custom_call.1} parent=31 // pred_region
          %p592 = scmp.lt.s32.totalorder %s35, 1
          %s593 = scalar_select %p592, %s35, 1
          %s594 = smul.addr %s593, 3
          %s595 = scalar_lea.vmem %s3, %s594
        $region40: #{tpu_custom_call.1} parent=31 // pred_fallthru
          _
        // Predicated region
        $region41: #{tpu_custom_call.1} parent=31 // pred_check
          %p596 = pneg %p163
        $region42: #{tpu_custom_call.1} parent=31 // pred_check_branch
          %598 = sbr.rel (%p596) target = $region44
        $region43: #{tpu_custom_call.1} parent=31 // pred_region
          %s599 = sand.u32 %s27, 1
          %s600 = scalar_lea.sflag [#allocation4], %s599
          %s601 = sand.u32 %s153, 1
          %s602 = smul.addr %s601, 32
          %s603 = scalar_lea.vmem [#allocation8], %s602
          %s605 = ssub.s32 512, 512
          %606 = vsyncadd %s600, %s605
          %s607 = smul.addr %s35, 4
          %s608 = smul.addr %s607, 128
          %s609 = scalar_lea.hbm %s4, %s608
          %s610 = sshll.u32 %s603, 4
          %s611 = int_to_ptr.vmem [resolvable:$true] %s610
          %616 = dma.hbm_to_vmem [thread:$0]  %s609, 512, %s611, %s600, 128, 128, 8
        $region44: #{tpu_custom_call.1} parent=31 // pred_fallthru
          _
        // Predicated region
        $region45: #{tpu_custom_call.1} parent=31 // pred_check
          %p617 = pneg %p189
        $region46: #{tpu_custom_call.1} parent=31 // pred_check_branch
          %619 = sbr.rel (%p617) target = $region48
        $region47: #{tpu_custom_call.1} parent=31 // pred_region
          %s620 = sand.u32 %s27, 1
          %s621 = scalar_lea.sflag [#allocation4], %s620
          %s622 = sand.u32 %s179, 1
          %s623 = scalar_lea.vmem [#allocation9], %s622
          %s625 = ssub.s32 16, 16
          %626 = vsyncadd %s621, %s625
          %s627 = smul.addr %s35, 16
          %s628 = scalar_lea.hbm %s5, %s627
          %s630 = sshll.u32 %s623, 4
          %s631 = int_to_ptr.vmem [resolvable:$true] %s630
          %633 = dma.hbm_to_vmem [thread:$0]  %s628, 16, %s631, %s621
        $region48: #{tpu_custom_call.1} parent=31 // pred_fallthru
          _
        // Predicated region
        $region49: #{tpu_custom_call.1} parent=31 // pred_check
          %p634 = pneg %p215
        $region50: #{tpu_custom_call.1} parent=31 // pred_check_branch
          %636 = sbr.rel (%p634) target = $region52
        $region51: #{tpu_custom_call.1} parent=31 // pred_region
          %s637 = sand.u32 %s27, 1
          %s638 = scalar_lea.sflag [#allocation4], %s637
          %s639 = sand.u32 %s205, 1
          %s640 = smul.addr %s639, 96
          %s641 = scalar_lea.vmem [#allocation10], %s640
          %s643 = ssub.s32 1536, 1536
          %644 = vsyncadd %s638, %s643
          %s645 = smul.addr %s35, 12
          %s646 = smul.addr %s645, 128
          %s647 = scalar_lea.hbm %s6, %s646
          %s648 = sshll.u32 %s641, 4
          %s649 = int_to_ptr.vmem [resolvable:$true] %s648
          %654 = dma.hbm_to_vmem [thread:$0]  %s647, 1536, %s649, %s638, 128, 128, 8
        $region52: #{tpu_custom_call.1} parent=31 // pred_fallthru
          _
        // Predicated region
        $region53: #{tpu_custom_call.1} parent=31 // pred_check
          %p655 = pneg %p241
        $region54: #{tpu_custom_call.1} parent=31 // pred_check_branch
          %657 = sbr.rel (%p655) target = $region56
        $region55: #{tpu_custom_call.1} parent=31 // pred_region
          %s658 = sand.u32 %s27, 1
          %s659 = scalar_lea.sflag [#allocation4], %s658
          %s660 = sand.u32 %s231, 1
          %s661 = smul.addr %s660, 3
          %s662 = scalar_lea.vmem [#allocation11], %s661
          %s664 = ssub.s32 48, 48
          %665 = vsyncadd %s659, %s664
          %s666 = smul.addr %s35, 3
          %s667 = smul.addr %s666, 16
          %s668 = scalar_lea.hbm %s7, %s667
          %s669 = sshll.u32 %s662, 4
          %s670 = int_to_ptr.vmem [resolvable:$true] %s669
          %675 = dma.hbm_to_vmem [thread:$0]  %s668, 48, %s670, %s659, 16, 16, 1
        $region56: #{tpu_custom_call.1} parent=31 // pred_fallthru
          _
        // Predicated region
        $region57: #{tpu_custom_call.1} parent=31 // pred_check
          %p676 = pneg %p267
        $region58: #{tpu_custom_call.1} parent=31 // pred_check_branch
          %678 = sbr.rel (%p676) target = $region60
        $region59: #{tpu_custom_call.1} parent=31 // pred_region
          %s679 = sand.u32 %s27, 1
          %s680 = scalar_lea.sflag [#allocation4], %s679
          %s681 = sand.u32 %s257, 1
          %s682 = smul.addr %s681, 32
          %s683 = scalar_lea.vmem [#allocation12], %s682
          %s685 = ssub.s32 512, 512
          %686 = vsyncadd %s680, %s685
          %s687 = smul.addr %s35, 4
          %s688 = smul.addr %s687, 128
          %s689 = scalar_lea.hbm %s8, %s688
          %s690 = sshll.u32 %s683, 4
          %s691 = int_to_ptr.vmem [resolvable:$true] %s690
          %696 = dma.hbm_to_vmem [thread:$0]  %s689, 512, %s691, %s680, 128, 128, 8
        $region60: #{tpu_custom_call.1} parent=31 // pred_fallthru
          _
        // Predicated region
        $region61: #{tpu_custom_call.1} parent=31 // pred_check
          %p697 = pneg %p293
        $region62: #{tpu_custom_call.1} parent=31 // pred_check_branch
          %699 = sbr.rel (%p697) target = $region64
        $region63: #{tpu_custom_call.1} parent=31 // pred_region
          %s700 = sand.u32 %s27, 1
          %s701 = scalar_lea.sflag [#allocation4], %s700
          %s702 = sand.u32 %s283, 1
          %s703 = scalar_lea.vmem [#allocation13], %s702
          %s705 = ssub.s32 16, 16
          %706 = vsyncadd %s701, %s705
          %s707 = smul.addr %s35, 16
          %s708 = scalar_lea.hbm %s9, %s707
          %s710 = sshll.u32 %s703, 4
          %s711 = int_to_ptr.vmem [resolvable:$true] %s710
          %713 = dma.hbm_to_vmem [thread:$0]  %s708, 16, %s711, %s701
        $region64: #{tpu_custom_call.1} parent=31 // pred_fallthru
          _
        // Predicated region
        $region65: #{tpu_custom_call.1} parent=31 // pred_check
          %p714 = pneg %p319
        $region66: #{tpu_custom_call.1} parent=31 // pred_check_branch
          %716 = sbr.rel (%p714) target = $region68
        $region67: #{tpu_custom_call.1} parent=31 // pred_region
          %s717 = sand.u32 %s27, 1
          %s718 = scalar_lea.sflag [#allocation4], %s717
          %s719 = sand.u32 %s309, 1
          %s720 = smul.addr %s719, 32
          %s721 = scalar_lea.vmem [#allocation14], %s720
          %s723 = ssub.s32 512, 512
          %724 = vsyncadd %s718, %s723
          %s725 = smul.addr %s35, 4
          %s726 = smul.addr %s725, 128
          %s727 = scalar_lea.hbm %s10, %s726
          %s728 = sshll.u32 %s721, 4
          %s729 = int_to_ptr.vmem [resolvable:$true] %s728
          %734 = dma.hbm_to_vmem [thread:$0]  %s727, 512, %s729, %s718, 128, 128, 8
        $region68: #{tpu_custom_call.1} parent=31 // pred_fallthru
          _
        // Predicated region
        $region69: #{tpu_custom_call.1} parent=31 // pred_check
          %p735 = pneg %p345
        $region70: #{tpu_custom_call.1} parent=31 // pred_check_branch
          %737 = sbr.rel (%p735) target = $region72
        $region71: #{tpu_custom_call.1} parent=31 // pred_region
          %s738 = sand.u32 %s27, 1
          %s739 = scalar_lea.sflag [#allocation4], %s738
          %s740 = sand.u32 %s335, 1
          %s741 = scalar_lea.vmem [#allocation15], %s740
          %s743 = ssub.s32 16, 16
          %744 = vsyncadd %s739, %s743
          %s745 = smul.addr %s35, 16
          %s746 = scalar_lea.hbm %s11, %s745
          %s748 = sshll.u32 %s741, 4
          %s749 = int_to_ptr.vmem [resolvable:$true] %s748
          %751 = dma.hbm_to_vmem [thread:$0]  %s746, 16, %s749, %s739
        $region72: #{tpu_custom_call.1} parent=31 // pred_fallthru
          _
        // Predicated region
        $region73: #{tpu_custom_call.1} parent=31 // pred_check
          %p752 = pneg %p371
        $region74: #{tpu_custom_call.1} parent=31 // pred_check_branch
          %754 = sbr.rel (%p752) target = $region76
        $region75: #{tpu_custom_call.1} parent=31 // pred_region
          %p755 = scmp.lt.s32.totalorder %s35, 1
          %s756 = scalar_select %p755, %s35, 1
          %s757 = smul.addr %s756, 8
          %s758 = smul.addr %s757, 8
          %s759 = scalar_lea.vmem %s12, %s758
        $region76: #{tpu_custom_call.1} parent=31 // pred_fallthru
          _
        // Predicated region
        $region77: #{tpu_custom_call.1} parent=31 // pred_check
          %p760 = pneg %p397
        $region78: #{tpu_custom_call.1} parent=31 // pred_check_branch
          %762 = sbr.rel (%p760) target = $region80
        $region79: #{tpu_custom_call.1} parent=31 // pred_region
          %s763 = sand.u32 %s27, 1
          %s764 = scalar_lea.sflag [#allocation4], %s763
          %s765 = sand.u32 %s387, 1
          %s766 = scalar_lea.vmem [#allocation16], %s765
          %s768 = ssub.s32 16, 16
          %769 = vsyncadd %s764, %s768
          %s770 = smul.addr %s35, 16
          %s771 = scalar_lea.hbm %s13, %s770
          %s773 = sshll.u32 %s766, 4
          %s774 = int_to_ptr.vmem [resolvable:$true] %s773
          %776 = dma.hbm_to_vmem [thread:$0]  %s771, 16, %s774, %s764
        $region80: #{tpu_custom_call.1} parent=31 // pred_fallthru
          _
        // Predicated region
        $region81: #{tpu_custom_call.1} parent=31 // pred_check
          %p777 = pneg %p423
        $region82: #{tpu_custom_call.1} parent=31 // pred_check_branch
          %779 = sbr.rel (%p777) target = $region84
        $region83: #{tpu_custom_call.1} parent=31 // pred_region
          %p780 = scmp.lt.s32.totalorder %s35, 1
          %s781 = scalar_select %p780, %s35, 1
          %s782 = smul.addr %s781, 4
          %s783 = scalar_lea.vmem %s14, %s782
        $region84: #{tpu_custom_call.1} parent=31 // pred_fallthru
          _
        // Predicated region
        $region85: #{tpu_custom_call.1} parent=31 // pred_check
          %p784 = pneg %p449
        $region86: #{tpu_custom_call.1} parent=31 // pred_check_branch
          %786 = sbr.rel (%p784) target = $region88
        $region87: #{tpu_custom_call.1} parent=31 // pred_region
          %p787 = scmp.lt.s32.totalorder %s35, 1
          %s788 = scalar_select %p787, %s35, 1
          %s789 = smul.addr %s788, 4
          %s790 = scalar_lea.vmem %s15, %s789
        $region88: #{tpu_custom_call.1} parent=31 // pred_fallthru
          _
      $region32: #{tpu_custom_call.1} parent=5 // pred_fallthru
        _
      %p791 = scmp.le.s32.totalorder 1, %s27
      %p792 = scmp.lt.s32.totalorder %s27, 3
      %p793 = pnand %p791, %p792
      %p794 = pneg %p793
      // Predicated region
      $region89: #{tpu_custom_call.1} parent=5 // pred_check
        _
      $region90: #{tpu_custom_call.1} parent=5 // pred_check_branch
        %796 = sbr.rel (%p793) target = $region92
      $region91: #{tpu_custom_call.1} parent=5 // pred_region
        %s797 = ssub.s32 %s27, 1
        // Predicated region
        $region93: #{tpu_custom_call.1} parent=91 // pred_check
          %p798 = pneg %p65
        $region94: #{tpu_custom_call.1} parent=91 // pred_check_branch
          %800 = sbr.rel (%p798) target = $region96
        $region95: #{tpu_custom_call.1} parent=91 // pred_region
          %801 = dma.done [#allocation4], 256
        $region96: #{tpu_custom_call.1} parent=91 // pred_fallthru
          _
        // Predicated region
        $region97: #{tpu_custom_call.1} parent=91 // pred_check
          %p802 = pneg %p91
        $region98: #{tpu_custom_call.1} parent=91 // pred_check_branch
          %804 = sbr.rel (%p802) target = $region100
        $region99: #{tpu_custom_call.1} parent=91 // pred_region
          %805 = dma.done [#allocation7], 512
        $region100: #{tpu_custom_call.1} parent=91 // pred_fallthru
          _
        %s806 = sand.u32 %s32, 1
        %s807 = scalar_lea.sflag [#allocation4], %s806
        %s808 = sand.u32 %s156, 1
        %s809 = smul.addr %s808, 32
        %s810 = scalar_lea.vmem [#allocation8], %s809
        // Predicated region
        $region101: #{tpu_custom_call.1} parent=91 // pred_check
          %p811 = pneg %p169
        $region102: #{tpu_custom_call.1} parent=91 // pred_check_branch
          %813 = sbr.rel (%p811) target = $region104
        $region103: #{tpu_custom_call.1} parent=91 // pred_region
          %814 = dma.done %s807, 512
        $region104: #{tpu_custom_call.1} parent=91 // pred_fallthru
          _
        %s815 = sand.u32 %s32, 1
        %s816 = scalar_lea.sflag [#allocation4], %s815
        %s817 = sand.u32 %s182, 1
        %s818 = scalar_lea.vmem [#allocation9], %s817
        // Predicated region
        $region105: #{tpu_custom_call.1} parent=91 // pred_check
          %p819 = pneg %p195
        $region106: #{tpu_custom_call.1} parent=91 // pred_check_branch
          %821 = sbr.rel (%p819) target = $region108
        $region107: #{tpu_custom_call.1} parent=91 // pred_region
          %822 = dma.done %s816, 16
        $region108: #{tpu_custom_call.1} parent=91 // pred_fallthru
          _
        %s823 = sand.u32 %s32, 1
        %s824 = scalar_lea.sflag [#allocation4], %s823
        %s825 = sand.u32 %s208, 1
        %s826 = smul.addr %s825, 96
        %s827 = scalar_lea.vmem [#allocation10], %s826
        // Predicated region
        $region109: #{tpu_custom_call.1} parent=91 // pred_check
          %p828 = pneg %p221
        $region110: #{tpu_custom_call.1} parent=91 // pred_check_branch
          %830 = sbr.rel (%p828) target = $region112
        $region111: #{tpu_custom_call.1} parent=91 // pred_region
          %831 = dma.done %s824, 1536
        $region112: #{tpu_custom_call.1} parent=91 // pred_fallthru
          _
        %s832 = sand.u32 %s32, 1
        %s833 = scalar_lea.sflag [#allocation4], %s832
        %s834 = sand.u32 %s234, 1
        %s835 = smul.addr %s834, 3
        %s836 = scalar_lea.vmem [#allocation11], %s835
        // Predicated region
        $region113: #{tpu_custom_call.1} parent=91 // pred_check
          %p837 = pneg %p247
        $region114: #{tpu_custom_call.1} parent=91 // pred_check_branch
          %839 = sbr.rel (%p837) target = $region116
        $region115: #{tpu_custom_call.1} parent=91 // pred_region
          %840 = dma.done %s833, 48
        $region116: #{tpu_custom_call.1} parent=91 // pred_fallthru
          _
        %s841 = sand.u32 %s32, 1
        %s842 = scalar_lea.sflag [#allocation4], %s841
        %s843 = sand.u32 %s260, 1
        %s844 = smul.addr %s843, 32
        %s845 = scalar_lea.vmem [#allocation12], %s844
        // Predicated region
        $region117: #{tpu_custom_call.1} parent=91 // pred_check
          %p846 = pneg %p273
        $region118: #{tpu_custom_call.1} parent=91 // pred_check_branch
          %848 = sbr.rel (%p846) target = $region120
        $region119: #{tpu_custom_call.1} parent=91 // pred_region
          %849 = dma.done %s842, 512
        $region120: #{tpu_custom_call.1} parent=91 // pred_fallthru
          _
        %s850 = sand.u32 %s32, 1
        %s851 = scalar_lea.sflag [#allocation4], %s850
        %s852 = sand.u32 %s286, 1
        %s853 = scalar_lea.vmem [#allocation13], %s852
        // Predicated region
        $region121: #{tpu_custom_call.1} parent=91 // pred_check
          %p854 = pneg %p299
        $region122: #{tpu_custom_call.1} parent=91 // pred_check_branch
          %856 = sbr.rel (%p854) target = $region124
        $region123: #{tpu_custom_call.1} parent=91 // pred_region
          %857 = dma.done %s851, 16
        $region124: #{tpu_custom_call.1} parent=91 // pred_fallthru
          _
        %s858 = sand.u32 %s32, 1
        %s859 = scalar_lea.sflag [#allocation4], %s858
        %s860 = sand.u32 %s312, 1
        %s861 = smul.addr %s860, 32
        %s862 = scalar_lea.vmem [#allocation14], %s861
        // Predicated region
        $region125: #{tpu_custom_call.1} parent=91 // pred_check
          %p863 = pneg %p325
        $region126: #{tpu_custom_call.1} parent=91 // pred_check_branch
          %865 = sbr.rel (%p863) target = $region128
        $region127: #{tpu_custom_call.1} parent=91 // pred_region
          %866 = dma.done %s859, 512
        $region128: #{tpu_custom_call.1} parent=91 // pred_fallthru
          _
        %s867 = sand.u32 %s32, 1
        %s868 = scalar_lea.sflag [#allocation4], %s867
        %s869 = sand.u32 %s338, 1
        %s870 = scalar_lea.vmem [#allocation15], %s869
        // Predicated region
        $region129: #{tpu_custom_call.1} parent=91 // pred_check
          %p871 = pneg %p351
        $region130: #{tpu_custom_call.1} parent=91 // pred_check_branch
          %873 = sbr.rel (%p871) target = $region132
        $region131: #{tpu_custom_call.1} parent=91 // pred_region
          %874 = dma.done %s868, 16
        $region132: #{tpu_custom_call.1} parent=91 // pred_fallthru
          _
        %s875 = sand.u32 %s32, 1
        %s876 = scalar_lea.sflag [#allocation4], %s875
        %s877 = sand.u32 %s390, 1
        %s878 = scalar_lea.vmem [#allocation16], %s877
        // Predicated region
        $region133: #{tpu_custom_call.1} parent=91 // pred_check
          %p879 = pneg %p403
        $region134: #{tpu_custom_call.1} parent=91 // pred_check_branch
          %881 = sbr.rel (%p879) target = $region136
        $region135: #{tpu_custom_call.1} parent=91 // pred_region
          %882 = dma.done %s876, 16
        $region136: #{tpu_custom_call.1} parent=91 // pred_fallthru
          _
        %p883 = pneg %p65
        %p884 = pneg %p62
        %p885 = pneg %p91
        %p886 = pneg %p88
        %p887 = scmp.lt.s32.totalorder %s37, 1
        %s888 = scalar_select %p887, %s37, 1
        %s889 = smul.addr %s888, 12
        %s890 = smul.addr %s889, 8
        %s891 = scalar_lea.vmem %s2, %s890
        %p892 = pneg %p117
        %p893 = pneg %p114
        %p894 = scmp.lt.s32.totalorder %s37, 1
        %s895 = scalar_select %p894, %s37, 1
        %s896 = smul.addr %s895, 3
        %s897 = scalar_lea.vmem %s3, %s896
        %p898 = pneg %p143
        %p899 = pneg %p140
        %s900 = sand.u32 %s32, 1
        %s901 = scalar_lea.sflag [#allocation4], %s900
        %s902 = sand.u32 %s156, 1
        %s903 = smul.addr %s902, 32
        %s904 = scalar_lea.vmem [#allocation8], %s903
        %p905 = pneg %p169
        %p906 = pneg %p166
        %s907 = sand.u32 %s32, 1
        %s908 = scalar_lea.sflag [#allocation4], %s907
        %s909 = sand.u32 %s182, 1
        %s910 = scalar_lea.vmem [#allocation9], %s909
        %p911 = pneg %p195
        %p912 = pneg %p192
        %s913 = sand.u32 %s32, 1
        %s914 = scalar_lea.sflag [#allocation4], %s913
        %s915 = sand.u32 %s208, 1
        %s916 = smul.addr %s915, 96
        %s917 = scalar_lea.vmem [#allocation10], %s916
        %p918 = pneg %p221
        %p919 = pneg %p218
        %s920 = sand.u32 %s32, 1
        %s921 = scalar_lea.sflag [#allocation4], %s920
        %s922 = sand.u32 %s234, 1
        %s923 = smul.addr %s922, 3
        %s924 = scalar_lea.vmem [#allocation11], %s923
        %p925 = pneg %p247
        %p926 = pneg %p244
        %s927 = sand.u32 %s32, 1
        %s928 = scalar_lea.sflag [#allocation4], %s927
        %s929 = sand.u32 %s260, 1
        %s930 = smul.addr %s929, 32
        %s931 = scalar_lea.vmem [#allocation12], %s930
        %p932 = pneg %p273
        %p933 = pneg %p270
        %s934 = sand.u32 %s32, 1
        %s935 = scalar_lea.sflag [#allocation4], %s934
        %s936 = sand.u32 %s286, 1
        %s937 = scalar_lea.vmem [#allocation13], %s936
        %p938 = pneg %p299
        %p939 = pneg %p296
        %s940 = sand.u32 %s32, 1
        %s941 = scalar_lea.sflag [#allocation4], %s940
        %s942 = sand.u32 %s312, 1
        %s943 = smul.addr %s942, 32
        %s944 = scalar_lea.vmem [#allocation14], %s943
        %p945 = pneg %p325
        %p946 = pneg %p322
        %s947 = sand.u32 %s32, 1
        %s948 = scalar_lea.sflag [#allocation4], %s947
        %s949 = sand.u32 %s338, 1
        %s950 = scalar_lea.vmem [#allocation15], %s949
        %p951 = pneg %p351
        %p952 = pneg %p348
        %p953 = scmp.lt.s32.totalorder %s37, 1
        %s954 = scalar_select %p953, %s37, 1
        %s955 = smul.addr %s954, 8
        %s956 = smul.addr %s955, 8
        %s957 = scalar_lea.vmem %s12, %s956
        %p958 = pneg %p377
        %p959 = pneg %p374
        %s960 = sand.u32 %s32, 1
        %s961 = scalar_lea.sflag [#allocation4], %s960
        %s962 = sand.u32 %s390, 1
        %s963 = scalar_lea.vmem [#allocation16], %s962
        %p964 = pneg %p403
        %p965 = pneg %p400
        %p966 = scmp.lt.s32.totalorder %s37, 1
        %s967 = scalar_select %p966, %s37, 1
        %s968 = smul.addr %s967, 4
        %s969 = scalar_lea.vmem %s14, %s968
        %p970 = pneg %p429
        %p971 = pneg %p426
        %p972 = scmp.lt.s32.totalorder %s37, 1
        %s973 = scalar_select %p972, %s37, 1
        %s974 = smul.addr %s973, 4
        %s975 = scalar_lea.vmem %s15, %s974
        %p976 = pneg %p455
        %p977 = pneg %p452
        %p978 = pneg %p476
        %p979 = pneg %p473
        %p980 = pneg %p497
        %p981 = pneg %p494
        %p982 = pneg %p523
        %p983 = pneg %p520
        %s984 = smul.u32 2, %s36
        %s985 = smul.u32 2, %s36
        %p986 = scmp.lt.s32.totalorder %s37, 1
        %s987 = scalar_select %p986, %s37, 1
        %s988 = smul.addr %s987, 12
        %s989 = smul.addr %s988, 8
        %s990 = scalar_lea.vmem %s2, %s989
        %p991 = scmp.lt.s32.totalorder %s37, 1
        %s992 = scalar_select %p991, %s37, 1
        %s993 = smul.addr %s992, 3
        %s994 = scalar_lea.vmem %s3, %s993
        %p995 = scmp.lt.s32.totalorder %s37, 1
        %s996 = scalar_select %p995, %s37, 1
        %s997 = smul.addr %s996, 8
        %s998 = smul.addr %s997, 8
        %s999 = scalar_lea.vmem %s12, %s998
        %p1000 = scmp.lt.s32.totalorder %s37, 1
        %s1001 = scalar_select %p1000, %s37, 1
        %s1002 = smul.addr %s1001, 4
        %s1003 = scalar_lea.vmem %s14, %s1002
        %p1004 = scmp.lt.s32.totalorder %s37, 1
        %s1005 = scalar_select %p1004, %s37, 1
        %s1006 = smul.addr %s1005, 4
        %s1007 = scalar_lea.vmem %s15, %s1006
        %s1008 = smul.u32 2, %s36
        %p1009 = scmp.eq.s32.totalorder %s37, 0
        // Predicated region
        $region137: #{tpu_custom_call.1} parent=91 // pred_check
          %p1010 = pneg %p1009
        $region138: #{tpu_custom_call.1} parent=91 // pred_check_branch
          %1012 = sbr.rel (%p1010) target = $region140
        $region139: #{tpu_custom_call.1} parent=91 // pred_region
          %v1013 = vld [vmem:[#allocation3] sm:$0xff]
          %v1014 = vld [vmem:[#allocation3 + $0x8] sm:$0xff]
          %vm1015 = vcmask 261120
          %1016 = vst.msk [vmem:[#allocation2] sm:$0xff] %vm1015, %v1013
          %1017 = vst.msk [vmem:[#allocation2 + $0x8] sm:$0xff] %vm1015, %v1014
        $region140: #{tpu_custom_call.1} parent=91 // pred_fallthru
          _
        %v1018 = vld [vmem:[#allocation2] sm:$0xff]
        %v1019 = vld [vmem:[#allocation2 + $0x8] sm:$0xff]
        %v1020 = vld [vmem:[#allocation6] sm:$0xff]
        %v1021 = vld [vmem:[#allocation6 + $0x8] sm:$0xff]
        %v1022 = vld [vmem:[#allocation6 + $0x10] sm:$0xff]
        %v1023 = vld [vmem:[#allocation6 + $0x18] sm:$0xff]
        %v1024 = vld [vmem:[%s1003] sm:$0x7]
        %v1025 = vld [vmem:[%s1007] sm:$0x7]
        %v1026 = vld [vmem:[%s990] sm:$0xff]
        %v1027 = vld [vmem:[%s990 + $0x8] sm:$0xff]
        %v1028 = vld [vmem:[%s990 + $0x10] sm:$0xff]
        %v1029 = vld [vmem:[%s990 + $0x18] sm:$0xff]
        %v1030 = vld [vmem:[%s994] sm:$0x1]
        %v1032 = vlaneseq
        %v1033 = vshrl.u32 %v1032, 7
        %v1034 = vsub.s32 0, %v1033
        %v1035 = vrot.slane %v1030, %v1034
        %vm1037 = vcmask 261120
        %v1039 = vsel %vm1037, %v1018, 0
        %v1042 = vsel %vm1037, %v1019, 0
        %1044 = vmatprep.subr.mxu0 0.0
        %1045 = vmatpush1.msra.mxu0 %v1026
        %1046 = vmatprep.subr.mxu0 0.0
        %1047 = vmatpush1.msra.mxu0 %v1027
        %1048 = vmatprep.subr.mxu0 0.0
        %1049 = vmatpush1.msra.mxu0 %v1028
        %1050 = vmatprep.subr.mxu0 0.0
        %1051 = vmatpush1.msra.mxu0 %v1029
        %1052 = vmatprep.subr.mxu0 0.0
        %1053 = vmatpush1.msra.mxu0 0.0
        %1054 = vmatprep.subr.mxu0 0.0
        %1055 = vmatpush1.msra.mxu0 0.0
        %1056 = vmatprep.subr.mxu0 0.0
        %1057 = vmatpush1.msra.mxu0 0.0
        %1058 = vmatprep.subr.mxu0 0.0
        %1059 = vmatpush1.msra.mxu0 0.0
        %1060 = vmatprep.subr.mxu0 0.0
        %1061 = vmatpush1.msra.mxu0 0.0
        %1062 = vmatprep.subr.mxu0 0.0
        %1063 = vmatpush1.msra.mxu0 0.0
        %1064 = vmatprep.subr.mxu0 0.0
        %1065 = vmatpush1.msra.mxu0 0.0
        %1066 = vmatprep.subr.mxu0 0.0
        %1067 = vmatpush1.msra.mxu0 0.0
        %1068 = vmatprep.subr.mxu0 0.0
        %1069 = vmatpush1.msra.mxu0 0.0
        %1070 = vmatprep.subr.mxu0 0.0
        %1071 = vmatpush1.msra.mxu0 0.0
        %1072 = vmatprep.subr.mxu0 0.0
        %1073 = vmatpush1.msra.mxu0 0.0
        %1074 = vmatprep.subr.mxu0 0.0
        %1075 = vmatpush1.msra.mxu0 0.0
        %1076 = vmatprep.subr.mxu0 0.0
        %1077 = vmatpush1.msra.mxu0 0.0
        %1078 = vmatprep.subr.mxu0 0.0
        %1079 = vmatpush1.msra.mxu0 0.0
        %1080 = vmatprep.subr.mxu0 0.0
        %1081 = vmatpush1.msra.mxu0 0.0
        %1082 = vmatprep.subr.mxu0 0.0
        %1083 = vmatpush1.msra.mxu0 0.0
        %1084 = vmatprep.subr.mxu0 0.0
        %1085 = vmatpush1.msra.mxu0 0.0
        %1086 = vmatprep.subr.mxu0 0.0
        %1087 = vmatpush1.msra.mxu0 0.0
        %1088 = vmatprep.subr.mxu0 0.0
        %1089 = vmatpush1.msra.mxu0 0.0
        %1090 = vmatprep.subr.mxu0 0.0
        %1091 = vmatpush1.msra.mxu0 0.0
        %1092 = vmatprep.subr.mxu0 0.0
        %1093 = vmatpush1.msra.mxu0 0.0
        %1094 = vmatprep.subr.mxu0 0.0
        %1095 = vmatpush1.msra.mxu0 0.0
        %1096 = vmatprep.subr.mxu0 0.0
        %1097 = vmatpush1.msra.mxu0 0.0
        %1098 = vmatprep.subr.mxu0 0.0
        %1099 = vmatpush1.msra.mxu0 0.0
        %1100 = vmatprep.subr.mxu0 0.0
        %1101 = vmatpush1.msra.mxu0 0.0
        %1102 = vmatprep.subr.mxu0 0.0
        %1103 = vmatpush1.msra.mxu0 0.0
        %1104 = vmatprep.subr.mxu0 0.0
        %1105 = vmatpush1.msra.mxu0 0.0
        %1106 = vmatprep.subr.mxu0 0.0
        %1107 = vmatpush1.msra.mxu0 0.0
        %1108 = vmatprep.mubr.f32.mxu0 0.0
        %1109 = vmatmul.mubr.f32.gmra.mrb[0].mxu0 %v1039
        %v1110 = vpop.f32.mrb[0].mxu0
        %v1111 = vadd.f32 %v1035, %v1110
        %v1112 = vpop.f32.mrb[0].mxu0
        %1113 = vmatprep.mubr.f32.mxu0 0.0
        %1114 = vmatmul.mubr.f32.gmra.mrb[0].mxu0 %v1042
        %v1115 = vpop.f32.mrb[0].mxu0
        %v1116 = vadd.f32 %v1035, %v1115
        %v1117 = vpop.f32.mrb[0].mxu0
        %1118 = vdwg.mxu0
        %s1119 = scalar_lea.vmem %s990, 32
        %v1120 = vld [vmem:[%s1119] sm:$0xff]
        %v1121 = vld [vmem:[%s1119 + $0x8] sm:$0xff]
        %v1122 = vld [vmem:[%s1119 + $0x10] sm:$0xff]
        %v1123 = vld [vmem:[%s1119 + $0x18] sm:$0xff]
        %s1124 = scalar_lea.vmem %s994, 1
        %v1125 = vld [vmem:[%s1124] sm:$0x1]
        %v1127 = vlaneseq
        %v1128 = vshrl.u32 %v1127, 7
        %v1129 = vsub.s32 0, %v1128
        %v1130 = vrot.slane %v1125, %v1129
        %1132 = vmatprep.subr.mxu0 0.0
        %1133 = vmatpush1.msra.mxu0 %v1120
        %1134 = vmatprep.subr.mxu0 0.0
        %1135 = vmatpush1.msra.mxu0 %v1121
        %1136 = vmatprep.subr.mxu0 0.0
        %1137 = vmatpush1.msra.mxu0 %v1122
        %1138 = vmatprep.subr.mxu0 0.0
        %1139 = vmatpush1.msra.mxu0 %v1123
        %1140 = vmatprep.subr.mxu0 0.0
        %1141 = vmatpush1.msra.mxu0 0.0
        %1142 = vmatprep.subr.mxu0 0.0
        %1143 = vmatpush1.msra.mxu0 0.0
        %1144 = vmatprep.subr.mxu0 0.0
        %1145 = vmatpush1.msra.mxu0 0.0
        %1146 = vmatprep.subr.mxu0 0.0
        %1147 = vmatpush1.msra.mxu0 0.0
        %1148 = vmatprep.subr.mxu0 0.0
        %1149 = vmatpush1.msra.mxu0 0.0
        %1150 = vmatprep.subr.mxu0 0.0
        %1151 = vmatpush1.msra.mxu0 0.0
        %1152 = vmatprep.subr.mxu0 0.0
        %1153 = vmatpush1.msra.mxu0 0.0
        %1154 = vmatprep.subr.mxu0 0.0
        %1155 = vmatpush1.msra.mxu0 0.0
        %1156 = vmatprep.subr.mxu0 0.0
        %1157 = vmatpush1.msra.mxu0 0.0
        %1158 = vmatprep.subr.mxu0 0.0
        %1159 = vmatpush1.msra.mxu0 0.0
        %1160 = vmatprep.subr.mxu0 0.0
        %1161 = vmatpush1.msra.mxu0 0.0
        %1162 = vmatprep.subr.mxu0 0.0
        %1163 = vmatpush1.msra.mxu0 0.0
        %1164 = vmatprep.subr.mxu0 0.0
        %1165 = vmatpush1.msra.mxu0 0.0
        %1166 = vmatprep.subr.mxu0 0.0
        %1167 = vmatpush1.msra.mxu0 0.0
        %1168 = vmatprep.subr.mxu0 0.0
        %1169 = vmatpush1.msra.mxu0 0.0
        %1170 = vmatprep.subr.mxu0 0.0
        %1171 = vmatpush1.msra.mxu0 0.0
        %1172 = vmatprep.subr.mxu0 0.0
        %1173 = vmatpush1.msra.mxu0 0.0
        %1174 = vmatprep.subr.mxu0 0.0
        %1175 = vmatpush1.msra.mxu0 0.0
        %1176 = vmatprep.subr.mxu0 0.0
        %1177 = vmatpush1.msra.mxu0 0.0
        %1178 = vmatprep.subr.mxu0 0.0
        %1179 = vmatpush1.msra.mxu0 0.0
        %1180 = vmatprep.subr.mxu0 0.0
        %1181 = vmatpush1.msra.mxu0 0.0
        %1182 = vmatprep.subr.mxu0 0.0
        %1183 = vmatpush1.msra.mxu0 0.0
        %1184 = vmatprep.subr.mxu0 0.0
        %1185 = vmatpush1.msra.mxu0 0.0
        %1186 = vmatprep.subr.mxu0 0.0
        %1187 = vmatpush1.msra.mxu0 0.0
        %1188 = vmatprep.subr.mxu0 0.0
        %1189 = vmatpush1.msra.mxu0 0.0
        %1190 = vmatprep.subr.mxu0 0.0
        %1191 = vmatpush1.msra.mxu0 0.0
        %1192 = vmatprep.subr.mxu0 0.0
        %1193 = vmatpush1.msra.mxu0 0.0
        %1194 = vmatprep.subr.mxu0 0.0
        %1195 = vmatpush1.msra.mxu0 0.0
        %1196 = vmatprep.mubr.f32.mxu0 0.0
        %1197 = vmatmul.mubr.f32.gmra.mrb[0].mxu0 %v1039
        %v1198 = vpop.f32.mrb[0].mxu0
        %v1199 = vadd.f32 %v1130, %v1198
        %v1200 = vpop.f32.mrb[0].mxu0
        %1201 = vmatprep.mubr.f32.mxu0 0.0
        %1202 = vmatmul.mubr.f32.gmra.mrb[0].mxu0 %v1042
        %v1203 = vpop.f32.mrb[0].mxu0
        %v1204 = vadd.f32 %v1130, %v1203
        %v1205 = vpop.f32.mrb[0].mxu0
        %1206 = vdwg.mxu0
        %s1207 = scalar_lea.vmem %s990, 64
        %v1208 = vld [vmem:[%s1207] sm:$0xff]
        %v1209 = vld [vmem:[%s1207 + $0x8] sm:$0xff]
        %v1210 = vld [vmem:[%s1207 + $0x10] sm:$0xff]
        %v1211 = vld [vmem:[%s1207 + $0x18] sm:$0xff]
        %s1212 = scalar_lea.vmem %s994, 2
        %v1213 = vld [vmem:[%s1212] sm:$0x1]
        %v1215 = vlaneseq
        %v1216 = vshrl.u32 %v1215, 7
        %v1217 = vsub.s32 0, %v1216
        %v1218 = vrot.slane %v1213, %v1217
        %1220 = vmatprep.subr.mxu0 0.0
        %1221 = vmatpush1.msra.mxu0 %v1208
        %1222 = vmatprep.subr.mxu0 0.0
        %1223 = vmatpush1.msra.mxu0 %v1209
        %1224 = vmatprep.subr.mxu0 0.0
        %1225 = vmatpush1.msra.mxu0 %v1210
        %1226 = vmatprep.subr.mxu0 0.0
        %1227 = vmatpush1.msra.mxu0 %v1211
        %1228 = vmatprep.subr.mxu0 0.0
        %1229 = vmatpush1.msra.mxu0 0.0
        %1230 = vmatprep.subr.mxu0 0.0
        %1231 = vmatpush1.msra.mxu0 0.0
        %1232 = vmatprep.subr.mxu0 0.0
        %1233 = vmatpush1.msra.mxu0 0.0
        %1234 = vmatprep.subr.mxu0 0.0
        %1235 = vmatpush1.msra.mxu0 0.0
        %1236 = vmatprep.subr.mxu0 0.0
        %1237 = vmatpush1.msra.mxu0 0.0
        %1238 = vmatprep.subr.mxu0 0.0
        %1239 = vmatpush1.msra.mxu0 0.0
        %1240 = vmatprep.subr.mxu0 0.0
        %1241 = vmatpush1.msra.mxu0 0.0
        %1242 = vmatprep.subr.mxu0 0.0
        %1243 = vmatpush1.msra.mxu0 0.0
        %1244 = vmatprep.subr.mxu0 0.0
        %1245 = vmatpush1.msra.mxu0 0.0
        %1246 = vmatprep.subr.mxu0 0.0
        %1247 = vmatpush1.msra.mxu0 0.0
        %1248 = vmatprep.subr.mxu0 0.0
        %1249 = vmatpush1.msra.mxu0 0.0
        %1250 = vmatprep.subr.mxu0 0.0
        %1251 = vmatpush1.msra.mxu0 0.0
        %1252 = vmatprep.subr.mxu0 0.0
        %1253 = vmatpush1.msra.mxu0 0.0
        %1254 = vmatprep.subr.mxu0 0.0
        %1255 = vmatpush1.msra.mxu0 0.0
        %1256 = vmatprep.subr.mxu0 0.0
        %1257 = vmatpush1.msra.mxu0 0.0
        %1258 = vmatprep.subr.mxu0 0.0
        %1259 = vmatpush1.msra.mxu0 0.0
        %1260 = vmatprep.subr.mxu0 0.0
        %1261 = vmatpush1.msra.mxu0 0.0
        %1262 = vmatprep.subr.mxu0 0.0
        %1263 = vmatpush1.msra.mxu0 0.0
        %1264 = vmatprep.subr.mxu0 0.0
        %1265 = vmatpush1.msra.mxu0 0.0
        %1266 = vmatprep.subr.mxu0 0.0
        %1267 = vmatpush1.msra.mxu0 0.0
        %1268 = vmatprep.subr.mxu0 0.0
        %1269 = vmatpush1.msra.mxu0 0.0
        %1270 = vmatprep.subr.mxu0 0.0
        %1271 = vmatpush1.msra.mxu0 0.0
        %1272 = vmatprep.subr.mxu0 0.0
        %1273 = vmatpush1.msra.mxu0 0.0
        %1274 = vmatprep.subr.mxu0 0.0
        %1275 = vmatpush1.msra.mxu0 0.0
        %1276 = vmatprep.subr.mxu0 0.0
        %1277 = vmatpush1.msra.mxu0 0.0
        %1278 = vmatprep.subr.mxu0 0.0
        %1279 = vmatpush1.msra.mxu0 0.0
        %1280 = vmatprep.subr.mxu0 0.0
        %1281 = vmatpush1.msra.mxu0 0.0
        %1282 = vmatprep.subr.mxu0 0.0
        %1283 = vmatpush1.msra.mxu0 0.0
        %1284 = vmatprep.mubr.f32.mxu0 0.0
        %1285 = vmatmul.mubr.f32.gmra.mrb[0].mxu0 %v1039
        %v1286 = vpop.f32.mrb[0].mxu0
        %v1287 = vadd.f32 %v1218, %v1286
        %v1288 = vpop.f32.mrb[0].mxu0
        %1289 = vmatprep.mubr.f32.mxu0 0.0
        %1290 = vmatmul.mubr.f32.gmra.mrb[0].mxu0 %v1042
        %v1291 = vpop.f32.mrb[0].mxu0
        %v1292 = vadd.f32 %v1218, %v1291
        %v1293 = vpop.f32.mrb[0].mxu0
        %1294 = vdwg.mxu0
        %v1295 = vld [vmem:[%s810] sm:$0xff]
        %v1296 = vld [vmem:[%s810 + $0x8] sm:$0xff]
        %v1297 = vld [vmem:[%s810 + $0x10] sm:$0xff]
        %v1298 = vld [vmem:[%s810 + $0x18] sm:$0xff]
        %v1299 = vld [vmem:[%s818] sm:$0x1]
        %1301 = vrot.lane.b32.xlu0 %v1111, 120
        %v1302 = vpop.permute.xlu0 %1301
        %1304 = vrot.lane.b32.xlu0 %v1111, 112
        %v1305 = vpop.permute.xlu0 %1304
        %1307 = vrot.lane.b32.xlu0 %v1111, 104
        %v1308 = vpop.permute.xlu0 %1307
        %v1310 = vcombine.low %v1111, %v1305
        %v1311 = vcombine.high %v1111, %v1305
        %v1313 = vunpack.c.l.s4 1983009808
        %v1314 = vunpack.c.0.s8 %v1313
        %v1315 = vlaneseq
        %v1316 = vshrl.u32 %v1315, 7
        %v1317 = vsub.s32 %v1314, %v1316
        %v1318 = vrot.slane %v1310, %v1317
        %v1320 = vunpack.c.l.s4 1983009808
        %v1321 = vunpack.c.0.s8 %v1320
        %v1322 = vlaneseq
        %v1323 = vshrl.u32 %v1322, 7
        %v1324 = vsub.s32 %v1321, %v1323
        %v1325 = vrot.slane %v1311, %v1324
        %v1326 = vcombine.low %v1302, %v1308
        %v1327 = vcombine.high %v1302, %v1308
        %v1329 = vunpack.c.l.s4 1983009808
        %v1330 = vunpack.c.0.s8 %v1329
        %v1331 = vlaneseq
        %v1332 = vshrl.u32 %v1331, 7
        %v1333 = vsub.s32 %v1330, %v1332
        %v1334 = vrot.slane %v1326, %v1333
        %v1336 = vunpack.c.l.s4 1983009808
        %v1337 = vunpack.c.0.s8 %v1336
        %v1338 = vlaneseq
        %v1339 = vshrl.u32 %v1338, 7
        %v1340 = vsub.s32 %v1337, %v1339
        %v1341 = vrot.slane %v1327, %v1340
        %v1342 = vcombine.low %v1318, %v1334
        %v1343 = vcombine.high %v1318, %v1334
        %v1345 = vunpack.c.l.s4 1934713408
        %v1346 = vunpack.c.0.s8 %v1345
        %v1347 = vlaneseq
        %v1348 = vshrl.u32 %v1347, 7
        %v1349 = vsub.s32 %v1346, %v1348
        %v1350 = vrot.slane %v1342, %v1349
        %v1352 = vunpack.c.l.s4 1934713408
        %v1353 = vunpack.c.0.s8 %v1352
        %v1354 = vlaneseq
        %v1355 = vshrl.u32 %v1354, 7
        %v1356 = vsub.s32 %v1353, %v1355
        %v1357 = vrot.slane %v1343, %v1356
        %v1358 = vcombine.low %v1325, %v1341
        %v1359 = vcombine.high %v1325, %v1341
        %v1361 = vunpack.c.l.s4 1934713408
        %v1362 = vunpack.c.0.s8 %v1361
        %v1363 = vlaneseq
        %v1364 = vshrl.u32 %v1363, 7
        %v1365 = vsub.s32 %v1362, %v1364
        %v1366 = vrot.slane %v1358, %v1365
        %v1368 = vunpack.c.l.s4 1934713408
        %v1369 = vunpack.c.0.s8 %v1368
        %v1370 = vlaneseq
        %v1371 = vshrl.u32 %v1370, 7
        %v1372 = vsub.s32 %v1369, %v1371
        %v1373 = vrot.slane %v1359, %v1372
        %v1374 = vcombine.high %v1350, 0.0
        %v1375 = vcombine.high %v1357, 0.0
        %v1376 = vcombine.high %v1366, 0.0
        %v1377 = vcombine.high %v1373, 0.0
        %v1378 = vcombine.low %v1350, %v1357
        %v1380 = vunpack.c.l.s4 1983009808
        %v1381 = vunpack.c.0.s8 %v1380
        %v1382 = vlaneseq
        %v1383 = vshrl.u32 %v1382, 7
        %v1384 = vsub.s32 %v1381, %v1383
        %v1385 = vrot.slane %v1378, %v1384
        %v1386 = vcombine.low %v1374, %v1375
        %v1388 = vunpack.c.l.s4 1983009808
        %v1389 = vunpack.c.0.s8 %v1388
        %v1390 = vlaneseq
        %v1391 = vshrl.u32 %v1390, 7
        %v1392 = vsub.s32 %v1389, %v1391
        %v1393 = vrot.slane %v1386, %v1392
        %v1394 = vcombine.low %v1366, %v1373
        %v1396 = vunpack.c.l.s4 1983009808
        %v1397 = vunpack.c.0.s8 %v1396
        %v1398 = vlaneseq
        %v1399 = vshrl.u32 %v1398, 7
        %v1400 = vsub.s32 %v1397, %v1399
        %v1401 = vrot.slane %v1394, %v1400
        %v1402 = vcombine.low %v1376, %v1377
        %v1404 = vunpack.c.l.s4 1983009808
        %v1405 = vunpack.c.0.s8 %v1404
        %v1406 = vlaneseq
        %v1407 = vshrl.u32 %v1406, 7
        %v1408 = vsub.s32 %v1405, %v1407
        %v1409 = vrot.slane %v1402, %v1408
        %v1410 = vcombine.low %v1385, %v1393
        %v1411 = vcombine.high %v1385, %v1393
        %v1413 = vunpack.c.l.s4 1934713408
        %v1414 = vunpack.c.0.s8 %v1413
        %v1415 = vlaneseq
        %v1416 = vshrl.u32 %v1415, 7
        %v1417 = vsub.s32 %v1414, %v1416
        %v1418 = vrot.slane %v1410, %v1417
        %v1420 = vunpack.c.l.s4 1934713408
        %v1421 = vunpack.c.0.s8 %v1420
        %v1422 = vlaneseq
        %v1423 = vshrl.u32 %v1422, 7
        %v1424 = vsub.s32 %v1421, %v1423
        %v1425 = vrot.slane %v1411, %v1424
        %v1426 = vcombine.low %v1401, %v1409
        %v1427 = vcombine.high %v1401, %v1409
        %v1429 = vunpack.c.l.s4 1934713408
        %v1430 = vunpack.c.0.s8 %v1429
        %v1431 = vlaneseq
        %v1432 = vshrl.u32 %v1431, 7
        %v1433 = vsub.s32 %v1430, %v1432
        %v1434 = vrot.slane %v1426, %v1433
        %v1436 = vunpack.c.l.s4 1934713408
        %v1437 = vunpack.c.0.s8 %v1436
        %v1438 = vlaneseq
        %v1439 = vshrl.u32 %v1438, 7
        %v1440 = vsub.s32 %v1437, %v1439
        %v1441 = vrot.slane %v1427, %v1440
        %v1442 = vcombine.low %v1418, %v1434
        %v1443 = vcombine.high %v1418, %v1434
        %v1444 = vcombine.low %v1425, %v1441
        %v1445 = vcombine.high %v1425, %v1441
        %1447 = vrot.lane.b32.xlu0 %v1199, 120
        %v1448 = vpop.permute.xlu0 %1447
        %1450 = vrot.lane.b32.xlu0 %v1199, 112
        %v1451 = vpop.permute.xlu0 %1450
        %1453 = vrot.lane.b32.xlu0 %v1199, 104
        %v1454 = vpop.permute.xlu0 %1453
        %v1456 = vcombine.low %v1199, %v1451
        %v1457 = vcombine.high %v1199, %v1451
        %v1459 = vunpack.c.l.s4 1983009808
        %v1460 = vunpack.c.0.s8 %v1459
        %v1461 = vlaneseq
        %v1462 = vshrl.u32 %v1461, 7
        %v1463 = vsub.s32 %v1460, %v1462
        %v1464 = vrot.slane %v1456, %v1463
        %v1466 = vunpack.c.l.s4 1983009808
        %v1467 = vunpack.c.0.s8 %v1466
        %v1468 = vlaneseq
        %v1469 = vshrl.u32 %v1468, 7
        %v1470 = vsub.s32 %v1467, %v1469
        %v1471 = vrot.slane %v1457, %v1470
        %v1472 = vcombine.low %v1448, %v1454
        %v1473 = vcombine.high %v1448, %v1454
        %v1475 = vunpack.c.l.s4 1983009808
        %v1476 = vunpack.c.0.s8 %v1475
        %v1477 = vlaneseq
        %v1478 = vshrl.u32 %v1477, 7
        %v1479 = vsub.s32 %v1476, %v1478
        %v1480 = vrot.slane %v1472, %v1479
        %v1482 = vunpack.c.l.s4 1983009808
        %v1483 = vunpack.c.0.s8 %v1482
        %v1484 = vlaneseq
        %v1485 = vshrl.u32 %v1484, 7
        %v1486 = vsub.s32 %v1483, %v1485
        %v1487 = vrot.slane %v1473, %v1486
        %v1488 = vcombine.low %v1464, %v1480
        %v1489 = vcombine.high %v1464, %v1480
        %v1491 = vunpack.c.l.s4 1934713408
        %v1492 = vunpack.c.0.s8 %v1491
        %v1493 = vlaneseq
        %v1494 = vshrl.u32 %v1493, 7
        %v1495 = vsub.s32 %v1492, %v1494
        %v1496 = vrot.slane %v1488, %v1495
        %v1498 = vunpack.c.l.s4 1934713408
        %v1499 = vunpack.c.0.s8 %v1498
        %v1500 = vlaneseq
        %v1501 = vshrl.u32 %v1500, 7
        %v1502 = vsub.s32 %v1499, %v1501
        %v1503 = vrot.slane %v1489, %v1502
        %v1504 = vcombine.low %v1471, %v1487
        %v1505 = vcombine.high %v1471, %v1487
        %v1507 = vunpack.c.l.s4 1934713408
        %v1508 = vunpack.c.0.s8 %v1507
        %v1509 = vlaneseq
        %v1510 = vshrl.u32 %v1509, 7
        %v1511 = vsub.s32 %v1508, %v1510
        %v1512 = vrot.slane %v1504, %v1511
        %v1514 = vunpack.c.l.s4 1934713408
        %v1515 = vunpack.c.0.s8 %v1514
        %v1516 = vlaneseq
        %v1517 = vshrl.u32 %v1516, 7
        %v1518 = vsub.s32 %v1515, %v1517
        %v1519 = vrot.slane %v1505, %v1518
        %v1520 = vcombine.high %v1496, 0.0
        %v1521 = vcombine.high %v1503, 0.0
        %v1522 = vcombine.high %v1512, 0.0
        %v1523 = vcombine.high %v1519, 0.0
        %v1524 = vcombine.low %v1496, %v1503
        %v1526 = vunpack.c.l.s4 1983009808
        %v1527 = vunpack.c.0.s8 %v1526
        %v1528 = vlaneseq
        %v1529 = vshrl.u32 %v1528, 7
        %v1530 = vsub.s32 %v1527, %v1529
        %v1531 = vrot.slane %v1524, %v1530
        %v1532 = vcombine.low %v1520, %v1521
        %v1534 = vunpack.c.l.s4 1983009808
        %v1535 = vunpack.c.0.s8 %v1534
        %v1536 = vlaneseq
        %v1537 = vshrl.u32 %v1536, 7
        %v1538 = vsub.s32 %v1535, %v1537
        %v1539 = vrot.slane %v1532, %v1538
        %v1540 = vcombine.low %v1512, %v1519
        %v1542 = vunpack.c.l.s4 1983009808
        %v1543 = vunpack.c.0.s8 %v1542
        %v1544 = vlaneseq
        %v1545 = vshrl.u32 %v1544, 7
        %v1546 = vsub.s32 %v1543, %v1545
        %v1547 = vrot.slane %v1540, %v1546
        %v1548 = vcombine.low %v1522, %v1523
        %v1550 = vunpack.c.l.s4 1983009808
        %v1551 = vunpack.c.0.s8 %v1550
        %v1552 = vlaneseq
        %v1553 = vshrl.u32 %v1552, 7
        %v1554 = vsub.s32 %v1551, %v1553
        %v1555 = vrot.slane %v1548, %v1554
        %v1556 = vcombine.low %v1531, %v1539
        %v1557 = vcombine.high %v1531, %v1539
        %v1559 = vunpack.c.l.s4 1934713408
        %v1560 = vunpack.c.0.s8 %v1559
        %v1561 = vlaneseq
        %v1562 = vshrl.u32 %v1561, 7
        %v1563 = vsub.s32 %v1560, %v1562
        %v1564 = vrot.slane %v1556, %v1563
        %v1566 = vunpack.c.l.s4 1934713408
        %v1567 = vunpack.c.0.s8 %v1566
        %v1568 = vlaneseq
        %v1569 = vshrl.u32 %v1568, 7
        %v1570 = vsub.s32 %v1567, %v1569
        %v1571 = vrot.slane %v1557, %v1570
        %v1572 = vcombine.low %v1547, %v1555
        %v1573 = vcombine.high %v1547, %v1555
        %v1575 = vunpack.c.l.s4 1934713408
        %v1576 = vunpack.c.0.s8 %v1575
        %v1577 = vlaneseq
        %v1578 = vshrl.u32 %v1577, 7
        %v1579 = vsub.s32 %v1576, %v1578
        %v1580 = vrot.slane %v1572, %v1579
        %v1582 = vunpack.c.l.s4 1934713408
        %v1583 = vunpack.c.0.s8 %v1582
        %v1584 = vlaneseq
        %v1585 = vshrl.u32 %v1584, 7
        %v1586 = vsub.s32 %v1583, %v1585
        %v1587 = vrot.slane %v1573, %v1586
        %v1588 = vcombine.low %v1564, %v1580
        %v1589 = vcombine.high %v1564, %v1580
        %v1590 = vcombine.low %v1571, %v1587
        %v1591 = vcombine.high %v1571, %v1587
        %1593 = vrot.lane.b32.xlu0 %v1287, 120
        %v1594 = vpop.permute.xlu0 %1593
        %1596 = vrot.lane.b32.xlu0 %v1287, 112
        %v1597 = vpop.permute.xlu0 %1596
        %1599 = vrot.lane.b32.xlu0 %v1287, 104
        %v1600 = vpop.permute.xlu0 %1599
        %v1602 = vcombine.low %v1287, %v1597
        %v1603 = vcombine.high %v1287, %v1597
        %v1605 = vunpack.c.l.s4 1983009808
        %v1606 = vunpack.c.0.s8 %v1605
        %v1607 = vlaneseq
        %v1608 = vshrl.u32 %v1607, 7
        %v1609 = vsub.s32 %v1606, %v1608
        %v1610 = vrot.slane %v1602, %v1609
        %v1612 = vunpack.c.l.s4 1983009808
        %v1613 = vunpack.c.0.s8 %v1612
        %v1614 = vlaneseq
        %v1615 = vshrl.u32 %v1614, 7
        %v1616 = vsub.s32 %v1613, %v1615
        %v1617 = vrot.slane %v1603, %v1616
        %v1618 = vcombine.low %v1594, %v1600
        %v1619 = vcombine.high %v1594, %v1600
        %v1621 = vunpack.c.l.s4 1983009808
        %v1622 = vunpack.c.0.s8 %v1621
        %v1623 = vlaneseq
        %v1624 = vshrl.u32 %v1623, 7
        %v1625 = vsub.s32 %v1622, %v1624
        %v1626 = vrot.slane %v1618, %v1625
        %v1628 = vunpack.c.l.s4 1983009808
        %v1629 = vunpack.c.0.s8 %v1628
        %v1630 = vlaneseq
        %v1631 = vshrl.u32 %v1630, 7
        %v1632 = vsub.s32 %v1629, %v1631
        %v1633 = vrot.slane %v1619, %v1632
        %v1634 = vcombine.low %v1610, %v1626
        %v1635 = vcombine.high %v1610, %v1626
        %v1637 = vunpack.c.l.s4 1934713408
        %v1638 = vunpack.c.0.s8 %v1637
        %v1639 = vlaneseq
        %v1640 = vshrl.u32 %v1639, 7
        %v1641 = vsub.s32 %v1638, %v1640
        %v1642 = vrot.slane %v1634, %v1641
        %v1644 = vunpack.c.l.s4 1934713408
        %v1645 = vunpack.c.0.s8 %v1644
        %v1646 = vlaneseq
        %v1647 = vshrl.u32 %v1646, 7
        %v1648 = vsub.s32 %v1645, %v1647
        %v1649 = vrot.slane %v1635, %v1648
        %v1650 = vcombine.low %v1617, %v1633
        %v1651 = vcombine.high %v1617, %v1633
        %v1653 = vunpack.c.l.s4 1934713408
        %v1654 = vunpack.c.0.s8 %v1653
        %v1655 = vlaneseq
        %v1656 = vshrl.u32 %v1655, 7
        %v1657 = vsub.s32 %v1654, %v1656
        %v1658 = vrot.slane %v1650, %v1657
        %v1660 = vunpack.c.l.s4 1934713408
        %v1661 = vunpack.c.0.s8 %v1660
        %v1662 = vlaneseq
        %v1663 = vshrl.u32 %v1662, 7
        %v1664 = vsub.s32 %v1661, %v1663
        %v1665 = vrot.slane %v1651, %v1664
        %v1666 = vcombine.high %v1642, 0.0
        %v1667 = vcombine.high %v1649, 0.0
        %v1668 = vcombine.high %v1658, 0.0
        %v1669 = vcombine.high %v1665, 0.0
        %v1670 = vcombine.low %v1642, %v1649
        %v1672 = vunpack.c.l.s4 1983009808
        %v1673 = vunpack.c.0.s8 %v1672
        %v1674 = vlaneseq
        %v1675 = vshrl.u32 %v1674, 7
        %v1676 = vsub.s32 %v1673, %v1675
        %v1677 = vrot.slane %v1670, %v1676
        %v1678 = vcombine.low %v1666, %v1667
        %v1680 = vunpack.c.l.s4 1983009808
        %v1681 = vunpack.c.0.s8 %v1680
        %v1682 = vlaneseq
        %v1683 = vshrl.u32 %v1682, 7
        %v1684 = vsub.s32 %v1681, %v1683
        %v1685 = vrot.slane %v1678, %v1684
        %v1686 = vcombine.low %v1658, %v1665
        %v1688 = vunpack.c.l.s4 1983009808
        %v1689 = vunpack.c.0.s8 %v1688
        %v1690 = vlaneseq
        %v1691 = vshrl.u32 %v1690, 7
        %v1692 = vsub.s32 %v1689, %v1691
        %v1693 = vrot.slane %v1686, %v1692
        %v1694 = vcombine.low %v1668, %v1669
        %v1696 = vunpack.c.l.s4 1983009808
        %v1697 = vunpack.c.0.s8 %v1696
        %v1698 = vlaneseq
        %v1699 = vshrl.u32 %v1698, 7
        %v1700 = vsub.s32 %v1697, %v1699
        %v1701 = vrot.slane %v1694, %v1700
        %v1702 = vcombine.low %v1677, %v1685
        %v1703 = vcombine.high %v1677, %v1685
        %v1705 = vunpack.c.l.s4 1934713408
        %v1706 = vunpack.c.0.s8 %v1705
        %v1707 = vlaneseq
        %v1708 = vshrl.u32 %v1707, 7
        %v1709 = vsub.s32 %v1706, %v1708
        %v1710 = vrot.slane %v1702, %v1709
        %v1712 = vunpack.c.l.s4 1934713408
        %v1713 = vunpack.c.0.s8 %v1712
        %v1714 = vlaneseq
        %v1715 = vshrl.u32 %v1714, 7
        %v1716 = vsub.s32 %v1713, %v1715
        %v1717 = vrot.slane %v1703, %v1716
        %v1718 = vcombine.low %v1693, %v1701
        %v1719 = vcombine.high %v1693, %v1701
        %v1721 = vunpack.c.l.s4 1934713408
        %v1722 = vunpack.c.0.s8 %v1721
        %v1723 = vlaneseq
        %v1724 = vshrl.u32 %v1723, 7
        %v1725 = vsub.s32 %v1722, %v1724
        %v1726 = vrot.slane %v1718, %v1725
        %v1728 = vunpack.c.l.s4 1934713408
        %v1729 = vunpack.c.0.s8 %v1728
        %v1730 = vlaneseq
        %v1731 = vshrl.u32 %v1730, 7
        %v1732 = vsub.s32 %v1729, %v1731
        %v1733 = vrot.slane %v1719, %v1732
        %v1734 = vcombine.low %v1710, %v1726
        %v1735 = vcombine.high %v1710, %v1726
        %v1736 = vcombine.low %v1717, %v1733
        %v1737 = vcombine.high %v1717, %v1733
        %vm1738 = vcmask 64512
        %v1740 = vsel %vm1738, %v1442, 0
        %v1743 = vsel %vm1738, %v1588, 0
        %1745 = vmatprep.subr.mxu0 0.0
        %1746 = vmatpush1.xpose.msra.mxu0 %v1743
        %1747 = vmatprep.subr.mxu0 0.0
        %1748 = vmatpush1.xpose.msra.mxu0 0.0
        %1749 = vmatprep.subr.mxu0 0.0
        %1750 = vmatpush1.xpose.msra.mxu0 0.0
        %1751 = vmatprep.subr.mxu0 0.0
        %1752 = vmatpush1.xpose.msra.mxu0 0.0
        %1753 = vmatprep.subr.mxu0 0.0
        %1754 = vmatpush1.xpose.msra.mxu0 0.0
        %1755 = vmatprep.subr.mxu0 0.0
        %1756 = vmatpush1.xpose.msra.mxu0 0.0
        %1757 = vmatprep.subr.mxu0 0.0
        %1758 = vmatpush1.xpose.msra.mxu0 0.0
        %1759 = vmatprep.subr.mxu0 0.0
        %1760 = vmatpush1.xpose.msra.mxu0 0.0
        %1761 = vmatprep.subr.mxu0 0.0
        %1762 = vmatpush1.xpose.msra.mxu0 0.0
        %1763 = vmatprep.subr.mxu0 0.0
        %1764 = vmatpush1.xpose.msra.mxu0 0.0
        %1765 = vmatprep.subr.mxu0 0.0
        %1766 = vmatpush1.xpose.msra.mxu0 0.0
        %1767 = vmatprep.subr.mxu0 0.0
        %1768 = vmatpush1.xpose.msra.mxu0 0.0
        %1769 = vmatprep.subr.mxu0 0.0
        %1770 = vmatpush1.xpose.msra.mxu0 0.0
        %1771 = vmatprep.subr.mxu0 0.0
        %1772 = vmatpush1.xpose.msra.mxu0 0.0
        %1773 = vmatprep.subr.mxu0 0.0
        %1774 = vmatpush1.xpose.msra.mxu0 0.0
        %1775 = vmatprep.subr.mxu0 0.0
        %1776 = vmatpush1.xpose.msra.mxu0 0.0
        %1777 = vmatprep.subr.mxu0 0.0
        %1778 = vmatpush1.xpose.msra.mxu0 0.0
        %1779 = vmatprep.subr.mxu0 0.0
        %1780 = vmatpush1.xpose.msra.mxu0 0.0
        %1781 = vmatprep.subr.mxu0 0.0
        %1782 = vmatpush1.xpose.msra.mxu0 0.0
        %1783 = vmatprep.subr.mxu0 0.0
        %1784 = vmatpush1.xpose.msra.mxu0 0.0
        %1785 = vmatprep.subr.mxu0 0.0
        %1786 = vmatpush1.xpose.msra.mxu0 0.0
        %1787 = vmatprep.subr.mxu0 0.0
        %1788 = vmatpush1.xpose.msra.mxu0 0.0
        %1789 = vmatprep.subr.mxu0 0.0
        %1790 = vmatpush1.xpose.msra.mxu0 0.0
        %1791 = vmatprep.subr.mxu0 0.0
        %1792 = vmatpush1.xpose.msra.mxu0 0.0
        %1793 = vmatprep.subr.mxu0 0.0
        %1794 = vmatpush1.xpose.msra.mxu0 0.0
        %1795 = vmatprep.subr.mxu0 0.0
        %1796 = vmatpush1.xpose.msra.mxu0 0.0
        %1797 = vmatprep.subr.mxu0 0.0
        %1798 = vmatpush1.xpose.msra.mxu0 0.0
        %1799 = vmatprep.subr.mxu0 0.0
        %1800 = vmatpush1.xpose.msra.mxu0 0.0
        %1801 = vmatprep.subr.mxu0 0.0
        %1802 = vmatpush1.xpose.msra.mxu0 0.0
        %1803 = vmatprep.subr.mxu0 0.0
        %1804 = vmatpush1.xpose.msra.mxu0 0.0
        %1805 = vmatprep.subr.mxu0 0.0
        %1806 = vmatpush1.xpose.msra.mxu0 0.0
        %1807 = vmatprep.subr.mxu0 0.0
        %1808 = vmatpush1.xpose.msra.mxu0 0.0
        %1809 = vmatprep.mubr.f32.mxu0 0.0
        %1810 = vmatmul.mubr.f32.gmra.mrb[0].mxu0 %v1740
        %v1811 = vpop.f32.mrb[0].mxu0
        %v1812 = vadd.f32 0.0, %v1811
        %v1813 = vpop.f32.mrb[0].mxu0
        %1814 = vdwg.mxu0
        %v1816 = vsel %vm1738, %v1443, 0
        %v1819 = vsel %vm1738, %v1589, 0
        %1821 = vmatprep.subr.mxu0 0.0
        %1822 = vmatpush1.xpose.msra.mxu0 %v1819
        %1823 = vmatprep.subr.mxu0 0.0
        %1824 = vmatpush1.xpose.msra.mxu0 0.0
        %1825 = vmatprep.subr.mxu0 0.0
        %1826 = vmatpush1.xpose.msra.mxu0 0.0
        %1827 = vmatprep.subr.mxu0 0.0
        %1828 = vmatpush1.xpose.msra.mxu0 0.0
        %1829 = vmatprep.subr.mxu0 0.0
        %1830 = vmatpush1.xpose.msra.mxu0 0.0
        %1831 = vmatprep.subr.mxu0 0.0
        %1832 = vmatpush1.xpose.msra.mxu0 0.0
        %1833 = vmatprep.subr.mxu0 0.0
        %1834 = vmatpush1.xpose.msra.mxu0 0.0
        %1835 = vmatprep.subr.mxu0 0.0
        %1836 = vmatpush1.xpose.msra.mxu0 0.0
        %1837 = vmatprep.subr.mxu0 0.0
        %1838 = vmatpush1.xpose.msra.mxu0 0.0
        %1839 = vmatprep.subr.mxu0 0.0
        %1840 = vmatpush1.xpose.msra.mxu0 0.0
        %1841 = vmatprep.subr.mxu0 0.0
        %1842 = vmatpush1.xpose.msra.mxu0 0.0
        %1843 = vmatprep.subr.mxu0 0.0
        %1844 = vmatpush1.xpose.msra.mxu0 0.0
        %1845 = vmatprep.subr.mxu0 0.0
        %1846 = vmatpush1.xpose.msra.mxu0 0.0
        %1847 = vmatprep.subr.mxu0 0.0
        %1848 = vmatpush1.xpose.msra.mxu0 0.0
        %1849 = vmatprep.subr.mxu0 0.0
        %1850 = vmatpush1.xpose.msra.mxu0 0.0
        %1851 = vmatprep.subr.mxu0 0.0
        %1852 = vmatpush1.xpose.msra.mxu0 0.0
        %1853 = vmatprep.subr.mxu0 0.0
        %1854 = vmatpush1.xpose.msra.mxu0 0.0
        %1855 = vmatprep.subr.mxu0 0.0
        %1856 = vmatpush1.xpose.msra.mxu0 0.0
        %1857 = vmatprep.subr.mxu0 0.0
        %1858 = vmatpush1.xpose.msra.mxu0 0.0
        %1859 = vmatprep.subr.mxu0 0.0
        %1860 = vmatpush1.xpose.msra.mxu0 0.0
        %1861 = vmatprep.subr.mxu0 0.0
        %1862 = vmatpush1.xpose.msra.mxu0 0.0
        %1863 = vmatprep.subr.mxu0 0.0
        %1864 = vmatpush1.xpose.msra.mxu0 0.0
        %1865 = vmatprep.subr.mxu0 0.0
        %1866 = vmatpush1.xpose.msra.mxu0 0.0
        %1867 = vmatprep.subr.mxu0 0.0
        %1868 = vmatpush1.xpose.msra.mxu0 0.0
        %1869 = vmatprep.subr.mxu0 0.0
        %1870 = vmatpush1.xpose.msra.mxu0 0.0
        %1871 = vmatprep.subr.mxu0 0.0
        %1872 = vmatpush1.xpose.msra.mxu0 0.0
        %1873 = vmatprep.subr.mxu0 0.0
        %1874 = vmatpush1.xpose.msra.mxu0 0.0
        %1875 = vmatprep.subr.mxu0 0.0
        %1876 = vmatpush1.xpose.msra.mxu0 0.0
        %1877 = vmatprep.subr.mxu0 0.0
        %1878 = vmatpush1.xpose.msra.mxu0 0.0
        %1879 = vmatprep.subr.mxu0 0.0
        %1880 = vmatpush1.xpose.msra.mxu0 0.0
        %1881 = vmatprep.subr.mxu0 0.0
        %1882 = vmatpush1.xpose.msra.mxu0 0.0
        %1883 = vmatprep.subr.mxu0 0.0
        %1884 = vmatpush1.xpose.msra.mxu0 0.0
        %1885 = vmatprep.mubr.f32.mxu0 0.0
        %1886 = vmatmul.mubr.f32.gmra.mrb[0].mxu0 %v1816
        %v1887 = vpop.f32.mrb[0].mxu0
        %v1888 = vadd.f32 0.0, %v1887
        %v1889 = vpop.f32.mrb[0].mxu0
        %1890 = vdwg.mxu0
        %v1892 = vsel %vm1738, %v1444, 0
        %v1895 = vsel %vm1738, %v1590, 0
        %1897 = vmatprep.subr.mxu0 0.0
        %1898 = vmatpush1.xpose.msra.mxu0 %v1895
        %1899 = vmatprep.subr.mxu0 0.0
        %1900 = vmatpush1.xpose.msra.mxu0 0.0
        %1901 = vmatprep.subr.mxu0 0.0
        %1902 = vmatpush1.xpose.msra.mxu0 0.0
        %1903 = vmatprep.subr.mxu0 0.0
        %1904 = vmatpush1.xpose.msra.mxu0 0.0
        %1905 = vmatprep.subr.mxu0 0.0
        %1906 = vmatpush1.xpose.msra.mxu0 0.0
        %1907 = vmatprep.subr.mxu0 0.0
        %1908 = vmatpush1.xpose.msra.mxu0 0.0
        %1909 = vmatprep.subr.mxu0 0.0
        %1910 = vmatpush1.xpose.msra.mxu0 0.0
        %1911 = vmatprep.subr.mxu0 0.0
        %1912 = vmatpush1.xpose.msra.mxu0 0.0
        %1913 = vmatprep.subr.mxu0 0.0
        %1914 = vmatpush1.xpose.msra.mxu0 0.0
        %1915 = vmatprep.subr.mxu0 0.0
        %1916 = vmatpush1.xpose.msra.mxu0 0.0
        %1917 = vmatprep.subr.mxu0 0.0
        %1918 = vmatpush1.xpose.msra.mxu0 0.0
        %1919 = vmatprep.subr.mxu0 0.0
        %1920 = vmatpush1.xpose.msra.mxu0 0.0
        %1921 = vmatprep.subr.mxu0 0.0
        %1922 = vmatpush1.xpose.msra.mxu0 0.0
        %1923 = vmatprep.subr.mxu0 0.0
        %1924 = vmatpush1.xpose.msra.mxu0 0.0
        %1925 = vmatprep.subr.mxu0 0.0
        %1926 = vmatpush1.xpose.msra.mxu0 0.0
        %1927 = vmatprep.subr.mxu0 0.0
        %1928 = vmatpush1.xpose.msra.mxu0 0.0
        %1929 = vmatprep.subr.mxu0 0.0
        %1930 = vmatpush1.xpose.msra.mxu0 0.0
        %1931 = vmatprep.subr.mxu0 0.0
        %1932 = vmatpush1.xpose.msra.mxu0 0.0
        %1933 = vmatprep.subr.mxu0 0.0
        %1934 = vmatpush1.xpose.msra.mxu0 0.0
        %1935 = vmatprep.subr.mxu0 0.0
        %1936 = vmatpush1.xpose.msra.mxu0 0.0
        %1937 = vmatprep.subr.mxu0 0.0
        %1938 = vmatpush1.xpose.msra.mxu0 0.0
        %1939 = vmatprep.subr.mxu0 0.0
        %1940 = vmatpush1.xpose.msra.mxu0 0.0
        %1941 = vmatprep.subr.mxu0 0.0
        %1942 = vmatpush1.xpose.msra.mxu0 0.0
        %1943 = vmatprep.subr.mxu0 0.0
        %1944 = vmatpush1.xpose.msra.mxu0 0.0
        %1945 = vmatprep.subr.mxu0 0.0
        %1946 = vmatpush1.xpose.msra.mxu0 0.0
        %1947 = vmatprep.subr.mxu0 0.0
        %1948 = vmatpush1.xpose.msra.mxu0 0.0
        %1949 = vmatprep.subr.mxu0 0.0
        %1950 = vmatpush1.xpose.msra.mxu0 0.0
        %1951 = vmatprep.subr.mxu0 0.0
        %1952 = vmatpush1.xpose.msra.mxu0 0.0
        %1953 = vmatprep.subr.mxu0 0.0
        %1954 = vmatpush1.xpose.msra.mxu0 0.0
        %1955 = vmatprep.subr.mxu0 0.0
        %1956 = vmatpush1.xpose.msra.mxu0 0.0
        %1957 = vmatprep.subr.mxu0 0.0
        %1958 = vmatpush1.xpose.msra.mxu0 0.0
        %1959 = vmatprep.subr.mxu0 0.0
        %1960 = vmatpush1.xpose.msra.mxu0 0.0
        %1961 = vmatprep.mubr.f32.mxu0 0.0
        %1962 = vmatmul.mubr.f32.gmra.mrb[0].mxu0 %v1892
        %v1963 = vpop.f32.mrb[0].mxu0
        %v1964 = vadd.f32 0.0, %v1963
        %v1965 = vpop.f32.mrb[0].mxu0
        %1966 = vdwg.mxu0
        %v1968 = vsel %vm1738, %v1445, 0
        %v1971 = vsel %vm1738, %v1591, 0
        %1973 = vmatprep.subr.mxu0 0.0
        %1974 = vmatpush1.xpose.msra.mxu0 %v1971
        %1975 = vmatprep.subr.mxu0 0.0
        %1976 = vmatpush1.xpose.msra.mxu0 0.0
        %1977 = vmatprep.subr.mxu0 0.0
        %1978 = vmatpush1.xpose.msra.mxu0 0.0
        %1979 = vmatprep.subr.mxu0 0.0
        %1980 = vmatpush1.xpose.msra.mxu0 0.0
        %1981 = vmatprep.subr.mxu0 0.0
        %1982 = vmatpush1.xpose.msra.mxu0 0.0
        %1983 = vmatprep.subr.mxu0 0.0
        %1984 = vmatpush1.xpose.msra.mxu0 0.0
        %1985 = vmatprep.subr.mxu0 0.0
        %1986 = vmatpush1.xpose.msra.mxu0 0.0
        %1987 = vmatprep.subr.mxu0 0.0
        %1988 = vmatpush1.xpose.msra.mxu0 0.0
        %1989 = vmatprep.subr.mxu0 0.0
        %1990 = vmatpush1.xpose.msra.mxu0 0.0
        %1991 = vmatprep.subr.mxu0 0.0
        %1992 = vmatpush1.xpose.msra.mxu0 0.0
        %1993 = vmatprep.subr.mxu0 0.0
        %1994 = vmatpush1.xpose.msra.mxu0 0.0
        %1995 = vmatprep.subr.mxu0 0.0
        %1996 = vmatpush1.xpose.msra.mxu0 0.0
        %1997 = vmatprep.subr.mxu0 0.0
        %1998 = vmatpush1.xpose.msra.mxu0 0.0
        %1999 = vmatprep.subr.mxu0 0.0
        %2000 = vmatpush1.xpose.msra.mxu0 0.0
        %2001 = vmatprep.subr.mxu0 0.0
        %2002 = vmatpush1.xpose.msra.mxu0 0.0
        %2003 = vmatprep.subr.mxu0 0.0
        %2004 = vmatpush1.xpose.msra.mxu0 0.0
        %2005 = vmatprep.subr.mxu0 0.0
        %2006 = vmatpush1.xpose.msra.mxu0 0.0
        %2007 = vmatprep.subr.mxu0 0.0
        %2008 = vmatpush1.xpose.msra.mxu0 0.0
        %2009 = vmatprep.subr.mxu0 0.0
        %2010 = vmatpush1.xpose.msra.mxu0 0.0
        %2011 = vmatprep.subr.mxu0 0.0
        %2012 = vmatpush1.xpose.msra.mxu0 0.0
        %2013 = vmatprep.subr.mxu0 0.0
        %2014 = vmatpush1.xpose.msra.mxu0 0.0
        %2015 = vmatprep.subr.mxu0 0.0
        %2016 = vmatpush1.xpose.msra.mxu0 0.0
        %2017 = vmatprep.subr.mxu0 0.0
        %2018 = vmatpush1.xpose.msra.mxu0 0.0
        %2019 = vmatprep.subr.mxu0 0.0
        %2020 = vmatpush1.xpose.msra.mxu0 0.0
        %2021 = vmatprep.subr.mxu0 0.0
        %2022 = vmatpush1.xpose.msra.mxu0 0.0
        %2023 = vmatprep.subr.mxu0 0.0
        %2024 = vmatpush1.xpose.msra.mxu0 0.0
        %2025 = vmatprep.subr.mxu0 0.0
        %2026 = vmatpush1.xpose.msra.mxu0 0.0
        %2027 = vmatprep.subr.mxu0 0.0
        %2028 = vmatpush1.xpose.msra.mxu0 0.0
        %2029 = vmatprep.subr.mxu0 0.0
        %2030 = vmatpush1.xpose.msra.mxu0 0.0
        %2031 = vmatprep.subr.mxu0 0.0
        %2032 = vmatpush1.xpose.msra.mxu0 0.0
        %2033 = vmatprep.subr.mxu0 0.0
        %2034 = vmatpush1.xpose.msra.mxu0 0.0
        %2035 = vmatprep.subr.mxu0 0.0
        %2036 = vmatpush1.xpose.msra.mxu0 0.0
        %2037 = vmatprep.mubr.f32.mxu0 0.0
        %2038 = vmatmul.mubr.f32.gmra.mrb[0].mxu0 %v1968
        %v2039 = vpop.f32.mrb[0].mxu0
        %v2040 = vadd.f32 0.0, %v2039
        %v2041 = vpop.f32.mrb[0].mxu0
        %2042 = vdwg.mxu0
        %v2043 = vmul.f32 %v1812, 0.35355338
        %v2044 = vmul.f32 %v1888, 0.35355338
        %v2045 = vmul.f32 %v1964, 0.35355338
        %v2046 = vmul.f32 %v2040, 0.35355338
        %v2047 = vsel %vm1738, %v2043, -inf
        %2048 = vmax.xlane.f32.xlu0 %v2047
        %v2049 = vpop.xlane.xlu0 %2048
        %v2050 = vsel %vm1738, %v2044, -inf
        %2051 = vmax.xlane.f32.xlu0 %v2050
        %v2052 = vpop.xlane.xlu0 %2051
        %v2053 = vsel %vm1738, %v2045, -inf
        %2054 = vmax.xlane.f32.xlu0 %v2053
        %v2055 = vpop.xlane.xlu0 %2054
        %v2056 = vsel %vm1738, %v2046, -inf
        %2057 = vmax.xlane.f32.xlu0 %v2056
        %v2058 = vpop.xlane.xlu0 %2057
        %v2059 = vsub.f32 %v2043, %v2049
        %v2060 = vsub.f32 %v2044, %v2052
        %v2061 = vsub.f32 %v2045, %v2055
        %v2062 = vsub.f32 %v2046, %v2058
        %v2063 = vmul.f32 %v2059, 1.442695
        %v2064 = vpow.pop %v2063
        %v2065 = vmul.f32 %v2060, 1.442695
        %v2066 = vpow.pop %v2065
        %v2067 = vmul.f32 %v2061, 1.442695
        %v2068 = vpow.pop %v2067
        %v2069 = vmul.f32 %v2062, 1.442695
        %v2070 = vpow.pop %v2069
        %v2071 = vsel %vm1738, %v2064, 0.0
        %2072 = vadd.xlane.f32.xlu0 %v2071
        %v2073 = vpop.xlane.xlu0 %2072
        %v2074 = vsel %vm1738, %v2066, 0.0
        %2075 = vadd.xlane.f32.xlu0 %v2074
        %v2076 = vpop.xlane.xlu0 %2075
        %v2077 = vsel %vm1738, %v2068, 0.0
        %2078 = vadd.xlane.f32.xlu0 %v2077
        %v2079 = vpop.xlane.xlu0 %2078
        %v2080 = vsel %vm1738, %v2070, 0.0
        %2081 = vadd.xlane.f32.xlu0 %v2080
        %v2082 = vpop.xlane.xlu0 %2081
        %v2083 = vrcp.pop %v2073
        %v2084 = vmul.f32 %v2064, %v2083
        %v2085 = vrcp.pop %v2076
        %v2086 = vmul.f32 %v2066, %v2085
        %v2087 = vrcp.pop %v2079
        %v2088 = vmul.f32 %v2068, %v2087
        %v2089 = vrcp.pop %v2082
        %v2090 = vmul.f32 %v2070, %v2089
        %v2092 = vsel %vm1738, %v2084, 0
        %2094 = vmatprep.subr.mxu0 0.0
        %2095 = vmatpush1.msra.mxu0 %v1734
        %2096 = vmatprep.subr.mxu0 0.0
        %2097 = vmatpush1.msra.mxu0 0.0
        %2098 = vmatprep.subr.mxu0 0.0
        %2099 = vmatpush1.msra.mxu0 0.0
        %2100 = vmatprep.subr.mxu0 0.0
        %2101 = vmatpush1.msra.mxu0 0.0
        %2102 = vmatprep.subr.mxu0 0.0
        %2103 = vmatpush1.msra.mxu0 0.0
        %2104 = vmatprep.subr.mxu0 0.0
        %2105 = vmatpush1.msra.mxu0 0.0
        %2106 = vmatprep.subr.mxu0 0.0
        %2107 = vmatpush1.msra.mxu0 0.0
        %2108 = vmatprep.subr.mxu0 0.0
        %2109 = vmatpush1.msra.mxu0 0.0
        %2110 = vmatprep.subr.mxu0 0.0
        %2111 = vmatpush1.msra.mxu0 0.0
        %2112 = vmatprep.subr.mxu0 0.0
        %2113 = vmatpush1.msra.mxu0 0.0
        %2114 = vmatprep.subr.mxu0 0.0
        %2115 = vmatpush1.msra.mxu0 0.0
        %2116 = vmatprep.subr.mxu0 0.0
        %2117 = vmatpush1.msra.mxu0 0.0
        %2118 = vmatprep.subr.mxu0 0.0
        %2119 = vmatpush1.msra.mxu0 0.0
        %2120 = vmatprep.subr.mxu0 0.0
        %2121 = vmatpush1.msra.mxu0 0.0
        %2122 = vmatprep.subr.mxu0 0.0
        %2123 = vmatpush1.msra.mxu0 0.0
        %2124 = vmatprep.subr.mxu0 0.0
        %2125 = vmatpush1.msra.mxu0 0.0
        %2126 = vmatprep.subr.mxu0 0.0
        %2127 = vmatpush1.msra.mxu0 0.0
        %2128 = vmatprep.subr.mxu0 0.0
        %2129 = vmatpush1.msra.mxu0 0.0
        %2130 = vmatprep.subr.mxu0 0.0
        %2131 = vmatpush1.msra.mxu0 0.0
        %2132 = vmatprep.subr.mxu0 0.0
        %2133 = vmatpush1.msra.mxu0 0.0
        %2134 = vmatprep.subr.mxu0 0.0
        %2135 = vmatpush1.msra.mxu0 0.0
        %2136 = vmatprep.subr.mxu0 0.0
        %2137 = vmatpush1.msra.mxu0 0.0
        %2138 = vmatprep.subr.mxu0 0.0
        %2139 = vmatpush1.msra.mxu0 0.0
        %2140 = vmatprep.subr.mxu0 0.0
        %2141 = vmatpush1.msra.mxu0 0.0
        %2142 = vmatprep.subr.mxu0 0.0
        %2143 = vmatpush1.msra.mxu0 0.0
        %2144 = vmatprep.subr.mxu0 0.0
        %2145 = vmatpush1.msra.mxu0 0.0
        %2146 = vmatprep.subr.mxu0 0.0
        %2147 = vmatpush1.msra.mxu0 0.0
        %2148 = vmatprep.subr.mxu0 0.0
        %2149 = vmatpush1.msra.mxu0 0.0
        %2150 = vmatprep.subr.mxu0 0.0
        %2151 = vmatpush1.msra.mxu0 0.0
        %2152 = vmatprep.subr.mxu0 0.0
        %2153 = vmatpush1.msra.mxu0 0.0
        %2154 = vmatprep.subr.mxu0 0.0
        %2155 = vmatpush1.msra.mxu0 0.0
        %2156 = vmatprep.subr.mxu0 0.0
        %2157 = vmatpush1.msra.mxu0 0.0
        %2158 = vmatprep.mubr.f32.mxu0 0.0
        %2159 = vmatmul.mubr.f32.gmra.mrb[0].mxu0 %v2092
        %v2160 = vpop.f32.mrb[0].mxu0
        %v2161 = vadd.f32 0.0, %v2160
        %v2162 = vpop.f32.mrb[0].mxu0
        %2163 = vdwg.mxu0
        %v2165 = vsel %vm1738, %v2086, 0
        %2167 = vmatprep.subr.mxu0 0.0
        %2168 = vmatpush1.msra.mxu0 %v1735
        %2169 = vmatprep.subr.mxu0 0.0
        %2170 = vmatpush1.msra.mxu0 0.0
        %2171 = vmatprep.subr.mxu0 0.0
        %2172 = vmatpush1.msra.mxu0 0.0
        %2173 = vmatprep.subr.mxu0 0.0
        %2174 = vmatpush1.msra.mxu0 0.0
        %2175 = vmatprep.subr.mxu0 0.0
        %2176 = vmatpush1.msra.mxu0 0.0
        %2177 = vmatprep.subr.mxu0 0.0
        %2178 = vmatpush1.msra.mxu0 0.0
        %2179 = vmatprep.subr.mxu0 0.0
        %2180 = vmatpush1.msra.mxu0 0.0
        %2181 = vmatprep.subr.mxu0 0.0
        %2182 = vmatpush1.msra.mxu0 0.0
        %2183 = vmatprep.subr.mxu0 0.0
        %2184 = vmatpush1.msra.mxu0 0.0
        %2185 = vmatprep.subr.mxu0 0.0
        %2186 = vmatpush1.msra.mxu0 0.0
        %2187 = vmatprep.subr.mxu0 0.0
        %2188 = vmatpush1.msra.mxu0 0.0
        %2189 = vmatprep.subr.mxu0 0.0
        %2190 = vmatpush1.msra.mxu0 0.0
        %2191 = vmatprep.subr.mxu0 0.0
        %2192 = vmatpush1.msra.mxu0 0.0
        %2193 = vmatprep.subr.mxu0 0.0
        %2194 = vmatpush1.msra.mxu0 0.0
        %2195 = vmatprep.subr.mxu0 0.0
        %2196 = vmatpush1.msra.mxu0 0.0
        %2197 = vmatprep.subr.mxu0 0.0
        %2198 = vmatpush1.msra.mxu0 0.0
        %2199 = vmatprep.subr.mxu0 0.0
        %2200 = vmatpush1.msra.mxu0 0.0
        %2201 = vmatprep.subr.mxu0 0.0
        %2202 = vmatpush1.msra.mxu0 0.0
        %2203 = vmatprep.subr.mxu0 0.0
        %2204 = vmatpush1.msra.mxu0 0.0
        %2205 = vmatprep.subr.mxu0 0.0
        %2206 = vmatpush1.msra.mxu0 0.0
        %2207 = vmatprep.subr.mxu0 0.0
        %2208 = vmatpush1.msra.mxu0 0.0
        %2209 = vmatprep.subr.mxu0 0.0
        %2210 = vmatpush1.msra.mxu0 0.0
        %2211 = vmatprep.subr.mxu0 0.0
        %2212 = vmatpush1.msra.mxu0 0.0
        %2213 = vmatprep.subr.mxu0 0.0
        %2214 = vmatpush1.msra.mxu0 0.0
        %2215 = vmatprep.subr.mxu0 0.0
        %2216 = vmatpush1.msra.mxu0 0.0
        %2217 = vmatprep.subr.mxu0 0.0
        %2218 = vmatpush1.msra.mxu0 0.0
        %2219 = vmatprep.subr.mxu0 0.0
        %2220 = vmatpush1.msra.mxu0 0.0
        %2221 = vmatprep.subr.mxu0 0.0
        %2222 = vmatpush1.msra.mxu0 0.0
        %2223 = vmatprep.subr.mxu0 0.0
        %2224 = vmatpush1.msra.mxu0 0.0
        %2225 = vmatprep.subr.mxu0 0.0
        %2226 = vmatpush1.msra.mxu0 0.0
        %2227 = vmatprep.subr.mxu0 0.0
        %2228 = vmatpush1.msra.mxu0 0.0
        %2229 = vmatprep.subr.mxu0 0.0
        %2230 = vmatpush1.msra.mxu0 0.0
        %2231 = vmatprep.mubr.f32.mxu0 0.0
        %2232 = vmatmul.mubr.f32.gmra.mrb[0].mxu0 %v2165
        %v2233 = vpop.f32.mrb[0].mxu0
        %v2234 = vadd.f32 0.0, %v2233
        %v2235 = vpop.f32.mrb[0].mxu0
        %2236 = vdwg.mxu0
        %v2238 = vsel %vm1738, %v2088, 0
        %2240 = vmatprep.subr.mxu0 0.0
        %2241 = vmatpush1.msra.mxu0 %v1736
        %2242 = vmatprep.subr.mxu0 0.0
        %2243 = vmatpush1.msra.mxu0 0.0
        %2244 = vmatprep.subr.mxu0 0.0
        %2245 = vmatpush1.msra.mxu0 0.0
        %2246 = vmatprep.subr.mxu0 0.0
        %2247 = vmatpush1.msra.mxu0 0.0
        %2248 = vmatprep.subr.mxu0 0.0
        %2249 = vmatpush1.msra.mxu0 0.0
        %2250 = vmatprep.subr.mxu0 0.0
        %2251 = vmatpush1.msra.mxu0 0.0
        %2252 = vmatprep.subr.mxu0 0.0
        %2253 = vmatpush1.msra.mxu0 0.0
        %2254 = vmatprep.subr.mxu0 0.0
        %2255 = vmatpush1.msra.mxu0 0.0
        %2256 = vmatprep.subr.mxu0 0.0
        %2257 = vmatpush1.msra.mxu0 0.0
        %2258 = vmatprep.subr.mxu0 0.0
        %2259 = vmatpush1.msra.mxu0 0.0
        %2260 = vmatprep.subr.mxu0 0.0
        %2261 = vmatpush1.msra.mxu0 0.0
        %2262 = vmatprep.subr.mxu0 0.0
        %2263 = vmatpush1.msra.mxu0 0.0
        %2264 = vmatprep.subr.mxu0 0.0
        %2265 = vmatpush1.msra.mxu0 0.0
        %2266 = vmatprep.subr.mxu0 0.0
        %2267 = vmatpush1.msra.mxu0 0.0
        %2268 = vmatprep.subr.mxu0 0.0
        %2269 = vmatpush1.msra.mxu0 0.0
        %2270 = vmatprep.subr.mxu0 0.0
        %2271 = vmatpush1.msra.mxu0 0.0
        %2272 = vmatprep.subr.mxu0 0.0
        %2273 = vmatpush1.msra.mxu0 0.0
        %2274 = vmatprep.subr.mxu0 0.0
        %2275 = vmatpush1.msra.mxu0 0.0
        %2276 = vmatprep.subr.mxu0 0.0
        %2277 = vmatpush1.msra.mxu0 0.0
        %2278 = vmatprep.subr.mxu0 0.0
        %2279 = vmatpush1.msra.mxu0 0.0
        %2280 = vmatprep.subr.mxu0 0.0
        %2281 = vmatpush1.msra.mxu0 0.0
        %2282 = vmatprep.subr.mxu0 0.0
        %2283 = vmatpush1.msra.mxu0 0.0
        %2284 = vmatprep.subr.mxu0 0.0
        %2285 = vmatpush1.msra.mxu0 0.0
        %2286 = vmatprep.subr.mxu0 0.0
        %2287 = vmatpush1.msra.mxu0 0.0
        %2288 = vmatprep.subr.mxu0 0.0
        %2289 = vmatpush1.msra.mxu0 0.0
        %2290 = vmatprep.subr.mxu0 0.0
        %2291 = vmatpush1.msra.mxu0 0.0
        %2292 = vmatprep.subr.mxu0 0.0
        %2293 = vmatpush1.msra.mxu0 0.0
        %2294 = vmatprep.subr.mxu0 0.0
        %2295 = vmatpush1.msra.mxu0 0.0
        %2296 = vmatprep.subr.mxu0 0.0
        %2297 = vmatpush1.msra.mxu0 0.0
        %2298 = vmatprep.subr.mxu0 0.0
        %2299 = vmatpush1.msra.mxu0 0.0
        %2300 = vmatprep.subr.mxu0 0.0
        %2301 = vmatpush1.msra.mxu0 0.0
        %2302 = vmatprep.subr.mxu0 0.0
        %2303 = vmatpush1.msra.mxu0 0.0
        %2304 = vmatprep.mubr.f32.mxu0 0.0
        %2305 = vmatmul.mubr.f32.gmra.mrb[0].mxu0 %v2238
        %v2306 = vpop.f32.mrb[0].mxu0
        %v2307 = vadd.f32 0.0, %v2306
        %v2308 = vpop.f32.mrb[0].mxu0
        %2309 = vdwg.mxu0
        %v2311 = vsel %vm1738, %v2090, 0
        %2313 = vmatprep.subr.mxu0 0.0
        %2314 = vmatpush1.msra.mxu0 %v1737
        %2315 = vmatprep.subr.mxu0 0.0
        %2316 = vmatpush1.msra.mxu0 0.0
        %2317 = vmatprep.subr.mxu0 0.0
        %2318 = vmatpush1.msra.mxu0 0.0
        %2319 = vmatprep.subr.mxu0 0.0
        %2320 = vmatpush1.msra.mxu0 0.0
        %2321 = vmatprep.subr.mxu0 0.0
        %2322 = vmatpush1.msra.mxu0 0.0
        %2323 = vmatprep.subr.mxu0 0.0
        %2324 = vmatpush1.msra.mxu0 0.0
        %2325 = vmatprep.subr.mxu0 0.0
        %2326 = vmatpush1.msra.mxu0 0.0
        %2327 = vmatprep.subr.mxu0 0.0
        %2328 = vmatpush1.msra.mxu0 0.0
        %2329 = vmatprep.subr.mxu0 0.0
        %2330 = vmatpush1.msra.mxu0 0.0
        %2331 = vmatprep.subr.mxu0 0.0
        %2332 = vmatpush1.msra.mxu0 0.0
        %2333 = vmatprep.subr.mxu0 0.0
        %2334 = vmatpush1.msra.mxu0 0.0
        %2335 = vmatprep.subr.mxu0 0.0
        %2336 = vmatpush1.msra.mxu0 0.0
        %2337 = vmatprep.subr.mxu0 0.0
        %2338 = vmatpush1.msra.mxu0 0.0
        %2339 = vmatprep.subr.mxu0 0.0
        %2340 = vmatpush1.msra.mxu0 0.0
        %2341 = vmatprep.subr.mxu0 0.0
        %2342 = vmatpush1.msra.mxu0 0.0
        %2343 = vmatprep.subr.mxu0 0.0
        %2344 = vmatpush1.msra.mxu0 0.0
        %2345 = vmatprep.subr.mxu0 0.0
        %2346 = vmatpush1.msra.mxu0 0.0
        %2347 = vmatprep.subr.mxu0 0.0
        %2348 = vmatpush1.msra.mxu0 0.0
        %2349 = vmatprep.subr.mxu0 0.0
        %2350 = vmatpush1.msra.mxu0 0.0
        %2351 = vmatprep.subr.mxu0 0.0
        %2352 = vmatpush1.msra.mxu0 0.0
        %2353 = vmatprep.subr.mxu0 0.0
        %2354 = vmatpush1.msra.mxu0 0.0
        %2355 = vmatprep.subr.mxu0 0.0
        %2356 = vmatpush1.msra.mxu0 0.0
        %2357 = vmatprep.subr.mxu0 0.0
        %2358 = vmatpush1.msra.mxu0 0.0
        %2359 = vmatprep.subr.mxu0 0.0
        %2360 = vmatpush1.msra.mxu0 0.0
        %2361 = vmatprep.subr.mxu0 0.0
        %2362 = vmatpush1.msra.mxu0 0.0
        %2363 = vmatprep.subr.mxu0 0.0
        %2364 = vmatpush1.msra.mxu0 0.0
        %2365 = vmatprep.subr.mxu0 0.0
        %2366 = vmatpush1.msra.mxu0 0.0
        %2367 = vmatprep.subr.mxu0 0.0
        %2368 = vmatpush1.msra.mxu0 0.0
        %2369 = vmatprep.subr.mxu0 0.0
        %2370 = vmatpush1.msra.mxu0 0.0
        %2371 = vmatprep.subr.mxu0 0.0
        %2372 = vmatpush1.msra.mxu0 0.0
        %2373 = vmatprep.subr.mxu0 0.0
        %2374 = vmatpush1.msra.mxu0 0.0
        %2375 = vmatprep.subr.mxu0 0.0
        %2376 = vmatpush1.msra.mxu0 0.0
        %2377 = vmatprep.mubr.f32.mxu0 0.0
        %2378 = vmatmul.mubr.f32.gmra.mrb[0].mxu0 %v2311
        %v2379 = vpop.f32.mrb[0].mxu0
        %v2380 = vadd.f32 0.0, %v2379
        %v2381 = vpop.f32.mrb[0].mxu0
        %2382 = vdwg.mxu0
        %v2383 = vcombine.low %v2161, %v2307
        %v2384 = vcombine.high %v2161, %v2307
        %v2386 = vunpack.c.l.s4 1983009808
        %v2387 = vunpack.c.0.s8 %v2386
        %v2388 = vlaneseq
        %v2389 = vshrl.u32 %v2388, 7
        %v2390 = vsub.s32 %v2387, %v2389
        %v2391 = vrot.slane %v2383, %v2390
        %v2393 = vunpack.c.l.s4 1983009808
        %v2394 = vunpack.c.0.s8 %v2393
        %v2395 = vlaneseq
        %v2396 = vshrl.u32 %v2395, 7
        %v2397 = vsub.s32 %v2394, %v2396
        %v2398 = vrot.slane %v2384, %v2397
        %v2399 = vcombine.low %v2234, %v2380
        %v2400 = vcombine.high %v2234, %v2380
        %v2402 = vunpack.c.l.s4 1983009808
        %v2403 = vunpack.c.0.s8 %v2402
        %v2404 = vlaneseq
        %v2405 = vshrl.u32 %v2404, 7
        %v2406 = vsub.s32 %v2403, %v2405
        %v2407 = vrot.slane %v2399, %v2406
        %v2409 = vunpack.c.l.s4 1983009808
        %v2410 = vunpack.c.0.s8 %v2409
        %v2411 = vlaneseq
        %v2412 = vshrl.u32 %v2411, 7
        %v2413 = vsub.s32 %v2410, %v2412
        %v2414 = vrot.slane %v2400, %v2413
        %v2415 = vcombine.low %v2391, %v2407
        %v2416 = vcombine.high %v2391, %v2407
        %v2418 = vunpack.c.l.s4 1934713408
        %v2419 = vunpack.c.0.s8 %v2418
        %v2420 = vlaneseq
        %v2421 = vshrl.u32 %v2420, 7
        %v2422 = vsub.s32 %v2419, %v2421
        %v2423 = vrot.slane %v2415, %v2422
        %v2425 = vunpack.c.l.s4 1934713408
        %v2426 = vunpack.c.0.s8 %v2425
        %v2427 = vlaneseq
        %v2428 = vshrl.u32 %v2427, 7
        %v2429 = vsub.s32 %v2426, %v2428
        %v2430 = vrot.slane %v2416, %v2429
        %v2431 = vcombine.low %v2398, %v2414
        %v2432 = vcombine.high %v2398, %v2414
        %v2434 = vunpack.c.l.s4 1934713408
        %v2435 = vunpack.c.0.s8 %v2434
        %v2436 = vlaneseq
        %v2437 = vshrl.u32 %v2436, 7
        %v2438 = vsub.s32 %v2435, %v2437
        %v2439 = vrot.slane %v2431, %v2438
        %v2441 = vunpack.c.l.s4 1934713408
        %v2442 = vunpack.c.0.s8 %v2441
        %v2443 = vlaneseq
        %v2444 = vshrl.u32 %v2443, 7
        %v2445 = vsub.s32 %v2442, %v2444
        %v2446 = vrot.slane %v2432, %v2445
        %v2447 = vcombine.high %v2423, 0.0
        %v2448 = vcombine.high %v2430, 0.0
        %v2449 = vcombine.high %v2439, 0.0
        %v2450 = vcombine.high %v2446, 0.0
        %v2451 = vcombine.low %v2423, %v2430
        %v2453 = vunpack.c.l.s4 1983009808
        %v2454 = vunpack.c.0.s8 %v2453
        %v2455 = vlaneseq
        %v2456 = vshrl.u32 %v2455, 7
        %v2457 = vsub.s32 %v2454, %v2456
        %v2458 = vrot.slane %v2451, %v2457
        %v2459 = vcombine.low %v2447, %v2448
        %v2461 = vunpack.c.l.s4 1983009808
        %v2462 = vunpack.c.0.s8 %v2461
        %v2463 = vlaneseq
        %v2464 = vshrl.u32 %v2463, 7
        %v2465 = vsub.s32 %v2462, %v2464
        %v2466 = vrot.slane %v2459, %v2465
        %v2467 = vcombine.low %v2439, %v2446
        %v2469 = vunpack.c.l.s4 1983009808
        %v2470 = vunpack.c.0.s8 %v2469
        %v2471 = vlaneseq
        %v2472 = vshrl.u32 %v2471, 7
        %v2473 = vsub.s32 %v2470, %v2472
        %v2474 = vrot.slane %v2467, %v2473
        %v2475 = vcombine.low %v2449, %v2450
        %v2477 = vunpack.c.l.s4 1983009808
        %v2478 = vunpack.c.0.s8 %v2477
        %v2479 = vlaneseq
        %v2480 = vshrl.u32 %v2479, 7
        %v2481 = vsub.s32 %v2478, %v2480
        %v2482 = vrot.slane %v2475, %v2481
        %v2483 = vcombine.low %v2458, %v2466
        %v2484 = vcombine.high %v2458, %v2466
        %v2486 = vunpack.c.l.s4 1934713408
        %v2487 = vunpack.c.0.s8 %v2486
        %v2488 = vlaneseq
        %v2489 = vshrl.u32 %v2488, 7
        %v2490 = vsub.s32 %v2487, %v2489
        %v2491 = vrot.slane %v2483, %v2490
        %v2493 = vunpack.c.l.s4 1934713408
        %v2494 = vunpack.c.0.s8 %v2493
        %v2495 = vlaneseq
        %v2496 = vshrl.u32 %v2495, 7
        %v2497 = vsub.s32 %v2494, %v2496
        %v2498 = vrot.slane %v2484, %v2497
        %v2499 = vcombine.low %v2474, %v2482
        %v2500 = vcombine.high %v2474, %v2482
        %v2502 = vunpack.c.l.s4 1934713408
        %v2503 = vunpack.c.0.s8 %v2502
        %v2504 = vlaneseq
        %v2505 = vshrl.u32 %v2504, 7
        %v2506 = vsub.s32 %v2503, %v2505
        %v2507 = vrot.slane %v2499, %v2506
        %v2509 = vunpack.c.l.s4 1934713408
        %v2510 = vunpack.c.0.s8 %v2509
        %v2511 = vlaneseq
        %v2512 = vshrl.u32 %v2511, 7
        %v2513 = vsub.s32 %v2510, %v2512
        %v2514 = vrot.slane %v2500, %v2513
        %v2515 = vcombine.low %v2491, %v2507
        %v2516 = vcombine.high %v2491, %v2507
        %v2517 = vcombine.low %v2498, %v2514
        %v2518 = vcombine.high %v2498, %v2514
        %2520 = vrot.lane.b32.xlu0 %v2516, 8
        %v2521 = vpop.permute.xlu0 %2520
        %2524 = vrot.lane.b32.xlu0 %v2517, 16
        %v2525 = vpop.permute.xlu0 %2524
        %2528 = vrot.lane.b32.xlu0 %v2518, 24
        %v2529 = vpop.permute.xlu0 %2528
        %v2531 = vsel %vm1738, %v2515, %v2521
        %vm2532 = vcmask 130048
        %v2533 = vsel %vm2532, %v2531, %v2525
        %vm2534 = vcmask 195584
        %v2535 = vsel %vm2534, %v2533, %v2529
        %2537 = vrot.lane.b32.xlu0 %v1116, 120
        %v2538 = vpop.permute.xlu0 %2537
        %2540 = vrot.lane.b32.xlu0 %v1116, 112
        %v2541 = vpop.permute.xlu0 %2540
        %2543 = vrot.lane.b32.xlu0 %v1116, 104
        %v2544 = vpop.permute.xlu0 %2543
        %v2546 = vcombine.low %v1116, %v2541
        %v2547 = vcombine.high %v1116, %v2541
        %v2549 = vunpack.c.l.s4 1983009808
        %v2550 = vunpack.c.0.s8 %v2549
        %v2551 = vlaneseq
        %v2552 = vshrl.u32 %v2551, 7
        %v2553 = vsub.s32 %v2550, %v2552
        %v2554 = vrot.slane %v2546, %v2553
        %v2556 = vunpack.c.l.s4 1983009808
        %v2557 = vunpack.c.0.s8 %v2556
        %v2558 = vlaneseq
        %v2559 = vshrl.u32 %v2558, 7
        %v2560 = vsub.s32 %v2557, %v2559
        %v2561 = vrot.slane %v2547, %v2560
        %v2562 = vcombine.low %v2538, %v2544
        %v2563 = vcombine.high %v2538, %v2544
        %v2565 = vunpack.c.l.s4 1983009808
        %v2566 = vunpack.c.0.s8 %v2565
        %v2567 = vlaneseq
        %v2568 = vshrl.u32 %v2567, 7
        %v2569 = vsub.s32 %v2566, %v2568
        %v2570 = vrot.slane %v2562, %v2569
        %v2572 = vunpack.c.l.s4 1983009808
        %v2573 = vunpack.c.0.s8 %v2572
        %v2574 = vlaneseq
        %v2575 = vshrl.u32 %v2574, 7
        %v2576 = vsub.s32 %v2573, %v2575
        %v2577 = vrot.slane %v2563, %v2576
        %v2578 = vcombine.low %v2554, %v2570
        %v2579 = vcombine.high %v2554, %v2570
        %v2581 = vunpack.c.l.s4 1934713408
        %v2582 = vunpack.c.0.s8 %v2581
        %v2583 = vlaneseq
        %v2584 = vshrl.u32 %v2583, 7
        %v2585 = vsub.s32 %v2582, %v2584
        %v2586 = vrot.slane %v2578, %v2585
        %v2588 = vunpack.c.l.s4 1934713408
        %v2589 = vunpack.c.0.s8 %v2588
        %v2590 = vlaneseq
        %v2591 = vshrl.u32 %v2590, 7
        %v2592 = vsub.s32 %v2589, %v2591
        %v2593 = vrot.slane %v2579, %v2592
        %v2594 = vcombine.low %v2561, %v2577
        %v2595 = vcombine.high %v2561, %v2577
        %v2597 = vunpack.c.l.s4 1934713408
        %v2598 = vunpack.c.0.s8 %v2597
        %v2599 = vlaneseq
        %v2600 = vshrl.u32 %v2599, 7
        %v2601 = vsub.s32 %v2598, %v2600
        %v2602 = vrot.slane %v2594, %v2601
        %v2604 = vunpack.c.l.s4 1934713408
        %v2605 = vunpack.c.0.s8 %v2604
        %v2606 = vlaneseq
        %v2607 = vshrl.u32 %v2606, 7
        %v2608 = vsub.s32 %v2605, %v2607
        %v2609 = vrot.slane %v2595, %v2608
        %v2610 = vcombine.high %v2586, 0.0
        %v2611 = vcombine.high %v2593, 0.0
        %v2612 = vcombine.high %v2602, 0.0
        %v2613 = vcombine.high %v2609, 0.0
        %v2614 = vcombine.low %v2586, %v2593
        %v2616 = vunpack.c.l.s4 1983009808
        %v2617 = vunpack.c.0.s8 %v2616
        %v2618 = vlaneseq
        %v2619 = vshrl.u32 %v2618, 7
        %v2620 = vsub.s32 %v2617, %v2619
        %v2621 = vrot.slane %v2614, %v2620
        %v2622 = vcombine.low %v2610, %v2611
        %v2624 = vunpack.c.l.s4 1983009808
        %v2625 = vunpack.c.0.s8 %v2624
        %v2626 = vlaneseq
        %v2627 = vshrl.u32 %v2626, 7
        %v2628 = vsub.s32 %v2625, %v2627
        %v2629 = vrot.slane %v2622, %v2628
        %v2630 = vcombine.low %v2602, %v2609
        %v2632 = vunpack.c.l.s4 1983009808
        %v2633 = vunpack.c.0.s8 %v2632
        %v2634 = vlaneseq
        %v2635 = vshrl.u32 %v2634, 7
        %v2636 = vsub.s32 %v2633, %v2635
        %v2637 = vrot.slane %v2630, %v2636
        %v2638 = vcombine.low %v2612, %v2613
        %v2640 = vunpack.c.l.s4 1983009808
        %v2641 = vunpack.c.0.s8 %v2640
        %v2642 = vlaneseq
        %v2643 = vshrl.u32 %v2642, 7
        %v2644 = vsub.s32 %v2641, %v2643
        %v2645 = vrot.slane %v2638, %v2644
        %v2646 = vcombine.low %v2621, %v2629
        %v2647 = vcombine.high %v2621, %v2629
        %v2649 = vunpack.c.l.s4 1934713408
        %v2650 = vunpack.c.0.s8 %v2649
        %v2651 = vlaneseq
        %v2652 = vshrl.u32 %v2651, 7
        %v2653 = vsub.s32 %v2650, %v2652
        %v2654 = vrot.slane %v2646, %v2653
        %v2656 = vunpack.c.l.s4 1934713408
        %v2657 = vunpack.c.0.s8 %v2656
        %v2658 = vlaneseq
        %v2659 = vshrl.u32 %v2658, 7
        %v2660 = vsub.s32 %v2657, %v2659
        %v2661 = vrot.slane %v2647, %v2660
        %v2662 = vcombine.low %v2637, %v2645
        %v2663 = vcombine.high %v2637, %v2645
        %v2665 = vunpack.c.l.s4 1934713408
        %v2666 = vunpack.c.0.s8 %v2665
        %v2667 = vlaneseq
        %v2668 = vshrl.u32 %v2667, 7
        %v2669 = vsub.s32 %v2666, %v2668
        %v2670 = vrot.slane %v2662, %v2669
        %v2672 = vunpack.c.l.s4 1934713408
        %v2673 = vunpack.c.0.s8 %v2672
        %v2674 = vlaneseq
        %v2675 = vshrl.u32 %v2674, 7
        %v2676 = vsub.s32 %v2673, %v2675
        %v2677 = vrot.slane %v2663, %v2676
        %v2678 = vcombine.low %v2654, %v2670
        %v2679 = vcombine.high %v2654, %v2670
        %v2680 = vcombine.low %v2661, %v2677
        %v2681 = vcombine.high %v2661, %v2677
        %2683 = vrot.lane.b32.xlu0 %v1204, 120
        %v2684 = vpop.permute.xlu0 %2683
        %2686 = vrot.lane.b32.xlu0 %v1204, 112
        %v2687 = vpop.permute.xlu0 %2686
        %2689 = vrot.lane.b32.xlu0 %v1204, 104
        %v2690 = vpop.permute.xlu0 %2689
        %v2692 = vcombine.low %v1204, %v2687
        %v2693 = vcombine.high %v1204, %v2687
        %v2695 = vunpack.c.l.s4 1983009808
        %v2696 = vunpack.c.0.s8 %v2695
        %v2697 = vlaneseq
        %v2698 = vshrl.u32 %v2697, 7
        %v2699 = vsub.s32 %v2696, %v2698
        %v2700 = vrot.slane %v2692, %v2699
        %v2702 = vunpack.c.l.s4 1983009808
        %v2703 = vunpack.c.0.s8 %v2702
        %v2704 = vlaneseq
        %v2705 = vshrl.u32 %v2704, 7
        %v2706 = vsub.s32 %v2703, %v2705
        %v2707 = vrot.slane %v2693, %v2706
        %v2708 = vcombine.low %v2684, %v2690
        %v2709 = vcombine.high %v2684, %v2690
        %v2711 = vunpack.c.l.s4 1983009808
        %v2712 = vunpack.c.0.s8 %v2711
        %v2713 = vlaneseq
        %v2714 = vshrl.u32 %v2713, 7
        %v2715 = vsub.s32 %v2712, %v2714
        %v2716 = vrot.slane %v2708, %v2715
        %v2718 = vunpack.c.l.s4 1983009808
        %v2719 = vunpack.c.0.s8 %v2718
        %v2720 = vlaneseq
        %v2721 = vshrl.u32 %v2720, 7
        %v2722 = vsub.s32 %v2719, %v2721
        %v2723 = vrot.slane %v2709, %v2722
        %v2724 = vcombine.low %v2700, %v2716
        %v2725 = vcombine.high %v2700, %v2716
        %v2727 = vunpack.c.l.s4 1934713408
        %v2728 = vunpack.c.0.s8 %v2727
        %v2729 = vlaneseq
        %v2730 = vshrl.u32 %v2729, 7
        %v2731 = vsub.s32 %v2728, %v2730
        %v2732 = vrot.slane %v2724, %v2731
        %v2734 = vunpack.c.l.s4 1934713408
        %v2735 = vunpack.c.0.s8 %v2734
        %v2736 = vlaneseq
        %v2737 = vshrl.u32 %v2736, 7
        %v2738 = vsub.s32 %v2735, %v2737
        %v2739 = vrot.slane %v2725, %v2738
        %v2740 = vcombine.low %v2707, %v2723
        %v2741 = vcombine.high %v2707, %v2723
        %v2743 = vunpack.c.l.s4 1934713408
        %v2744 = vunpack.c.0.s8 %v2743
        %v2745 = vlaneseq
        %v2746 = vshrl.u32 %v2745, 7
        %v2747 = vsub.s32 %v2744, %v2746
        %v2748 = vrot.slane %v2740, %v2747
        %v2750 = vunpack.c.l.s4 1934713408
        %v2751 = vunpack.c.0.s8 %v2750
        %v2752 = vlaneseq
        %v2753 = vshrl.u32 %v2752, 7
        %v2754 = vsub.s32 %v2751, %v2753
        %v2755 = vrot.slane %v2741, %v2754
        %v2756 = vcombine.high %v2732, 0.0
        %v2757 = vcombine.high %v2739, 0.0
        %v2758 = vcombine.high %v2748, 0.0
        %v2759 = vcombine.high %v2755, 0.0
        %v2760 = vcombine.low %v2732, %v2739
        %v2762 = vunpack.c.l.s4 1983009808
        %v2763 = vunpack.c.0.s8 %v2762
        %v2764 = vlaneseq
        %v2765 = vshrl.u32 %v2764, 7
        %v2766 = vsub.s32 %v2763, %v2765
        %v2767 = vrot.slane %v2760, %v2766
        %v2768 = vcombine.low %v2756, %v2757
        %v2770 = vunpack.c.l.s4 1983009808
        %v2771 = vunpack.c.0.s8 %v2770
        %v2772 = vlaneseq
        %v2773 = vshrl.u32 %v2772, 7
        %v2774 = vsub.s32 %v2771, %v2773
        %v2775 = vrot.slane %v2768, %v2774
        %v2776 = vcombine.low %v2748, %v2755
        %v2778 = vunpack.c.l.s4 1983009808
        %v2779 = vunpack.c.0.s8 %v2778
        %v2780 = vlaneseq
        %v2781 = vshrl.u32 %v2780, 7
        %v2782 = vsub.s32 %v2779, %v2781
        %v2783 = vrot.slane %v2776, %v2782
        %v2784 = vcombine.low %v2758, %v2759
        %v2786 = vunpack.c.l.s4 1983009808
        %v2787 = vunpack.c.0.s8 %v2786
        %v2788 = vlaneseq
        %v2789 = vshrl.u32 %v2788, 7
        %v2790 = vsub.s32 %v2787, %v2789
        %v2791 = vrot.slane %v2784, %v2790
        %v2792 = vcombine.low %v2767, %v2775
        %v2793 = vcombine.high %v2767, %v2775
        %v2795 = vunpack.c.l.s4 1934713408
        %v2796 = vunpack.c.0.s8 %v2795
        %v2797 = vlaneseq
        %v2798 = vshrl.u32 %v2797, 7
        %v2799 = vsub.s32 %v2796, %v2798
        %v2800 = vrot.slane %v2792, %v2799
        %v2802 = vunpack.c.l.s4 1934713408
        %v2803 = vunpack.c.0.s8 %v2802
        %v2804 = vlaneseq
        %v2805 = vshrl.u32 %v2804, 7
        %v2806 = vsub.s32 %v2803, %v2805
        %v2807 = vrot.slane %v2793, %v2806
        %v2808 = vcombine.low %v2783, %v2791
        %v2809 = vcombine.high %v2783, %v2791
        %v2811 = vunpack.c.l.s4 1934713408
        %v2812 = vunpack.c.0.s8 %v2811
        %v2813 = vlaneseq
        %v2814 = vshrl.u32 %v2813, 7
        %v2815 = vsub.s32 %v2812, %v2814
        %v2816 = vrot.slane %v2808, %v2815
        %v2818 = vunpack.c.l.s4 1934713408
        %v2819 = vunpack.c.0.s8 %v2818
        %v2820 = vlaneseq
        %v2821 = vshrl.u32 %v2820, 7
        %v2822 = vsub.s32 %v2819, %v2821
        %v2823 = vrot.slane %v2809, %v2822
        %v2824 = vcombine.low %v2800, %v2816
        %v2825 = vcombine.high %v2800, %v2816
        %v2826 = vcombine.low %v2807, %v2823
        %v2827 = vcombine.high %v2807, %v2823
        %2829 = vrot.lane.b32.xlu0 %v1292, 120
        %v2830 = vpop.permute.xlu0 %2829
        %2832 = vrot.lane.b32.xlu0 %v1292, 112
        %v2833 = vpop.permute.xlu0 %2832
        %2835 = vrot.lane.b32.xlu0 %v1292, 104
        %v2836 = vpop.permute.xlu0 %2835
        %v2838 = vcombine.low %v1292, %v2833
        %v2839 = vcombine.high %v1292, %v2833
        %v2841 = vunpack.c.l.s4 1983009808
        %v2842 = vunpack.c.0.s8 %v2841
        %v2843 = vlaneseq
        %v2844 = vshrl.u32 %v2843, 7
        %v2845 = vsub.s32 %v2842, %v2844
        %v2846 = vrot.slane %v2838, %v2845
        %v2848 = vunpack.c.l.s4 1983009808
        %v2849 = vunpack.c.0.s8 %v2848
        %v2850 = vlaneseq
        %v2851 = vshrl.u32 %v2850, 7
        %v2852 = vsub.s32 %v2849, %v2851
        %v2853 = vrot.slane %v2839, %v2852
        %v2854 = vcombine.low %v2830, %v2836
        %v2855 = vcombine.high %v2830, %v2836
        %v2857 = vunpack.c.l.s4 1983009808
        %v2858 = vunpack.c.0.s8 %v2857
        %v2859 = vlaneseq
        %v2860 = vshrl.u32 %v2859, 7
        %v2861 = vsub.s32 %v2858, %v2860
        %v2862 = vrot.slane %v2854, %v2861
        %v2864 = vunpack.c.l.s4 1983009808
        %v2865 = vunpack.c.0.s8 %v2864
        %v2866 = vlaneseq
        %v2867 = vshrl.u32 %v2866, 7
        %v2868 = vsub.s32 %v2865, %v2867
        %v2869 = vrot.slane %v2855, %v2868
        %v2870 = vcombine.low %v2846, %v2862
        %v2871 = vcombine.high %v2846, %v2862
        %v2873 = vunpack.c.l.s4 1934713408
        %v2874 = vunpack.c.0.s8 %v2873
        %v2875 = vlaneseq
        %v2876 = vshrl.u32 %v2875, 7
        %v2877 = vsub.s32 %v2874, %v2876
        %v2878 = vrot.slane %v2870, %v2877
        %v2880 = vunpack.c.l.s4 1934713408
        %v2881 = vunpack.c.0.s8 %v2880
        %v2882 = vlaneseq
        %v2883 = vshrl.u32 %v2882, 7
        %v2884 = vsub.s32 %v2881, %v2883
        %v2885 = vrot.slane %v2871, %v2884
        %v2886 = vcombine.low %v2853, %v2869
        %v2887 = vcombine.high %v2853, %v2869
        %v2889 = vunpack.c.l.s4 1934713408
        %v2890 = vunpack.c.0.s8 %v2889
        %v2891 = vlaneseq
        %v2892 = vshrl.u32 %v2891, 7
        %v2893 = vsub.s32 %v2890, %v2892
        %v2894 = vrot.slane %v2886, %v2893
        %v2896 = vunpack.c.l.s4 1934713408
        %v2897 = vunpack.c.0.s8 %v2896
        %v2898 = vlaneseq
        %v2899 = vshrl.u32 %v2898, 7
        %v2900 = vsub.s32 %v2897, %v2899
        %v2901 = vrot.slane %v2887, %v2900
        %v2902 = vcombine.high %v2878, 0.0
        %v2903 = vcombine.high %v2885, 0.0
        %v2904 = vcombine.high %v2894, 0.0
        %v2905 = vcombine.high %v2901, 0.0
        %v2906 = vcombine.low %v2878, %v2885
        %v2908 = vunpack.c.l.s4 1983009808
        %v2909 = vunpack.c.0.s8 %v2908
        %v2910 = vlaneseq
        %v2911 = vshrl.u32 %v2910, 7
        %v2912 = vsub.s32 %v2909, %v2911
        %v2913 = vrot.slane %v2906, %v2912
        %v2914 = vcombine.low %v2902, %v2903
        %v2916 = vunpack.c.l.s4 1983009808
        %v2917 = vunpack.c.0.s8 %v2916
        %v2918 = vlaneseq
        %v2919 = vshrl.u32 %v2918, 7
        %v2920 = vsub.s32 %v2917, %v2919
        %v2921 = vrot.slane %v2914, %v2920
        %v2922 = vcombine.low %v2894, %v2901
        %v2924 = vunpack.c.l.s4 1983009808
        %v2925 = vunpack.c.0.s8 %v2924
        %v2926 = vlaneseq
        %v2927 = vshrl.u32 %v2926, 7
        %v2928 = vsub.s32 %v2925, %v2927
        %v2929 = vrot.slane %v2922, %v2928
        %v2930 = vcombine.low %v2904, %v2905
        %v2932 = vunpack.c.l.s4 1983009808
        %v2933 = vunpack.c.0.s8 %v2932
        %v2934 = vlaneseq
        %v2935 = vshrl.u32 %v2934, 7
        %v2936 = vsub.s32 %v2933, %v2935
        %v2937 = vrot.slane %v2930, %v2936
        %v2938 = vcombine.low %v2913, %v2921
        %v2939 = vcombine.high %v2913, %v2921
        %v2941 = vunpack.c.l.s4 1934713408
        %v2942 = vunpack.c.0.s8 %v2941
        %v2943 = vlaneseq
        %v2944 = vshrl.u32 %v2943, 7
        %v2945 = vsub.s32 %v2942, %v2944
        %v2946 = vrot.slane %v2938, %v2945
        %v2948 = vunpack.c.l.s4 1934713408
        %v2949 = vunpack.c.0.s8 %v2948
        %v2950 = vlaneseq
        %v2951 = vshrl.u32 %v2950, 7
        %v2952 = vsub.s32 %v2949, %v2951
        %v2953 = vrot.slane %v2939, %v2952
        %v2954 = vcombine.low %v2929, %v2937
        %v2955 = vcombine.high %v2929, %v2937
        %v2957 = vunpack.c.l.s4 1934713408
        %v2958 = vunpack.c.0.s8 %v2957
        %v2959 = vlaneseq
        %v2960 = vshrl.u32 %v2959, 7
        %v2961 = vsub.s32 %v2958, %v2960
        %v2962 = vrot.slane %v2954, %v2961
        %v2964 = vunpack.c.l.s4 1934713408
        %v2965 = vunpack.c.0.s8 %v2964
        %v2966 = vlaneseq
        %v2967 = vshrl.u32 %v2966, 7
        %v2968 = vsub.s32 %v2965, %v2967
        %v2969 = vrot.slane %v2955, %v2968
        %v2970 = vcombine.low %v2946, %v2962
        %v2971 = vcombine.high %v2946, %v2962
        %v2972 = vcombine.low %v2953, %v2969
        %v2973 = vcombine.high %v2953, %v2969
        %v2975 = vsel %vm1738, %v2678, 0
        %v2978 = vsel %vm1738, %v2824, 0
        %2980 = vmatprep.subr.mxu0 0.0
        %2981 = vmatpush1.xpose.msra.mxu0 %v2978
        %2982 = vmatprep.subr.mxu0 0.0
        %2983 = vmatpush1.xpose.msra.mxu0 0.0
        %2984 = vmatprep.subr.mxu0 0.0
        %2985 = vmatpush1.xpose.msra.mxu0 0.0
        %2986 = vmatprep.subr.mxu0 0.0
        %2987 = vmatpush1.xpose.msra.mxu0 0.0
        %2988 = vmatprep.subr.mxu0 0.0
        %2989 = vmatpush1.xpose.msra.mxu0 0.0
        %2990 = vmatprep.subr.mxu0 0.0
        %2991 = vmatpush1.xpose.msra.mxu0 0.0
        %2992 = vmatprep.subr.mxu0 0.0
        %2993 = vmatpush1.xpose.msra.mxu0 0.0
        %2994 = vmatprep.subr.mxu0 0.0
        %2995 = vmatpush1.xpose.msra.mxu0 0.0
        %2996 = vmatprep.subr.mxu0 0.0
        %2997 = vmatpush1.xpose.msra.mxu0 0.0
        %2998 = vmatprep.subr.mxu0 0.0
        %2999 = vmatpush1.xpose.msra.mxu0 0.0
        %3000 = vmatprep.subr.mxu0 0.0
        %3001 = vmatpush1.xpose.msra.mxu0 0.0
        %3002 = vmatprep.subr.mxu0 0.0
        %3003 = vmatpush1.xpose.msra.mxu0 0.0
        %3004 = vmatprep.subr.mxu0 0.0
        %3005 = vmatpush1.xpose.msra.mxu0 0.0
        %3006 = vmatprep.subr.mxu0 0.0
        %3007 = vmatpush1.xpose.msra.mxu0 0.0
        %3008 = vmatprep.subr.mxu0 0.0
        %3009 = vmatpush1.xpose.msra.mxu0 0.0
        %3010 = vmatprep.subr.mxu0 0.0
        %3011 = vmatpush1.xpose.msra.mxu0 0.0
        %3012 = vmatprep.subr.mxu0 0.0
        %3013 = vmatpush1.xpose.msra.mxu0 0.0
        %3014 = vmatprep.subr.mxu0 0.0
        %3015 = vmatpush1.xpose.msra.mxu0 0.0
        %3016 = vmatprep.subr.mxu0 0.0
        %3017 = vmatpush1.xpose.msra.mxu0 0.0
        %3018 = vmatprep.subr.mxu0 0.0
        %3019 = vmatpush1.xpose.msra.mxu0 0.0
        %3020 = vmatprep.subr.mxu0 0.0
        %3021 = vmatpush1.xpose.msra.mxu0 0.0
        %3022 = vmatprep.subr.mxu0 0.0
        %3023 = vmatpush1.xpose.msra.mxu0 0.0
        %3024 = vmatprep.subr.mxu0 0.0
        %3025 = vmatpush1.xpose.msra.mxu0 0.0
        %3026 = vmatprep.subr.mxu0 0.0
        %3027 = vmatpush1.xpose.msra.mxu0 0.0
        %3028 = vmatprep.subr.mxu0 0.0
        %3029 = vmatpush1.xpose.msra.mxu0 0.0
        %3030 = vmatprep.subr.mxu0 0.0
        %3031 = vmatpush1.xpose.msra.mxu0 0.0
        %3032 = vmatprep.subr.mxu0 0.0
        %3033 = vmatpush1.xpose.msra.mxu0 0.0
        %3034 = vmatprep.subr.mxu0 0.0
        %3035 = vmatpush1.xpose.msra.mxu0 0.0
        %3036 = vmatprep.subr.mxu0 0.0
        %3037 = vmatpush1.xpose.msra.mxu0 0.0
        %3038 = vmatprep.subr.mxu0 0.0
        %3039 = vmatpush1.xpose.msra.mxu0 0.0
        %3040 = vmatprep.subr.mxu0 0.0
        %3041 = vmatpush1.xpose.msra.mxu0 0.0
        %3042 = vmatprep.subr.mxu0 0.0
        %3043 = vmatpush1.xpose.msra.mxu0 0.0
        %3044 = vmatprep.mubr.f32.mxu0 0.0
        %3045 = vmatmul.mubr.f32.gmra.mrb[0].mxu0 %v2975
        %v3046 = vpop.f32.mrb[0].mxu0
        %v3047 = vadd.f32 0.0, %v3046
        %v3048 = vpop.f32.mrb[0].mxu0
        %3049 = vdwg.mxu0
        %v3051 = vsel %vm1738, %v2679, 0
        %v3054 = vsel %vm1738, %v2825, 0
        %3056 = vmatprep.subr.mxu0 0.0
        %3057 = vmatpush1.xpose.msra.mxu0 %v3054
        %3058 = vmatprep.subr.mxu0 0.0
        %3059 = vmatpush1.xpose.msra.mxu0 0.0
        %3060 = vmatprep.subr.mxu0 0.0
        %3061 = vmatpush1.xpose.msra.mxu0 0.0
        %3062 = vmatprep.subr.mxu0 0.0
        %3063 = vmatpush1.xpose.msra.mxu0 0.0
        %3064 = vmatprep.subr.mxu0 0.0
        %3065 = vmatpush1.xpose.msra.mxu0 0.0
        %3066 = vmatprep.subr.mxu0 0.0
        %3067 = vmatpush1.xpose.msra.mxu0 0.0
        %3068 = vmatprep.subr.mxu0 0.0
        %3069 = vmatpush1.xpose.msra.mxu0 0.0
        %3070 = vmatprep.subr.mxu0 0.0
        %3071 = vmatpush1.xpose.msra.mxu0 0.0
        %3072 = vmatprep.subr.mxu0 0.0
        %3073 = vmatpush1.xpose.msra.mxu0 0.0
        %3074 = vmatprep.subr.mxu0 0.0
        %3075 = vmatpush1.xpose.msra.mxu0 0.0
        %3076 = vmatprep.subr.mxu0 0.0
        %3077 = vmatpush1.xpose.msra.mxu0 0.0
        %3078 = vmatprep.subr.mxu0 0.0
        %3079 = vmatpush1.xpose.msra.mxu0 0.0
        %3080 = vmatprep.subr.mxu0 0.0
        %3081 = vmatpush1.xpose.msra.mxu0 0.0
        %3082 = vmatprep.subr.mxu0 0.0
        %3083 = vmatpush1.xpose.msra.mxu0 0.0
        %3084 = vmatprep.subr.mxu0 0.0
        %3085 = vmatpush1.xpose.msra.mxu0 0.0
        %3086 = vmatprep.subr.mxu0 0.0
        %3087 = vmatpush1.xpose.msra.mxu0 0.0
        %3088 = vmatprep.subr.mxu0 0.0
        %3089 = vmatpush1.xpose.msra.mxu0 0.0
        %3090 = vmatprep.subr.mxu0 0.0
        %3091 = vmatpush1.xpose.msra.mxu0 0.0
        %3092 = vmatprep.subr.mxu0 0.0
        %3093 = vmatpush1.xpose.msra.mxu0 0.0
        %3094 = vmatprep.subr.mxu0 0.0
        %3095 = vmatpush1.xpose.msra.mxu0 0.0
        %3096 = vmatprep.subr.mxu0 0.0
        %3097 = vmatpush1.xpose.msra.mxu0 0.0
        %3098 = vmatprep.subr.mxu0 0.0
        %3099 = vmatpush1.xpose.msra.mxu0 0.0
        %3100 = vmatprep.subr.mxu0 0.0
        %3101 = vmatpush1.xpose.msra.mxu0 0.0
        %3102 = vmatprep.subr.mxu0 0.0
        %3103 = vmatpush1.xpose.msra.mxu0 0.0
        %3104 = vmatprep.subr.mxu0 0.0
        %3105 = vmatpush1.xpose.msra.mxu0 0.0
        %3106 = vmatprep.subr.mxu0 0.0
        %3107 = vmatpush1.xpose.msra.mxu0 0.0
        %3108 = vmatprep.subr.mxu0 0.0
        %3109 = vmatpush1.xpose.msra.mxu0 0.0
        %3110 = vmatprep.subr.mxu0 0.0
        %3111 = vmatpush1.xpose.msra.mxu0 0.0
        %3112 = vmatprep.subr.mxu0 0.0
        %3113 = vmatpush1.xpose.msra.mxu0 0.0
        %3114 = vmatprep.subr.mxu0 0.0
        %3115 = vmatpush1.xpose.msra.mxu0 0.0
        %3116 = vmatprep.subr.mxu0 0.0
        %3117 = vmatpush1.xpose.msra.mxu0 0.0
        %3118 = vmatprep.subr.mxu0 0.0
        %3119 = vmatpush1.xpose.msra.mxu0 0.0
        %3120 = vmatprep.mubr.f32.mxu0 0.0
        %3121 = vmatmul.mubr.f32.gmra.mrb[0].mxu0 %v3051
        %v3122 = vpop.f32.mrb[0].mxu0
        %v3123 = vadd.f32 0.0, %v3122
        %v3124 = vpop.f32.mrb[0].mxu0
        %3125 = vdwg.mxu0
        %v3127 = vsel %vm1738, %v2680, 0
        %v3130 = vsel %vm1738, %v2826, 0
        %3132 = vmatprep.subr.mxu0 0.0
        %3133 = vmatpush1.xpose.msra.mxu0 %v3130
        %3134 = vmatprep.subr.mxu0 0.0
        %3135 = vmatpush1.xpose.msra.mxu0 0.0
        %3136 = vmatprep.subr.mxu0 0.0
        %3137 = vmatpush1.xpose.msra.mxu0 0.0
        %3138 = vmatprep.subr.mxu0 0.0
        %3139 = vmatpush1.xpose.msra.mxu0 0.0
        %3140 = vmatprep.subr.mxu0 0.0
        %3141 = vmatpush1.xpose.msra.mxu0 0.0
        %3142 = vmatprep.subr.mxu0 0.0
        %3143 = vmatpush1.xpose.msra.mxu0 0.0
        %3144 = vmatprep.subr.mxu0 0.0
        %3145 = vmatpush1.xpose.msra.mxu0 0.0
        %3146 = vmatprep.subr.mxu0 0.0
        %3147 = vmatpush1.xpose.msra.mxu0 0.0
        %3148 = vmatprep.subr.mxu0 0.0
        %3149 = vmatpush1.xpose.msra.mxu0 0.0
        %3150 = vmatprep.subr.mxu0 0.0
        %3151 = vmatpush1.xpose.msra.mxu0 0.0
        %3152 = vmatprep.subr.mxu0 0.0
        %3153 = vmatpush1.xpose.msra.mxu0 0.0
        %3154 = vmatprep.subr.mxu0 0.0
        %3155 = vmatpush1.xpose.msra.mxu0 0.0
        %3156 = vmatprep.subr.mxu0 0.0
        %3157 = vmatpush1.xpose.msra.mxu0 0.0
        %3158 = vmatprep.subr.mxu0 0.0
        %3159 = vmatpush1.xpose.msra.mxu0 0.0
        %3160 = vmatprep.subr.mxu0 0.0
        %3161 = vmatpush1.xpose.msra.mxu0 0.0
        %3162 = vmatprep.subr.mxu0 0.0
        %3163 = vmatpush1.xpose.msra.mxu0 0.0
        %3164 = vmatprep.subr.mxu0 0.0
        %3165 = vmatpush1.xpose.msra.mxu0 0.0
        %3166 = vmatprep.subr.mxu0 0.0
        %3167 = vmatpush1.xpose.msra.mxu0 0.0
        %3168 = vmatprep.subr.mxu0 0.0
        %3169 = vmatpush1.xpose.msra.mxu0 0.0
        %3170 = vmatprep.subr.mxu0 0.0
        %3171 = vmatpush1.xpose.msra.mxu0 0.0
        %3172 = vmatprep.subr.mxu0 0.0
        %3173 = vmatpush1.xpose.msra.mxu0 0.0
        %3174 = vmatprep.subr.mxu0 0.0
        %3175 = vmatpush1.xpose.msra.mxu0 0.0
        %3176 = vmatprep.subr.mxu0 0.0
        %3177 = vmatpush1.xpose.msra.mxu0 0.0
        %3178 = vmatprep.subr.mxu0 0.0
        %3179 = vmatpush1.xpose.msra.mxu0 0.0
        %3180 = vmatprep.subr.mxu0 0.0
        %3181 = vmatpush1.xpose.msra.mxu0 0.0
        %3182 = vmatprep.subr.mxu0 0.0
        %3183 = vmatpush1.xpose.msra.mxu0 0.0
        %3184 = vmatprep.subr.mxu0 0.0
        %3185 = vmatpush1.xpose.msra.mxu0 0.0
        %3186 = vmatprep.subr.mxu0 0.0
        %3187 = vmatpush1.xpose.msra.mxu0 0.0
        %3188 = vmatprep.subr.mxu0 0.0
        %3189 = vmatpush1.xpose.msra.mxu0 0.0
        %3190 = vmatprep.subr.mxu0 0.0
        %3191 = vmatpush1.xpose.msra.mxu0 0.0
        %3192 = vmatprep.subr.mxu0 0.0
        %3193 = vmatpush1.xpose.msra.mxu0 0.0
        %3194 = vmatprep.subr.mxu0 0.0
        %3195 = vmatpush1.xpose.msra.mxu0 0.0
        %3196 = vmatprep.mubr.f32.mxu0 0.0
        %3197 = vmatmul.mubr.f32.gmra.mrb[0].mxu0 %v3127
        %v3198 = vpop.f32.mrb[0].mxu0
        %v3199 = vadd.f32 0.0, %v3198
        %v3200 = vpop.f32.mrb[0].mxu0
        %3201 = vdwg.mxu0
        %v3203 = vsel %vm1738, %v2681, 0
        %v3206 = vsel %vm1738, %v2827, 0
        %3208 = vmatprep.subr.mxu0 0.0
        %3209 = vmatpush1.xpose.msra.mxu0 %v3206
        %3210 = vmatprep.subr.mxu0 0.0
        %3211 = vmatpush1.xpose.msra.mxu0 0.0
        %3212 = vmatprep.subr.mxu0 0.0
        %3213 = vmatpush1.xpose.msra.mxu0 0.0
        %3214 = vmatprep.subr.mxu0 0.0
        %3215 = vmatpush1.xpose.msra.mxu0 0.0
        %3216 = vmatprep.subr.mxu0 0.0
        %3217 = vmatpush1.xpose.msra.mxu0 0.0
        %3218 = vmatprep.subr.mxu0 0.0
        %3219 = vmatpush1.xpose.msra.mxu0 0.0
        %3220 = vmatprep.subr.mxu0 0.0
        %3221 = vmatpush1.xpose.msra.mxu0 0.0
        %3222 = vmatprep.subr.mxu0 0.0
        %3223 = vmatpush1.xpose.msra.mxu0 0.0
        %3224 = vmatprep.subr.mxu0 0.0
        %3225 = vmatpush1.xpose.msra.mxu0 0.0
        %3226 = vmatprep.subr.mxu0 0.0
        %3227 = vmatpush1.xpose.msra.mxu0 0.0
        %3228 = vmatprep.subr.mxu0 0.0
        %3229 = vmatpush1.xpose.msra.mxu0 0.0
        %3230 = vmatprep.subr.mxu0 0.0
        %3231 = vmatpush1.xpose.msra.mxu0 0.0
        %3232 = vmatprep.subr.mxu0 0.0
        %3233 = vmatpush1.xpose.msra.mxu0 0.0
        %3234 = vmatprep.subr.mxu0 0.0
        %3235 = vmatpush1.xpose.msra.mxu0 0.0
        %3236 = vmatprep.subr.mxu0 0.0
        %3237 = vmatpush1.xpose.msra.mxu0 0.0
        %3238 = vmatprep.subr.mxu0 0.0
        %3239 = vmatpush1.xpose.msra.mxu0 0.0
        %3240 = vmatprep.subr.mxu0 0.0
        %3241 = vmatpush1.xpose.msra.mxu0 0.0
        %3242 = vmatprep.subr.mxu0 0.0
        %3243 = vmatpush1.xpose.msra.mxu0 0.0
        %3244 = vmatprep.subr.mxu0 0.0
        %3245 = vmatpush1.xpose.msra.mxu0 0.0
        %3246 = vmatprep.subr.mxu0 0.0
        %3247 = vmatpush1.xpose.msra.mxu0 0.0
        %3248 = vmatprep.subr.mxu0 0.0
        %3249 = vmatpush1.xpose.msra.mxu0 0.0
        %3250 = vmatprep.subr.mxu0 0.0
        %3251 = vmatpush1.xpose.msra.mxu0 0.0
        %3252 = vmatprep.subr.mxu0 0.0
        %3253 = vmatpush1.xpose.msra.mxu0 0.0
        %3254 = vmatprep.subr.mxu0 0.0
        %3255 = vmatpush1.xpose.msra.mxu0 0.0
        %3256 = vmatprep.subr.mxu0 0.0
        %3257 = vmatpush1.xpose.msra.mxu0 0.0
        %3258 = vmatprep.subr.mxu0 0.0
        %3259 = vmatpush1.xpose.msra.mxu0 0.0
        %3260 = vmatprep.subr.mxu0 0.0
        %3261 = vmatpush1.xpose.msra.mxu0 0.0
        %3262 = vmatprep.subr.mxu0 0.0
        %3263 = vmatpush1.xpose.msra.mxu0 0.0
        %3264 = vmatprep.subr.mxu0 0.0
        %3265 = vmatpush1.xpose.msra.mxu0 0.0
        %3266 = vmatprep.subr.mxu0 0.0
        %3267 = vmatpush1.xpose.msra.mxu0 0.0
        %3268 = vmatprep.subr.mxu0 0.0
        %3269 = vmatpush1.xpose.msra.mxu0 0.0
        %3270 = vmatprep.subr.mxu0 0.0
        %3271 = vmatpush1.xpose.msra.mxu0 0.0
        %3272 = vmatprep.mubr.f32.mxu0 0.0
        %3273 = vmatmul.mubr.f32.gmra.mrb[0].mxu0 %v3203
        %v3274 = vpop.f32.mrb[0].mxu0
        %v3275 = vadd.f32 0.0, %v3274
        %v3276 = vpop.f32.mrb[0].mxu0
        %3277 = vdwg.mxu0
        %v3278 = vmul.f32 %v3047, 0.35355338
        %v3279 = vmul.f32 %v3123, 0.35355338
        %v3280 = vmul.f32 %v3199, 0.35355338
        %v3281 = vmul.f32 %v3275, 0.35355338
        %v3282 = vsel %vm1738, %v3278, -inf
        %3283 = vmax.xlane.f32.xlu0 %v3282
        %v3284 = vpop.xlane.xlu0 %3283
        %v3285 = vsel %vm1738, %v3279, -inf
        %3286 = vmax.xlane.f32.xlu0 %v3285
        %v3287 = vpop.xlane.xlu0 %3286
        %v3288 = vsel %vm1738, %v3280, -inf
        %3289 = vmax.xlane.f32.xlu0 %v3288
        %v3290 = vpop.xlane.xlu0 %3289
        %v3291 = vsel %vm1738, %v3281, -inf
        %3292 = vmax.xlane.f32.xlu0 %v3291
        %v3293 = vpop.xlane.xlu0 %3292
        %v3294 = vsub.f32 %v3278, %v3284
        %v3295 = vsub.f32 %v3279, %v3287
        %v3296 = vsub.f32 %v3280, %v3290
        %v3297 = vsub.f32 %v3281, %v3293
        %v3298 = vmul.f32 %v3294, 1.442695
        %v3299 = vpow.pop %v3298
        %v3300 = vmul.f32 %v3295, 1.442695
        %v3301 = vpow.pop %v3300
        %v3302 = vmul.f32 %v3296, 1.442695
        %v3303 = vpow.pop %v3302
        %v3304 = vmul.f32 %v3297, 1.442695
        %v3305 = vpow.pop %v3304
        %v3306 = vsel %vm1738, %v3299, 0.0
        %3307 = vadd.xlane.f32.xlu0 %v3306
        %v3308 = vpop.xlane.xlu0 %3307
        %v3309 = vsel %vm1738, %v3301, 0.0
        %3310 = vadd.xlane.f32.xlu0 %v3309
        %v3311 = vpop.xlane.xlu0 %3310
        %v3312 = vsel %vm1738, %v3303, 0.0
        %3313 = vadd.xlane.f32.xlu0 %v3312
        %v3314 = vpop.xlane.xlu0 %3313
        %v3315 = vsel %vm1738, %v3305, 0.0
        %3316 = vadd.xlane.f32.xlu0 %v3315
        %v3317 = vpop.xlane.xlu0 %3316
        %v3318 = vrcp.pop %v3308
        %v3319 = vmul.f32 %v3299, %v3318
        %v3320 = vrcp.pop %v3311
        %v3321 = vmul.f32 %v3301, %v3320
        %v3322 = vrcp.pop %v3314
        %v3323 = vmul.f32 %v3303, %v3322
        %v3324 = vrcp.pop %v3317
        %v3325 = vmul.f32 %v3305, %v3324
        %v3327 = vsel %vm1738, %v3319, 0
        %3329 = vmatprep.subr.mxu0 0.0
        %3330 = vmatpush1.msra.mxu0 %v2970
        %3331 = vmatprep.subr.mxu0 0.0
        %3332 = vmatpush1.msra.mxu0 0.0
        %3333 = vmatprep.subr.mxu0 0.0
        %3334 = vmatpush1.msra.mxu0 0.0
        %3335 = vmatprep.subr.mxu0 0.0
        %3336 = vmatpush1.msra.mxu0 0.0
        %3337 = vmatprep.subr.mxu0 0.0
        %3338 = vmatpush1.msra.mxu0 0.0
        %3339 = vmatprep.subr.mxu0 0.0
        %3340 = vmatpush1.msra.mxu0 0.0
        %3341 = vmatprep.subr.mxu0 0.0
        %3342 = vmatpush1.msra.mxu0 0.0
        %3343 = vmatprep.subr.mxu0 0.0
        %3344 = vmatpush1.msra.mxu0 0.0
        %3345 = vmatprep.subr.mxu0 0.0
        %3346 = vmatpush1.msra.mxu0 0.0
        %3347 = vmatprep.subr.mxu0 0.0
        %3348 = vmatpush1.msra.mxu0 0.0
        %3349 = vmatprep.subr.mxu0 0.0
        %3350 = vmatpush1.msra.mxu0 0.0
        %3351 = vmatprep.subr.mxu0 0.0
        %3352 = vmatpush1.msra.mxu0 0.0
        %3353 = vmatprep.subr.mxu0 0.0
        %3354 = vmatpush1.msra.mxu0 0.0
        %3355 = vmatprep.subr.mxu0 0.0
        %3356 = vmatpush1.msra.mxu0 0.0
        %3357 = vmatprep.subr.mxu0 0.0
        %3358 = vmatpush1.msra.mxu0 0.0
        %3359 = vmatprep.subr.mxu0 0.0
        %3360 = vmatpush1.msra.mxu0 0.0
        %3361 = vmatprep.subr.mxu0 0.0
        %3362 = vmatpush1.msra.mxu0 0.0
        %3363 = vmatprep.subr.mxu0 0.0
        %3364 = vmatpush1.msra.mxu0 0.0
        %3365 = vmatprep.subr.mxu0 0.0
        %3366 = vmatpush1.msra.mxu0 0.0
        %3367 = vmatprep.subr.mxu0 0.0
        %3368 = vmatpush1.msra.mxu0 0.0
        %3369 = vmatprep.subr.mxu0 0.0
        %3370 = vmatpush1.msra.mxu0 0.0
        %3371 = vmatprep.subr.mxu0 0.0
        %3372 = vmatpush1.msra.mxu0 0.0
        %3373 = vmatprep.subr.mxu0 0.0
        %3374 = vmatpush1.msra.mxu0 0.0
        %3375 = vmatprep.subr.mxu0 0.0
        %3376 = vmatpush1.msra.mxu0 0.0
        %3377 = vmatprep.subr.mxu0 0.0
        %3378 = vmatpush1.msra.mxu0 0.0
        %3379 = vmatprep.subr.mxu0 0.0
        %3380 = vmatpush1.msra.mxu0 0.0
        %3381 = vmatprep.subr.mxu0 0.0
        %3382 = vmatpush1.msra.mxu0 0.0
        %3383 = vmatprep.subr.mxu0 0.0
        %3384 = vmatpush1.msra.mxu0 0.0
        %3385 = vmatprep.subr.mxu0 0.0
        %3386 = vmatpush1.msra.mxu0 0.0
        %3387 = vmatprep.subr.mxu0 0.0
        %3388 = vmatpush1.msra.mxu0 0.0
        %3389 = vmatprep.subr.mxu0 0.0
        %3390 = vmatpush1.msra.mxu0 0.0
        %3391 = vmatprep.subr.mxu0 0.0
        %3392 = vmatpush1.msra.mxu0 0.0
        %3393 = vmatprep.mubr.f32.mxu0 0.0
        %3394 = vmatmul.mubr.f32.gmra.mrb[0].mxu0 %v3327
        %v3395 = vpop.f32.mrb[0].mxu0
        %v3396 = vadd.f32 0.0, %v3395
        %v3397 = vpop.f32.mrb[0].mxu0
        %3398 = vdwg.mxu0
        %v3400 = vsel %vm1738, %v3321, 0
        %3402 = vmatprep.subr.mxu0 0.0
        %3403 = vmatpush1.msra.mxu0 %v2971
        %3404 = vmatprep.subr.mxu0 0.0
        %3405 = vmatpush1.msra.mxu0 0.0
        %3406 = vmatprep.subr.mxu0 0.0
        %3407 = vmatpush1.msra.mxu0 0.0
        %3408 = vmatprep.subr.mxu0 0.0
        %3409 = vmatpush1.msra.mxu0 0.0
        %3410 = vmatprep.subr.mxu0 0.0
        %3411 = vmatpush1.msra.mxu0 0.0
        %3412 = vmatprep.subr.mxu0 0.0
        %3413 = vmatpush1.msra.mxu0 0.0
        %3414 = vmatprep.subr.mxu0 0.0
        %3415 = vmatpush1.msra.mxu0 0.0
        %3416 = vmatprep.subr.mxu0 0.0
        %3417 = vmatpush1.msra.mxu0 0.0
        %3418 = vmatprep.subr.mxu0 0.0
        %3419 = vmatpush1.msra.mxu0 0.0
        %3420 = vmatprep.subr.mxu0 0.0
        %3421 = vmatpush1.msra.mxu0 0.0
        %3422 = vmatprep.subr.mxu0 0.0
        %3423 = vmatpush1.msra.mxu0 0.0
        %3424 = vmatprep.subr.mxu0 0.0
        %3425 = vmatpush1.msra.mxu0 0.0
        %3426 = vmatprep.subr.mxu0 0.0
        %3427 = vmatpush1.msra.mxu0 0.0
        %3428 = vmatprep.subr.mxu0 0.0
        %3429 = vmatpush1.msra.mxu0 0.0
        %3430 = vmatprep.subr.mxu0 0.0
        %3431 = vmatpush1.msra.mxu0 0.0
        %3432 = vmatprep.subr.mxu0 0.0
        %3433 = vmatpush1.msra.mxu0 0.0
        %3434 = vmatprep.subr.mxu0 0.0
        %3435 = vmatpush1.msra.mxu0 0.0
        %3436 = vmatprep.subr.mxu0 0.0
        %3437 = vmatpush1.msra.mxu0 0.0
        %3438 = vmatprep.subr.mxu0 0.0
        %3439 = vmatpush1.msra.mxu0 0.0
        %3440 = vmatprep.subr.mxu0 0.0
        %3441 = vmatpush1.msra.mxu0 0.0
        %3442 = vmatprep.subr.mxu0 0.0
        %3443 = vmatpush1.msra.mxu0 0.0
        %3444 = vmatprep.subr.mxu0 0.0
        %3445 = vmatpush1.msra.mxu0 0.0
        %3446 = vmatprep.subr.mxu0 0.0
        %3447 = vmatpush1.msra.mxu0 0.0
        %3448 = vmatprep.subr.mxu0 0.0
        %3449 = vmatpush1.msra.mxu0 0.0
        %3450 = vmatprep.subr.mxu0 0.0
        %3451 = vmatpush1.msra.mxu0 0.0
        %3452 = vmatprep.subr.mxu0 0.0
        %3453 = vmatpush1.msra.mxu0 0.0
        %3454 = vmatprep.subr.mxu0 0.0
        %3455 = vmatpush1.msra.mxu0 0.0
        %3456 = vmatprep.subr.mxu0 0.0
        %3457 = vmatpush1.msra.mxu0 0.0
        %3458 = vmatprep.subr.mxu0 0.0
        %3459 = vmatpush1.msra.mxu0 0.0
        %3460 = vmatprep.subr.mxu0 0.0
        %3461 = vmatpush1.msra.mxu0 0.0
        %3462 = vmatprep.subr.mxu0 0.0
        %3463 = vmatpush1.msra.mxu0 0.0
        %3464 = vmatprep.subr.mxu0 0.0
        %3465 = vmatpush1.msra.mxu0 0.0
        %3466 = vmatprep.mubr.f32.mxu0 0.0
        %3467 = vmatmul.mubr.f32.gmra.mrb[0].mxu0 %v3400
        %v3468 = vpop.f32.mrb[0].mxu0
        %v3469 = vadd.f32 0.0, %v3468
        %v3470 = vpop.f32.mrb[0].mxu0
        %3471 = vdwg.mxu0
        %v3473 = vsel %vm1738, %v3323, 0
        %3475 = vmatprep.subr.mxu0 0.0
        %3476 = vmatpush1.msra.mxu0 %v2972
        %3477 = vmatprep.subr.mxu0 0.0
        %3478 = vmatpush1.msra.mxu0 0.0
        %3479 = vmatprep.subr.mxu0 0.0
        %3480 = vmatpush1.msra.mxu0 0.0
        %3481 = vmatprep.subr.mxu0 0.0
        %3482 = vmatpush1.msra.mxu0 0.0
        %3483 = vmatprep.subr.mxu0 0.0
        %3484 = vmatpush1.msra.mxu0 0.0
        %3485 = vmatprep.subr.mxu0 0.0
        %3486 = vmatpush1.msra.mxu0 0.0
        %3487 = vmatprep.subr.mxu0 0.0
        %3488 = vmatpush1.msra.mxu0 0.0
        %3489 = vmatprep.subr.mxu0 0.0
        %3490 = vmatpush1.msra.mxu0 0.0
        %3491 = vmatprep.subr.mxu0 0.0
        %3492 = vmatpush1.msra.mxu0 0.0
        %3493 = vmatprep.subr.mxu0 0.0
        %3494 = vmatpush1.msra.mxu0 0.0
        %3495 = vmatprep.subr.mxu0 0.0
        %3496 = vmatpush1.msra.mxu0 0.0
        %3497 = vmatprep.subr.mxu0 0.0
        %3498 = vmatpush1.msra.mxu0 0.0
        %3499 = vmatprep.subr.mxu0 0.0
        %3500 = vmatpush1.msra.mxu0 0.0
        %3501 = vmatprep.subr.mxu0 0.0
        %3502 = vmatpush1.msra.mxu0 0.0
        %3503 = vmatprep.subr.mxu0 0.0
        %3504 = vmatpush1.msra.mxu0 0.0
        %3505 = vmatprep.subr.mxu0 0.0
        %3506 = vmatpush1.msra.mxu0 0.0
        %3507 = vmatprep.subr.mxu0 0.0
        %3508 = vmatpush1.msra.mxu0 0.0
        %3509 = vmatprep.subr.mxu0 0.0
        %3510 = vmatpush1.msra.mxu0 0.0
        %3511 = vmatprep.subr.mxu0 0.0
        %3512 = vmatpush1.msra.mxu0 0.0
        %3513 = vmatprep.subr.mxu0 0.0
        %3514 = vmatpush1.msra.mxu0 0.0
        %3515 = vmatprep.subr.mxu0 0.0
        %3516 = vmatpush1.msra.mxu0 0.0
        %3517 = vmatprep.subr.mxu0 0.0
        %3518 = vmatpush1.msra.mxu0 0.0
        %3519 = vmatprep.subr.mxu0 0.0
        %3520 = vmatpush1.msra.mxu0 0.0
        %3521 = vmatprep.subr.mxu0 0.0
        %3522 = vmatpush1.msra.mxu0 0.0
        %3523 = vmatprep.subr.mxu0 0.0
        %3524 = vmatpush1.msra.mxu0 0.0
        %3525 = vmatprep.subr.mxu0 0.0
        %3526 = vmatpush1.msra.mxu0 0.0
        %3527 = vmatprep.subr.mxu0 0.0
        %3528 = vmatpush1.msra.mxu0 0.0
        %3529 = vmatprep.subr.mxu0 0.0
        %3530 = vmatpush1.msra.mxu0 0.0
        %3531 = vmatprep.subr.mxu0 0.0
        %3532 = vmatpush1.msra.mxu0 0.0
        %3533 = vmatprep.subr.mxu0 0.0
        %3534 = vmatpush1.msra.mxu0 0.0
        %3535 = vmatprep.subr.mxu0 0.0
        %3536 = vmatpush1.msra.mxu0 0.0
        %3537 = vmatprep.subr.mxu0 0.0
        %3538 = vmatpush1.msra.mxu0 0.0
        %3539 = vmatprep.mubr.f32.mxu0 0.0
        %3540 = vmatmul.mubr.f32.gmra.mrb[0].mxu0 %v3473
        %v3541 = vpop.f32.mrb[0].mxu0
        %v3542 = vadd.f32 0.0, %v3541
        %v3543 = vpop.f32.mrb[0].mxu0
        %3544 = vdwg.mxu0
        %v3546 = vsel %vm1738, %v3325, 0
        %3548 = vmatprep.subr.mxu0 0.0
        %3549 = vmatpush1.msra.mxu0 %v2973
        %3550 = vmatprep.subr.mxu0 0.0
        %3551 = vmatpush1.msra.mxu0 0.0
        %3552 = vmatprep.subr.mxu0 0.0
        %3553 = vmatpush1.msra.mxu0 0.0
        %3554 = vmatprep.subr.mxu0 0.0
        %3555 = vmatpush1.msra.mxu0 0.0
        %3556 = vmatprep.subr.mxu0 0.0
        %3557 = vmatpush1.msra.mxu0 0.0
        %3558 = vmatprep.subr.mxu0 0.0
        %3559 = vmatpush1.msra.mxu0 0.0
        %3560 = vmatprep.subr.mxu0 0.0
        %3561 = vmatpush1.msra.mxu0 0.0
        %3562 = vmatprep.subr.mxu0 0.0
        %3563 = vmatpush1.msra.mxu0 0.0
        %3564 = vmatprep.subr.mxu0 0.0
        %3565 = vmatpush1.msra.mxu0 0.0
        %3566 = vmatprep.subr.mxu0 0.0
        %3567 = vmatpush1.msra.mxu0 0.0
        %3568 = vmatprep.subr.mxu0 0.0
        %3569 = vmatpush1.msra.mxu0 0.0
        %3570 = vmatprep.subr.mxu0 0.0
        %3571 = vmatpush1.msra.mxu0 0.0
        %3572 = vmatprep.subr.mxu0 0.0
        %3573 = vmatpush1.msra.mxu0 0.0
        %3574 = vmatprep.subr.mxu0 0.0
        %3575 = vmatpush1.msra.mxu0 0.0
        %3576 = vmatprep.subr.mxu0 0.0
        %3577 = vmatpush1.msra.mxu0 0.0
        %3578 = vmatprep.subr.mxu0 0.0
        %3579 = vmatpush1.msra.mxu0 0.0
        %3580 = vmatprep.subr.mxu0 0.0
        %3581 = vmatpush1.msra.mxu0 0.0
        %3582 = vmatprep.subr.mxu0 0.0
        %3583 = vmatpush1.msra.mxu0 0.0
        %3584 = vmatprep.subr.mxu0 0.0
        %3585 = vmatpush1.msra.mxu0 0.0
        %3586 = vmatprep.subr.mxu0 0.0
        %3587 = vmatpush1.msra.mxu0 0.0
        %3588 = vmatprep.subr.mxu0 0.0
        %3589 = vmatpush1.msra.mxu0 0.0
        %3590 = vmatprep.subr.mxu0 0.0
        %3591 = vmatpush1.msra.mxu0 0.0
        %3592 = vmatprep.subr.mxu0 0.0
        %3593 = vmatpush1.msra.mxu0 0.0
        %3594 = vmatprep.subr.mxu0 0.0
        %3595 = vmatpush1.msra.mxu0 0.0
        %3596 = vmatprep.subr.mxu0 0.0
        %3597 = vmatpush1.msra.mxu0 0.0
        %3598 = vmatprep.subr.mxu0 0.0
        %3599 = vmatpush1.msra.mxu0 0.0
        %3600 = vmatprep.subr.mxu0 0.0
        %3601 = vmatpush1.msra.mxu0 0.0
        %3602 = vmatprep.subr.mxu0 0.0
        %3603 = vmatpush1.msra.mxu0 0.0
        %3604 = vmatprep.subr.mxu0 0.0
        %3605 = vmatpush1.msra.mxu0 0.0
        %3606 = vmatprep.subr.mxu0 0.0
        %3607 = vmatpush1.msra.mxu0 0.0
        %3608 = vmatprep.subr.mxu0 0.0
        %3609 = vmatpush1.msra.mxu0 0.0
        %3610 = vmatprep.subr.mxu0 0.0
        %3611 = vmatpush1.msra.mxu0 0.0
        %3612 = vmatprep.mubr.f32.mxu0 0.0
        %3613 = vmatmul.mubr.f32.gmra.mrb[0].mxu0 %v3546
        %v3614 = vpop.f32.mrb[0].mxu0
        %v3615 = vadd.f32 0.0, %v3614
        %v3616 = vpop.f32.mrb[0].mxu0
        %3617 = vdwg.mxu0
        %v3618 = vcombine.low %v3396, %v3542
        %v3619 = vcombine.high %v3396, %v3542
        %v3621 = vunpack.c.l.s4 1983009808
        %v3622 = vunpack.c.0.s8 %v3621
        %v3623 = vlaneseq
        %v3624 = vshrl.u32 %v3623, 7
        %v3625 = vsub.s32 %v3622, %v3624
        %v3626 = vrot.slane %v3618, %v3625
        %v3628 = vunpack.c.l.s4 1983009808
        %v3629 = vunpack.c.0.s8 %v3628
        %v3630 = vlaneseq
        %v3631 = vshrl.u32 %v3630, 7
        %v3632 = vsub.s32 %v3629, %v3631
        %v3633 = vrot.slane %v3619, %v3632
        %v3634 = vcombine.low %v3469, %v3615
        %v3635 = vcombine.high %v3469, %v3615
        %v3637 = vunpack.c.l.s4 1983009808
        %v3638 = vunpack.c.0.s8 %v3637
        %v3639 = vlaneseq
        %v3640 = vshrl.u32 %v3639, 7
        %v3641 = vsub.s32 %v3638, %v3640
        %v3642 = vrot.slane %v3634, %v3641
        %v3644 = vunpack.c.l.s4 1983009808
        %v3645 = vunpack.c.0.s8 %v3644
        %v3646 = vlaneseq
        %v3647 = vshrl.u32 %v3646, 7
        %v3648 = vsub.s32 %v3645, %v3647
        %v3649 = vrot.slane %v3635, %v3648
        %v3650 = vcombine.low %v3626, %v3642
        %v3651 = vcombine.high %v3626, %v3642
        %v3653 = vunpack.c.l.s4 1934713408
        %v3654 = vunpack.c.0.s8 %v3653
        %v3655 = vlaneseq
        %v3656 = vshrl.u32 %v3655, 7
        %v3657 = vsub.s32 %v3654, %v3656
        %v3658 = vrot.slane %v3650, %v3657
        %v3660 = vunpack.c.l.s4 1934713408
        %v3661 = vunpack.c.0.s8 %v3660
        %v3662 = vlaneseq
        %v3663 = vshrl.u32 %v3662, 7
        %v3664 = vsub.s32 %v3661, %v3663
        %v3665 = vrot.slane %v3651, %v3664
        %v3666 = vcombine.low %v3633, %v3649
        %v3667 = vcombine.high %v3633, %v3649
        %v3669 = vunpack.c.l.s4 1934713408
        %v3670 = vunpack.c.0.s8 %v3669
        %v3671 = vlaneseq
        %v3672 = vshrl.u32 %v3671, 7
        %v3673 = vsub.s32 %v3670, %v3672
        %v3674 = vrot.slane %v3666, %v3673
        %v3676 = vunpack.c.l.s4 1934713408
        %v3677 = vunpack.c.0.s8 %v3676
        %v3678 = vlaneseq
        %v3679 = vshrl.u32 %v3678, 7
        %v3680 = vsub.s32 %v3677, %v3679
        %v3681 = vrot.slane %v3667, %v3680
        %v3682 = vcombine.high %v3658, 0.0
        %v3683 = vcombine.high %v3665, 0.0
        %v3684 = vcombine.high %v3674, 0.0
        %v3685 = vcombine.high %v3681, 0.0
        %v3686 = vcombine.low %v3658, %v3665
        %v3688 = vunpack.c.l.s4 1983009808
        %v3689 = vunpack.c.0.s8 %v3688
        %v3690 = vlaneseq
        %v3691 = vshrl.u32 %v3690, 7
        %v3692 = vsub.s32 %v3689, %v3691
        %v3693 = vrot.slane %v3686, %v3692
        %v3694 = vcombine.low %v3682, %v3683
        %v3696 = vunpack.c.l.s4 1983009808
        %v3697 = vunpack.c.0.s8 %v3696
        %v3698 = vlaneseq
        %v3699 = vshrl.u32 %v3698, 7
        %v3700 = vsub.s32 %v3697, %v3699
        %v3701 = vrot.slane %v3694, %v3700
        %v3702 = vcombine.low %v3674, %v3681
        %v3704 = vunpack.c.l.s4 1983009808
        %v3705 = vunpack.c.0.s8 %v3704
        %v3706 = vlaneseq
        %v3707 = vshrl.u32 %v3706, 7
        %v3708 = vsub.s32 %v3705, %v3707
        %v3709 = vrot.slane %v3702, %v3708
        %v3710 = vcombine.low %v3684, %v3685
        %v3712 = vunpack.c.l.s4 1983009808
        %v3713 = vunpack.c.0.s8 %v3712
        %v3714 = vlaneseq
        %v3715 = vshrl.u32 %v3714, 7
        %v3716 = vsub.s32 %v3713, %v3715
        %v3717 = vrot.slane %v3710, %v3716
        %v3718 = vcombine.low %v3693, %v3701
        %v3719 = vcombine.high %v3693, %v3701
        %v3721 = vunpack.c.l.s4 1934713408
        %v3722 = vunpack.c.0.s8 %v3721
        %v3723 = vlaneseq
        %v3724 = vshrl.u32 %v3723, 7
        %v3725 = vsub.s32 %v3722, %v3724
        %v3726 = vrot.slane %v3718, %v3725
        %v3728 = vunpack.c.l.s4 1934713408
        %v3729 = vunpack.c.0.s8 %v3728
        %v3730 = vlaneseq
        %v3731 = vshrl.u32 %v3730, 7
        %v3732 = vsub.s32 %v3729, %v3731
        %v3733 = vrot.slane %v3719, %v3732
        %v3734 = vcombine.low %v3709, %v3717
        %v3735 = vcombine.high %v3709, %v3717
        %v3737 = vunpack.c.l.s4 1934713408
        %v3738 = vunpack.c.0.s8 %v3737
        %v3739 = vlaneseq
        %v3740 = vshrl.u32 %v3739, 7
        %v3741 = vsub.s32 %v3738, %v3740
        %v3742 = vrot.slane %v3734, %v3741
        %v3744 = vunpack.c.l.s4 1934713408
        %v3745 = vunpack.c.0.s8 %v3744
        %v3746 = vlaneseq
        %v3747 = vshrl.u32 %v3746, 7
        %v3748 = vsub.s32 %v3745, %v3747
        %v3749 = vrot.slane %v3735, %v3748
        %v3750 = vcombine.low %v3726, %v3742
        %v3751 = vcombine.high %v3726, %v3742
        %v3752 = vcombine.low %v3733, %v3749
        %v3753 = vcombine.high %v3733, %v3749
        %3755 = vrot.lane.b32.xlu0 %v3751, 8
        %v3756 = vpop.permute.xlu0 %3755
        %3759 = vrot.lane.b32.xlu0 %v3752, 16
        %v3760 = vpop.permute.xlu0 %3759
        %3763 = vrot.lane.b32.xlu0 %v3753, 24
        %v3764 = vpop.permute.xlu0 %3763
        %v3766 = vsel %vm1738, %v3750, %v3756
        %v3767 = vsel %vm2532, %v3766, %v3760
        %v3768 = vsel %vm2534, %v3767, %v3764
        %v3770 = vlaneseq
        %v3771 = vshrl.u32 %v3770, 7
        %v3772 = vsub.s32 0, %v3771
        %v3773 = vrot.slane %v1299, %v3772
        %v3776 = vsel %vm1037, %v2535, 0
        %v3779 = vsel %vm1037, %v3768, 0
        %3781 = vmatprep.subr.mxu0 0.0
        %3782 = vmatpush1.msra.mxu0 %v1295
        %3783 = vmatprep.subr.mxu0 0.0
        %3784 = vmatpush1.msra.mxu0 %v1296
        %3785 = vmatprep.subr.mxu0 0.0
        %3786 = vmatpush1.msra.mxu0 %v1297
        %3787 = vmatprep.subr.mxu0 0.0
        %3788 = vmatpush1.msra.mxu0 %v1298
        %3789 = vmatprep.subr.mxu0 0.0
        %3790 = vmatpush1.msra.mxu0 0.0
        %3791 = vmatprep.subr.mxu0 0.0
        %3792 = vmatpush1.msra.mxu0 0.0
        %3793 = vmatprep.subr.mxu0 0.0
        %3794 = vmatpush1.msra.mxu0 0.0
        %3795 = vmatprep.subr.mxu0 0.0
        %3796 = vmatpush1.msra.mxu0 0.0
        %3797 = vmatprep.subr.mxu0 0.0
        %3798 = vmatpush1.msra.mxu0 0.0
        %3799 = vmatprep.subr.mxu0 0.0
        %3800 = vmatpush1.msra.mxu0 0.0
        %3801 = vmatprep.subr.mxu0 0.0
        %3802 = vmatpush1.msra.mxu0 0.0
        %3803 = vmatprep.subr.mxu0 0.0
        %3804 = vmatpush1.msra.mxu0 0.0
        %3805 = vmatprep.subr.mxu0 0.0
        %3806 = vmatpush1.msra.mxu0 0.0
        %3807 = vmatprep.subr.mxu0 0.0
        %3808 = vmatpush1.msra.mxu0 0.0
        %3809 = vmatprep.subr.mxu0 0.0
        %3810 = vmatpush1.msra.mxu0 0.0
        %3811 = vmatprep.subr.mxu0 0.0
        %3812 = vmatpush1.msra.mxu0 0.0
        %3813 = vmatprep.subr.mxu0 0.0
        %3814 = vmatpush1.msra.mxu0 0.0
        %3815 = vmatprep.subr.mxu0 0.0
        %3816 = vmatpush1.msra.mxu0 0.0
        %3817 = vmatprep.subr.mxu0 0.0
        %3818 = vmatpush1.msra.mxu0 0.0
        %3819 = vmatprep.subr.mxu0 0.0
        %3820 = vmatpush1.msra.mxu0 0.0
        %3821 = vmatprep.subr.mxu0 0.0
        %3822 = vmatpush1.msra.mxu0 0.0
        %3823 = vmatprep.subr.mxu0 0.0
        %3824 = vmatpush1.msra.mxu0 0.0
        %3825 = vmatprep.subr.mxu0 0.0
        %3826 = vmatpush1.msra.mxu0 0.0
        %3827 = vmatprep.subr.mxu0 0.0
        %3828 = vmatpush1.msra.mxu0 0.0
        %3829 = vmatprep.subr.mxu0 0.0
        %3830 = vmatpush1.msra.mxu0 0.0
        %3831 = vmatprep.subr.mxu0 0.0
        %3832 = vmatpush1.msra.mxu0 0.0
        %3833 = vmatprep.subr.mxu0 0.0
        %3834 = vmatpush1.msra.mxu0 0.0
        %3835 = vmatprep.subr.mxu0 0.0
        %3836 = vmatpush1.msra.mxu0 0.0
        %3837 = vmatprep.subr.mxu0 0.0
        %3838 = vmatpush1.msra.mxu0 0.0
        %3839 = vmatprep.subr.mxu0 0.0
        %3840 = vmatpush1.msra.mxu0 0.0
        %3841 = vmatprep.subr.mxu0 0.0
        %3842 = vmatpush1.msra.mxu0 0.0
        %3843 = vmatprep.subr.mxu0 0.0
        %3844 = vmatpush1.msra.mxu0 0.0
        %3845 = vmatprep.mubr.f32.mxu0 0.0
        %3846 = vmatmul.mubr.f32.gmra.mrb[0].mxu0 %v3776
        %v3847 = vpop.f32.mrb[0].mxu0
        %v3848 = vadd.f32 %v3773, %v3847
        %v3849 = vpop.f32.mrb[0].mxu0
        %3850 = vmatprep.mubr.f32.mxu0 0.0
        %3851 = vmatmul.mubr.f32.gmra.mrb[0].mxu0 %v3779
        %v3852 = vpop.f32.mrb[0].mxu0
        %v3853 = vadd.f32 %v3773, %v3852
        %v3854 = vpop.f32.mrb[0].mxu0
        %3855 = vdwg.mxu0
        %v3856 = vadd.f32 %v1018, %v3848
        %v3857 = vadd.f32 %v1019, %v3853
        %v3858 = vsel %vm1037, %v3856, 0.0
        %3859 = vadd.xlane.f32.xlu0 %v3858
        %v3860 = vpop.xlane.xlu0 %3859
        %v3861 = vsel %vm1037, %v3857, 0.0
        %3862 = vadd.xlane.f32.xlu0 %v3861
        %v3863 = vpop.xlane.xlu0 %3862
        %v3864 = vrcp.pop 32.0
        %v3865 = vmul.f32 %v3860, %v3864
        %v3866 = vmul.f32 %v3863, %v3864
        %v3867 = vsub.f32 %v3856, %v3865
        %v3868 = vsub.f32 %v3857, %v3866
        %v3869 = vmul.f32 %v3867, %v3867
        %v3870 = vmul.f32 %v3868, %v3868
        %v3871 = vsel %vm1037, %v3869, 0.0
        %3872 = vadd.xlane.f32.xlu0 %v3871
        %v3873 = vpop.xlane.xlu0 %3872
        %v3874 = vsel %vm1037, %v3870, 0.0
        %3875 = vadd.xlane.f32.xlu0 %v3874
        %v3876 = vpop.xlane.xlu0 %3875
        %v3877 = vmul.f32 %v3873, %v3864
        %v3878 = vmul.f32 %v3876, %v3864
        %v3879 = vadd.f32 %v3877, 1e-05
        %v3880 = vadd.f32 %v3878, 1e-05
        %v3881 = vrsqrt.pop %v3879
        %v3882 = vrsqrt.pop %v3880
        %v3883 = vmul.f32 %v3867, %v3881
        %v3884 = vmul.f32 %v3868, %v3882
        %v3885 = vlaneseq
        %v3886 = vshrl.u32 %v3885, 7
        %v3887 = vsub.s32 0, %v3886
        %v3888 = vrot.slane %v1024, %v3887
        %v3889 = vmul.f32 %v3883, %v3888
        %v3890 = vmul.f32 %v3884, %v3888
        %v3891 = vlaneseq
        %v3892 = vshrl.u32 %v3891, 7
        %v3893 = vsub.s32 0, %v3892
        %v3894 = vrot.slane %v1025, %v3893
        %v3895 = vadd.f32 %v3889, %v3894
        %v3896 = vadd.f32 %v3890, %v3894
        %v3897 = vld [vmem:[%s827] sm:$0xff]
        %v3898 = vld [vmem:[%s827 + $0x8] sm:$0xff]
        %v3899 = vld [vmem:[%s827 + $0x10] sm:$0xff]
        %v3900 = vld [vmem:[%s827 + $0x18] sm:$0xff]
        %v3901 = vld [vmem:[%s836] sm:$0x1]
        %v3903 = vlaneseq
        %v3904 = vshrl.u32 %v3903, 7
        %v3905 = vsub.s32 0, %v3904
        %v3906 = vrot.slane %v3901, %v3905
        %v3909 = vsel %vm1037, %v3895, 0
        %v3912 = vsel %vm1037, %v3896, 0
        %3914 = vmatprep.subr.mxu0 0.0
        %3915 = vmatpush1.msra.mxu0 %v3897
        %3916 = vmatprep.subr.mxu0 0.0
        %3917 = vmatpush1.msra.mxu0 %v3898
        %3918 = vmatprep.subr.mxu0 0.0
        %3919 = vmatpush1.msra.mxu0 %v3899
        %3920 = vmatprep.subr.mxu0 0.0
        %3921 = vmatpush1.msra.mxu0 %v3900
        %3922 = vmatprep.subr.mxu0 0.0
        %3923 = vmatpush1.msra.mxu0 0.0
        %3924 = vmatprep.subr.mxu0 0.0
        %3925 = vmatpush1.msra.mxu0 0.0
        %3926 = vmatprep.subr.mxu0 0.0
        %3927 = vmatpush1.msra.mxu0 0.0
        %3928 = vmatprep.subr.mxu0 0.0
        %3929 = vmatpush1.msra.mxu0 0.0
        %3930 = vmatprep.subr.mxu0 0.0
        %3931 = vmatpush1.msra.mxu0 0.0
        %3932 = vmatprep.subr.mxu0 0.0
        %3933 = vmatpush1.msra.mxu0 0.0
        %3934 = vmatprep.subr.mxu0 0.0
        %3935 = vmatpush1.msra.mxu0 0.0
        %3936 = vmatprep.subr.mxu0 0.0
        %3937 = vmatpush1.msra.mxu0 0.0
        %3938 = vmatprep.subr.mxu0 0.0
        %3939 = vmatpush1.msra.mxu0 0.0
        %3940 = vmatprep.subr.mxu0 0.0
        %3941 = vmatpush1.msra.mxu0 0.0
        %3942 = vmatprep.subr.mxu0 0.0
        %3943 = vmatpush1.msra.mxu0 0.0
        %3944 = vmatprep.subr.mxu0 0.0
        %3945 = vmatpush1.msra.mxu0 0.0
        %3946 = vmatprep.subr.mxu0 0.0
        %3947 = vmatpush1.msra.mxu0 0.0
        %3948 = vmatprep.subr.mxu0 0.0
        %3949 = vmatpush1.msra.mxu0 0.0
        %3950 = vmatprep.subr.mxu0 0.0
        %3951 = vmatpush1.msra.mxu0 0.0
        %3952 = vmatprep.subr.mxu0 0.0
        %3953 = vmatpush1.msra.mxu0 0.0
        %3954 = vmatprep.subr.mxu0 0.0
        %3955 = vmatpush1.msra.mxu0 0.0
        %3956 = vmatprep.subr.mxu0 0.0
        %3957 = vmatpush1.msra.mxu0 0.0
        %3958 = vmatprep.subr.mxu0 0.0
        %3959 = vmatpush1.msra.mxu0 0.0
        %3960 = vmatprep.subr.mxu0 0.0
        %3961 = vmatpush1.msra.mxu0 0.0
        %3962 = vmatprep.subr.mxu0 0.0
        %3963 = vmatpush1.msra.mxu0 0.0
        %3964 = vmatprep.subr.mxu0 0.0
        %3965 = vmatpush1.msra.mxu0 0.0
        %3966 = vmatprep.subr.mxu0 0.0
        %3967 = vmatpush1.msra.mxu0 0.0
        %3968 = vmatprep.subr.mxu0 0.0
        %3969 = vmatpush1.msra.mxu0 0.0
        %3970 = vmatprep.subr.mxu0 0.0
        %3971 = vmatpush1.msra.mxu0 0.0
        %3972 = vmatprep.subr.mxu0 0.0
        %3973 = vmatpush1.msra.mxu0 0.0
        %3974 = vmatprep.subr.mxu0 0.0
        %3975 = vmatpush1.msra.mxu0 0.0
        %3976 = vmatprep.subr.mxu0 0.0
        %3977 = vmatpush1.msra.mxu0 0.0
        %3978 = vmatprep.mubr.f32.mxu0 0.0
        %3979 = vmatmul.mubr.f32.gmra.mrb[0].mxu0 %v3909
        %v3980 = vpop.f32.mrb[0].mxu0
        %v3981 = vadd.f32 %v3906, %v3980
        %v3982 = vpop.f32.mrb[0].mxu0
        %3983 = vmatprep.mubr.f32.mxu0 0.0
        %3984 = vmatmul.mubr.f32.gmra.mrb[0].mxu0 %v3912
        %v3985 = vpop.f32.mrb[0].mxu0
        %v3986 = vadd.f32 %v3906, %v3985
        %v3987 = vpop.f32.mrb[0].mxu0
        %3988 = vdwg.mxu0
        %s3989 = scalar_lea.vmem %s827, 32 [#allocation10]
        %v3990 = vld [vmem:[%s3989] sm:$0xff]
        %v3991 = vld [vmem:[%s3989 + $0x8] sm:$0xff]
        %v3992 = vld [vmem:[%s3989 + $0x10] sm:$0xff]
        %v3993 = vld [vmem:[%s3989 + $0x18] sm:$0xff]
        %s3994 = scalar_lea.vmem %s836, 1 [#allocation11]
        %v3995 = vld [vmem:[%s3994] sm:$0x1]
        %v3997 = vlaneseq
        %v3998 = vshrl.u32 %v3997, 7
        %v3999 = vsub.s32 0, %v3998
        %v4000 = vrot.slane %v3995, %v3999
        %v4003 = vsel %vm1037, %v1020, 0
        %v4006 = vsel %vm1037, %v1021, 0
        %v4009 = vsel %vm1037, %v1022, 0
        %v4012 = vsel %vm1037, %v1023, 0
        %4014 = vmatprep.subr.mxu0 0.0
        %4015 = vmatpush1.msra.mxu0 %v3990
        %4016 = vmatprep.subr.mxu0 0.0
        %4017 = vmatpush1.msra.mxu0 %v3991
        %4018 = vmatprep.subr.mxu0 0.0
        %4019 = vmatpush1.msra.mxu0 %v3992
        %4020 = vmatprep.subr.mxu0 0.0
        %4021 = vmatpush1.msra.mxu0 %v3993
        %4022 = vmatprep.subr.mxu0 0.0
        %4023 = vmatpush1.msra.mxu0 0.0
        %4024 = vmatprep.subr.mxu0 0.0
        %4025 = vmatpush1.msra.mxu0 0.0
        %4026 = vmatprep.subr.mxu0 0.0
        %4027 = vmatpush1.msra.mxu0 0.0
        %4028 = vmatprep.subr.mxu0 0.0
        %4029 = vmatpush1.msra.mxu0 0.0
        %4030 = vmatprep.subr.mxu0 0.0
        %4031 = vmatpush1.msra.mxu0 0.0
        %4032 = vmatprep.subr.mxu0 0.0
        %4033 = vmatpush1.msra.mxu0 0.0
        %4034 = vmatprep.subr.mxu0 0.0
        %4035 = vmatpush1.msra.mxu0 0.0
        %4036 = vmatprep.subr.mxu0 0.0
        %4037 = vmatpush1.msra.mxu0 0.0
        %4038 = vmatprep.subr.mxu0 0.0
        %4039 = vmatpush1.msra.mxu0 0.0
        %4040 = vmatprep.subr.mxu0 0.0
        %4041 = vmatpush1.msra.mxu0 0.0
        %4042 = vmatprep.subr.mxu0 0.0
        %4043 = vmatpush1.msra.mxu0 0.0
        %4044 = vmatprep.subr.mxu0 0.0
        %4045 = vmatpush1.msra.mxu0 0.0
        %4046 = vmatprep.subr.mxu0 0.0
        %4047 = vmatpush1.msra.mxu0 0.0
        %4048 = vmatprep.subr.mxu0 0.0
        %4049 = vmatpush1.msra.mxu0 0.0
        %4050 = vmatprep.subr.mxu0 0.0
        %4051 = vmatpush1.msra.mxu0 0.0
        %4052 = vmatprep.subr.mxu0 0.0
        %4053 = vmatpush1.msra.mxu0 0.0
        %4054 = vmatprep.subr.mxu0 0.0
        %4055 = vmatpush1.msra.mxu0 0.0
        %4056 = vmatprep.subr.mxu0 0.0
        %4057 = vmatpush1.msra.mxu0 0.0
        %4058 = vmatprep.subr.mxu0 0.0
        %4059 = vmatpush1.msra.mxu0 0.0
        %4060 = vmatprep.subr.mxu0 0.0
        %4061 = vmatpush1.msra.mxu0 0.0
        %4062 = vmatprep.subr.mxu0 0.0
        %4063 = vmatpush1.msra.mxu0 0.0
        %4064 = vmatprep.subr.mxu0 0.0
        %4065 = vmatpush1.msra.mxu0 0.0
        %4066 = vmatprep.subr.mxu0 0.0
        %4067 = vmatpush1.msra.mxu0 0.0
        %4068 = vmatprep.subr.mxu0 0.0
        %4069 = vmatpush1.msra.mxu0 0.0
        %4070 = vmatprep.subr.mxu0 0.0
        %4071 = vmatpush1.msra.mxu0 0.0
        %4072 = vmatprep.subr.mxu0 0.0
        %4073 = vmatpush1.msra.mxu0 0.0
        %4074 = vmatprep.subr.mxu0 0.0
        %4075 = vmatpush1.msra.mxu0 0.0
        %4076 = vmatprep.subr.mxu0 0.0
        %4077 = vmatpush1.msra.mxu0 0.0
        %4078 = vmatprep.mubr.f32.mxu0 0.0
        %4079 = vmatmul.mubr.f32.gmra.mrb[0].mxu0 %v4003
        %v4080 = vpop.f32.mrb[0].mxu0
        %v4081 = vadd.f32 %v4000, %v4080
        %v4082 = vpop.f32.mrb[0].mxu0
        %4083 = vmatprep.mubr.f32.mxu0 0.0
        %4084 = vmatmul.mubr.f32.gmra.mrb[0].mxu0 %v4006
        %v4085 = vpop.f32.mrb[0].mxu0
        %v4086 = vadd.f32 %v4000, %v4085
        %v4087 = vpop.f32.mrb[0].mxu0
        %4088 = vmatprep.mubr.f32.mxu0 0.0
        %4089 = vmatmul.mubr.f32.gmra.mrb[0].mxu0 %v4009
        %v4090 = vpop.f32.mrb[0].mxu0
        %v4091 = vadd.f32 %v4000, %v4090
        %v4092 = vpop.f32.mrb[0].mxu0
        %4093 = vmatprep.mubr.f32.mxu0 0.0
        %4094 = vmatmul.mubr.f32.gmra.mrb[0].mxu0 %v4012
        %v4095 = vpop.f32.mrb[0].mxu0
        %v4096 = vadd.f32 %v4000, %v4095
        %v4097 = vpop.f32.mrb[0].mxu0
        %4098 = vdwg.mxu0
        %s4099 = scalar_lea.vmem %s827, 64 [#allocation10]
        %v4100 = vld [vmem:[%s4099] sm:$0xff]
        %v4101 = vld [vmem:[%s4099 + $0x8] sm:$0xff]
        %v4102 = vld [vmem:[%s4099 + $0x10] sm:$0xff]
        %v4103 = vld [vmem:[%s4099 + $0x18] sm:$0xff]
        %s4104 = scalar_lea.vmem %s836, 2 [#allocation11]
        %v4105 = vld [vmem:[%s4104] sm:$0x1]
        %v4107 = vlaneseq
        %v4108 = vshrl.u32 %v4107, 7
        %v4109 = vsub.s32 0, %v4108
        %v4110 = vrot.slane %v4105, %v4109
        %4112 = vmatprep.subr.mxu0 0.0
        %4113 = vmatpush1.msra.mxu0 %v4100
        %4114 = vmatprep.subr.mxu0 0.0
        %4115 = vmatpush1.msra.mxu0 %v4101
        %4116 = vmatprep.subr.mxu0 0.0
        %4117 = vmatpush1.msra.mxu0 %v4102
        %4118 = vmatprep.subr.mxu0 0.0
        %4119 = vmatpush1.msra.mxu0 %v4103
        %4120 = vmatprep.subr.mxu0 0.0
        %4121 = vmatpush1.msra.mxu0 0.0
        %4122 = vmatprep.subr.mxu0 0.0
        %4123 = vmatpush1.msra.mxu0 0.0
        %4124 = vmatprep.subr.mxu0 0.0
        %4125 = vmatpush1.msra.mxu0 0.0
        %4126 = vmatprep.subr.mxu0 0.0
        %4127 = vmatpush1.msra.mxu0 0.0
        %4128 = vmatprep.subr.mxu0 0.0
        %4129 = vmatpush1.msra.mxu0 0.0
        %4130 = vmatprep.subr.mxu0 0.0
        %4131 = vmatpush1.msra.mxu0 0.0
        %4132 = vmatprep.subr.mxu0 0.0
        %4133 = vmatpush1.msra.mxu0 0.0
        %4134 = vmatprep.subr.mxu0 0.0
        %4135 = vmatpush1.msra.mxu0 0.0
        %4136 = vmatprep.subr.mxu0 0.0
        %4137 = vmatpush1.msra.mxu0 0.0
        %4138 = vmatprep.subr.mxu0 0.0
        %4139 = vmatpush1.msra.mxu0 0.0
        %4140 = vmatprep.subr.mxu0 0.0
        %4141 = vmatpush1.msra.mxu0 0.0
        %4142 = vmatprep.subr.mxu0 0.0
        %4143 = vmatpush1.msra.mxu0 0.0
        %4144 = vmatprep.subr.mxu0 0.0
        %4145 = vmatpush1.msra.mxu0 0.0
        %4146 = vmatprep.subr.mxu0 0.0
        %4147 = vmatpush1.msra.mxu0 0.0
        %4148 = vmatprep.subr.mxu0 0.0
        %4149 = vmatpush1.msra.mxu0 0.0
        %4150 = vmatprep.subr.mxu0 0.0
        %4151 = vmatpush1.msra.mxu0 0.0
        %4152 = vmatprep.subr.mxu0 0.0
        %4153 = vmatpush1.msra.mxu0 0.0
        %4154 = vmatprep.subr.mxu0 0.0
        %4155 = vmatpush1.msra.mxu0 0.0
        %4156 = vmatprep.subr.mxu0 0.0
        %4157 = vmatpush1.msra.mxu0 0.0
        %4158 = vmatprep.subr.mxu0 0.0
        %4159 = vmatpush1.msra.mxu0 0.0
        %4160 = vmatprep.subr.mxu0 0.0
        %4161 = vmatpush1.msra.mxu0 0.0
        %4162 = vmatprep.subr.mxu0 0.0
        %4163 = vmatpush1.msra.mxu0 0.0
        %4164 = vmatprep.subr.mxu0 0.0
        %4165 = vmatpush1.msra.mxu0 0.0
        %4166 = vmatprep.subr.mxu0 0.0
        %4167 = vmatpush1.msra.mxu0 0.0
        %4168 = vmatprep.subr.mxu0 0.0
        %4169 = vmatpush1.msra.mxu0 0.0
        %4170 = vmatprep.subr.mxu0 0.0
        %4171 = vmatpush1.msra.mxu0 0.0
        %4172 = vmatprep.subr.mxu0 0.0
        %4173 = vmatpush1.msra.mxu0 0.0
        %4174 = vmatprep.subr.mxu0 0.0
        %4175 = vmatpush1.msra.mxu0 0.0
        %4176 = vmatprep.mubr.f32.mxu0 0.0
        %4177 = vmatmul.mubr.f32.gmra.mrb[0].mxu0 %v4003
        %v4178 = vpop.f32.mrb[0].mxu0
        %v4179 = vadd.f32 %v4110, %v4178
        %v4180 = vpop.f32.mrb[0].mxu0
        %4181 = vmatprep.mubr.f32.mxu0 0.0
        %4182 = vmatmul.mubr.f32.gmra.mrb[0].mxu0 %v4006
        %v4183 = vpop.f32.mrb[0].mxu0
        %v4184 = vadd.f32 %v4110, %v4183
        %v4185 = vpop.f32.mrb[0].mxu0
        %4186 = vmatprep.mubr.f32.mxu0 0.0
        %4187 = vmatmul.mubr.f32.gmra.mrb[0].mxu0 %v4009
        %v4188 = vpop.f32.mrb[0].mxu0
        %v4189 = vadd.f32 %v4110, %v4188
        %v4190 = vpop.f32.mrb[0].mxu0
        %4191 = vmatprep.mubr.f32.mxu0 0.0
        %4192 = vmatmul.mubr.f32.gmra.mrb[0].mxu0 %v4012
        %v4193 = vpop.f32.mrb[0].mxu0
        %v4194 = vadd.f32 %v4110, %v4193
        %v4195 = vpop.f32.mrb[0].mxu0
        %4196 = vdwg.mxu0
        %v4197 = vld [vmem:[%s845] sm:$0xff]
        %v4198 = vld [vmem:[%s845 + $0x8] sm:$0xff]
        %v4199 = vld [vmem:[%s845 + $0x10] sm:$0xff]
        %v4200 = vld [vmem:[%s845 + $0x18] sm:$0xff]
        %v4201 = vld [vmem:[%s853] sm:$0x1]
        %4203 = vrot.lane.b32.xlu0 %v3981, 120
        %v4204 = vpop.permute.xlu0 %4203
        %4206 = vrot.lane.b32.xlu0 %v3981, 112
        %v4207 = vpop.permute.xlu0 %4206
        %4209 = vrot.lane.b32.xlu0 %v3981, 104
        %v4210 = vpop.permute.xlu0 %4209
        %v4212 = vcombine.low %v3981, %v4207
        %v4213 = vcombine.high %v3981, %v4207
        %v4215 = vunpack.c.l.s4 1983009808
        %v4216 = vunpack.c.0.s8 %v4215
        %v4217 = vlaneseq
        %v4218 = vshrl.u32 %v4217, 7
        %v4219 = vsub.s32 %v4216, %v4218
        %v4220 = vrot.slane %v4212, %v4219
        %v4222 = vunpack.c.l.s4 1983009808
        %v4223 = vunpack.c.0.s8 %v4222
        %v4224 = vlaneseq
        %v4225 = vshrl.u32 %v4224, 7
        %v4226 = vsub.s32 %v4223, %v4225
        %v4227 = vrot.slane %v4213, %v4226
        %v4228 = vcombine.low %v4204, %v4210
        %v4229 = vcombine.high %v4204, %v4210
        %v4231 = vunpack.c.l.s4 1983009808
        %v4232 = vunpack.c.0.s8 %v4231
        %v4233 = vlaneseq
        %v4234 = vshrl.u32 %v4233, 7
        %v4235 = vsub.s32 %v4232, %v4234
        %v4236 = vrot.slane %v4228, %v4235
        %v4238 = vunpack.c.l.s4 1983009808
        %v4239 = vunpack.c.0.s8 %v4238
        %v4240 = vlaneseq
        %v4241 = vshrl.u32 %v4240, 7
        %v4242 = vsub.s32 %v4239, %v4241
        %v4243 = vrot.slane %v4229, %v4242
        %v4244 = vcombine.low %v4220, %v4236
        %v4245 = vcombine.high %v4220, %v4236
        %v4247 = vunpack.c.l.s4 1934713408
        %v4248 = vunpack.c.0.s8 %v4247
        %v4249 = vlaneseq
        %v4250 = vshrl.u32 %v4249, 7
        %v4251 = vsub.s32 %v4248, %v4250
        %v4252 = vrot.slane %v4244, %v4251
        %v4254 = vunpack.c.l.s4 1934713408
        %v4255 = vunpack.c.0.s8 %v4254
        %v4256 = vlaneseq
        %v4257 = vshrl.u32 %v4256, 7
        %v4258 = vsub.s32 %v4255, %v4257
        %v4259 = vrot.slane %v4245, %v4258
        %v4260 = vcombine.low %v4227, %v4243
        %v4261 = vcombine.high %v4227, %v4243
        %v4263 = vunpack.c.l.s4 1934713408
        %v4264 = vunpack.c.0.s8 %v4263
        %v4265 = vlaneseq
        %v4266 = vshrl.u32 %v4265, 7
        %v4267 = vsub.s32 %v4264, %v4266
        %v4268 = vrot.slane %v4260, %v4267
        %v4270 = vunpack.c.l.s4 1934713408
        %v4271 = vunpack.c.0.s8 %v4270
        %v4272 = vlaneseq
        %v4273 = vshrl.u32 %v4272, 7
        %v4274 = vsub.s32 %v4271, %v4273
        %v4275 = vrot.slane %v4261, %v4274
        %v4276 = vcombine.high %v4252, 0.0
        %v4277 = vcombine.high %v4259, 0.0
        %v4278 = vcombine.high %v4268, 0.0
        %v4279 = vcombine.high %v4275, 0.0
        %v4280 = vcombine.low %v4252, %v4259
        %v4282 = vunpack.c.l.s4 1983009808
        %v4283 = vunpack.c.0.s8 %v4282
        %v4284 = vlaneseq
        %v4285 = vshrl.u32 %v4284, 7
        %v4286 = vsub.s32 %v4283, %v4285
        %v4287 = vrot.slane %v4280, %v4286
        %v4288 = vcombine.low %v4276, %v4277
        %v4290 = vunpack.c.l.s4 1983009808
        %v4291 = vunpack.c.0.s8 %v4290
        %v4292 = vlaneseq
        %v4293 = vshrl.u32 %v4292, 7
        %v4294 = vsub.s32 %v4291, %v4293
        %v4295 = vrot.slane %v4288, %v4294
        %v4296 = vcombine.low %v4268, %v4275
        %v4298 = vunpack.c.l.s4 1983009808
        %v4299 = vunpack.c.0.s8 %v4298
        %v4300 = vlaneseq
        %v4301 = vshrl.u32 %v4300, 7
        %v4302 = vsub.s32 %v4299, %v4301
        %v4303 = vrot.slane %v4296, %v4302
        %v4304 = vcombine.low %v4278, %v4279
        %v4306 = vunpack.c.l.s4 1983009808
        %v4307 = vunpack.c.0.s8 %v4306
        %v4308 = vlaneseq
        %v4309 = vshrl.u32 %v4308, 7
        %v4310 = vsub.s32 %v4307, %v4309
        %v4311 = vrot.slane %v4304, %v4310
        %v4312 = vcombine.low %v4287, %v4295
        %v4313 = vcombine.high %v4287, %v4295
        %v4315 = vunpack.c.l.s4 1934713408
        %v4316 = vunpack.c.0.s8 %v4315
        %v4317 = vlaneseq
        %v4318 = vshrl.u32 %v4317, 7
        %v4319 = vsub.s32 %v4316, %v4318
        %v4320 = vrot.slane %v4312, %v4319
        %v4322 = vunpack.c.l.s4 1934713408
        %v4323 = vunpack.c.0.s8 %v4322
        %v4324 = vlaneseq
        %v4325 = vshrl.u32 %v4324, 7
        %v4326 = vsub.s32 %v4323, %v4325
        %v4327 = vrot.slane %v4313, %v4326
        %v4328 = vcombine.low %v4303, %v4311
        %v4329 = vcombine.high %v4303, %v4311
        %v4331 = vunpack.c.l.s4 1934713408
        %v4332 = vunpack.c.0.s8 %v4331
        %v4333 = vlaneseq
        %v4334 = vshrl.u32 %v4333, 7
        %v4335 = vsub.s32 %v4332, %v4334
        %v4336 = vrot.slane %v4328, %v4335
        %v4338 = vunpack.c.l.s4 1934713408
        %v4339 = vunpack.c.0.s8 %v4338
        %v4340 = vlaneseq
        %v4341 = vshrl.u32 %v4340, 7
        %v4342 = vsub.s32 %v4339, %v4341
        %v4343 = vrot.slane %v4329, %v4342
        %v4344 = vcombine.low %v4320, %v4336
        %v4345 = vcombine.high %v4320, %v4336
        %v4346 = vcombine.low %v4327, %v4343
        %v4347 = vcombine.high %v4327, %v4343
        %4350 = vrot.lane.b32.xlu0 %v4081, 120
        %v4351 = vpop.permute.xlu0 %4350
        %4352 = vrot.lane.b32.xlu0 %v4086, 120
        %v4353 = vpop.permute.xlu0 %4352
        %4356 = vrot.lane.b32.xlu0 %v4081, 112
        %v4357 = vpop.permute.xlu0 %4356
        %4358 = vrot.lane.b32.xlu0 %v4086, 112
        %v4359 = vpop.permute.xlu0 %4358
        %4362 = vrot.lane.b32.xlu0 %v4081, 104
        %v4363 = vpop.permute.xlu0 %4362
        %4364 = vrot.lane.b32.xlu0 %v4086, 104
        %v4365 = vpop.permute.xlu0 %4364
        %v4368 = vcombine.low %v4081, %v4357
        %v4369 = vcombine.high %v4081, %v4357
        %v4371 = vunpack.c.l.s4 1983009808
        %v4372 = vunpack.c.0.s8 %v4371
        %v4373 = vlaneseq
        %v4374 = vshrl.u32 %v4373, 7
        %v4375 = vsub.s32 %v4372, %v4374
        %v4376 = vrot.slane %v4368, %v4375
        %v4378 = vunpack.c.l.s4 1983009808
        %v4379 = vunpack.c.0.s8 %v4378
        %v4380 = vlaneseq
        %v4381 = vshrl.u32 %v4380, 7
        %v4382 = vsub.s32 %v4379, %v4381
        %v4383 = vrot.slane %v4369, %v4382
        %v4384 = vcombine.low %v4351, %v4363
        %v4385 = vcombine.high %v4351, %v4363
        %v4387 = vunpack.c.l.s4 1983009808
        %v4388 = vunpack.c.0.s8 %v4387
        %v4389 = vlaneseq
        %v4390 = vshrl.u32 %v4389, 7
        %v4391 = vsub.s32 %v4388, %v4390
        %v4392 = vrot.slane %v4384, %v4391
        %v4394 = vunpack.c.l.s4 1983009808
        %v4395 = vunpack.c.0.s8 %v4394
        %v4396 = vlaneseq
        %v4397 = vshrl.u32 %v4396, 7
        %v4398 = vsub.s32 %v4395, %v4397
        %v4399 = vrot.slane %v4385, %v4398
        %v4400 = vcombine.low %v4376, %v4392
        %v4401 = vcombine.high %v4376, %v4392
        %v4403 = vunpack.c.l.s4 1934713408
        %v4404 = vunpack.c.0.s8 %v4403
        %v4405 = vlaneseq
        %v4406 = vshrl.u32 %v4405, 7
        %v4407 = vsub.s32 %v4404, %v4406
        %v4408 = vrot.slane %v4400, %v4407
        %v4410 = vunpack.c.l.s4 1934713408
        %v4411 = vunpack.c.0.s8 %v4410
        %v4412 = vlaneseq
        %v4413 = vshrl.u32 %v4412, 7
        %v4414 = vsub.s32 %v4411, %v4413
        %v4415 = vrot.slane %v4401, %v4414
        %v4416 = vcombine.low %v4383, %v4399
        %v4417 = vcombine.high %v4383, %v4399
        %v4419 = vunpack.c.l.s4 1934713408
        %v4420 = vunpack.c.0.s8 %v4419
        %v4421 = vlaneseq
        %v4422 = vshrl.u32 %v4421, 7
        %v4423 = vsub.s32 %v4420, %v4422
        %v4424 = vrot.slane %v4416, %v4423
        %v4426 = vunpack.c.l.s4 1934713408
        %v4427 = vunpack.c.0.s8 %v4426
        %v4428 = vlaneseq
        %v4429 = vshrl.u32 %v4428, 7
        %v4430 = vsub.s32 %v4427, %v4429
        %v4431 = vrot.slane %v4417, %v4430
        %v4432 = vcombine.high %v4408, 0.0
        %v4433 = vcombine.high %v4415, 0.0
        %v4434 = vcombine.high %v4424, 0.0
        %v4435 = vcombine.high %v4431, 0.0
        %v4436 = vcombine.low %v4086, %v4359
        %v4437 = vcombine.high %v4086, %v4359
        %v4439 = vunpack.c.l.s4 1983009808
        %v4440 = vunpack.c.0.s8 %v4439
        %v4441 = vlaneseq
        %v4442 = vshrl.u32 %v4441, 7
        %v4443 = vsub.s32 %v4440, %v4442
        %v4444 = vrot.slane %v4436, %v4443
        %v4446 = vunpack.c.l.s4 1983009808
        %v4447 = vunpack.c.0.s8 %v4446
        %v4448 = vlaneseq
        %v4449 = vshrl.u32 %v4448, 7
        %v4450 = vsub.s32 %v4447, %v4449
        %v4451 = vrot.slane %v4437, %v4450
        %v4452 = vcombine.low %v4353, %v4365
        %v4453 = vcombine.high %v4353, %v4365
        %v4455 = vunpack.c.l.s4 1983009808
        %v4456 = vunpack.c.0.s8 %v4455
        %v4457 = vlaneseq
        %v4458 = vshrl.u32 %v4457, 7
        %v4459 = vsub.s32 %v4456, %v4458
        %v4460 = vrot.slane %v4452, %v4459
        %v4462 = vunpack.c.l.s4 1983009808
        %v4463 = vunpack.c.0.s8 %v4462
        %v4464 = vlaneseq
        %v4465 = vshrl.u32 %v4464, 7
        %v4466 = vsub.s32 %v4463, %v4465
        %v4467 = vrot.slane %v4453, %v4466
        %v4468 = vcombine.low %v4444, %v4460
        %v4469 = vcombine.high %v4444, %v4460
        %v4471 = vunpack.c.l.s4 1934713408
        %v4472 = vunpack.c.0.s8 %v4471
        %v4473 = vlaneseq
        %v4474 = vshrl.u32 %v4473, 7
        %v4475 = vsub.s32 %v4472, %v4474
        %v4476 = vrot.slane %v4468, %v4475
        %v4478 = vunpack.c.l.s4 1934713408
        %v4479 = vunpack.c.0.s8 %v4478
        %v4480 = vlaneseq
        %v4481 = vshrl.u32 %v4480, 7
        %v4482 = vsub.s32 %v4479, %v4481
        %v4483 = vrot.slane %v4469, %v4482
        %v4484 = vcombine.low %v4451, %v4467
        %v4485 = vcombine.high %v4451, %v4467
        %v4487 = vunpack.c.l.s4 1934713408
        %v4488 = vunpack.c.0.s8 %v4487
        %v4489 = vlaneseq
        %v4490 = vshrl.u32 %v4489, 7
        %v4491 = vsub.s32 %v4488, %v4490
        %v4492 = vrot.slane %v4484, %v4491
        %v4494 = vunpack.c.l.s4 1934713408
        %v4495 = vunpack.c.0.s8 %v4494
        %v4496 = vlaneseq
        %v4497 = vshrl.u32 %v4496, 7
        %v4498 = vsub.s32 %v4495, %v4497
        %v4499 = vrot.slane %v4485, %v4498
        %v4500 = vcombine.high %v4476, 0.0
        %v4501 = vcombine.high %v4483, 0.0
        %v4502 = vcombine.high %v4492, 0.0
        %v4503 = vcombine.high %v4499, 0.0
        %v4504 = vcombine.low %v4408, %v4415
        %v4506 = vunpack.c.l.s4 1983009808
        %v4507 = vunpack.c.0.s8 %v4506
        %v4508 = vlaneseq
        %v4509 = vshrl.u32 %v4508, 7
        %v4510 = vsub.s32 %v4507, %v4509
        %v4511 = vrot.slane %v4504, %v4510
        %v4512 = vcombine.low %v4432, %v4433
        %v4514 = vunpack.c.l.s4 1983009808
        %v4515 = vunpack.c.0.s8 %v4514
        %v4516 = vlaneseq
        %v4517 = vshrl.u32 %v4516, 7
        %v4518 = vsub.s32 %v4515, %v4517
        %v4519 = vrot.slane %v4512, %v4518
        %v4520 = vcombine.low %v4424, %v4431
        %v4522 = vunpack.c.l.s4 1983009808
        %v4523 = vunpack.c.0.s8 %v4522
        %v4524 = vlaneseq
        %v4525 = vshrl.u32 %v4524, 7
        %v4526 = vsub.s32 %v4523, %v4525
        %v4527 = vrot.slane %v4520, %v4526
        %v4528 = vcombine.low %v4434, %v4435
        %v4530 = vunpack.c.l.s4 1983009808
        %v4531 = vunpack.c.0.s8 %v4530
        %v4532 = vlaneseq
        %v4533 = vshrl.u32 %v4532, 7
        %v4534 = vsub.s32 %v4531, %v4533
        %v4535 = vrot.slane %v4528, %v4534
        %v4536 = vcombine.low %v4511, %v4519
        %v4537 = vcombine.high %v4511, %v4519
        %v4539 = vunpack.c.l.s4 1934713408
        %v4540 = vunpack.c.0.s8 %v4539
        %v4541 = vlaneseq
        %v4542 = vshrl.u32 %v4541, 7
        %v4543 = vsub.s32 %v4540, %v4542
        %v4544 = vrot.slane %v4536, %v4543
        %v4546 = vunpack.c.l.s4 1934713408
        %v4547 = vunpack.c.0.s8 %v4546
        %v4548 = vlaneseq
        %v4549 = vshrl.u32 %v4548, 7
        %v4550 = vsub.s32 %v4547, %v4549
        %v4551 = vrot.slane %v4537, %v4550
        %v4552 = vcombine.low %v4527, %v4535
        %v4553 = vcombine.high %v4527, %v4535
        %v4555 = vunpack.c.l.s4 1934713408
        %v4556 = vunpack.c.0.s8 %v4555
        %v4557 = vlaneseq
        %v4558 = vshrl.u32 %v4557, 7
        %v4559 = vsub.s32 %v4556, %v4558
        %v4560 = vrot.slane %v4552, %v4559
        %v4562 = vunpack.c.l.s4 1934713408
        %v4563 = vunpack.c.0.s8 %v4562
        %v4564 = vlaneseq
        %v4565 = vshrl.u32 %v4564, 7
        %v4566 = vsub.s32 %v4563, %v4565
        %v4567 = vrot.slane %v4553, %v4566
        %v4568 = vcombine.low %v4544, %v4560
        %v4569 = vcombine.high %v4544, %v4560
        %v4570 = vcombine.low %v4551, %v4567
        %v4571 = vcombine.high %v4551, %v4567
        %v4572 = vcombine.low %v4476, %v4483
        %v4574 = vunpack.c.l.s4 1983009808
        %v4575 = vunpack.c.0.s8 %v4574
        %v4576 = vlaneseq
        %v4577 = vshrl.u32 %v4576, 7
        %v4578 = vsub.s32 %v4575, %v4577
        %v4579 = vrot.slane %v4572, %v4578
        %v4580 = vcombine.low %v4500, %v4501
        %v4582 = vunpack.c.l.s4 1983009808
        %v4583 = vunpack.c.0.s8 %v4582
        %v4584 = vlaneseq
        %v4585 = vshrl.u32 %v4584, 7
        %v4586 = vsub.s32 %v4583, %v4585
        %v4587 = vrot.slane %v4580, %v4586
        %v4588 = vcombine.low %v4492, %v4499
        %v4590 = vunpack.c.l.s4 1983009808
        %v4591 = vunpack.c.0.s8 %v4590
        %v4592 = vlaneseq
        %v4593 = vshrl.u32 %v4592, 7
        %v4594 = vsub.s32 %v4591, %v4593
        %v4595 = vrot.slane %v4588, %v4594
        %v4596 = vcombine.low %v4502, %v4503
        %v4598 = vunpack.c.l.s4 1983009808
        %v4599 = vunpack.c.0.s8 %v4598
        %v4600 = vlaneseq
        %v4601 = vshrl.u32 %v4600, 7
        %v4602 = vsub.s32 %v4599, %v4601
        %v4603 = vrot.slane %v4596, %v4602
        %v4604 = vcombine.low %v4579, %v4587
        %v4605 = vcombine.high %v4579, %v4587
        %v4607 = vunpack.c.l.s4 1934713408
        %v4608 = vunpack.c.0.s8 %v4607
        %v4609 = vlaneseq
        %v4610 = vshrl.u32 %v4609, 7
        %v4611 = vsub.s32 %v4608, %v4610
        %v4612 = vrot.slane %v4604, %v4611
        %v4614 = vunpack.c.l.s4 1934713408
        %v4615 = vunpack.c.0.s8 %v4614
        %v4616 = vlaneseq
        %v4617 = vshrl.u32 %v4616, 7
        %v4618 = vsub.s32 %v4615, %v4617
        %v4619 = vrot.slane %v4605, %v4618
        %v4620 = vcombine.low %v4595, %v4603
        %v4621 = vcombine.high %v4595, %v4603
        %v4623 = vunpack.c.l.s4 1934713408
        %v4624 = vunpack.c.0.s8 %v4623
        %v4625 = vlaneseq
        %v4626 = vshrl.u32 %v4625, 7
        %v4627 = vsub.s32 %v4624, %v4626
        %v4628 = vrot.slane %v4620, %v4627
        %v4630 = vunpack.c.l.s4 1934713408
        %v4631 = vunpack.c.0.s8 %v4630
        %v4632 = vlaneseq
        %v4633 = vshrl.u32 %v4632, 7
        %v4634 = vsub.s32 %v4631, %v4633
        %v4635 = vrot.slane %v4621, %v4634
        %v4636 = vcombine.low %v4612, %v4628
        %v4637 = vcombine.high %v4612, %v4628
        %v4638 = vcombine.low %v4619, %v4635
        %v4639 = vcombine.high %v4619, %v4635
        %4642 = vrot.lane.b32.xlu0 %v4179, 120
        %v4643 = vpop.permute.xlu0 %4642
        %4644 = vrot.lane.b32.xlu0 %v4184, 120
        %v4645 = vpop.permute.xlu0 %4644
        %4648 = vrot.lane.b32.xlu0 %v4179, 112
        %v4649 = vpop.permute.xlu0 %4648
        %4650 = vrot.lane.b32.xlu0 %v4184, 112
        %v4651 = vpop.permute.xlu0 %4650
        %4654 = vrot.lane.b32.xlu0 %v4179, 104
        %v4655 = vpop.permute.xlu0 %4654
        %4656 = vrot.lane.b32.xlu0 %v4184, 104
        %v4657 = vpop.permute.xlu0 %4656
        %v4660 = vcombine.low %v4179, %v4649
        %v4661 = vcombine.high %v4179, %v4649
        %v4663 = vunpack.c.l.s4 1983009808
        %v4664 = vunpack.c.0.s8 %v4663
        %v4665 = vlaneseq
        %v4666 = vshrl.u32 %v4665, 7
        %v4667 = vsub.s32 %v4664, %v4666
        %v4668 = vrot.slane %v4660, %v4667
        %v4670 = vunpack.c.l.s4 1983009808
        %v4671 = vunpack.c.0.s8 %v4670
        %v4672 = vlaneseq
        %v4673 = vshrl.u32 %v4672, 7
        %v4674 = vsub.s32 %v4671, %v4673
        %v4675 = vrot.slane %v4661, %v4674
        %v4676 = vcombine.low %v4643, %v4655
        %v4677 = vcombine.high %v4643, %v4655
        %v4679 = vunpack.c.l.s4 1983009808
        %v4680 = vunpack.c.0.s8 %v4679
        %v4681 = vlaneseq
        %v4682 = vshrl.u32 %v4681, 7
        %v4683 = vsub.s32 %v4680, %v4682
        %v4684 = vrot.slane %v4676, %v4683
        %v4686 = vunpack.c.l.s4 1983009808
        %v4687 = vunpack.c.0.s8 %v4686
        %v4688 = vlaneseq
        %v4689 = vshrl.u32 %v4688, 7
        %v4690 = vsub.s32 %v4687, %v4689
        %v4691 = vrot.slane %v4677, %v4690
        %v4692 = vcombine.low %v4668, %v4684
        %v4693 = vcombine.high %v4668, %v4684
        %v4695 = vunpack.c.l.s4 1934713408
        %v4696 = vunpack.c.0.s8 %v4695
        %v4697 = vlaneseq
        %v4698 = vshrl.u32 %v4697, 7
        %v4699 = vsub.s32 %v4696, %v4698
        %v4700 = vrot.slane %v4692, %v4699
        %v4702 = vunpack.c.l.s4 1934713408
        %v4703 = vunpack.c.0.s8 %v4702
        %v4704 = vlaneseq
        %v4705 = vshrl.u32 %v4704, 7
        %v4706 = vsub.s32 %v4703, %v4705
        %v4707 = vrot.slane %v4693, %v4706
        %v4708 = vcombine.low %v4675, %v4691
        %v4709 = vcombine.high %v4675, %v4691
        %v4711 = vunpack.c.l.s4 1934713408
        %v4712 = vunpack.c.0.s8 %v4711
        %v4713 = vlaneseq
        %v4714 = vshrl.u32 %v4713, 7
        %v4715 = vsub.s32 %v4712, %v4714
        %v4716 = vrot.slane %v4708, %v4715
        %v4718 = vunpack.c.l.s4 1934713408
        %v4719 = vunpack.c.0.s8 %v4718
        %v4720 = vlaneseq
        %v4721 = vshrl.u32 %v4720, 7
        %v4722 = vsub.s32 %v4719, %v4721
        %v4723 = vrot.slane %v4709, %v4722
        %v4724 = vcombine.high %v4700, 0.0
        %v4725 = vcombine.high %v4707, 0.0
        %v4726 = vcombine.high %v4716, 0.0
        %v4727 = vcombine.high %v4723, 0.0
        %v4728 = vcombine.low %v4184, %v4651
        %v4729 = vcombine.high %v4184, %v4651
        %v4731 = vunpack.c.l.s4 1983009808
        %v4732 = vunpack.c.0.s8 %v4731
        %v4733 = vlaneseq
        %v4734 = vshrl.u32 %v4733, 7
        %v4735 = vsub.s32 %v4732, %v4734
        %v4736 = vrot.slane %v4728, %v4735
        %v4738 = vunpack.c.l.s4 1983009808
        %v4739 = vunpack.c.0.s8 %v4738
        %v4740 = vlaneseq
        %v4741 = vshrl.u32 %v4740, 7
        %v4742 = vsub.s32 %v4739, %v4741
        %v4743 = vrot.slane %v4729, %v4742
        %v4744 = vcombine.low %v4645, %v4657
        %v4745 = vcombine.high %v4645, %v4657
        %v4747 = vunpack.c.l.s4 1983009808
        %v4748 = vunpack.c.0.s8 %v4747
        %v4749 = vlaneseq
        %v4750 = vshrl.u32 %v4749, 7
        %v4751 = vsub.s32 %v4748, %v4750
        %v4752 = vrot.slane %v4744, %v4751
        %v4754 = vunpack.c.l.s4 1983009808
        %v4755 = vunpack.c.0.s8 %v4754
        %v4756 = vlaneseq
        %v4757 = vshrl.u32 %v4756, 7
        %v4758 = vsub.s32 %v4755, %v4757
        %v4759 = vrot.slane %v4745, %v4758
        %v4760 = vcombine.low %v4736, %v4752
        %v4761 = vcombine.high %v4736, %v4752
        %v4763 = vunpack.c.l.s4 1934713408
        %v4764 = vunpack.c.0.s8 %v4763
        %v4765 = vlaneseq
        %v4766 = vshrl.u32 %v4765, 7
        %v4767 = vsub.s32 %v4764, %v4766
        %v4768 = vrot.slane %v4760, %v4767
        %v4770 = vunpack.c.l.s4 1934713408
        %v4771 = vunpack.c.0.s8 %v4770
        %v4772 = vlaneseq
        %v4773 = vshrl.u32 %v4772, 7
        %v4774 = vsub.s32 %v4771, %v4773
        %v4775 = vrot.slane %v4761, %v4774
        %v4776 = vcombine.low %v4743, %v4759
        %v4777 = vcombine.high %v4743, %v4759
        %v4779 = vunpack.c.l.s4 1934713408
        %v4780 = vunpack.c.0.s8 %v4779
        %v4781 = vlaneseq
        %v4782 = vshrl.u32 %v4781, 7
        %v4783 = vsub.s32 %v4780, %v4782
        %v4784 = vrot.slane %v4776, %v4783
        %v4786 = vunpack.c.l.s4 1934713408
        %v4787 = vunpack.c.0.s8 %v4786
        %v4788 = vlaneseq
        %v4789 = vshrl.u32 %v4788, 7
        %v4790 = vsub.s32 %v4787, %v4789
        %v4791 = vrot.slane %v4777, %v4790
        %v4792 = vcombine.high %v4768, 0.0
        %v4793 = vcombine.high %v4775, 0.0
        %v4794 = vcombine.high %v4784, 0.0
        %v4795 = vcombine.high %v4791, 0.0
        %v4796 = vcombine.low %v4700, %v4707
        %v4798 = vunpack.c.l.s4 1983009808
        %v4799 = vunpack.c.0.s8 %v4798
        %v4800 = vlaneseq
        %v4801 = vshrl.u32 %v4800, 7
        %v4802 = vsub.s32 %v4799, %v4801
        %v4803 = vrot.slane %v4796, %v4802
        %v4804 = vcombine.low %v4724, %v4725
        %v4806 = vunpack.c.l.s4 1983009808
        %v4807 = vunpack.c.0.s8 %v4806
        %v4808 = vlaneseq
        %v4809 = vshrl.u32 %v4808, 7
        %v4810 = vsub.s32 %v4807, %v4809
        %v4811 = vrot.slane %v4804, %v4810
        %v4812 = vcombine.low %v4716, %v4723
        %v4814 = vunpack.c.l.s4 1983009808
        %v4815 = vunpack.c.0.s8 %v4814
        %v4816 = vlaneseq
        %v4817 = vshrl.u32 %v4816, 7
        %v4818 = vsub.s32 %v4815, %v4817
        %v4819 = vrot.slane %v4812, %v4818
        %v4820 = vcombine.low %v4726, %v4727
        %v4822 = vunpack.c.l.s4 1983009808
        %v4823 = vunpack.c.0.s8 %v4822
        %v4824 = vlaneseq
        %v4825 = vshrl.u32 %v4824, 7
        %v4826 = vsub.s32 %v4823, %v4825
        %v4827 = vrot.slane %v4820, %v4826
        %v4828 = vcombine.low %v4803, %v4811
        %v4829 = vcombine.high %v4803, %v4811
        %v4831 = vunpack.c.l.s4 1934713408
        %v4832 = vunpack.c.0.s8 %v4831
        %v4833 = vlaneseq
        %v4834 = vshrl.u32 %v4833, 7
        %v4835 = vsub.s32 %v4832, %v4834
        %v4836 = vrot.slane %v4828, %v4835
        %v4838 = vunpack.c.l.s4 1934713408
        %v4839 = vunpack.c.0.s8 %v4838
        %v4840 = vlaneseq
        %v4841 = vshrl.u32 %v4840, 7
        %v4842 = vsub.s32 %v4839, %v4841
        %v4843 = vrot.slane %v4829, %v4842
        %v4844 = vcombine.low %v4819, %v4827
        %v4845 = vcombine.high %v4819, %v4827
        %v4847 = vunpack.c.l.s4 1934713408
        %v4848 = vunpack.c.0.s8 %v4847
        %v4849 = vlaneseq
        %v4850 = vshrl.u32 %v4849, 7
        %v4851 = vsub.s32 %v4848, %v4850
        %v4852 = vrot.slane %v4844, %v4851
        %v4854 = vunpack.c.l.s4 1934713408
        %v4855 = vunpack.c.0.s8 %v4854
        %v4856 = vlaneseq
        %v4857 = vshrl.u32 %v4856, 7
        %v4858 = vsub.s32 %v4855, %v4857
        %v4859 = vrot.slane %v4845, %v4858
        %v4860 = vcombine.low %v4836, %v4852
        %v4861 = vcombine.high %v4836, %v4852
        %v4862 = vcombine.low %v4843, %v4859
        %v4863 = vcombine.high %v4843, %v4859
        %v4864 = vcombine.low %v4768, %v4775
        %v4866 = vunpack.c.l.s4 1983009808
        %v4867 = vunpack.c.0.s8 %v4866
        %v4868 = vlaneseq
        %v4869 = vshrl.u32 %v4868, 7
        %v4870 = vsub.s32 %v4867, %v4869
        %v4871 = vrot.slane %v4864, %v4870
        %v4872 = vcombine.low %v4792, %v4793
        %v4874 = vunpack.c.l.s4 1983009808
        %v4875 = vunpack.c.0.s8 %v4874
        %v4876 = vlaneseq
        %v4877 = vshrl.u32 %v4876, 7
        %v4878 = vsub.s32 %v4875, %v4877
        %v4879 = vrot.slane %v4872, %v4878
        %v4880 = vcombine.low %v4784, %v4791
        %v4882 = vunpack.c.l.s4 1983009808
        %v4883 = vunpack.c.0.s8 %v4882
        %v4884 = vlaneseq
        %v4885 = vshrl.u32 %v4884, 7
        %v4886 = vsub.s32 %v4883, %v4885
        %v4887 = vrot.slane %v4880, %v4886
        %v4888 = vcombine.low %v4794, %v4795
        %v4890 = vunpack.c.l.s4 1983009808
        %v4891 = vunpack.c.0.s8 %v4890
        %v4892 = vlaneseq
        %v4893 = vshrl.u32 %v4892, 7
        %v4894 = vsub.s32 %v4891, %v4893
        %v4895 = vrot.slane %v4888, %v4894
        %v4896 = vcombine.low %v4871, %v4879
        %v4897 = vcombine.high %v4871, %v4879
        %v4899 = vunpack.c.l.s4 1934713408
        %v4900 = vunpack.c.0.s8 %v4899
        %v4901 = vlaneseq
        %v4902 = vshrl.u32 %v4901, 7
        %v4903 = vsub.s32 %v4900, %v4902
        %v4904 = vrot.slane %v4896, %v4903
        %v4906 = vunpack.c.l.s4 1934713408
        %v4907 = vunpack.c.0.s8 %v4906
        %v4908 = vlaneseq
        %v4909 = vshrl.u32 %v4908, 7
        %v4910 = vsub.s32 %v4907, %v4909
        %v4911 = vrot.slane %v4897, %v4910
        %v4912 = vcombine.low %v4887, %v4895
        %v4913 = vcombine.high %v4887, %v4895
        %v4915 = vunpack.c.l.s4 1934713408
        %v4916 = vunpack.c.0.s8 %v4915
        %v4917 = vlaneseq
        %v4918 = vshrl.u32 %v4917, 7
        %v4919 = vsub.s32 %v4916, %v4918
        %v4920 = vrot.slane %v4912, %v4919
        %v4922 = vunpack.c.l.s4 1934713408
        %v4923 = vunpack.c.0.s8 %v4922
        %v4924 = vlaneseq
        %v4925 = vshrl.u32 %v4924, 7
        %v4926 = vsub.s32 %v4923, %v4925
        %v4927 = vrot.slane %v4913, %v4926
        %v4928 = vcombine.low %v4904, %v4920
        %v4929 = vcombine.high %v4904, %v4920
        %v4930 = vcombine.low %v4911, %v4927
        %v4931 = vcombine.high %v4911, %v4927
        %v4933 = vsel %vm1738, %v4344, 0
        %v4936 = vsel %vm1738, %v4568, 0
        %v4939 = vsel %vm1738, %v4636, 0
        %4941 = vmatprep.subr.mxu0 0.0
        %4942 = vmatpush1.xpose.msra.mxu0 %v4936
        %4943 = vmatprep.subr.mxu0 0.0
        %4944 = vmatpush1.xpose.msra.mxu0 %v4939
        %4945 = vmatprep.subr.mxu0 0.0
        %4946 = vmatpush1.xpose.msra.mxu0 0.0
        %4947 = vmatprep.subr.mxu0 0.0
        %4948 = vmatpush1.xpose.msra.mxu0 0.0
        %4949 = vmatprep.subr.mxu0 0.0
        %4950 = vmatpush1.xpose.msra.mxu0 0.0
        %4951 = vmatprep.subr.mxu0 0.0
        %4952 = vmatpush1.xpose.msra.mxu0 0.0
        %4953 = vmatprep.subr.mxu0 0.0
        %4954 = vmatpush1.xpose.msra.mxu0 0.0
        %4955 = vmatprep.subr.mxu0 0.0
        %4956 = vmatpush1.xpose.msra.mxu0 0.0
        %4957 = vmatprep.subr.mxu0 0.0
        %4958 = vmatpush1.xpose.msra.mxu0 0.0
        %4959 = vmatprep.subr.mxu0 0.0
        %4960 = vmatpush1.xpose.msra.mxu0 0.0
        %4961 = vmatprep.subr.mxu0 0.0
        %4962 = vmatpush1.xpose.msra.mxu0 0.0
        %4963 = vmatprep.subr.mxu0 0.0
        %4964 = vmatpush1.xpose.msra.mxu0 0.0
        %4965 = vmatprep.subr.mxu0 0.0
        %4966 = vmatpush1.xpose.msra.mxu0 0.0
        %4967 = vmatprep.subr.mxu0 0.0
        %4968 = vmatpush1.xpose.msra.mxu0 0.0
        %4969 = vmatprep.subr.mxu0 0.0
        %4970 = vmatpush1.xpose.msra.mxu0 0.0
        %4971 = vmatprep.subr.mxu0 0.0
        %4972 = vmatpush1.xpose.msra.mxu0 0.0
        %4973 = vmatprep.subr.mxu0 0.0
        %4974 = vmatpush1.xpose.msra.mxu0 0.0
        %4975 = vmatprep.subr.mxu0 0.0
        %4976 = vmatpush1.xpose.msra.mxu0 0.0
        %4977 = vmatprep.subr.mxu0 0.0
        %4978 = vmatpush1.xpose.msra.mxu0 0.0
        %4979 = vmatprep.subr.mxu0 0.0
        %4980 = vmatpush1.xpose.msra.mxu0 0.0
        %4981 = vmatprep.subr.mxu0 0.0
        %4982 = vmatpush1.xpose.msra.mxu0 0.0
        %4983 = vmatprep.subr.mxu0 0.0
        %4984 = vmatpush1.xpose.msra.mxu0 0.0
        %4985 = vmatprep.subr.mxu0 0.0
        %4986 = vmatpush1.xpose.msra.mxu0 0.0
        %4987 = vmatprep.subr.mxu0 0.0
        %4988 = vmatpush1.xpose.msra.mxu0 0.0
        %4989 = vmatprep.subr.mxu0 0.0
        %4990 = vmatpush1.xpose.msra.mxu0 0.0
        %4991 = vmatprep.subr.mxu0 0.0
        %4992 = vmatpush1.xpose.msra.mxu0 0.0
        %4993 = vmatprep.subr.mxu0 0.0
        %4994 = vmatpush1.xpose.msra.mxu0 0.0
        %4995 = vmatprep.subr.mxu0 0.0
        %4996 = vmatpush1.xpose.msra.mxu0 0.0
        %4997 = vmatprep.subr.mxu0 0.0
        %4998 = vmatpush1.xpose.msra.mxu0 0.0
        %4999 = vmatprep.subr.mxu0 0.0
        %5000 = vmatpush1.xpose.msra.mxu0 0.0
        %5001 = vmatprep.subr.mxu0 0.0
        %5002 = vmatpush1.xpose.msra.mxu0 0.0
        %5003 = vmatprep.subr.mxu0 0.0
        %5004 = vmatpush1.xpose.msra.mxu0 0.0
        %5005 = vmatprep.mubr.f32.mxu0 0.0
        %5006 = vmatmul.mubr.f32.gmra.mrb[0].mxu0 %v4933
        %v5007 = vpop.f32.mrb[0].mxu0
        %v5008 = vadd.f32 0.0, %v5007
        %v5009 = vpop.f32.mrb[0].mxu0
        %5010 = vdwg.mxu0
        %v5012 = vsel %vm1738, %v4345, 0
        %v5015 = vsel %vm1738, %v4569, 0
        %v5018 = vsel %vm1738, %v4637, 0
        %5020 = vmatprep.subr.mxu0 0.0
        %5021 = vmatpush1.xpose.msra.mxu0 %v5015
        %5022 = vmatprep.subr.mxu0 0.0
        %5023 = vmatpush1.xpose.msra.mxu0 %v5018
        %5024 = vmatprep.subr.mxu0 0.0
        %5025 = vmatpush1.xpose.msra.mxu0 0.0
        %5026 = vmatprep.subr.mxu0 0.0
        %5027 = vmatpush1.xpose.msra.mxu0 0.0
        %5028 = vmatprep.subr.mxu0 0.0
        %5029 = vmatpush1.xpose.msra.mxu0 0.0
        %5030 = vmatprep.subr.mxu0 0.0
        %5031 = vmatpush1.xpose.msra.mxu0 0.0
        %5032 = vmatprep.subr.mxu0 0.0
        %5033 = vmatpush1.xpose.msra.mxu0 0.0
        %5034 = vmatprep.subr.mxu0 0.0
        %5035 = vmatpush1.xpose.msra.mxu0 0.0
        %5036 = vmatprep.subr.mxu0 0.0
        %5037 = vmatpush1.xpose.msra.mxu0 0.0
        %5038 = vmatprep.subr.mxu0 0.0
        %5039 = vmatpush1.xpose.msra.mxu0 0.0
        %5040 = vmatprep.subr.mxu0 0.0
        %5041 = vmatpush1.xpose.msra.mxu0 0.0
        %5042 = vmatprep.subr.mxu0 0.0
        %5043 = vmatpush1.xpose.msra.mxu0 0.0
        %5044 = vmatprep.subr.mxu0 0.0
        %5045 = vmatpush1.xpose.msra.mxu0 0.0
        %5046 = vmatprep.subr.mxu0 0.0
        %5047 = vmatpush1.xpose.msra.mxu0 0.0
        %5048 = vmatprep.subr.mxu0 0.0
        %5049 = vmatpush1.xpose.msra.mxu0 0.0
        %5050 = vmatprep.subr.mxu0 0.0
        %5051 = vmatpush1.xpose.msra.mxu0 0.0
        %5052 = vmatprep.subr.mxu0 0.0
        %5053 = vmatpush1.xpose.msra.mxu0 0.0
        %5054 = vmatprep.subr.mxu0 0.0
        %5055 = vmatpush1.xpose.msra.mxu0 0.0
        %5056 = vmatprep.subr.mxu0 0.0
        %5057 = vmatpush1.xpose.msra.mxu0 0.0
        %5058 = vmatprep.subr.mxu0 0.0
        %5059 = vmatpush1.xpose.msra.mxu0 0.0
        %5060 = vmatprep.subr.mxu0 0.0
        %5061 = vmatpush1.xpose.msra.mxu0 0.0
        %5062 = vmatprep.subr.mxu0 0.0
        %5063 = vmatpush1.xpose.msra.mxu0 0.0
        %5064 = vmatprep.subr.mxu0 0.0
        %5065 = vmatpush1.xpose.msra.mxu0 0.0
        %5066 = vmatprep.subr.mxu0 0.0
        %5067 = vmatpush1.xpose.msra.mxu0 0.0
        %5068 = vmatprep.subr.mxu0 0.0
        %5069 = vmatpush1.xpose.msra.mxu0 0.0
        %5070 = vmatprep.subr.mxu0 0.0
        %5071 = vmatpush1.xpose.msra.mxu0 0.0
        %5072 = vmatprep.subr.mxu0 0.0
        %5073 = vmatpush1.xpose.msra.mxu0 0.0
        %5074 = vmatprep.subr.mxu0 0.0
        %5075 = vmatpush1.xpose.msra.mxu0 0.0
        %5076 = vmatprep.subr.mxu0 0.0
        %5077 = vmatpush1.xpose.msra.mxu0 0.0
        %5078 = vmatprep.subr.mxu0 0.0
        %5079 = vmatpush1.xpose.msra.mxu0 0.0
        %5080 = vmatprep.subr.mxu0 0.0
        %5081 = vmatpush1.xpose.msra.mxu0 0.0
        %5082 = vmatprep.subr.mxu0 0.0
        %5083 = vmatpush1.xpose.msra.mxu0 0.0
        %5084 = vmatprep.mubr.f32.mxu0 0.0
        %5085 = vmatmul.mubr.f32.gmra.mrb[0].mxu0 %v5012
        %v5086 = vpop.f32.mrb[0].mxu0
        %v5087 = vadd.f32 0.0, %v5086
        %v5088 = vpop.f32.mrb[0].mxu0
        %5089 = vdwg.mxu0
        %v5091 = vsel %vm1738, %v4346, 0
        %v5094 = vsel %vm1738, %v4570, 0
        %v5097 = vsel %vm1738, %v4638, 0
        %5099 = vmatprep.subr.mxu0 0.0
        %5100 = vmatpush1.xpose.msra.mxu0 %v5094
        %5101 = vmatprep.subr.mxu0 0.0
        %5102 = vmatpush1.xpose.msra.mxu0 %v5097
        %5103 = vmatprep.subr.mxu0 0.0
        %5104 = vmatpush1.xpose.msra.mxu0 0.0
        %5105 = vmatprep.subr.mxu0 0.0
        %5106 = vmatpush1.xpose.msra.mxu0 0.0
        %5107 = vmatprep.subr.mxu0 0.0
        %5108 = vmatpush1.xpose.msra.mxu0 0.0
        %5109 = vmatprep.subr.mxu0 0.0
        %5110 = vmatpush1.xpose.msra.mxu0 0.0
        %5111 = vmatprep.subr.mxu0 0.0
        %5112 = vmatpush1.xpose.msra.mxu0 0.0
        %5113 = vmatprep.subr.mxu0 0.0
        %5114 = vmatpush1.xpose.msra.mxu0 0.0
        %5115 = vmatprep.subr.mxu0 0.0
        %5116 = vmatpush1.xpose.msra.mxu0 0.0
        %5117 = vmatprep.subr.mxu0 0.0
        %5118 = vmatpush1.xpose.msra.mxu0 0.0
        %5119 = vmatprep.subr.mxu0 0.0
        %5120 = vmatpush1.xpose.msra.mxu0 0.0
        %5121 = vmatprep.subr.mxu0 0.0
        %5122 = vmatpush1.xpose.msra.mxu0 0.0
        %5123 = vmatprep.subr.mxu0 0.0
        %5124 = vmatpush1.xpose.msra.mxu0 0.0
        %5125 = vmatprep.subr.mxu0 0.0
        %5126 = vmatpush1.xpose.msra.mxu0 0.0
        %5127 = vmatprep.subr.mxu0 0.0
        %5128 = vmatpush1.xpose.msra.mxu0 0.0
        %5129 = vmatprep.subr.mxu0 0.0
        %5130 = vmatpush1.xpose.msra.mxu0 0.0
        %5131 = vmatprep.subr.mxu0 0.0
        %5132 = vmatpush1.xpose.msra.mxu0 0.0
        %5133 = vmatprep.subr.mxu0 0.0
        %5134 = vmatpush1.xpose.msra.mxu0 0.0
        %5135 = vmatprep.subr.mxu0 0.0
        %5136 = vmatpush1.xpose.msra.mxu0 0.0
        %5137 = vmatprep.subr.mxu0 0.0
        %5138 = vmatpush1.xpose.msra.mxu0 0.0
        %5139 = vmatprep.subr.mxu0 0.0
        %5140 = vmatpush1.xpose.msra.mxu0 0.0
        %5141 = vmatprep.subr.mxu0 0.0
        %5142 = vmatpush1.xpose.msra.mxu0 0.0
        %5143 = vmatprep.subr.mxu0 0.0
        %5144 = vmatpush1.xpose.msra.mxu0 0.0
        %5145 = vmatprep.subr.mxu0 0.0
        %5146 = vmatpush1.xpose.msra.mxu0 0.0
        %5147 = vmatprep.subr.mxu0 0.0
        %5148 = vmatpush1.xpose.msra.mxu0 0.0
        %5149 = vmatprep.subr.mxu0 0.0
        %5150 = vmatpush1.xpose.msra.mxu0 0.0
        %5151 = vmatprep.subr.mxu0 0.0
        %5152 = vmatpush1.xpose.msra.mxu0 0.0
        %5153 = vmatprep.subr.mxu0 0.0
        %5154 = vmatpush1.xpose.msra.mxu0 0.0
        %5155 = vmatprep.subr.mxu0 0.0
        %5156 = vmatpush1.xpose.msra.mxu0 0.0
        %5157 = vmatprep.subr.mxu0 0.0
        %5158 = vmatpush1.xpose.msra.mxu0 0.0
        %5159 = vmatprep.subr.mxu0 0.0
        %5160 = vmatpush1.xpose.msra.mxu0 0.0
        %5161 = vmatprep.subr.mxu0 0.0
        %5162 = vmatpush1.xpose.msra.mxu0 0.0
        %5163 = vmatprep.mubr.f32.mxu0 0.0
        %5164 = vmatmul.mubr.f32.gmra.mrb[0].mxu0 %v5091
        %v5165 = vpop.f32.mrb[0].mxu0
        %v5166 = vadd.f32 0.0, %v5165
        %v5167 = vpop.f32.mrb[0].mxu0
        %5168 = vdwg.mxu0
        %v5170 = vsel %vm1738, %v4347, 0
        %v5173 = vsel %vm1738, %v4571, 0
        %v5176 = vsel %vm1738, %v4639, 0
        %5178 = vmatprep.subr.mxu0 0.0
        %5179 = vmatpush1.xpose.msra.mxu0 %v5173
        %5180 = vmatprep.subr.mxu0 0.0
        %5181 = vmatpush1.xpose.msra.mxu0 %v5176
        %5182 = vmatprep.subr.mxu0 0.0
        %5183 = vmatpush1.xpose.msra.mxu0 0.0
        %5184 = vmatprep.subr.mxu0 0.0
        %5185 = vmatpush1.xpose.msra.mxu0 0.0
        %5186 = vmatprep.subr.mxu0 0.0
        %5187 = vmatpush1.xpose.msra.mxu0 0.0
        %5188 = vmatprep.subr.mxu0 0.0
        %5189 = vmatpush1.xpose.msra.mxu0 0.0
        %5190 = vmatprep.subr.mxu0 0.0
        %5191 = vmatpush1.xpose.msra.mxu0 0.0
        %5192 = vmatprep.subr.mxu0 0.0
        %5193 = vmatpush1.xpose.msra.mxu0 0.0
        %5194 = vmatprep.subr.mxu0 0.0
        %5195 = vmatpush1.xpose.msra.mxu0 0.0
        %5196 = vmatprep.subr.mxu0 0.0
        %5197 = vmatpush1.xpose.msra.mxu0 0.0
        %5198 = vmatprep.subr.mxu0 0.0
        %5199 = vmatpush1.xpose.msra.mxu0 0.0
        %5200 = vmatprep.subr.mxu0 0.0
        %5201 = vmatpush1.xpose.msra.mxu0 0.0
        %5202 = vmatprep.subr.mxu0 0.0
        %5203 = vmatpush1.xpose.msra.mxu0 0.0
        %5204 = vmatprep.subr.mxu0 0.0
        %5205 = vmatpush1.xpose.msra.mxu0 0.0
        %5206 = vmatprep.subr.mxu0 0.0
        %5207 = vmatpush1.xpose.msra.mxu0 0.0
        %5208 = vmatprep.subr.mxu0 0.0
        %5209 = vmatpush1.xpose.msra.mxu0 0.0
        %5210 = vmatprep.subr.mxu0 0.0
        %5211 = vmatpush1.xpose.msra.mxu0 0.0
        %5212 = vmatprep.subr.mxu0 0.0
        %5213 = vmatpush1.xpose.msra.mxu0 0.0
        %5214 = vmatprep.subr.mxu0 0.0
        %5215 = vmatpush1.xpose.msra.mxu0 0.0
        %5216 = vmatprep.subr.mxu0 0.0
        %5217 = vmatpush1.xpose.msra.mxu0 0.0
        %5218 = vmatprep.subr.mxu0 0.0
        %5219 = vmatpush1.xpose.msra.mxu0 0.0
        %5220 = vmatprep.subr.mxu0 0.0
        %5221 = vmatpush1.xpose.msra.mxu0 0.0
        %5222 = vmatprep.subr.mxu0 0.0
        %5223 = vmatpush1.xpose.msra.mxu0 0.0
        %5224 = vmatprep.subr.mxu0 0.0
        %5225 = vmatpush1.xpose.msra.mxu0 0.0
        %5226 = vmatprep.subr.mxu0 0.0
        %5227 = vmatpush1.xpose.msra.mxu0 0.0
        %5228 = vmatprep.subr.mxu0 0.0
        %5229 = vmatpush1.xpose.msra.mxu0 0.0
        %5230 = vmatprep.subr.mxu0 0.0
        %5231 = vmatpush1.xpose.msra.mxu0 0.0
        %5232 = vmatprep.subr.mxu0 0.0
        %5233 = vmatpush1.xpose.msra.mxu0 0.0
        %5234 = vmatprep.subr.mxu0 0.0
        %5235 = vmatpush1.xpose.msra.mxu0 0.0
        %5236 = vmatprep.subr.mxu0 0.0
        %5237 = vmatpush1.xpose.msra.mxu0 0.0
        %5238 = vmatprep.subr.mxu0 0.0
        %5239 = vmatpush1.xpose.msra.mxu0 0.0
        %5240 = vmatprep.subr.mxu0 0.0
        %5241 = vmatpush1.xpose.msra.mxu0 0.0
        %5242 = vmatprep.mubr.f32.mxu0 0.0
        %5243 = vmatmul.mubr.f32.gmra.mrb[0].mxu0 %v5170
        %v5244 = vpop.f32.mrb[0].mxu0
        %v5245 = vadd.f32 0.0, %v5244
        %v5246 = vpop.f32.mrb[0].mxu0
        %5247 = vdwg.mxu0
        %v5248 = vmul.f32 %v5008, 0.35355338
        %v5249 = vmul.f32 %v5087, 0.35355338
        %v5250 = vmul.f32 %v5166, 0.35355338
        %v5251 = vmul.f32 %v5245, 0.35355338
        %v5252 = vsel %vm2532, %v5248, -inf
        %5253 = vmax.xlane.f32.xlu0 %v5252
        %v5254 = vpop.xlane.xlu0 %5253
        %v5255 = vsel %vm2532, %v5249, -inf
        %5256 = vmax.xlane.f32.xlu0 %v5255
        %v5257 = vpop.xlane.xlu0 %5256
        %v5258 = vsel %vm2532, %v5250, -inf
        %5259 = vmax.xlane.f32.xlu0 %v5258
        %v5260 = vpop.xlane.xlu0 %5259
        %v5261 = vsel %vm2532, %v5251, -inf
        %5262 = vmax.xlane.f32.xlu0 %v5261
        %v5263 = vpop.xlane.xlu0 %5262
        %v5264 = vsub.f32 %v5248, %v5254
        %v5265 = vsub.f32 %v5249, %v5257
        %v5266 = vsub.f32 %v5250, %v5260
        %v5267 = vsub.f32 %v5251, %v5263
        %v5268 = vmul.f32 %v5264, 1.442695
        %v5269 = vpow.pop %v5268
        %v5270 = vmul.f32 %v5265, 1.442695
        %v5271 = vpow.pop %v5270
        %v5272 = vmul.f32 %v5266, 1.442695
        %v5273 = vpow.pop %v5272
        %v5274 = vmul.f32 %v5267, 1.442695
        %v5275 = vpow.pop %v5274
        %v5276 = vsel %vm2532, %v5269, 0.0
        %5277 = vadd.xlane.f32.xlu0 %v5276
        %v5278 = vpop.xlane.xlu0 %5277
        %v5279 = vsel %vm2532, %v5271, 0.0
        %5280 = vadd.xlane.f32.xlu0 %v5279
        %v5281 = vpop.xlane.xlu0 %5280
        %v5282 = vsel %vm2532, %v5273, 0.0
        %5283 = vadd.xlane.f32.xlu0 %v5282
        %v5284 = vpop.xlane.xlu0 %5283
        %v5285 = vsel %vm2532, %v5275, 0.0
        %5286 = vadd.xlane.f32.xlu0 %v5285
        %v5287 = vpop.xlane.xlu0 %5286
        %v5288 = vrcp.pop %v5278
        %v5289 = vmul.f32 %v5269, %v5288
        %v5290 = vrcp.pop %v5281
        %v5291 = vmul.f32 %v5271, %v5290
        %v5292 = vrcp.pop %v5284
        %v5293 = vmul.f32 %v5273, %v5292
        %v5294 = vrcp.pop %v5287
        %v5295 = vmul.f32 %v5275, %v5294
        %v5297 = vsel %vm2532, %v5289, 0
        %5299 = vmatprep.subr.mxu0 0.0
        %5300 = vmatpush1.msra.mxu0 %v4860
        %5301 = vmatprep.subr.mxu0 0.0
        %5302 = vmatpush1.msra.mxu0 %v4928
        %5303 = vmatprep.subr.mxu0 0.0
        %5304 = vmatpush1.msra.mxu0 0.0
        %5305 = vmatprep.subr.mxu0 0.0
        %5306 = vmatpush1.msra.mxu0 0.0
        %5307 = vmatprep.subr.mxu0 0.0
        %5308 = vmatpush1.msra.mxu0 0.0
        %5309 = vmatprep.subr.mxu0 0.0
        %5310 = vmatpush1.msra.mxu0 0.0
        %5311 = vmatprep.subr.mxu0 0.0
        %5312 = vmatpush1.msra.mxu0 0.0
        %5313 = vmatprep.subr.mxu0 0.0
        %5314 = vmatpush1.msra.mxu0 0.0
        %5315 = vmatprep.subr.mxu0 0.0
        %5316 = vmatpush1.msra.mxu0 0.0
        %5317 = vmatprep.subr.mxu0 0.0
        %5318 = vmatpush1.msra.mxu0 0.0
        %5319 = vmatprep.subr.mxu0 0.0
        %5320 = vmatpush1.msra.mxu0 0.0
        %5321 = vmatprep.subr.mxu0 0.0
        %5322 = vmatpush1.msra.mxu0 0.0
        %5323 = vmatprep.subr.mxu0 0.0
        %5324 = vmatpush1.msra.mxu0 0.0
        %5325 = vmatprep.subr.mxu0 0.0
        %5326 = vmatpush1.msra.mxu0 0.0
        %5327 = vmatprep.subr.mxu0 0.0
        %5328 = vmatpush1.msra.mxu0 0.0
        %5329 = vmatprep.subr.mxu0 0.0
        %5330 = vmatpush1.msra.mxu0 0.0
        %5331 = vmatprep.subr.mxu0 0.0
        %5332 = vmatpush1.msra.mxu0 0.0
        %5333 = vmatprep.subr.mxu0 0.0
        %5334 = vmatpush1.msra.mxu0 0.0
        %5335 = vmatprep.subr.mxu0 0.0
        %5336 = vmatpush1.msra.mxu0 0.0
        %5337 = vmatprep.subr.mxu0 0.0
        %5338 = vmatpush1.msra.mxu0 0.0
        %5339 = vmatprep.subr.mxu0 0.0
        %5340 = vmatpush1.msra.mxu0 0.0
        %5341 = vmatprep.subr.mxu0 0.0
        %5342 = vmatpush1.msra.mxu0 0.0
        %5343 = vmatprep.subr.mxu0 0.0
        %5344 = vmatpush1.msra.mxu0 0.0
        %5345 = vmatprep.subr.mxu0 0.0
        %5346 = vmatpush1.msra.mxu0 0.0
        %5347 = vmatprep.subr.mxu0 0.0
        %5348 = vmatpush1.msra.mxu0 0.0
        %5349 = vmatprep.subr.mxu0 0.0
        %5350 = vmatpush1.msra.mxu0 0.0
        %5351 = vmatprep.subr.mxu0 0.0
        %5352 = vmatpush1.msra.mxu0 0.0
        %5353 = vmatprep.subr.mxu0 0.0
        %5354 = vmatpush1.msra.mxu0 0.0
        %5355 = vmatprep.subr.mxu0 0.0
        %5356 = vmatpush1.msra.mxu0 0.0
        %5357 = vmatprep.subr.mxu0 0.0
        %5358 = vmatpush1.msra.mxu0 0.0
        %5359 = vmatprep.subr.mxu0 0.0
        %5360 = vmatpush1.msra.mxu0 0.0
        %5361 = vmatprep.subr.mxu0 0.0
        %5362 = vmatpush1.msra.mxu0 0.0
        %5363 = vmatprep.mubr.f32.mxu0 0.0
        %5364 = vmatmul.mubr.f32.gmra.mrb[0].mxu0 %v5297
        %v5365 = vpop.f32.mrb[0].mxu0
        %v5366 = vadd.f32 0.0, %v5365
        %v5367 = vpop.f32.mrb[0].mxu0
        %5368 = vdwg.mxu0
        %v5370 = vsel %vm2532, %v5291, 0
        %5372 = vmatprep.subr.mxu0 0.0
        %5373 = vmatpush1.msra.mxu0 %v4861
        %5374 = vmatprep.subr.mxu0 0.0
        %5375 = vmatpush1.msra.mxu0 %v4929
        %5376 = vmatprep.subr.mxu0 0.0
        %5377 = vmatpush1.msra.mxu0 0.0
        %5378 = vmatprep.subr.mxu0 0.0
        %5379 = vmatpush1.msra.mxu0 0.0
        %5380 = vmatprep.subr.mxu0 0.0
        %5381 = vmatpush1.msra.mxu0 0.0
        %5382 = vmatprep.subr.mxu0 0.0
        %5383 = vmatpush1.msra.mxu0 0.0
        %5384 = vmatprep.subr.mxu0 0.0
        %5385 = vmatpush1.msra.mxu0 0.0
        %5386 = vmatprep.subr.mxu0 0.0
        %5387 = vmatpush1.msra.mxu0 0.0
        %5388 = vmatprep.subr.mxu0 0.0
        %5389 = vmatpush1.msra.mxu0 0.0
        %5390 = vmatprep.subr.mxu0 0.0
        %5391 = vmatpush1.msra.mxu0 0.0
        %5392 = vmatprep.subr.mxu0 0.0
        %5393 = vmatpush1.msra.mxu0 0.0
        %5394 = vmatprep.subr.mxu0 0.0
        %5395 = vmatpush1.msra.mxu0 0.0
        %5396 = vmatprep.subr.mxu0 0.0
        %5397 = vmatpush1.msra.mxu0 0.0
        %5398 = vmatprep.subr.mxu0 0.0
        %5399 = vmatpush1.msra.mxu0 0.0
        %5400 = vmatprep.subr.mxu0 0.0
        %5401 = vmatpush1.msra.mxu0 0.0
        %5402 = vmatprep.subr.mxu0 0.0
        %5403 = vmatpush1.msra.mxu0 0.0
        %5404 = vmatprep.subr.mxu0 0.0
        %5405 = vmatpush1.msra.mxu0 0.0
        %5406 = vmatprep.subr.mxu0 0.0
        %5407 = vmatpush1.msra.mxu0 0.0
        %5408 = vmatprep.subr.mxu0 0.0
        %5409 = vmatpush1.msra.mxu0 0.0
        %5410 = vmatprep.subr.mxu0 0.0
        %5411 = vmatpush1.msra.mxu0 0.0
        %5412 = vmatprep.subr.mxu0 0.0
        %5413 = vmatpush1.msra.mxu0 0.0
        %5414 = vmatprep.subr.mxu0 0.0
        %5415 = vmatpush1.msra.mxu0 0.0
        %5416 = vmatprep.subr.mxu0 0.0
        %5417 = vmatpush1.msra.mxu0 0.0
        %5418 = vmatprep.subr.mxu0 0.0
        %5419 = vmatpush1.msra.mxu0 0.0
        %5420 = vmatprep.subr.mxu0 0.0
        %5421 = vmatpush1.msra.mxu0 0.0
        %5422 = vmatprep.subr.mxu0 0.0
        %5423 = vmatpush1.msra.mxu0 0.0
        %5424 = vmatprep.subr.mxu0 0.0
        %5425 = vmatpush1.msra.mxu0 0.0
        %5426 = vmatprep.subr.mxu0 0.0
        %5427 = vmatpush1.msra.mxu0 0.0
        %5428 = vmatprep.subr.mxu0 0.0
        %5429 = vmatpush1.msra.mxu0 0.0
        %5430 = vmatprep.subr.mxu0 0.0
        %5431 = vmatpush1.msra.mxu0 0.0
        %5432 = vmatprep.subr.mxu0 0.0
        %5433 = vmatpush1.msra.mxu0 0.0
        %5434 = vmatprep.subr.mxu0 0.0
        %5435 = vmatpush1.msra.mxu0 0.0
        %5436 = vmatprep.mubr.f32.mxu0 0.0
        %5437 = vmatmul.mubr.f32.gmra.mrb[0].mxu0 %v5370
        %v5438 = vpop.f32.mrb[0].mxu0
        %v5439 = vadd.f32 0.0, %v5438
        %v5440 = vpop.f32.mrb[0].mxu0
        %5441 = vdwg.mxu0
        %v5443 = vsel %vm2532, %v5293, 0
        %5445 = vmatprep.subr.mxu0 0.0
        %5446 = vmatpush1.msra.mxu0 %v4862
        %5447 = vmatprep.subr.mxu0 0.0
        %5448 = vmatpush1.msra.mxu0 %v4930
        %5449 = vmatprep.subr.mxu0 0.0
        %5450 = vmatpush1.msra.mxu0 0.0
        %5451 = vmatprep.subr.mxu0 0.0
        %5452 = vmatpush1.msra.mxu0 0.0
        %5453 = vmatprep.subr.mxu0 0.0
        %5454 = vmatpush1.msra.mxu0 0.0
        %5455 = vmatprep.subr.mxu0 0.0
        %5456 = vmatpush1.msra.mxu0 0.0
        %5457 = vmatprep.subr.mxu0 0.0
        %5458 = vmatpush1.msra.mxu0 0.0
        %5459 = vmatprep.subr.mxu0 0.0
        %5460 = vmatpush1.msra.mxu0 0.0
        %5461 = vmatprep.subr.mxu0 0.0
        %5462 = vmatpush1.msra.mxu0 0.0
        %5463 = vmatprep.subr.mxu0 0.0
        %5464 = vmatpush1.msra.mxu0 0.0
        %5465 = vmatprep.subr.mxu0 0.0
        %5466 = vmatpush1.msra.mxu0 0.0
        %5467 = vmatprep.subr.mxu0 0.0
        %5468 = vmatpush1.msra.mxu0 0.0
        %5469 = vmatprep.subr.mxu0 0.0
        %5470 = vmatpush1.msra.mxu0 0.0
        %5471 = vmatprep.subr.mxu0 0.0
        %5472 = vmatpush1.msra.mxu0 0.0
        %5473 = vmatprep.subr.mxu0 0.0
        %5474 = vmatpush1.msra.mxu0 0.0
        %5475 = vmatprep.subr.mxu0 0.0
        %5476 = vmatpush1.msra.mxu0 0.0
        %5477 = vmatprep.subr.mxu0 0.0
        %5478 = vmatpush1.msra.mxu0 0.0
        %5479 = vmatprep.subr.mxu0 0.0
        %5480 = vmatpush1.msra.mxu0 0.0
        %5481 = vmatprep.subr.mxu0 0.0
        %5482 = vmatpush1.msra.mxu0 0.0
        %5483 = vmatprep.subr.mxu0 0.0
        %5484 = vmatpush1.msra.mxu0 0.0
        %5485 = vmatprep.subr.mxu0 0.0
        %5486 = vmatpush1.msra.mxu0 0.0
        %5487 = vmatprep.subr.mxu0 0.0
        %5488 = vmatpush1.msra.mxu0 0.0
        %5489 = vmatprep.subr.mxu0 0.0
        %5490 = vmatpush1.msra.mxu0 0.0
        %5491 = vmatprep.subr.mxu0 0.0
        %5492 = vmatpush1.msra.mxu0 0.0
        %5493 = vmatprep.subr.mxu0 0.0
        %5494 = vmatpush1.msra.mxu0 0.0
        %5495 = vmatprep.subr.mxu0 0.0
        %5496 = vmatpush1.msra.mxu0 0.0
        %5497 = vmatprep.subr.mxu0 0.0
        %5498 = vmatpush1.msra.mxu0 0.0
        %5499 = vmatprep.subr.mxu0 0.0
        %5500 = vmatpush1.msra.mxu0 0.0
        %5501 = vmatprep.subr.mxu0 0.0
        %5502 = vmatpush1.msra.mxu0 0.0
        %5503 = vmatprep.subr.mxu0 0.0
        %5504 = vmatpush1.msra.mxu0 0.0
        %5505 = vmatprep.subr.mxu0 0.0
        %5506 = vmatpush1.msra.mxu0 0.0
        %5507 = vmatprep.subr.mxu0 0.0
        %5508 = vmatpush1.msra.mxu0 0.0
        %5509 = vmatprep.mubr.f32.mxu0 0.0
        %5510 = vmatmul.mubr.f32.gmra.mrb[0].mxu0 %v5443
        %v5511 = vpop.f32.mrb[0].mxu0
        %v5512 = vadd.f32 0.0, %v5511
        %v5513 = vpop.f32.mrb[0].mxu0
        %5514 = vdwg.mxu0
        %v5516 = vsel %vm2532, %v5295, 0
        %5518 = vmatprep.subr.mxu0 0.0
        %5519 = vmatpush1.msra.mxu0 %v4863
        %5520 = vmatprep.subr.mxu0 0.0
        %5521 = vmatpush1.msra.mxu0 %v4931
        %5522 = vmatprep.subr.mxu0 0.0
        %5523 = vmatpush1.msra.mxu0 0.0
        %5524 = vmatprep.subr.mxu0 0.0
        %5525 = vmatpush1.msra.mxu0 0.0
        %5526 = vmatprep.subr.mxu0 0.0
        %5527 = vmatpush1.msra.mxu0 0.0
        %5528 = vmatprep.subr.mxu0 0.0
        %5529 = vmatpush1.msra.mxu0 0.0
        %5530 = vmatprep.subr.mxu0 0.0
        %5531 = vmatpush1.msra.mxu0 0.0
        %5532 = vmatprep.subr.mxu0 0.0
        %5533 = vmatpush1.msra.mxu0 0.0
        %5534 = vmatprep.subr.mxu0 0.0
        %5535 = vmatpush1.msra.mxu0 0.0
        %5536 = vmatprep.subr.mxu0 0.0
        %5537 = vmatpush1.msra.mxu0 0.0
        %5538 = vmatprep.subr.mxu0 0.0
        %5539 = vmatpush1.msra.mxu0 0.0
        %5540 = vmatprep.subr.mxu0 0.0
        %5541 = vmatpush1.msra.mxu0 0.0
        %5542 = vmatprep.subr.mxu0 0.0
        %5543 = vmatpush1.msra.mxu0 0.0
        %5544 = vmatprep.subr.mxu0 0.0
        %5545 = vmatpush1.msra.mxu0 0.0
        %5546 = vmatprep.subr.mxu0 0.0
        %5547 = vmatpush1.msra.mxu0 0.0
        %5548 = vmatprep.subr.mxu0 0.0
        %5549 = vmatpush1.msra.mxu0 0.0
        %5550 = vmatprep.subr.mxu0 0.0
        %5551 = vmatpush1.msra.mxu0 0.0
        %5552 = vmatprep.subr.mxu0 0.0
        %5553 = vmatpush1.msra.mxu0 0.0
        %5554 = vmatprep.subr.mxu0 0.0
        %5555 = vmatpush1.msra.mxu0 0.0
        %5556 = vmatprep.subr.mxu0 0.0
        %5557 = vmatpush1.msra.mxu0 0.0
        %5558 = vmatprep.subr.mxu0 0.0
        %5559 = vmatpush1.msra.mxu0 0.0
        %5560 = vmatprep.subr.mxu0 0.0
        %5561 = vmatpush1.msra.mxu0 0.0
        %5562 = vmatprep.subr.mxu0 0.0
        %5563 = vmatpush1.msra.mxu0 0.0
        %5564 = vmatprep.subr.mxu0 0.0
        %5565 = vmatpush1.msra.mxu0 0.0
        %5566 = vmatprep.subr.mxu0 0.0
        %5567 = vmatpush1.msra.mxu0 0.0
        %5568 = vmatprep.subr.mxu0 0.0
        %5569 = vmatpush1.msra.mxu0 0.0
        %5570 = vmatprep.subr.mxu0 0.0
        %5571 = vmatpush1.msra.mxu0 0.0
        %5572 = vmatprep.subr.mxu0 0.0
        %5573 = vmatpush1.msra.mxu0 0.0
        %5574 = vmatprep.subr.mxu0 0.0
        %5575 = vmatpush1.msra.mxu0 0.0
        %5576 = vmatprep.subr.mxu0 0.0
        %5577 = vmatpush1.msra.mxu0 0.0
        %5578 = vmatprep.subr.mxu0 0.0
        %5579 = vmatpush1.msra.mxu0 0.0
        %5580 = vmatprep.subr.mxu0 0.0
        %5581 = vmatpush1.msra.mxu0 0.0
        %5582 = vmatprep.mubr.f32.mxu0 0.0
        %5583 = vmatmul.mubr.f32.gmra.mrb[0].mxu0 %v5516
        %v5584 = vpop.f32.mrb[0].mxu0
        %v5585 = vadd.f32 0.0, %v5584
        %v5586 = vpop.f32.mrb[0].mxu0
        %5587 = vdwg.mxu0
        %v5588 = vcombine.low %v5366, %v5512
        %v5589 = vcombine.high %v5366, %v5512
        %v5591 = vunpack.c.l.s4 1983009808
        %v5592 = vunpack.c.0.s8 %v5591
        %v5593 = vlaneseq
        %v5594 = vshrl.u32 %v5593, 7
        %v5595 = vsub.s32 %v5592, %v5594
        %v5596 = vrot.slane %v5588, %v5595
        %v5598 = vunpack.c.l.s4 1983009808
        %v5599 = vunpack.c.0.s8 %v5598
        %v5600 = vlaneseq
        %v5601 = vshrl.u32 %v5600, 7
        %v5602 = vsub.s32 %v5599, %v5601
        %v5603 = vrot.slane %v5589, %v5602
        %v5604 = vcombine.low %v5439, %v5585
        %v5605 = vcombine.high %v5439, %v5585
        %v5607 = vunpack.c.l.s4 1983009808
        %v5608 = vunpack.c.0.s8 %v5607
        %v5609 = vlaneseq
        %v5610 = vshrl.u32 %v5609, 7
        %v5611 = vsub.s32 %v5608, %v5610
        %v5612 = vrot.slane %v5604, %v5611
        %v5614 = vunpack.c.l.s4 1983009808
        %v5615 = vunpack.c.0.s8 %v5614
        %v5616 = vlaneseq
        %v5617 = vshrl.u32 %v5616, 7
        %v5618 = vsub.s32 %v5615, %v5617
        %v5619 = vrot.slane %v5605, %v5618
        %v5620 = vcombine.low %v5596, %v5612
        %v5621 = vcombine.high %v5596, %v5612
        %v5623 = vunpack.c.l.s4 1934713408
        %v5624 = vunpack.c.0.s8 %v5623
        %v5625 = vlaneseq
        %v5626 = vshrl.u32 %v5625, 7
        %v5627 = vsub.s32 %v5624, %v5626
        %v5628 = vrot.slane %v5620, %v5627
        %v5630 = vunpack.c.l.s4 1934713408
        %v5631 = vunpack.c.0.s8 %v5630
        %v5632 = vlaneseq
        %v5633 = vshrl.u32 %v5632, 7
        %v5634 = vsub.s32 %v5631, %v5633
        %v5635 = vrot.slane %v5621, %v5634
        %v5636 = vcombine.low %v5603, %v5619
        %v5637 = vcombine.high %v5603, %v5619
        %v5639 = vunpack.c.l.s4 1934713408
        %v5640 = vunpack.c.0.s8 %v5639
        %v5641 = vlaneseq
        %v5642 = vshrl.u32 %v5641, 7
        %v5643 = vsub.s32 %v5640, %v5642
        %v5644 = vrot.slane %v5636, %v5643
        %v5646 = vunpack.c.l.s4 1934713408
        %v5647 = vunpack.c.0.s8 %v5646
        %v5648 = vlaneseq
        %v5649 = vshrl.u32 %v5648, 7
        %v5650 = vsub.s32 %v5647, %v5649
        %v5651 = vrot.slane %v5637, %v5650
        %v5652 = vcombine.high %v5628, 0.0
        %v5653 = vcombine.high %v5635, 0.0
        %v5654 = vcombine.high %v5644, 0.0
        %v5655 = vcombine.high %v5651, 0.0
        %v5656 = vcombine.low %v5628, %v5635
        %v5658 = vunpack.c.l.s4 1983009808
        %v5659 = vunpack.c.0.s8 %v5658
        %v5660 = vlaneseq
        %v5661 = vshrl.u32 %v5660, 7
        %v5662 = vsub.s32 %v5659, %v5661
        %v5663 = vrot.slane %v5656, %v5662
        %v5664 = vcombine.low %v5652, %v5653
        %v5666 = vunpack.c.l.s4 1983009808
        %v5667 = vunpack.c.0.s8 %v5666
        %v5668 = vlaneseq
        %v5669 = vshrl.u32 %v5668, 7
        %v5670 = vsub.s32 %v5667, %v5669
        %v5671 = vrot.slane %v5664, %v5670
        %v5672 = vcombine.low %v5644, %v5651
        %v5674 = vunpack.c.l.s4 1983009808
        %v5675 = vunpack.c.0.s8 %v5674
        %v5676 = vlaneseq
        %v5677 = vshrl.u32 %v5676, 7
        %v5678 = vsub.s32 %v5675, %v5677
        %v5679 = vrot.slane %v5672, %v5678
        %v5680 = vcombine.low %v5654, %v5655
        %v5682 = vunpack.c.l.s4 1983009808
        %v5683 = vunpack.c.0.s8 %v5682
        %v5684 = vlaneseq
        %v5685 = vshrl.u32 %v5684, 7
        %v5686 = vsub.s32 %v5683, %v5685
        %v5687 = vrot.slane %v5680, %v5686
        %v5688 = vcombine.low %v5663, %v5671
        %v5689 = vcombine.high %v5663, %v5671
        %v5691 = vunpack.c.l.s4 1934713408
        %v5692 = vunpack.c.0.s8 %v5691
        %v5693 = vlaneseq
        %v5694 = vshrl.u32 %v5693, 7
        %v5695 = vsub.s32 %v5692, %v5694
        %v5696 = vrot.slane %v5688, %v5695
        %v5698 = vunpack.c.l.s4 1934713408
        %v5699 = vunpack.c.0.s8 %v5698
        %v5700 = vlaneseq
        %v5701 = vshrl.u32 %v5700, 7
        %v5702 = vsub.s32 %v5699, %v5701
        %v5703 = vrot.slane %v5689, %v5702
        %v5704 = vcombine.low %v5679, %v5687
        %v5705 = vcombine.high %v5679, %v5687
        %v5707 = vunpack.c.l.s4 1934713408
        %v5708 = vunpack.c.0.s8 %v5707
        %v5709 = vlaneseq
        %v5710 = vshrl.u32 %v5709, 7
        %v5711 = vsub.s32 %v5708, %v5710
        %v5712 = vrot.slane %v5704, %v5711
        %v5714 = vunpack.c.l.s4 1934713408
        %v5715 = vunpack.c.0.s8 %v5714
        %v5716 = vlaneseq
        %v5717 = vshrl.u32 %v5716, 7
        %v5718 = vsub.s32 %v5715, %v5717
        %v5719 = vrot.slane %v5705, %v5718
        %v5720 = vcombine.low %v5696, %v5712
        %v5721 = vcombine.high %v5696, %v5712
        %v5722 = vcombine.low %v5703, %v5719
        %v5723 = vcombine.high %v5703, %v5719
        %5725 = vrot.lane.b32.xlu0 %v5721, 8
        %v5726 = vpop.permute.xlu0 %5725
        %5729 = vrot.lane.b32.xlu0 %v5722, 16
        %v5730 = vpop.permute.xlu0 %5729
        %5733 = vrot.lane.b32.xlu0 %v5723, 24
        %v5734 = vpop.permute.xlu0 %5733
        %v5736 = vsel %vm1738, %v5720, %v5726
        %v5737 = vsel %vm2532, %v5736, %v5730
        %v5738 = vsel %vm2534, %v5737, %v5734
        %5740 = vrot.lane.b32.xlu0 %v3986, 120
        %v5741 = vpop.permute.xlu0 %5740
        %5743 = vrot.lane.b32.xlu0 %v3986, 112
        %v5744 = vpop.permute.xlu0 %5743
        %5746 = vrot.lane.b32.xlu0 %v3986, 104
        %v5747 = vpop.permute.xlu0 %5746
        %v5749 = vcombine.low %v3986, %v5744
        %v5750 = vcombine.high %v3986, %v5744
        %v5752 = vunpack.c.l.s4 1983009808
        %v5753 = vunpack.c.0.s8 %v5752
        %v5754 = vlaneseq
        %v5755 = vshrl.u32 %v5754, 7
        %v5756 = vsub.s32 %v5753, %v5755
        %v5757 = vrot.slane %v5749, %v5756
        %v5759 = vunpack.c.l.s4 1983009808
        %v5760 = vunpack.c.0.s8 %v5759
        %v5761 = vlaneseq
        %v5762 = vshrl.u32 %v5761, 7
        %v5763 = vsub.s32 %v5760, %v5762
        %v5764 = vrot.slane %v5750, %v5763
        %v5765 = vcombine.low %v5741, %v5747
        %v5766 = vcombine.high %v5741, %v5747
        %v5768 = vunpack.c.l.s4 1983009808
        %v5769 = vunpack.c.0.s8 %v5768
        %v5770 = vlaneseq
        %v5771 = vshrl.u32 %v5770, 7
        %v5772 = vsub.s32 %v5769, %v5771
        %v5773 = vrot.slane %v5765, %v5772
        %v5775 = vunpack.c.l.s4 1983009808
        %v5776 = vunpack.c.0.s8 %v5775
        %v5777 = vlaneseq
        %v5778 = vshrl.u32 %v5777, 7
        %v5779 = vsub.s32 %v5776, %v5778
        %v5780 = vrot.slane %v5766, %v5779
        %v5781 = vcombine.low %v5757, %v5773
        %v5782 = vcombine.high %v5757, %v5773
        %v5784 = vunpack.c.l.s4 1934713408
        %v5785 = vunpack.c.0.s8 %v5784
        %v5786 = vlaneseq
        %v5787 = vshrl.u32 %v5786, 7
        %v5788 = vsub.s32 %v5785, %v5787
        %v5789 = vrot.slane %v5781, %v5788
        %v5791 = vunpack.c.l.s4 1934713408
        %v5792 = vunpack.c.0.s8 %v5791
        %v5793 = vlaneseq
        %v5794 = vshrl.u32 %v5793, 7
        %v5795 = vsub.s32 %v5792, %v5794
        %v5796 = vrot.slane %v5782, %v5795
        %v5797 = vcombine.low %v5764, %v5780
        %v5798 = vcombine.high %v5764, %v5780
        %v5800 = vunpack.c.l.s4 1934713408
        %v5801 = vunpack.c.0.s8 %v5800
        %v5802 = vlaneseq
        %v5803 = vshrl.u32 %v5802, 7
        %v5804 = vsub.s32 %v5801, %v5803
        %v5805 = vrot.slane %v5797, %v5804
        %v5807 = vunpack.c.l.s4 1934713408
        %v5808 = vunpack.c.0.s8 %v5807
        %v5809 = vlaneseq
        %v5810 = vshrl.u32 %v5809, 7
        %v5811 = vsub.s32 %v5808, %v5810
        %v5812 = vrot.slane %v5798, %v5811
        %v5813 = vcombine.high %v5789, 0.0
        %v5814 = vcombine.high %v5796, 0.0
        %v5815 = vcombine.high %v5805, 0.0
        %v5816 = vcombine.high %v5812, 0.0
        %v5817 = vcombine.low %v5789, %v5796
        %v5819 = vunpack.c.l.s4 1983009808
        %v5820 = vunpack.c.0.s8 %v5819
        %v5821 = vlaneseq
        %v5822 = vshrl.u32 %v5821, 7
        %v5823 = vsub.s32 %v5820, %v5822
        %v5824 = vrot.slane %v5817, %v5823
        %v5825 = vcombine.low %v5813, %v5814
        %v5827 = vunpack.c.l.s4 1983009808
        %v5828 = vunpack.c.0.s8 %v5827
        %v5829 = vlaneseq
        %v5830 = vshrl.u32 %v5829, 7
        %v5831 = vsub.s32 %v5828, %v5830
        %v5832 = vrot.slane %v5825, %v5831
        %v5833 = vcombine.low %v5805, %v5812
        %v5835 = vunpack.c.l.s4 1983009808
        %v5836 = vunpack.c.0.s8 %v5835
        %v5837 = vlaneseq
        %v5838 = vshrl.u32 %v5837, 7
        %v5839 = vsub.s32 %v5836, %v5838
        %v5840 = vrot.slane %v5833, %v5839
        %v5841 = vcombine.low %v5815, %v5816
        %v5843 = vunpack.c.l.s4 1983009808
        %v5844 = vunpack.c.0.s8 %v5843
        %v5845 = vlaneseq
        %v5846 = vshrl.u32 %v5845, 7
        %v5847 = vsub.s32 %v5844, %v5846
        %v5848 = vrot.slane %v5841, %v5847
        %v5849 = vcombine.low %v5824, %v5832
        %v5850 = vcombine.high %v5824, %v5832
        %v5852 = vunpack.c.l.s4 1934713408
        %v5853 = vunpack.c.0.s8 %v5852
        %v5854 = vlaneseq
        %v5855 = vshrl.u32 %v5854, 7
        %v5856 = vsub.s32 %v5853, %v5855
        %v5857 = vrot.slane %v5849, %v5856
        %v5859 = vunpack.c.l.s4 1934713408
        %v5860 = vunpack.c.0.s8 %v5859
        %v5861 = vlaneseq
        %v5862 = vshrl.u32 %v5861, 7
        %v5863 = vsub.s32 %v5860, %v5862
        %v5864 = vrot.slane %v5850, %v5863
        %v5865 = vcombine.low %v5840, %v5848
        %v5866 = vcombine.high %v5840, %v5848
        %v5868 = vunpack.c.l.s4 1934713408
        %v5869 = vunpack.c.0.s8 %v5868
        %v5870 = vlaneseq
        %v5871 = vshrl.u32 %v5870, 7
        %v5872 = vsub.s32 %v5869, %v5871
        %v5873 = vrot.slane %v5865, %v5872
        %v5875 = vunpack.c.l.s4 1934713408
        %v5876 = vunpack.c.0.s8 %v5875
        %v5877 = vlaneseq
        %v5878 = vshrl.u32 %v5877, 7
        %v5879 = vsub.s32 %v5876, %v5878
        %v5880 = vrot.slane %v5866, %v5879
        %v5881 = vcombine.low %v5857, %v5873
        %v5882 = vcombine.high %v5857, %v5873
        %v5883 = vcombine.low %v5864, %v5880
        %v5884 = vcombine.high %v5864, %v5880
        %5887 = vrot.lane.b32.xlu0 %v4091, 120
        %v5888 = vpop.permute.xlu0 %5887
        %5889 = vrot.lane.b32.xlu0 %v4096, 120
        %v5890 = vpop.permute.xlu0 %5889
        %5893 = vrot.lane.b32.xlu0 %v4091, 112
        %v5894 = vpop.permute.xlu0 %5893
        %5895 = vrot.lane.b32.xlu0 %v4096, 112
        %v5896 = vpop.permute.xlu0 %5895
        %5899 = vrot.lane.b32.xlu0 %v4091, 104
        %v5900 = vpop.permute.xlu0 %5899
        %5901 = vrot.lane.b32.xlu0 %v4096, 104
        %v5902 = vpop.permute.xlu0 %5901
        %v5905 = vcombine.low %v4091, %v5894
        %v5906 = vcombine.high %v4091, %v5894
        %v5908 = vunpack.c.l.s4 1983009808
        %v5909 = vunpack.c.0.s8 %v5908
        %v5910 = vlaneseq
        %v5911 = vshrl.u32 %v5910, 7
        %v5912 = vsub.s32 %v5909, %v5911
        %v5913 = vrot.slane %v5905, %v5912
        %v5915 = vunpack.c.l.s4 1983009808
        %v5916 = vunpack.c.0.s8 %v5915
        %v5917 = vlaneseq
        %v5918 = vshrl.u32 %v5917, 7
        %v5919 = vsub.s32 %v5916, %v5918
        %v5920 = vrot.slane %v5906, %v5919
        %v5921 = vcombine.low %v5888, %v5900
        %v5922 = vcombine.high %v5888, %v5900
        %v5924 = vunpack.c.l.s4 1983009808
        %v5925 = vunpack.c.0.s8 %v5924
        %v5926 = vlaneseq
        %v5927 = vshrl.u32 %v5926, 7
        %v5928 = vsub.s32 %v5925, %v5927
        %v5929 = vrot.slane %v5921, %v5928
        %v5931 = vunpack.c.l.s4 1983009808
        %v5932 = vunpack.c.0.s8 %v5931
        %v5933 = vlaneseq
        %v5934 = vshrl.u32 %v5933, 7
        %v5935 = vsub.s32 %v5932, %v5934
        %v5936 = vrot.slane %v5922, %v5935
        %v5937 = vcombine.low %v5913, %v5929
        %v5938 = vcombine.high %v5913, %v5929
        %v5940 = vunpack.c.l.s4 1934713408
        %v5941 = vunpack.c.0.s8 %v5940
        %v5942 = vlaneseq
        %v5943 = vshrl.u32 %v5942, 7
        %v5944 = vsub.s32 %v5941, %v5943
        %v5945 = vrot.slane %v5937, %v5944
        %v5947 = vunpack.c.l.s4 1934713408
        %v5948 = vunpack.c.0.s8 %v5947
        %v5949 = vlaneseq
        %v5950 = vshrl.u32 %v5949, 7
        %v5951 = vsub.s32 %v5948, %v5950
        %v5952 = vrot.slane %v5938, %v5951
        %v5953 = vcombine.low %v5920, %v5936
        %v5954 = vcombine.high %v5920, %v5936
        %v5956 = vunpack.c.l.s4 1934713408
        %v5957 = vunpack.c.0.s8 %v5956
        %v5958 = vlaneseq
        %v5959 = vshrl.u32 %v5958, 7
        %v5960 = vsub.s32 %v5957, %v5959
        %v5961 = vrot.slane %v5953, %v5960
        %v5963 = vunpack.c.l.s4 1934713408
        %v5964 = vunpack.c.0.s8 %v5963
        %v5965 = vlaneseq
        %v5966 = vshrl.u32 %v5965, 7
        %v5967 = vsub.s32 %v5964, %v5966
        %v5968 = vrot.slane %v5954, %v5967
        %v5969 = vcombine.high %v5945, 0.0
        %v5970 = vcombine.high %v5952, 0.0
        %v5971 = vcombine.high %v5961, 0.0
        %v5972 = vcombine.high %v5968, 0.0
        %v5973 = vcombine.low %v4096, %v5896
        %v5974 = vcombine.high %v4096, %v5896
        %v5976 = vunpack.c.l.s4 1983009808
        %v5977 = vunpack.c.0.s8 %v5976
        %v5978 = vlaneseq
        %v5979 = vshrl.u32 %v5978, 7
        %v5980 = vsub.s32 %v5977, %v5979
        %v5981 = vrot.slane %v5973, %v5980
        %v5983 = vunpack.c.l.s4 1983009808
        %v5984 = vunpack.c.0.s8 %v5983
        %v5985 = vlaneseq
        %v5986 = vshrl.u32 %v5985, 7
        %v5987 = vsub.s32 %v5984, %v5986
        %v5988 = vrot.slane %v5974, %v5987
        %v5989 = vcombine.low %v5890, %v5902
        %v5990 = vcombine.high %v5890, %v5902
        %v5992 = vunpack.c.l.s4 1983009808
        %v5993 = vunpack.c.0.s8 %v5992
        %v5994 = vlaneseq
        %v5995 = vshrl.u32 %v5994, 7
        %v5996 = vsub.s32 %v5993, %v5995
        %v5997 = vrot.slane %v5989, %v5996
        %v5999 = vunpack.c.l.s4 1983009808
        %v6000 = vunpack.c.0.s8 %v5999
        %v6001 = vlaneseq
        %v6002 = vshrl.u32 %v6001, 7
        %v6003 = vsub.s32 %v6000, %v6002
        %v6004 = vrot.slane %v5990, %v6003
        %v6005 = vcombine.low %v5981, %v5997
        %v6006 = vcombine.high %v5981, %v5997
        %v6008 = vunpack.c.l.s4 1934713408
        %v6009 = vunpack.c.0.s8 %v6008
        %v6010 = vlaneseq
        %v6011 = vshrl.u32 %v6010, 7
        %v6012 = vsub.s32 %v6009, %v6011
        %v6013 = vrot.slane %v6005, %v6012
        %v6015 = vunpack.c.l.s4 1934713408
        %v6016 = vunpack.c.0.s8 %v6015
        %v6017 = vlaneseq
        %v6018 = vshrl.u32 %v6017, 7
        %v6019 = vsub.s32 %v6016, %v6018
        %v6020 = vrot.slane %v6006, %v6019
        %v6021 = vcombine.low %v5988, %v6004
        %v6022 = vcombine.high %v5988, %v6004
        %v6024 = vunpack.c.l.s4 1934713408
        %v6025 = vunpack.c.0.s8 %v6024
        %v6026 = vlaneseq
        %v6027 = vshrl.u32 %v6026, 7
        %v6028 = vsub.s32 %v6025, %v6027
        %v6029 = vrot.slane %v6021, %v6028
        %v6031 = vunpack.c.l.s4 1934713408
        %v6032 = vunpack.c.0.s8 %v6031
        %v6033 = vlaneseq
        %v6034 = vshrl.u32 %v6033, 7
        %v6035 = vsub.s32 %v6032, %v6034
        %v6036 = vrot.slane %v6022, %v6035
        %v6037 = vcombine.high %v6013, 0.0
        %v6038 = vcombine.high %v6020, 0.0
        %v6039 = vcombine.high %v6029, 0.0
        %v6040 = vcombine.high %v6036, 0.0
        %v6041 = vcombine.low %v5945, %v5952
        %v6043 = vunpack.c.l.s4 1983009808
        %v6044 = vunpack.c.0.s8 %v6043
        %v6045 = vlaneseq
        %v6046 = vshrl.u32 %v6045, 7
        %v6047 = vsub.s32 %v6044, %v6046
        %v6048 = vrot.slane %v6041, %v6047
        %v6049 = vcombine.low %v5969, %v5970
        %v6051 = vunpack.c.l.s4 1983009808
        %v6052 = vunpack.c.0.s8 %v6051
        %v6053 = vlaneseq
        %v6054 = vshrl.u32 %v6053, 7
        %v6055 = vsub.s32 %v6052, %v6054
        %v6056 = vrot.slane %v6049, %v6055
        %v6057 = vcombine.low %v5961, %v5968
        %v6059 = vunpack.c.l.s4 1983009808
        %v6060 = vunpack.c.0.s8 %v6059
        %v6061 = vlaneseq
        %v6062 = vshrl.u32 %v6061, 7
        %v6063 = vsub.s32 %v6060, %v6062
        %v6064 = vrot.slane %v6057, %v6063
        %v6065 = vcombine.low %v5971, %v5972
        %v6067 = vunpack.c.l.s4 1983009808
        %v6068 = vunpack.c.0.s8 %v6067
        %v6069 = vlaneseq
        %v6070 = vshrl.u32 %v6069, 7
        %v6071 = vsub.s32 %v6068, %v6070
        %v6072 = vrot.slane %v6065, %v6071
        %v6073 = vcombine.low %v6048, %v6056
        %v6074 = vcombine.high %v6048, %v6056
        %v6076 = vunpack.c.l.s4 1934713408
        %v6077 = vunpack.c.0.s8 %v6076
        %v6078 = vlaneseq
        %v6079 = vshrl.u32 %v6078, 7
        %v6080 = vsub.s32 %v6077, %v6079
        %v6081 = vrot.slane %v6073, %v6080
        %v6083 = vunpack.c.l.s4 1934713408
        %v6084 = vunpack.c.0.s8 %v6083
        %v6085 = vlaneseq
        %v6086 = vshrl.u32 %v6085, 7
        %v6087 = vsub.s32 %v6084, %v6086
        %v6088 = vrot.slane %v6074, %v6087
        %v6089 = vcombine.low %v6064, %v6072
        %v6090 = vcombine.high %v6064, %v6072
        %v6092 = vunpack.c.l.s4 1934713408
        %v6093 = vunpack.c.0.s8 %v6092
        %v6094 = vlaneseq
        %v6095 = vshrl.u32 %v6094, 7
        %v6096 = vsub.s32 %v6093, %v6095
        %v6097 = vrot.slane %v6089, %v6096
        %v6099 = vunpack.c.l.s4 1934713408
        %v6100 = vunpack.c.0.s8 %v6099
        %v6101 = vlaneseq
        %v6102 = vshrl.u32 %v6101, 7
        %v6103 = vsub.s32 %v6100, %v6102
        %v6104 = vrot.slane %v6090, %v6103
        %v6105 = vcombine.low %v6081, %v6097
        %v6106 = vcombine.high %v6081, %v6097
        %v6107 = vcombine.low %v6088, %v6104
        %v6108 = vcombine.high %v6088, %v6104
        %v6109 = vcombine.low %v6013, %v6020
        %v6111 = vunpack.c.l.s4 1983009808
        %v6112 = vunpack.c.0.s8 %v6111
        %v6113 = vlaneseq
        %v6114 = vshrl.u32 %v6113, 7
        %v6115 = vsub.s32 %v6112, %v6114
        %v6116 = vrot.slane %v6109, %v6115
        %v6117 = vcombine.low %v6037, %v6038
        %v6119 = vunpack.c.l.s4 1983009808
        %v6120 = vunpack.c.0.s8 %v6119
        %v6121 = vlaneseq
        %v6122 = vshrl.u32 %v6121, 7
        %v6123 = vsub.s32 %v6120, %v6122
        %v6124 = vrot.slane %v6117, %v6123
        %v6125 = vcombine.low %v6029, %v6036
        %v6127 = vunpack.c.l.s4 1983009808
        %v6128 = vunpack.c.0.s8 %v6127
        %v6129 = vlaneseq
        %v6130 = vshrl.u32 %v6129, 7
        %v6131 = vsub.s32 %v6128, %v6130
        %v6132 = vrot.slane %v6125, %v6131
        %v6133 = vcombine.low %v6039, %v6040
        %v6135 = vunpack.c.l.s4 1983009808
        %v6136 = vunpack.c.0.s8 %v6135
        %v6137 = vlaneseq
        %v6138 = vshrl.u32 %v6137, 7
        %v6139 = vsub.s32 %v6136, %v6138
        %v6140 = vrot.slane %v6133, %v6139
        %v6141 = vcombine.low %v6116, %v6124
        %v6142 = vcombine.high %v6116, %v6124
        %v6144 = vunpack.c.l.s4 1934713408
        %v6145 = vunpack.c.0.s8 %v6144
        %v6146 = vlaneseq
        %v6147 = vshrl.u32 %v6146, 7
        %v6148 = vsub.s32 %v6145, %v6147
        %v6149 = vrot.slane %v6141, %v6148
        %v6151 = vunpack.c.l.s4 1934713408
        %v6152 = vunpack.c.0.s8 %v6151
        %v6153 = vlaneseq
        %v6154 = vshrl.u32 %v6153, 7
        %v6155 = vsub.s32 %v6152, %v6154
        %v6156 = vrot.slane %v6142, %v6155
        %v6157 = vcombine.low %v6132, %v6140
        %v6158 = vcombine.high %v6132, %v6140
        %v6160 = vunpack.c.l.s4 1934713408
        %v6161 = vunpack.c.0.s8 %v6160
        %v6162 = vlaneseq
        %v6163 = vshrl.u32 %v6162, 7
        %v6164 = vsub.s32 %v6161, %v6163
        %v6165 = vrot.slane %v6157, %v6164
        %v6167 = vunpack.c.l.s4 1934713408
        %v6168 = vunpack.c.0.s8 %v6167
        %v6169 = vlaneseq
        %v6170 = vshrl.u32 %v6169, 7
        %v6171 = vsub.s32 %v6168, %v6170
        %v6172 = vrot.slane %v6158, %v6171
        %v6173 = vcombine.low %v6149, %v6165
        %v6174 = vcombine.high %v6149, %v6165
        %v6175 = vcombine.low %v6156, %v6172
        %v6176 = vcombine.high %v6156, %v6172
        %6179 = vrot.lane.b32.xlu0 %v4189, 120
        %v6180 = vpop.permute.xlu0 %6179
        %6181 = vrot.lane.b32.xlu0 %v4194, 120
        %v6182 = vpop.permute.xlu0 %6181
        %6185 = vrot.lane.b32.xlu0 %v4189, 112
        %v6186 = vpop.permute.xlu0 %6185
        %6187 = vrot.lane.b32.xlu0 %v4194, 112
        %v6188 = vpop.permute.xlu0 %6187
        %6191 = vrot.lane.b32.xlu0 %v4189, 104
        %v6192 = vpop.permute.xlu0 %6191
        %6193 = vrot.lane.b32.xlu0 %v4194, 104
        %v6194 = vpop.permute.xlu0 %6193
        %v6197 = vcombine.low %v4189, %v6186
        %v6198 = vcombine.high %v4189, %v6186
        %v6200 = vunpack.c.l.s4 1983009808
        %v6201 = vunpack.c.0.s8 %v6200
        %v6202 = vlaneseq
        %v6203 = vshrl.u32 %v6202, 7
        %v6204 = vsub.s32 %v6201, %v6203
        %v6205 = vrot.slane %v6197, %v6204
        %v6207 = vunpack.c.l.s4 1983009808
        %v6208 = vunpack.c.0.s8 %v6207
        %v6209 = vlaneseq
        %v6210 = vshrl.u32 %v6209, 7
        %v6211 = vsub.s32 %v6208, %v6210
        %v6212 = vrot.slane %v6198, %v6211
        %v6213 = vcombine.low %v6180, %v6192
        %v6214 = vcombine.high %v6180, %v6192
        %v6216 = vunpack.c.l.s4 1983009808
        %v6217 = vunpack.c.0.s8 %v6216
        %v6218 = vlaneseq
        %v6219 = vshrl.u32 %v6218, 7
        %v6220 = vsub.s32 %v6217, %v6219
        %v6221 = vrot.slane %v6213, %v6220
        %v6223 = vunpack.c.l.s4 1983009808
        %v6224 = vunpack.c.0.s8 %v6223
        %v6225 = vlaneseq
        %v6226 = vshrl.u32 %v6225, 7
        %v6227 = vsub.s32 %v6224, %v6226
        %v6228 = vrot.slane %v6214, %v6227
        %v6229 = vcombine.low %v6205, %v6221
        %v6230 = vcombine.high %v6205, %v6221
        %v6232 = vunpack.c.l.s4 1934713408
        %v6233 = vunpack.c.0.s8 %v6232
        %v6234 = vlaneseq
        %v6235 = vshrl.u32 %v6234, 7
        %v6236 = vsub.s32 %v6233, %v6235
        %v6237 = vrot.slane %v6229, %v6236
        %v6239 = vunpack.c.l.s4 1934713408
        %v6240 = vunpack.c.0.s8 %v6239
        %v6241 = vlaneseq
        %v6242 = vshrl.u32 %v6241, 7
        %v6243 = vsub.s32 %v6240, %v6242
        %v6244 = vrot.slane %v6230, %v6243
        %v6245 = vcombine.low %v6212, %v6228
        %v6246 = vcombine.high %v6212, %v6228
        %v6248 = vunpack.c.l.s4 1934713408
        %v6249 = vunpack.c.0.s8 %v6248
        %v6250 = vlaneseq
        %v6251 = vshrl.u32 %v6250, 7
        %v6252 = vsub.s32 %v6249, %v6251
        %v6253 = vrot.slane %v6245, %v6252
        %v6255 = vunpack.c.l.s4 1934713408
        %v6256 = vunpack.c.0.s8 %v6255
        %v6257 = vlaneseq
        %v6258 = vshrl.u32 %v6257, 7
        %v6259 = vsub.s32 %v6256, %v6258
        %v6260 = vrot.slane %v6246, %v6259
        %v6261 = vcombine.high %v6237, 0.0
        %v6262 = vcombine.high %v6244, 0.0
        %v6263 = vcombine.high %v6253, 0.0
        %v6264 = vcombine.high %v6260, 0.0
        %v6265 = vcombine.low %v4194, %v6188
        %v6266 = vcombine.high %v4194, %v6188
        %v6268 = vunpack.c.l.s4 1983009808
        %v6269 = vunpack.c.0.s8 %v6268
        %v6270 = vlaneseq
        %v6271 = vshrl.u32 %v6270, 7
        %v6272 = vsub.s32 %v6269, %v6271
        %v6273 = vrot.slane %v6265, %v6272
        %v6275 = vunpack.c.l.s4 1983009808
        %v6276 = vunpack.c.0.s8 %v6275
        %v6277 = vlaneseq
        %v6278 = vshrl.u32 %v6277, 7
        %v6279 = vsub.s32 %v6276, %v6278
        %v6280 = vrot.slane %v6266, %v6279
        %v6281 = vcombine.low %v6182, %v6194
        %v6282 = vcombine.high %v6182, %v6194
        %v6284 = vunpack.c.l.s4 1983009808
        %v6285 = vunpack.c.0.s8 %v6284
        %v6286 = vlaneseq
        %v6287 = vshrl.u32 %v6286, 7
        %v6288 = vsub.s32 %v6285, %v6287
        %v6289 = vrot.slane %v6281, %v6288
        %v6291 = vunpack.c.l.s4 1983009808
        %v6292 = vunpack.c.0.s8 %v6291
        %v6293 = vlaneseq
        %v6294 = vshrl.u32 %v6293, 7
        %v6295 = vsub.s32 %v6292, %v6294
        %v6296 = vrot.slane %v6282, %v6295
        %v6297 = vcombine.low %v6273, %v6289
        %v6298 = vcombine.high %v6273, %v6289
        %v6300 = vunpack.c.l.s4 1934713408
        %v6301 = vunpack.c.0.s8 %v6300
        %v6302 = vlaneseq
        %v6303 = vshrl.u32 %v6302, 7
        %v6304 = vsub.s32 %v6301, %v6303
        %v6305 = vrot.slane %v6297, %v6304
        %v6307 = vunpack.c.l.s4 1934713408
        %v6308 = vunpack.c.0.s8 %v6307
        %v6309 = vlaneseq
        %v6310 = vshrl.u32 %v6309, 7
        %v6311 = vsub.s32 %v6308, %v6310
        %v6312 = vrot.slane %v6298, %v6311
        %v6313 = vcombine.low %v6280, %v6296
        %v6314 = vcombine.high %v6280, %v6296
        %v6316 = vunpack.c.l.s4 1934713408
        %v6317 = vunpack.c.0.s8 %v6316
        %v6318 = vlaneseq
        %v6319 = vshrl.u32 %v6318, 7
        %v6320 = vsub.s32 %v6317, %v6319
        %v6321 = vrot.slane %v6313, %v6320
        %v6323 = vunpack.c.l.s4 1934713408
        %v6324 = vunpack.c.0.s8 %v6323
        %v6325 = vlaneseq
        %v6326 = vshrl.u32 %v6325, 7
        %v6327 = vsub.s32 %v6324, %v6326
        %v6328 = vrot.slane %v6314, %v6327
        %v6329 = vcombine.high %v6305, 0.0
        %v6330 = vcombine.high %v6312, 0.0
        %v6331 = vcombine.high %v6321, 0.0
        %v6332 = vcombine.high %v6328, 0.0
        %v6333 = vcombine.low %v6237, %v6244
        %v6335 = vunpack.c.l.s4 1983009808
        %v6336 = vunpack.c.0.s8 %v6335
        %v6337 = vlaneseq
        %v6338 = vshrl.u32 %v6337, 7
        %v6339 = vsub.s32 %v6336, %v6338
        %v6340 = vrot.slane %v6333, %v6339
        %v6341 = vcombine.low %v6261, %v6262
        %v6343 = vunpack.c.l.s4 1983009808
        %v6344 = vunpack.c.0.s8 %v6343
        %v6345 = vlaneseq
        %v6346 = vshrl.u32 %v6345, 7
        %v6347 = vsub.s32 %v6344, %v6346
        %v6348 = vrot.slane %v6341, %v6347
        %v6349 = vcombine.low %v6253, %v6260
        %v6351 = vunpack.c.l.s4 1983009808
        %v6352 = vunpack.c.0.s8 %v6351
        %v6353 = vlaneseq
        %v6354 = vshrl.u32 %v6353, 7
        %v6355 = vsub.s32 %v6352, %v6354
        %v6356 = vrot.slane %v6349, %v6355
        %v6357 = vcombine.low %v6263, %v6264
        %v6359 = vunpack.c.l.s4 1983009808
        %v6360 = vunpack.c.0.s8 %v6359
        %v6361 = vlaneseq
        %v6362 = vshrl.u32 %v6361, 7
        %v6363 = vsub.s32 %v6360, %v6362
        %v6364 = vrot.slane %v6357, %v6363
        %v6365 = vcombine.low %v6340, %v6348
        %v6366 = vcombine.high %v6340, %v6348
        %v6368 = vunpack.c.l.s4 1934713408
        %v6369 = vunpack.c.0.s8 %v6368
        %v6370 = vlaneseq
        %v6371 = vshrl.u32 %v6370, 7
        %v6372 = vsub.s32 %v6369, %v6371
        %v6373 = vrot.slane %v6365, %v6372
        %v6375 = vunpack.c.l.s4 1934713408
        %v6376 = vunpack.c.0.s8 %v6375
        %v6377 = vlaneseq
        %v6378 = vshrl.u32 %v6377, 7
        %v6379 = vsub.s32 %v6376, %v6378
        %v6380 = vrot.slane %v6366, %v6379
        %v6381 = vcombine.low %v6356, %v6364
        %v6382 = vcombine.high %v6356, %v6364
        %v6384 = vunpack.c.l.s4 1934713408
        %v6385 = vunpack.c.0.s8 %v6384
        %v6386 = vlaneseq
        %v6387 = vshrl.u32 %v6386, 7
        %v6388 = vsub.s32 %v6385, %v6387
        %v6389 = vrot.slane %v6381, %v6388
        %v6391 = vunpack.c.l.s4 1934713408
        %v6392 = vunpack.c.0.s8 %v6391
        %v6393 = vlaneseq
        %v6394 = vshrl.u32 %v6393, 7
        %v6395 = vsub.s32 %v6392, %v6394
        %v6396 = vrot.slane %v6382, %v6395
        %v6397 = vcombine.low %v6373, %v6389
        %v6398 = vcombine.high %v6373, %v6389
        %v6399 = vcombine.low %v6380, %v6396
        %v6400 = vcombine.high %v6380, %v6396
        %v6401 = vcombine.low %v6305, %v6312
        %v6403 = vunpack.c.l.s4 1983009808
        %v6404 = vunpack.c.0.s8 %v6403
        %v6405 = vlaneseq
        %v6406 = vshrl.u32 %v6405, 7
        %v6407 = vsub.s32 %v6404, %v6406
        %v6408 = vrot.slane %v6401, %v6407
        %v6409 = vcombine.low %v6329, %v6330
        %v6411 = vunpack.c.l.s4 1983009808
        %v6412 = vunpack.c.0.s8 %v6411
        %v6413 = vlaneseq
        %v6414 = vshrl.u32 %v6413, 7
        %v6415 = vsub.s32 %v6412, %v6414
        %v6416 = vrot.slane %v6409, %v6415
        %v6417 = vcombine.low %v6321, %v6328
        %v6419 = vunpack.c.l.s4 1983009808
        %v6420 = vunpack.c.0.s8 %v6419
        %v6421 = vlaneseq
        %v6422 = vshrl.u32 %v6421, 7
        %v6423 = vsub.s32 %v6420, %v6422
        %v6424 = vrot.slane %v6417, %v6423
        %v6425 = vcombine.low %v6331, %v6332
        %v6427 = vunpack.c.l.s4 1983009808
        %v6428 = vunpack.c.0.s8 %v6427
        %v6429 = vlaneseq
        %v6430 = vshrl.u32 %v6429, 7
        %v6431 = vsub.s32 %v6428, %v6430
        %v6432 = vrot.slane %v6425, %v6431
        %v6433 = vcombine.low %v6408, %v6416
        %v6434 = vcombine.high %v6408, %v6416
        %v6436 = vunpack.c.l.s4 1934713408
        %v6437 = vunpack.c.0.s8 %v6436
        %v6438 = vlaneseq
        %v6439 = vshrl.u32 %v6438, 7
        %v6440 = vsub.s32 %v6437, %v6439
        %v6441 = vrot.slane %v6433, %v6440
        %v6443 = vunpack.c.l.s4 1934713408
        %v6444 = vunpack.c.0.s8 %v6443
        %v6445 = vlaneseq
        %v6446 = vshrl.u32 %v6445, 7
        %v6447 = vsub.s32 %v6444, %v6446
        %v6448 = vrot.slane %v6434, %v6447
        %v6449 = vcombine.low %v6424, %v6432
        %v6450 = vcombine.high %v6424, %v6432
        %v6452 = vunpack.c.l.s4 1934713408
        %v6453 = vunpack.c.0.s8 %v6452
        %v6454 = vlaneseq
        %v6455 = vshrl.u32 %v6454, 7
        %v6456 = vsub.s32 %v6453, %v6455
        %v6457 = vrot.slane %v6449, %v6456
        %v6459 = vunpack.c.l.s4 1934713408
        %v6460 = vunpack.c.0.s8 %v6459
        %v6461 = vlaneseq
        %v6462 = vshrl.u32 %v6461, 7
        %v6463 = vsub.s32 %v6460, %v6462
        %v6464 = vrot.slane %v6450, %v6463
        %v6465 = vcombine.low %v6441, %v6457
        %v6466 = vcombine.high %v6441, %v6457
        %v6467 = vcombine.low %v6448, %v6464
        %v6468 = vcombine.high %v6448, %v6464
        %v6470 = vsel %vm1738, %v5881, 0
        %v6473 = vsel %vm1738, %v6105, 0
        %v6476 = vsel %vm1738, %v6173, 0
        %6478 = vmatprep.subr.mxu0 0.0
        %6479 = vmatpush1.xpose.msra.mxu0 %v6473
        %6480 = vmatprep.subr.mxu0 0.0
        %6481 = vmatpush1.xpose.msra.mxu0 %v6476
        %6482 = vmatprep.subr.mxu0 0.0
        %6483 = vmatpush1.xpose.msra.mxu0 0.0
        %6484 = vmatprep.subr.mxu0 0.0
        %6485 = vmatpush1.xpose.msra.mxu0 0.0
        %6486 = vmatprep.subr.mxu0 0.0
        %6487 = vmatpush1.xpose.msra.mxu0 0.0
        %6488 = vmatprep.subr.mxu0 0.0
        %6489 = vmatpush1.xpose.msra.mxu0 0.0
        %6490 = vmatprep.subr.mxu0 0.0
        %6491 = vmatpush1.xpose.msra.mxu0 0.0
        %6492 = vmatprep.subr.mxu0 0.0
        %6493 = vmatpush1.xpose.msra.mxu0 0.0
        %6494 = vmatprep.subr.mxu0 0.0
        %6495 = vmatpush1.xpose.msra.mxu0 0.0
        %6496 = vmatprep.subr.mxu0 0.0
        %6497 = vmatpush1.xpose.msra.mxu0 0.0
        %6498 = vmatprep.subr.mxu0 0.0
        %6499 = vmatpush1.xpose.msra.mxu0 0.0
        %6500 = vmatprep.subr.mxu0 0.0
        %6501 = vmatpush1.xpose.msra.mxu0 0.0
        %6502 = vmatprep.subr.mxu0 0.0
        %6503 = vmatpush1.xpose.msra.mxu0 0.0
        %6504 = vmatprep.subr.mxu0 0.0
        %6505 = vmatpush1.xpose.msra.mxu0 0.0
        %6506 = vmatprep.subr.mxu0 0.0
        %6507 = vmatpush1.xpose.msra.mxu0 0.0
        %6508 = vmatprep.subr.mxu0 0.0
        %6509 = vmatpush1.xpose.msra.mxu0 0.0
        %6510 = vmatprep.subr.mxu0 0.0
        %6511 = vmatpush1.xpose.msra.mxu0 0.0
        %6512 = vmatprep.subr.mxu0 0.0
        %6513 = vmatpush1.xpose.msra.mxu0 0.0
        %6514 = vmatprep.subr.mxu0 0.0
        %6515 = vmatpush1.xpose.msra.mxu0 0.0
        %6516 = vmatprep.subr.mxu0 0.0
        %6517 = vmatpush1.xpose.msra.mxu0 0.0
        %6518 = vmatprep.subr.mxu0 0.0
        %6519 = vmatpush1.xpose.msra.mxu0 0.0
        %6520 = vmatprep.subr.mxu0 0.0
        %6521 = vmatpush1.xpose.msra.mxu0 0.0
        %6522 = vmatprep.subr.mxu0 0.0
        %6523 = vmatpush1.xpose.msra.mxu0 0.0
        %6524 = vmatprep.subr.mxu0 0.0
        %6525 = vmatpush1.xpose.msra.mxu0 0.0
        %6526 = vmatprep.subr.mxu0 0.0
        %6527 = vmatpush1.xpose.msra.mxu0 0.0
        %6528 = vmatprep.subr.mxu0 0.0
        %6529 = vmatpush1.xpose.msra.mxu0 0.0
        %6530 = vmatprep.subr.mxu0 0.0
        %6531 = vmatpush1.xpose.msra.mxu0 0.0
        %6532 = vmatprep.subr.mxu0 0.0
        %6533 = vmatpush1.xpose.msra.mxu0 0.0
        %6534 = vmatprep.subr.mxu0 0.0
        %6535 = vmatpush1.xpose.msra.mxu0 0.0
        %6536 = vmatprep.subr.mxu0 0.0
        %6537 = vmatpush1.xpose.msra.mxu0 0.0
        %6538 = vmatprep.subr.mxu0 0.0
        %6539 = vmatpush1.xpose.msra.mxu0 0.0
        %6540 = vmatprep.subr.mxu0 0.0
        %6541 = vmatpush1.xpose.msra.mxu0 0.0
        %6542 = vmatprep.mubr.f32.mxu0 0.0
        %6543 = vmatmul.mubr.f32.gmra.mrb[0].mxu0 %v6470
        %v6544 = vpop.f32.mrb[0].mxu0
        %v6545 = vadd.f32 0.0, %v6544
        %v6546 = vpop.f32.mrb[0].mxu0
        %6547 = vdwg.mxu0
        %v6549 = vsel %vm1738, %v5882, 0
        %v6552 = vsel %vm1738, %v6106, 0
        %v6555 = vsel %vm1738, %v6174, 0
        %6557 = vmatprep.subr.mxu0 0.0
        %6558 = vmatpush1.xpose.msra.mxu0 %v6552
        %6559 = vmatprep.subr.mxu0 0.0
        %6560 = vmatpush1.xpose.msra.mxu0 %v6555
        %6561 = vmatprep.subr.mxu0 0.0
        %6562 = vmatpush1.xpose.msra.mxu0 0.0
        %6563 = vmatprep.subr.mxu0 0.0
        %6564 = vmatpush1.xpose.msra.mxu0 0.0
        %6565 = vmatprep.subr.mxu0 0.0
        %6566 = vmatpush1.xpose.msra.mxu0 0.0
        %6567 = vmatprep.subr.mxu0 0.0
        %6568 = vmatpush1.xpose.msra.mxu0 0.0
        %6569 = vmatprep.subr.mxu0 0.0
        %6570 = vmatpush1.xpose.msra.mxu0 0.0
        %6571 = vmatprep.subr.mxu0 0.0
        %6572 = vmatpush1.xpose.msra.mxu0 0.0
        %6573 = vmatprep.subr.mxu0 0.0
        %6574 = vmatpush1.xpose.msra.mxu0 0.0
        %6575 = vmatprep.subr.mxu0 0.0
        %6576 = vmatpush1.xpose.msra.mxu0 0.0
        %6577 = vmatprep.subr.mxu0 0.0
        %6578 = vmatpush1.xpose.msra.mxu0 0.0
        %6579 = vmatprep.subr.mxu0 0.0
        %6580 = vmatpush1.xpose.msra.mxu0 0.0
        %6581 = vmatprep.subr.mxu0 0.0
        %6582 = vmatpush1.xpose.msra.mxu0 0.0
        %6583 = vmatprep.subr.mxu0 0.0
        %6584 = vmatpush1.xpose.msra.mxu0 0.0
        %6585 = vmatprep.subr.mxu0 0.0
        %6586 = vmatpush1.xpose.msra.mxu0 0.0
        %6587 = vmatprep.subr.mxu0 0.0
        %6588 = vmatpush1.xpose.msra.mxu0 0.0
        %6589 = vmatprep.subr.mxu0 0.0
        %6590 = vmatpush1.xpose.msra.mxu0 0.0
        %6591 = vmatprep.subr.mxu0 0.0
        %6592 = vmatpush1.xpose.msra.mxu0 0.0
        %6593 = vmatprep.subr.mxu0 0.0
        %6594 = vmatpush1.xpose.msra.mxu0 0.0
        %6595 = vmatprep.subr.mxu0 0.0
        %6596 = vmatpush1.xpose.msra.mxu0 0.0
        %6597 = vmatprep.subr.mxu0 0.0
        %6598 = vmatpush1.xpose.msra.mxu0 0.0
        %6599 = vmatprep.subr.mxu0 0.0
        %6600 = vmatpush1.xpose.msra.mxu0 0.0
        %6601 = vmatprep.subr.mxu0 0.0
        %6602 = vmatpush1.xpose.msra.mxu0 0.0
        %6603 = vmatprep.subr.mxu0 0.0
        %6604 = vmatpush1.xpose.msra.mxu0 0.0
        %6605 = vmatprep.subr.mxu0 0.0
        %6606 = vmatpush1.xpose.msra.mxu0 0.0
        %6607 = vmatprep.subr.mxu0 0.0
        %6608 = vmatpush1.xpose.msra.mxu0 0.0
        %6609 = vmatprep.subr.mxu0 0.0
        %6610 = vmatpush1.xpose.msra.mxu0 0.0
        %6611 = vmatprep.subr.mxu0 0.0
        %6612 = vmatpush1.xpose.msra.mxu0 0.0
        %6613 = vmatprep.subr.mxu0 0.0
        %6614 = vmatpush1.xpose.msra.mxu0 0.0
        %6615 = vmatprep.subr.mxu0 0.0
        %6616 = vmatpush1.xpose.msra.mxu0 0.0
        %6617 = vmatprep.subr.mxu0 0.0
        %6618 = vmatpush1.xpose.msra.mxu0 0.0
        %6619 = vmatprep.subr.mxu0 0.0
        %6620 = vmatpush1.xpose.msra.mxu0 0.0
        %6621 = vmatprep.mubr.f32.mxu0 0.0
        %6622 = vmatmul.mubr.f32.gmra.mrb[0].mxu0 %v6549
        %v6623 = vpop.f32.mrb[0].mxu0
        %v6624 = vadd.f32 0.0, %v6623
        %v6625 = vpop.f32.mrb[0].mxu0
        %6626 = vdwg.mxu0
        %v6628 = vsel %vm1738, %v5883, 0
        %v6631 = vsel %vm1738, %v6107, 0
        %v6634 = vsel %vm1738, %v6175, 0
        %6636 = vmatprep.subr.mxu0 0.0
        %6637 = vmatpush1.xpose.msra.mxu0 %v6631
        %6638 = vmatprep.subr.mxu0 0.0
        %6639 = vmatpush1.xpose.msra.mxu0 %v6634
        %6640 = vmatprep.subr.mxu0 0.0
        %6641 = vmatpush1.xpose.msra.mxu0 0.0
        %6642 = vmatprep.subr.mxu0 0.0
        %6643 = vmatpush1.xpose.msra.mxu0 0.0
        %6644 = vmatprep.subr.mxu0 0.0
        %6645 = vmatpush1.xpose.msra.mxu0 0.0
        %6646 = vmatprep.subr.mxu0 0.0
        %6647 = vmatpush1.xpose.msra.mxu0 0.0
        %6648 = vmatprep.subr.mxu0 0.0
        %6649 = vmatpush1.xpose.msra.mxu0 0.0
        %6650 = vmatprep.subr.mxu0 0.0
        %6651 = vmatpush1.xpose.msra.mxu0 0.0
        %6652 = vmatprep.subr.mxu0 0.0
        %6653 = vmatpush1.xpose.msra.mxu0 0.0
        %6654 = vmatprep.subr.mxu0 0.0
        %6655 = vmatpush1.xpose.msra.mxu0 0.0
        %6656 = vmatprep.subr.mxu0 0.0
        %6657 = vmatpush1.xpose.msra.mxu0 0.0
        %6658 = vmatprep.subr.mxu0 0.0
        %6659 = vmatpush1.xpose.msra.mxu0 0.0
        %6660 = vmatprep.subr.mxu0 0.0
        %6661 = vmatpush1.xpose.msra.mxu0 0.0
        %6662 = vmatprep.subr.mxu0 0.0
        %6663 = vmatpush1.xpose.msra.mxu0 0.0
        %6664 = vmatprep.subr.mxu0 0.0
        %6665 = vmatpush1.xpose.msra.mxu0 0.0
        %6666 = vmatprep.subr.mxu0 0.0
        %6667 = vmatpush1.xpose.msra.mxu0 0.0
        %6668 = vmatprep.subr.mxu0 0.0
        %6669 = vmatpush1.xpose.msra.mxu0 0.0
        %6670 = vmatprep.subr.mxu0 0.0
        %6671 = vmatpush1.xpose.msra.mxu0 0.0
        %6672 = vmatprep.subr.mxu0 0.0
        %6673 = vmatpush1.xpose.msra.mxu0 0.0
        %6674 = vmatprep.subr.mxu0 0.0
        %6675 = vmatpush1.xpose.msra.mxu0 0.0
        %6676 = vmatprep.subr.mxu0 0.0
        %6677 = vmatpush1.xpose.msra.mxu0 0.0
        %6678 = vmatprep.subr.mxu0 0.0
        %6679 = vmatpush1.xpose.msra.mxu0 0.0
        %6680 = vmatprep.subr.mxu0 0.0
        %6681 = vmatpush1.xpose.msra.mxu0 0.0
        %6682 = vmatprep.subr.mxu0 0.0
        %6683 = vmatpush1.xpose.msra.mxu0 0.0
        %6684 = vmatprep.subr.mxu0 0.0
        %6685 = vmatpush1.xpose.msra.mxu0 0.0
        %6686 = vmatprep.subr.mxu0 0.0
        %6687 = vmatpush1.xpose.msra.mxu0 0.0
        %6688 = vmatprep.subr.mxu0 0.0
        %6689 = vmatpush1.xpose.msra.mxu0 0.0
        %6690 = vmatprep.subr.mxu0 0.0
        %6691 = vmatpush1.xpose.msra.mxu0 0.0
        %6692 = vmatprep.subr.mxu0 0.0
        %6693 = vmatpush1.xpose.msra.mxu0 0.0
        %6694 = vmatprep.subr.mxu0 0.0
        %6695 = vmatpush1.xpose.msra.mxu0 0.0
        %6696 = vmatprep.subr.mxu0 0.0
        %6697 = vmatpush1.xpose.msra.mxu0 0.0
        %6698 = vmatprep.subr.mxu0 0.0
        %6699 = vmatpush1.xpose.msra.mxu0 0.0
        %6700 = vmatprep.mubr.f32.mxu0 0.0
        %6701 = vmatmul.mubr.f32.gmra.mrb[0].mxu0 %v6628
        %v6702 = vpop.f32.mrb[0].mxu0
        %v6703 = vadd.f32 0.0, %v6702
        %v6704 = vpop.f32.mrb[0].mxu0
        %6705 = vdwg.mxu0
        %v6707 = vsel %vm1738, %v5884, 0
        %v6710 = vsel %vm1738, %v6108, 0
        %v6713 = vsel %vm1738, %v6176, 0
        %6715 = vmatprep.subr.mxu0 0.0
        %6716 = vmatpush1.xpose.msra.mxu0 %v6710
        %6717 = vmatprep.subr.mxu0 0.0
        %6718 = vmatpush1.xpose.msra.mxu0 %v6713
        %6719 = vmatprep.subr.mxu0 0.0
        %6720 = vmatpush1.xpose.msra.mxu0 0.0
        %6721 = vmatprep.subr.mxu0 0.0
        %6722 = vmatpush1.xpose.msra.mxu0 0.0
        %6723 = vmatprep.subr.mxu0 0.0
        %6724 = vmatpush1.xpose.msra.mxu0 0.0
        %6725 = vmatprep.subr.mxu0 0.0
        %6726 = vmatpush1.xpose.msra.mxu0 0.0
        %6727 = vmatprep.subr.mxu0 0.0
        %6728 = vmatpush1.xpose.msra.mxu0 0.0
        %6729 = vmatprep.subr.mxu0 0.0
        %6730 = vmatpush1.xpose.msra.mxu0 0.0
        %6731 = vmatprep.subr.mxu0 0.0
        %6732 = vmatpush1.xpose.msra.mxu0 0.0
        %6733 = vmatprep.subr.mxu0 0.0
        %6734 = vmatpush1.xpose.msra.mxu0 0.0
        %6735 = vmatprep.subr.mxu0 0.0
        %6736 = vmatpush1.xpose.msra.mxu0 0.0
        %6737 = vmatprep.subr.mxu0 0.0
        %6738 = vmatpush1.xpose.msra.mxu0 0.0
        %6739 = vmatprep.subr.mxu0 0.0
        %6740 = vmatpush1.xpose.msra.mxu0 0.0
        %6741 = vmatprep.subr.mxu0 0.0
        %6742 = vmatpush1.xpose.msra.mxu0 0.0
        %6743 = vmatprep.subr.mxu0 0.0
        %6744 = vmatpush1.xpose.msra.mxu0 0.0
        %6745 = vmatprep.subr.mxu0 0.0
        %6746 = vmatpush1.xpose.msra.mxu0 0.0
        %6747 = vmatprep.subr.mxu0 0.0
        %6748 = vmatpush1.xpose.msra.mxu0 0.0
        %6749 = vmatprep.subr.mxu0 0.0
        %6750 = vmatpush1.xpose.msra.mxu0 0.0
        %6751 = vmatprep.subr.mxu0 0.0
        %6752 = vmatpush1.xpose.msra.mxu0 0.0
        %6753 = vmatprep.subr.mxu0 0.0
        %6754 = vmatpush1.xpose.msra.mxu0 0.0
        %6755 = vmatprep.subr.mxu0 0.0
        %6756 = vmatpush1.xpose.msra.mxu0 0.0
        %6757 = vmatprep.subr.mxu0 0.0
        %6758 = vmatpush1.xpose.msra.mxu0 0.0
        %6759 = vmatprep.subr.mxu0 0.0
        %6760 = vmatpush1.xpose.msra.mxu0 0.0
        %6761 = vmatprep.subr.mxu0 0.0
        %6762 = vmatpush1.xpose.msra.mxu0 0.0
        %6763 = vmatprep.subr.mxu0 0.0
        %6764 = vmatpush1.xpose.msra.mxu0 0.0
        %6765 = vmatprep.subr.mxu0 0.0
        %6766 = vmatpush1.xpose.msra.mxu0 0.0
        %6767 = vmatprep.subr.mxu0 0.0
        %6768 = vmatpush1.xpose.msra.mxu0 0.0
        %6769 = vmatprep.subr.mxu0 0.0
        %6770 = vmatpush1.xpose.msra.mxu0 0.0
        %6771 = vmatprep.subr.mxu0 0.0
        %6772 = vmatpush1.xpose.msra.mxu0 0.0
        %6773 = vmatprep.subr.mxu0 0.0
        %6774 = vmatpush1.xpose.msra.mxu0 0.0
        %6775 = vmatprep.subr.mxu0 0.0
        %6776 = vmatpush1.xpose.msra.mxu0 0.0
        %6777 = vmatprep.subr.mxu0 0.0
        %6778 = vmatpush1.xpose.msra.mxu0 0.0
        %6779 = vmatprep.mubr.f32.mxu0 0.0
        %6780 = vmatmul.mubr.f32.gmra.mrb[0].mxu0 %v6707
        %v6781 = vpop.f32.mrb[0].mxu0
        %v6782 = vadd.f32 0.0, %v6781
        %v6783 = vpop.f32.mrb[0].mxu0
        %6784 = vdwg.mxu0
        %v6785 = vmul.f32 %v6545, 0.35355338
        %v6786 = vmul.f32 %v6624, 0.35355338
        %v6787 = vmul.f32 %v6703, 0.35355338
        %v6788 = vmul.f32 %v6782, 0.35355338
        %v6789 = vsel %vm2532, %v6785, -inf
        %6790 = vmax.xlane.f32.xlu0 %v6789
        %v6791 = vpop.xlane.xlu0 %6790
        %v6792 = vsel %vm2532, %v6786, -inf
        %6793 = vmax.xlane.f32.xlu0 %v6792
        %v6794 = vpop.xlane.xlu0 %6793
        %v6795 = vsel %vm2532, %v6787, -inf
        %6796 = vmax.xlane.f32.xlu0 %v6795
        %v6797 = vpop.xlane.xlu0 %6796
        %v6798 = vsel %vm2532, %v6788, -inf
        %6799 = vmax.xlane.f32.xlu0 %v6798
        %v6800 = vpop.xlane.xlu0 %6799
        %v6801 = vsub.f32 %v6785, %v6791
        %v6802 = vsub.f32 %v6786, %v6794
        %v6803 = vsub.f32 %v6787, %v6797
        %v6804 = vsub.f32 %v6788, %v6800
        %v6805 = vmul.f32 %v6801, 1.442695
        %v6806 = vpow.pop %v6805
        %v6807 = vmul.f32 %v6802, 1.442695
        %v6808 = vpow.pop %v6807
        %v6809 = vmul.f32 %v6803, 1.442695
        %v6810 = vpow.pop %v6809
        %v6811 = vmul.f32 %v6804, 1.442695
        %v6812 = vpow.pop %v6811
        %v6813 = vsel %vm2532, %v6806, 0.0
        %6814 = vadd.xlane.f32.xlu0 %v6813
        %v6815 = vpop.xlane.xlu0 %6814
        %v6816 = vsel %vm2532, %v6808, 0.0
        %6817 = vadd.xlane.f32.xlu0 %v6816
        %v6818 = vpop.xlane.xlu0 %6817
        %v6819 = vsel %vm2532, %v6810, 0.0
        %6820 = vadd.xlane.f32.xlu0 %v6819
        %v6821 = vpop.xlane.xlu0 %6820
        %v6822 = vsel %vm2532, %v6812, 0.0
        %6823 = vadd.xlane.f32.xlu0 %v6822
        %v6824 = vpop.xlane.xlu0 %6823
        %v6825 = vrcp.pop %v6815
        %v6826 = vmul.f32 %v6806, %v6825
        %v6827 = vrcp.pop %v6818
        %v6828 = vmul.f32 %v6808, %v6827
        %v6829 = vrcp.pop %v6821
        %v6830 = vmul.f32 %v6810, %v6829
        %v6831 = vrcp.pop %v6824
        %v6832 = vmul.f32 %v6812, %v6831
        %v6834 = vsel %vm2532, %v6826, 0
        %6836 = vmatprep.subr.mxu0 0.0
        %6837 = vmatpush1.msra.mxu0 %v6397
        %6838 = vmatprep.subr.mxu0 0.0
        %6839 = vmatpush1.msra.mxu0 %v6465
        %6840 = vmatprep.subr.mxu0 0.0
        %6841 = vmatpush1.msra.mxu0 0.0
        %6842 = vmatprep.subr.mxu0 0.0
        %6843 = vmatpush1.msra.mxu0 0.0
        %6844 = vmatprep.subr.mxu0 0.0
        %6845 = vmatpush1.msra.mxu0 0.0
        %6846 = vmatprep.subr.mxu0 0.0
        %6847 = vmatpush1.msra.mxu0 0.0
        %6848 = vmatprep.subr.mxu0 0.0
        %6849 = vmatpush1.msra.mxu0 0.0
        %6850 = vmatprep.subr.mxu0 0.0
        %6851 = vmatpush1.msra.mxu0 0.0
        %6852 = vmatprep.subr.mxu0 0.0
        %6853 = vmatpush1.msra.mxu0 0.0
        %6854 = vmatprep.subr.mxu0 0.0
        %6855 = vmatpush1.msra.mxu0 0.0
        %6856 = vmatprep.subr.mxu0 0.0
        %6857 = vmatpush1.msra.mxu0 0.0
        %6858 = vmatprep.subr.mxu0 0.0
        %6859 = vmatpush1.msra.mxu0 0.0
        %6860 = vmatprep.subr.mxu0 0.0
        %6861 = vmatpush1.msra.mxu0 0.0
        %6862 = vmatprep.subr.mxu0 0.0
        %6863 = vmatpush1.msra.mxu0 0.0
        %6864 = vmatprep.subr.mxu0 0.0
        %6865 = vmatpush1.msra.mxu0 0.0
        %6866 = vmatprep.subr.mxu0 0.0
        %6867 = vmatpush1.msra.mxu0 0.0
        %6868 = vmatprep.subr.mxu0 0.0
        %6869 = vmatpush1.msra.mxu0 0.0
        %6870 = vmatprep.subr.mxu0 0.0
        %6871 = vmatpush1.msra.mxu0 0.0
        %6872 = vmatprep.subr.mxu0 0.0
        %6873 = vmatpush1.msra.mxu0 0.0
        %6874 = vmatprep.subr.mxu0 0.0
        %6875 = vmatpush1.msra.mxu0 0.0
        %6876 = vmatprep.subr.mxu0 0.0
        %6877 = vmatpush1.msra.mxu0 0.0
        %6878 = vmatprep.subr.mxu0 0.0
        %6879 = vmatpush1.msra.mxu0 0.0
        %6880 = vmatprep.subr.mxu0 0.0
        %6881 = vmatpush1.msra.mxu0 0.0
        %6882 = vmatprep.subr.mxu0 0.0
        %6883 = vmatpush1.msra.mxu0 0.0
        %6884 = vmatprep.subr.mxu0 0.0
        %6885 = vmatpush1.msra.mxu0 0.0
        %6886 = vmatprep.subr.mxu0 0.0
        %6887 = vmatpush1.msra.mxu0 0.0
        %6888 = vmatprep.subr.mxu0 0.0
        %6889 = vmatpush1.msra.mxu0 0.0
        %6890 = vmatprep.subr.mxu0 0.0
        %6891 = vmatpush1.msra.mxu0 0.0
        %6892 = vmatprep.subr.mxu0 0.0
        %6893 = vmatpush1.msra.mxu0 0.0
        %6894 = vmatprep.subr.mxu0 0.0
        %6895 = vmatpush1.msra.mxu0 0.0
        %6896 = vmatprep.subr.mxu0 0.0
        %6897 = vmatpush1.msra.mxu0 0.0
        %6898 = vmatprep.subr.mxu0 0.0
        %6899 = vmatpush1.msra.mxu0 0.0
        %6900 = vmatprep.mubr.f32.mxu0 0.0
        %6901 = vmatmul.mubr.f32.gmra.mrb[0].mxu0 %v6834
        %v6902 = vpop.f32.mrb[0].mxu0
        %v6903 = vadd.f32 0.0, %v6902
        %v6904 = vpop.f32.mrb[0].mxu0
        %6905 = vdwg.mxu0
        %v6907 = vsel %vm2532, %v6828, 0
        %6909 = vmatprep.subr.mxu0 0.0
        %6910 = vmatpush1.msra.mxu0 %v6398
        %6911 = vmatprep.subr.mxu0 0.0
        %6912 = vmatpush1.msra.mxu0 %v6466
        %6913 = vmatprep.subr.mxu0 0.0
        %6914 = vmatpush1.msra.mxu0 0.0
        %6915 = vmatprep.subr.mxu0 0.0
        %6916 = vmatpush1.msra.mxu0 0.0
        %6917 = vmatprep.subr.mxu0 0.0
        %6918 = vmatpush1.msra.mxu0 0.0
        %6919 = vmatprep.subr.mxu0 0.0
        %6920 = vmatpush1.msra.mxu0 0.0
        %6921 = vmatprep.subr.mxu0 0.0
        %6922 = vmatpush1.msra.mxu0 0.0
        %6923 = vmatprep.subr.mxu0 0.0
        %6924 = vmatpush1.msra.mxu0 0.0
        %6925 = vmatprep.subr.mxu0 0.0
        %6926 = vmatpush1.msra.mxu0 0.0
        %6927 = vmatprep.subr.mxu0 0.0
        %6928 = vmatpush1.msra.mxu0 0.0
        %6929 = vmatprep.subr.mxu0 0.0
        %6930 = vmatpush1.msra.mxu0 0.0
        %6931 = vmatprep.subr.mxu0 0.0
        %6932 = vmatpush1.msra.mxu0 0.0
        %6933 = vmatprep.subr.mxu0 0.0
        %6934 = vmatpush1.msra.mxu0 0.0
        %6935 = vmatprep.subr.mxu0 0.0
        %6936 = vmatpush1.msra.mxu0 0.0
        %6937 = vmatprep.subr.mxu0 0.0
        %6938 = vmatpush1.msra.mxu0 0.0
        %6939 = vmatprep.subr.mxu0 0.0
        %6940 = vmatpush1.msra.mxu0 0.0
        %6941 = vmatprep.subr.mxu0 0.0
        %6942 = vmatpush1.msra.mxu0 0.0
        %6943 = vmatprep.subr.mxu0 0.0
        %6944 = vmatpush1.msra.mxu0 0.0
        %6945 = vmatprep.subr.mxu0 0.0
        %6946 = vmatpush1.msra.mxu0 0.0
        %6947 = vmatprep.subr.mxu0 0.0
        %6948 = vmatpush1.msra.mxu0 0.0
        %6949 = vmatprep.subr.mxu0 0.0
        %6950 = vmatpush1.msra.mxu0 0.0
        %6951 = vmatprep.subr.mxu0 0.0
        %6952 = vmatpush1.msra.mxu0 0.0
        %6953 = vmatprep.subr.mxu0 0.0
        %6954 = vmatpush1.msra.mxu0 0.0
        %6955 = vmatprep.subr.mxu0 0.0
        %6956 = vmatpush1.msra.mxu0 0.0
        %6957 = vmatprep.subr.mxu0 0.0
        %6958 = vmatpush1.msra.mxu0 0.0
        %6959 = vmatprep.subr.mxu0 0.0
        %6960 = vmatpush1.msra.mxu0 0.0
        %6961 = vmatprep.subr.mxu0 0.0
        %6962 = vmatpush1.msra.mxu0 0.0
        %6963 = vmatprep.subr.mxu0 0.0
        %6964 = vmatpush1.msra.mxu0 0.0
        %6965 = vmatprep.subr.mxu0 0.0
        %6966 = vmatpush1.msra.mxu0 0.0
        %6967 = vmatprep.subr.mxu0 0.0
        %6968 = vmatpush1.msra.mxu0 0.0
        %6969 = vmatprep.subr.mxu0 0.0
        %6970 = vmatpush1.msra.mxu0 0.0
        %6971 = vmatprep.subr.mxu0 0.0
        %6972 = vmatpush1.msra.mxu0 0.0
        %6973 = vmatprep.mubr.f32.mxu0 0.0
        %6974 = vmatmul.mubr.f32.gmra.mrb[0].mxu0 %v6907
        %v6975 = vpop.f32.mrb[0].mxu0
        %v6976 = vadd.f32 0.0, %v6975
        %v6977 = vpop.f32.mrb[0].mxu0
        %6978 = vdwg.mxu0
        %v6980 = vsel %vm2532, %v6830, 0
        %6982 = vmatprep.subr.mxu0 0.0
        %6983 = vmatpush1.msra.mxu0 %v6399
        %6984 = vmatprep.subr.mxu0 0.0
        %6985 = vmatpush1.msra.mxu0 %v6467
        %6986 = vmatprep.subr.mxu0 0.0
        %6987 = vmatpush1.msra.mxu0 0.0
        %6988 = vmatprep.subr.mxu0 0.0
        %6989 = vmatpush1.msra.mxu0 0.0
        %6990 = vmatprep.subr.mxu0 0.0
        %6991 = vmatpush1.msra.mxu0 0.0
        %6992 = vmatprep.subr.mxu0 0.0
        %6993 = vmatpush1.msra.mxu0 0.0
        %6994 = vmatprep.subr.mxu0 0.0
        %6995 = vmatpush1.msra.mxu0 0.0
        %6996 = vmatprep.subr.mxu0 0.0
        %6997 = vmatpush1.msra.mxu0 0.0
        %6998 = vmatprep.subr.mxu0 0.0
        %6999 = vmatpush1.msra.mxu0 0.0
        %7000 = vmatprep.subr.mxu0 0.0
        %7001 = vmatpush1.msra.mxu0 0.0
        %7002 = vmatprep.subr.mxu0 0.0
        %7003 = vmatpush1.msra.mxu0 0.0
        %7004 = vmatprep.subr.mxu0 0.0
        %7005 = vmatpush1.msra.mxu0 0.0
        %7006 = vmatprep.subr.mxu0 0.0
        %7007 = vmatpush1.msra.mxu0 0.0
        %7008 = vmatprep.subr.mxu0 0.0
        %7009 = vmatpush1.msra.mxu0 0.0
        %7010 = vmatprep.subr.mxu0 0.0
        %7011 = vmatpush1.msra.mxu0 0.0
        %7012 = vmatprep.subr.mxu0 0.0
        %7013 = vmatpush1.msra.mxu0 0.0
        %7014 = vmatprep.subr.mxu0 0.0
        %7015 = vmatpush1.msra.mxu0 0.0
        %7016 = vmatprep.subr.mxu0 0.0
        %7017 = vmatpush1.msra.mxu0 0.0
        %7018 = vmatprep.subr.mxu0 0.0
        %7019 = vmatpush1.msra.mxu0 0.0
        %7020 = vmatprep.subr.mxu0 0.0
        %7021 = vmatpush1.msra.mxu0 0.0
        %7022 = vmatprep.subr.mxu0 0.0
        %7023 = vmatpush1.msra.mxu0 0.0
        %7024 = vmatprep.subr.mxu0 0.0
        %7025 = vmatpush1.msra.mxu0 0.0
        %7026 = vmatprep.subr.mxu0 0.0
        %7027 = vmatpush1.msra.mxu0 0.0
        %7028 = vmatprep.subr.mxu0 0.0
        %7029 = vmatpush1.msra.mxu0 0.0
        %7030 = vmatprep.subr.mxu0 0.0
        %7031 = vmatpush1.msra.mxu0 0.0
        %7032 = vmatprep.subr.mxu0 0.0
        %7033 = vmatpush1.msra.mxu0 0.0
        %7034 = vmatprep.subr.mxu0 0.0
        %7035 = vmatpush1.msra.mxu0 0.0
        %7036 = vmatprep.subr.mxu0 0.0
        %7037 = vmatpush1.msra.mxu0 0.0
        %7038 = vmatprep.subr.mxu0 0.0
        %7039 = vmatpush1.msra.mxu0 0.0
        %7040 = vmatprep.subr.mxu0 0.0
        %7041 = vmatpush1.msra.mxu0 0.0
        %7042 = vmatprep.subr.mxu0 0.0
        %7043 = vmatpush1.msra.mxu0 0.0
        %7044 = vmatprep.subr.mxu0 0.0
        %7045 = vmatpush1.msra.mxu0 0.0
        %7046 = vmatprep.mubr.f32.mxu0 0.0
        %7047 = vmatmul.mubr.f32.gmra.mrb[0].mxu0 %v6980
        %v7048 = vpop.f32.mrb[0].mxu0
        %v7049 = vadd.f32 0.0, %v7048
        %v7050 = vpop.f32.mrb[0].mxu0
        %7051 = vdwg.mxu0
        %v7053 = vsel %vm2532, %v6832, 0
        %7055 = vmatprep.subr.mxu0 0.0
        %7056 = vmatpush1.msra.mxu0 %v6400
        %7057 = vmatprep.subr.mxu0 0.0
        %7058 = vmatpush1.msra.mxu0 %v6468
        %7059 = vmatprep.subr.mxu0 0.0
        %7060 = vmatpush1.msra.mxu0 0.0
        %7061 = vmatprep.subr.mxu0 0.0
        %7062 = vmatpush1.msra.mxu0 0.0
        %7063 = vmatprep.subr.mxu0 0.0
        %7064 = vmatpush1.msra.mxu0 0.0
        %7065 = vmatprep.subr.mxu0 0.0
        %7066 = vmatpush1.msra.mxu0 0.0
        %7067 = vmatprep.subr.mxu0 0.0
        %7068 = vmatpush1.msra.mxu0 0.0
        %7069 = vmatprep.subr.mxu0 0.0
        %7070 = vmatpush1.msra.mxu0 0.0
        %7071 = vmatprep.subr.mxu0 0.0
        %7072 = vmatpush1.msra.mxu0 0.0
        %7073 = vmatprep.subr.mxu0 0.0
        %7074 = vmatpush1.msra.mxu0 0.0
        %7075 = vmatprep.subr.mxu0 0.0
        %7076 = vmatpush1.msra.mxu0 0.0
        %7077 = vmatprep.subr.mxu0 0.0
        %7078 = vmatpush1.msra.mxu0 0.0
        %7079 = vmatprep.subr.mxu0 0.0
        %7080 = vmatpush1.msra.mxu0 0.0
        %7081 = vmatprep.subr.mxu0 0.0
        %7082 = vmatpush1.msra.mxu0 0.0
        %7083 = vmatprep.subr.mxu0 0.0
        %7084 = vmatpush1.msra.mxu0 0.0
        %7085 = vmatprep.subr.mxu0 0.0
        %7086 = vmatpush1.msra.mxu0 0.0
        %7087 = vmatprep.subr.mxu0 0.0
        %7088 = vmatpush1.msra.mxu0 0.0
        %7089 = vmatprep.subr.mxu0 0.0
        %7090 = vmatpush1.msra.mxu0 0.0
        %7091 = vmatprep.subr.mxu0 0.0
        %7092 = vmatpush1.msra.mxu0 0.0
        %7093 = vmatprep.subr.mxu0 0.0
        %7094 = vmatpush1.msra.mxu0 0.0
        %7095 = vmatprep.subr.mxu0 0.0
        %7096 = vmatpush1.msra.mxu0 0.0
        %7097 = vmatprep.subr.mxu0 0.0
        %7098 = vmatpush1.msra.mxu0 0.0
        %7099 = vmatprep.subr.mxu0 0.0
        %7100 = vmatpush1.msra.mxu0 0.0
        %7101 = vmatprep.subr.mxu0 0.0
        %7102 = vmatpush1.msra.mxu0 0.0
        %7103 = vmatprep.subr.mxu0 0.0
        %7104 = vmatpush1.msra.mxu0 0.0
        %7105 = vmatprep.subr.mxu0 0.0
        %7106 = vmatpush1.msra.mxu0 0.0
        %7107 = vmatprep.subr.mxu0 0.0
        %7108 = vmatpush1.msra.mxu0 0.0
        %7109 = vmatprep.subr.mxu0 0.0
        %7110 = vmatpush1.msra.mxu0 0.0
        %7111 = vmatprep.subr.mxu0 0.0
        %7112 = vmatpush1.msra.mxu0 0.0
        %7113 = vmatprep.subr.mxu0 0.0
        %7114 = vmatpush1.msra.mxu0 0.0
        %7115 = vmatprep.subr.mxu0 0.0
        %7116 = vmatpush1.msra.mxu0 0.0
        %7117 = vmatprep.subr.mxu0 0.0
        %7118 = vmatpush1.msra.mxu0 0.0
        %7119 = vmatprep.mubr.f32.mxu0 0.0
        %7120 = vmatmul.mubr.f32.gmra.mrb[0].mxu0 %v7053
        %v7121 = vpop.f32.mrb[0].mxu0
        %v7122 = vadd.f32 0.0, %v7121
        %v7123 = vpop.f32.mrb[0].mxu0
        %7124 = vdwg.mxu0
        %v7125 = vcombine.low %v6903, %v7049
        %v7126 = vcombine.high %v6903, %v7049
        %v7128 = vunpack.c.l.s4 1983009808
        %v7129 = vunpack.c.0.s8 %v7128
        %v7130 = vlaneseq
        %v7131 = vshrl.u32 %v7130, 7
        %v7132 = vsub.s32 %v7129, %v7131
        %v7133 = vrot.slane %v7125, %v7132
        %v7135 = vunpack.c.l.s4 1983009808
        %v7136 = vunpack.c.0.s8 %v7135
        %v7137 = vlaneseq
        %v7138 = vshrl.u32 %v7137, 7
        %v7139 = vsub.s32 %v7136, %v7138
        %v7140 = vrot.slane %v7126, %v7139
        %v7141 = vcombine.low %v6976, %v7122
        %v7142 = vcombine.high %v6976, %v7122
        %v7144 = vunpack.c.l.s4 1983009808
        %v7145 = vunpack.c.0.s8 %v7144
        %v7146 = vlaneseq
        %v7147 = vshrl.u32 %v7146, 7
        %v7148 = vsub.s32 %v7145, %v7147
        %v7149 = vrot.slane %v7141, %v7148
        %v7151 = vunpack.c.l.s4 1983009808
        %v7152 = vunpack.c.0.s8 %v7151
        %v7153 = vlaneseq
        %v7154 = vshrl.u32 %v7153, 7
        %v7155 = vsub.s32 %v7152, %v7154
        %v7156 = vrot.slane %v7142, %v7155
        %v7157 = vcombine.low %v7133, %v7149
        %v7158 = vcombine.high %v7133, %v7149
        %v7160 = vunpack.c.l.s4 1934713408
        %v7161 = vunpack.c.0.s8 %v7160
        %v7162 = vlaneseq
        %v7163 = vshrl.u32 %v7162, 7
        %v7164 = vsub.s32 %v7161, %v7163
        %v7165 = vrot.slane %v7157, %v7164
        %v7167 = vunpack.c.l.s4 1934713408
        %v7168 = vunpack.c.0.s8 %v7167
        %v7169 = vlaneseq
        %v7170 = vshrl.u32 %v7169, 7
        %v7171 = vsub.s32 %v7168, %v7170
        %v7172 = vrot.slane %v7158, %v7171
        %v7173 = vcombine.low %v7140, %v7156
        %v7174 = vcombine.high %v7140, %v7156
        %v7176 = vunpack.c.l.s4 1934713408
        %v7177 = vunpack.c.0.s8 %v7176
        %v7178 = vlaneseq
        %v7179 = vshrl.u32 %v7178, 7
        %v7180 = vsub.s32 %v7177, %v7179
        %v7181 = vrot.slane %v7173, %v7180
        %v7183 = vunpack.c.l.s4 1934713408
        %v7184 = vunpack.c.0.s8 %v7183
        %v7185 = vlaneseq
        %v7186 = vshrl.u32 %v7185, 7
        %v7187 = vsub.s32 %v7184, %v7186
        %v7188 = vrot.slane %v7174, %v7187
        %v7189 = vcombine.high %v7165, 0.0
        %v7190 = vcombine.high %v7172, 0.0
        %v7191 = vcombine.high %v7181, 0.0
        %v7192 = vcombine.high %v7188, 0.0
        %v7193 = vcombine.low %v7165, %v7172
        %v7195 = vunpack.c.l.s4 1983009808
        %v7196 = vunpack.c.0.s8 %v7195
        %v7197 = vlaneseq
        %v7198 = vshrl.u32 %v7197, 7
        %v7199 = vsub.s32 %v7196, %v7198
        %v7200 = vrot.slane %v7193, %v7199
        %v7201 = vcombine.low %v7189, %v7190
        %v7203 = vunpack.c.l.s4 1983009808
        %v7204 = vunpack.c.0.s8 %v7203
        %v7205 = vlaneseq
        %v7206 = vshrl.u32 %v7205, 7
        %v7207 = vsub.s32 %v7204, %v7206
        %v7208 = vrot.slane %v7201, %v7207
        %v7209 = vcombine.low %v7181, %v7188
        %v7211 = vunpack.c.l.s4 1983009808
        %v7212 = vunpack.c.0.s8 %v7211
        %v7213 = vlaneseq
        %v7214 = vshrl.u32 %v7213, 7
        %v7215 = vsub.s32 %v7212, %v7214
        %v7216 = vrot.slane %v7209, %v7215
        %v7217 = vcombine.low %v7191, %v7192
        %v7219 = vunpack.c.l.s4 1983009808
        %v7220 = vunpack.c.0.s8 %v7219
        %v7221 = vlaneseq
        %v7222 = vshrl.u32 %v7221, 7
        %v7223 = vsub.s32 %v7220, %v7222
        %v7224 = vrot.slane %v7217, %v7223
        %v7225 = vcombine.low %v7200, %v7208
        %v7226 = vcombine.high %v7200, %v7208
        %v7228 = vunpack.c.l.s4 1934713408
        %v7229 = vunpack.c.0.s8 %v7228
        %v7230 = vlaneseq
        %v7231 = vshrl.u32 %v7230, 7
        %v7232 = vsub.s32 %v7229, %v7231
        %v7233 = vrot.slane %v7225, %v7232
        %v7235 = vunpack.c.l.s4 1934713408
        %v7236 = vunpack.c.0.s8 %v7235
        %v7237 = vlaneseq
        %v7238 = vshrl.u32 %v7237, 7
        %v7239 = vsub.s32 %v7236, %v7238
        %v7240 = vrot.slane %v7226, %v7239
        %v7241 = vcombine.low %v7216, %v7224
        %v7242 = vcombine.high %v7216, %v7224
        %v7244 = vunpack.c.l.s4 1934713408
        %v7245 = vunpack.c.0.s8 %v7244
        %v7246 = vlaneseq
        %v7247 = vshrl.u32 %v7246, 7
        %v7248 = vsub.s32 %v7245, %v7247
        %v7249 = vrot.slane %v7241, %v7248
        %v7251 = vunpack.c.l.s4 1934713408
        %v7252 = vunpack.c.0.s8 %v7251
        %v7253 = vlaneseq
        %v7254 = vshrl.u32 %v7253, 7
        %v7255 = vsub.s32 %v7252, %v7254
        %v7256 = vrot.slane %v7242, %v7255
        %v7257 = vcombine.low %v7233, %v7249
        %v7258 = vcombine.high %v7233, %v7249
        %v7259 = vcombine.low %v7240, %v7256
        %v7260 = vcombine.high %v7240, %v7256
        %7262 = vrot.lane.b32.xlu0 %v7258, 8
        %v7263 = vpop.permute.xlu0 %7262
        %7266 = vrot.lane.b32.xlu0 %v7259, 16
        %v7267 = vpop.permute.xlu0 %7266
        %7270 = vrot.lane.b32.xlu0 %v7260, 24
        %v7271 = vpop.permute.xlu0 %7270
        %v7273 = vsel %vm1738, %v7257, %v7263
        %v7274 = vsel %vm2532, %v7273, %v7267
        %v7275 = vsel %vm2534, %v7274, %v7271
        %v7277 = vlaneseq
        %v7278 = vshrl.u32 %v7277, 7
        %v7279 = vsub.s32 0, %v7278
        %v7280 = vrot.slane %v4201, %v7279
        %v7283 = vsel %vm1037, %v5738, 0
        %v7286 = vsel %vm1037, %v7275, 0
        %7288 = vmatprep.subr.mxu0 0.0
        %7289 = vmatpush1.msra.mxu0 %v4197
        %7290 = vmatprep.subr.mxu0 0.0
        %7291 = vmatpush1.msra.mxu0 %v4198
        %7292 = vmatprep.subr.mxu0 0.0
        %7293 = vmatpush1.msra.mxu0 %v4199
        %7294 = vmatprep.subr.mxu0 0.0
        %7295 = vmatpush1.msra.mxu0 %v4200
        %7296 = vmatprep.subr.mxu0 0.0
        %7297 = vmatpush1.msra.mxu0 0.0
        %7298 = vmatprep.subr.mxu0 0.0
        %7299 = vmatpush1.msra.mxu0 0.0
        %7300 = vmatprep.subr.mxu0 0.0
        %7301 = vmatpush1.msra.mxu0 0.0
        %7302 = vmatprep.subr.mxu0 0.0
        %7303 = vmatpush1.msra.mxu0 0.0
        %7304 = vmatprep.subr.mxu0 0.0
        %7305 = vmatpush1.msra.mxu0 0.0
        %7306 = vmatprep.subr.mxu0 0.0
        %7307 = vmatpush1.msra.mxu0 0.0
        %7308 = vmatprep.subr.mxu0 0.0
        %7309 = vmatpush1.msra.mxu0 0.0
        %7310 = vmatprep.subr.mxu0 0.0
        %7311 = vmatpush1.msra.mxu0 0.0
        %7312 = vmatprep.subr.mxu0 0.0
        %7313 = vmatpush1.msra.mxu0 0.0
        %7314 = vmatprep.subr.mxu0 0.0
        %7315 = vmatpush1.msra.mxu0 0.0
        %7316 = vmatprep.subr.mxu0 0.0
        %7317 = vmatpush1.msra.mxu0 0.0
        %7318 = vmatprep.subr.mxu0 0.0
        %7319 = vmatpush1.msra.mxu0 0.0
        %7320 = vmatprep.subr.mxu0 0.0
        %7321 = vmatpush1.msra.mxu0 0.0
        %7322 = vmatprep.subr.mxu0 0.0
        %7323 = vmatpush1.msra.mxu0 0.0
        %7324 = vmatprep.subr.mxu0 0.0
        %7325 = vmatpush1.msra.mxu0 0.0
        %7326 = vmatprep.subr.mxu0 0.0
        %7327 = vmatpush1.msra.mxu0 0.0
        %7328 = vmatprep.subr.mxu0 0.0
        %7329 = vmatpush1.msra.mxu0 0.0
        %7330 = vmatprep.subr.mxu0 0.0
        %7331 = vmatpush1.msra.mxu0 0.0
        %7332 = vmatprep.subr.mxu0 0.0
        %7333 = vmatpush1.msra.mxu0 0.0
        %7334 = vmatprep.subr.mxu0 0.0
        %7335 = vmatpush1.msra.mxu0 0.0
        %7336 = vmatprep.subr.mxu0 0.0
        %7337 = vmatpush1.msra.mxu0 0.0
        %7338 = vmatprep.subr.mxu0 0.0
        %7339 = vmatpush1.msra.mxu0 0.0
        %7340 = vmatprep.subr.mxu0 0.0
        %7341 = vmatpush1.msra.mxu0 0.0
        %7342 = vmatprep.subr.mxu0 0.0
        %7343 = vmatpush1.msra.mxu0 0.0
        %7344 = vmatprep.subr.mxu0 0.0
        %7345 = vmatpush1.msra.mxu0 0.0
        %7346 = vmatprep.subr.mxu0 0.0
        %7347 = vmatpush1.msra.mxu0 0.0
        %7348 = vmatprep.subr.mxu0 0.0
        %7349 = vmatpush1.msra.mxu0 0.0
        %7350 = vmatprep.subr.mxu0 0.0
        %7351 = vmatpush1.msra.mxu0 0.0
        %7352 = vmatprep.mubr.f32.mxu0 0.0
        %7353 = vmatmul.mubr.f32.gmra.mrb[0].mxu0 %v7283
        %v7354 = vpop.f32.mrb[0].mxu0
        %v7355 = vadd.f32 %v7280, %v7354
        %v7356 = vpop.f32.mrb[0].mxu0
        %7357 = vmatprep.mubr.f32.mxu0 0.0
        %7358 = vmatmul.mubr.f32.gmra.mrb[0].mxu0 %v7286
        %v7359 = vpop.f32.mrb[0].mxu0
        %v7360 = vadd.f32 %v7280, %v7359
        %v7361 = vpop.f32.mrb[0].mxu0
        %7362 = vdwg.mxu0
        %v7363 = vadd.f32 %v3895, %v7355
        %v7364 = vadd.f32 %v3896, %v7360
        %v7365 = vsel %vm1037, %v7363, 0.0
        %7366 = vadd.xlane.f32.xlu0 %v7365
        %v7367 = vpop.xlane.xlu0 %7366
        %v7368 = vsel %vm1037, %v7364, 0.0
        %7369 = vadd.xlane.f32.xlu0 %v7368
        %v7370 = vpop.xlane.xlu0 %7369
        %v7371 = vmul.f32 %v7367, %v3864
        %v7372 = vmul.f32 %v7370, %v3864
        %v7373 = vsub.f32 %v7363, %v7371
        %v7374 = vsub.f32 %v7364, %v7372
        %v7375 = vmul.f32 %v7373, %v7373
        %v7376 = vmul.f32 %v7374, %v7374
        %v7377 = vsel %vm1037, %v7375, 0.0
        %7378 = vadd.xlane.f32.xlu0 %v7377
        %v7379 = vpop.xlane.xlu0 %7378
        %v7380 = vsel %vm1037, %v7376, 0.0
        %7381 = vadd.xlane.f32.xlu0 %v7380
        %v7382 = vpop.xlane.xlu0 %7381
        %v7383 = vmul.f32 %v7379, %v3864
        %v7384 = vmul.f32 %v7382, %v3864
        %v7385 = vadd.f32 %v7383, 1e-05
        %v7386 = vadd.f32 %v7384, 1e-05
        %v7387 = vrsqrt.pop %v7385
        %v7388 = vrsqrt.pop %v7386
        %v7389 = vmul.f32 %v7373, %v7387
        %v7390 = vmul.f32 %v7374, %v7388
        %v7391 = vlaneseq
        %v7392 = vshrl.u32 %v7391, 7
        %v7393 = vsub.s32 1, %v7392
        %v7394 = vrot.slane %v1024, %v7393
        %v7395 = vmul.f32 %v7389, %v7394
        %v7396 = vmul.f32 %v7390, %v7394
        %v7397 = vlaneseq
        %v7398 = vshrl.u32 %v7397, 7
        %v7399 = vsub.s32 1, %v7398
        %v7400 = vrot.slane %v1025, %v7399
        %v7401 = vadd.f32 %v7395, %v7400
        %v7402 = vadd.f32 %v7396, %v7400
        %v7403 = vld [vmem:[%s862] sm:$0xff]
        %v7404 = vld [vmem:[%s862 + $0x8] sm:$0xff]
        %v7405 = vld [vmem:[%s862 + $0x10] sm:$0xff]
        %v7406 = vld [vmem:[%s862 + $0x18] sm:$0xff]
        %v7407 = vld [vmem:[%s870] sm:$0x1]
        %v7409 = vlaneseq
        %v7410 = vshrl.u32 %v7409, 7
        %v7411 = vsub.s32 0, %v7410
        %v7412 = vrot.slane %v7407, %v7411
        %v7415 = vsel %vm1037, %v7401, 0
        %v7418 = vsel %vm1037, %v7402, 0
        %7420 = vmatprep.subr.mxu0 0.0
        %7421 = vmatpush1.msra.mxu0 %v7403
        %7422 = vmatprep.subr.mxu0 0.0
        %7423 = vmatpush1.msra.mxu0 %v7404
        %7424 = vmatprep.subr.mxu0 0.0
        %7425 = vmatpush1.msra.mxu0 %v7405
        %7426 = vmatprep.subr.mxu0 0.0
        %7427 = vmatpush1.msra.mxu0 %v7406
        %7428 = vmatprep.subr.mxu0 0.0
        %7429 = vmatpush1.msra.mxu0 0.0
        %7430 = vmatprep.subr.mxu0 0.0
        %7431 = vmatpush1.msra.mxu0 0.0
        %7432 = vmatprep.subr.mxu0 0.0
        %7433 = vmatpush1.msra.mxu0 0.0
        %7434 = vmatprep.subr.mxu0 0.0
        %7435 = vmatpush1.msra.mxu0 0.0
        %7436 = vmatprep.subr.mxu0 0.0
        %7437 = vmatpush1.msra.mxu0 0.0
        %7438 = vmatprep.subr.mxu0 0.0
        %7439 = vmatpush1.msra.mxu0 0.0
        %7440 = vmatprep.subr.mxu0 0.0
        %7441 = vmatpush1.msra.mxu0 0.0
        %7442 = vmatprep.subr.mxu0 0.0
        %7443 = vmatpush1.msra.mxu0 0.0
        %7444 = vmatprep.subr.mxu0 0.0
        %7445 = vmatpush1.msra.mxu0 0.0
        %7446 = vmatprep.subr.mxu0 0.0
        %7447 = vmatpush1.msra.mxu0 0.0
        %7448 = vmatprep.subr.mxu0 0.0
        %7449 = vmatpush1.msra.mxu0 0.0
        %7450 = vmatprep.subr.mxu0 0.0
        %7451 = vmatpush1.msra.mxu0 0.0
        %7452 = vmatprep.subr.mxu0 0.0
        %7453 = vmatpush1.msra.mxu0 0.0
        %7454 = vmatprep.subr.mxu0 0.0
        %7455 = vmatpush1.msra.mxu0 0.0
        %7456 = vmatprep.subr.mxu0 0.0
        %7457 = vmatpush1.msra.mxu0 0.0
        %7458 = vmatprep.subr.mxu0 0.0
        %7459 = vmatpush1.msra.mxu0 0.0
        %7460 = vmatprep.subr.mxu0 0.0
        %7461 = vmatpush1.msra.mxu0 0.0
        %7462 = vmatprep.subr.mxu0 0.0
        %7463 = vmatpush1.msra.mxu0 0.0
        %7464 = vmatprep.subr.mxu0 0.0
        %7465 = vmatpush1.msra.mxu0 0.0
        %7466 = vmatprep.subr.mxu0 0.0
        %7467 = vmatpush1.msra.mxu0 0.0
        %7468 = vmatprep.subr.mxu0 0.0
        %7469 = vmatpush1.msra.mxu0 0.0
        %7470 = vmatprep.subr.mxu0 0.0
        %7471 = vmatpush1.msra.mxu0 0.0
        %7472 = vmatprep.subr.mxu0 0.0
        %7473 = vmatpush1.msra.mxu0 0.0
        %7474 = vmatprep.subr.mxu0 0.0
        %7475 = vmatpush1.msra.mxu0 0.0
        %7476 = vmatprep.subr.mxu0 0.0
        %7477 = vmatpush1.msra.mxu0 0.0
        %7478 = vmatprep.subr.mxu0 0.0
        %7479 = vmatpush1.msra.mxu0 0.0
        %7480 = vmatprep.subr.mxu0 0.0
        %7481 = vmatpush1.msra.mxu0 0.0
        %7482 = vmatprep.subr.mxu0 0.0
        %7483 = vmatpush1.msra.mxu0 0.0
        %7484 = vmatprep.mubr.f32.mxu0 0.0
        %7485 = vmatmul.mubr.f32.gmra.mrb[0].mxu0 %v7415
        %v7486 = vpop.f32.mrb[0].mxu0
        %v7487 = vadd.f32 %v7412, %v7486
        %v7488 = vpop.f32.mrb[0].mxu0
        %7489 = vmatprep.mubr.f32.mxu0 0.0
        %7490 = vmatmul.mubr.f32.gmra.mrb[0].mxu0 %v7418
        %v7491 = vpop.f32.mrb[0].mxu0
        %v7492 = vadd.f32 %v7412, %v7491
        %v7493 = vpop.f32.mrb[0].mxu0
        %7494 = vdwg.mxu0
        %v7495 = vmax.f32 %v7487, 0.0
        %v7496 = vmax.f32 %v7492, 0.0
        %v7497 = vld [vmem:[%s999] sm:$0xff]
        %v7498 = vld [vmem:[%s999 + $0x8] sm:$0xff]
        %v7499 = vld [vmem:[%s999 + $0x10] sm:$0xff]
        %v7500 = vld [vmem:[%s999 + $0x18] sm:$0xff]
        %v7501 = vld [vmem:[%s999 + $0x20] sm:$0xff]
        %v7502 = vld [vmem:[%s999 + $0x28] sm:$0xff]
        %v7503 = vld [vmem:[%s999 + $0x30] sm:$0xff]
        %v7504 = vld [vmem:[%s999 + $0x38] sm:$0xff]
        %v7505 = vld [vmem:[%s878] sm:$0x1]
        %v7507 = vlaneseq
        %v7508 = vshrl.u32 %v7507, 7
        %v7509 = vsub.s32 0, %v7508
        %v7510 = vrot.slane %v7505, %v7509
        %vm7512 = vcmask 523264
        %v7514 = vsel %vm7512, %v7495, 0
        %v7517 = vsel %vm7512, %v7496, 0
        %7519 = vmatprep.subr.mxu0 0.0
        %7520 = vmatpush1.msra.mxu0 %v7497
        %7521 = vmatprep.subr.mxu0 0.0
        %7522 = vmatpush1.msra.mxu0 %v7498
        %7523 = vmatprep.subr.mxu0 0.0
        %7524 = vmatpush1.msra.mxu0 %v7499
        %7525 = vmatprep.subr.mxu0 0.0
        %7526 = vmatpush1.msra.mxu0 %v7500
        %7527 = vmatprep.subr.mxu0 0.0
        %7528 = vmatpush1.msra.mxu0 %v7501
        %7529 = vmatprep.subr.mxu0 0.0
        %7530 = vmatpush1.msra.mxu0 %v7502
        %7531 = vmatprep.subr.mxu0 0.0
        %7532 = vmatpush1.msra.mxu0 %v7503
        %7533 = vmatprep.subr.mxu0 0.0
        %7534 = vmatpush1.msra.mxu0 %v7504
        %7535 = vmatprep.subr.mxu0 0.0
        %7536 = vmatpush1.msra.mxu0 0.0
        %7537 = vmatprep.subr.mxu0 0.0
        %7538 = vmatpush1.msra.mxu0 0.0
        %7539 = vmatprep.subr.mxu0 0.0
        %7540 = vmatpush1.msra.mxu0 0.0
        %7541 = vmatprep.subr.mxu0 0.0
        %7542 = vmatpush1.msra.mxu0 0.0
        %7543 = vmatprep.subr.mxu0 0.0
        %7544 = vmatpush1.msra.mxu0 0.0
        %7545 = vmatprep.subr.mxu0 0.0
        %7546 = vmatpush1.msra.mxu0 0.0
        %7547 = vmatprep.subr.mxu0 0.0
        %7548 = vmatpush1.msra.mxu0 0.0
        %7549 = vmatprep.subr.mxu0 0.0
        %7550 = vmatpush1.msra.mxu0 0.0
        %7551 = vmatprep.subr.mxu0 0.0
        %7552 = vmatpush1.msra.mxu0 0.0
        %7553 = vmatprep.subr.mxu0 0.0
        %7554 = vmatpush1.msra.mxu0 0.0
        %7555 = vmatprep.subr.mxu0 0.0
        %7556 = vmatpush1.msra.mxu0 0.0
        %7557 = vmatprep.subr.mxu0 0.0
        %7558 = vmatpush1.msra.mxu0 0.0
        %7559 = vmatprep.subr.mxu0 0.0
        %7560 = vmatpush1.msra.mxu0 0.0
        %7561 = vmatprep.subr.mxu0 0.0
        %7562 = vmatpush1.msra.mxu0 0.0
        %7563 = vmatprep.subr.mxu0 0.0
        %7564 = vmatpush1.msra.mxu0 0.0
        %7565 = vmatprep.subr.mxu0 0.0
        %7566 = vmatpush1.msra.mxu0 0.0
        %7567 = vmatprep.subr.mxu0 0.0
        %7568 = vmatpush1.msra.mxu0 0.0
        %7569 = vmatprep.subr.mxu0 0.0
        %7570 = vmatpush1.msra.mxu0 0.0
        %7571 = vmatprep.subr.mxu0 0.0
        %7572 = vmatpush1.msra.mxu0 0.0
        %7573 = vmatprep.subr.mxu0 0.0
        %7574 = vmatpush1.msra.mxu0 0.0
        %7575 = vmatprep.subr.mxu0 0.0
        %7576 = vmatpush1.msra.mxu0 0.0
        %7577 = vmatprep.subr.mxu0 0.0
        %7578 = vmatpush1.msra.mxu0 0.0
        %7579 = vmatprep.subr.mxu0 0.0
        %7580 = vmatpush1.msra.mxu0 0.0
        %7581 = vmatprep.subr.mxu0 0.0
        %7582 = vmatpush1.msra.mxu0 0.0
        %7583 = vmatprep.mubr.f32.mxu0 0.0
        %7584 = vmatmul.mubr.f32.gmra.mrb[0].mxu0 %v7514
        %v7585 = vpop.f32.mrb[0].mxu0
        %v7586 = vadd.f32 %v7510, %v7585
        %v7587 = vpop.f32.mrb[0].mxu0
        %7588 = vmatprep.mubr.f32.mxu0 0.0
        %7589 = vmatmul.mubr.f32.gmra.mrb[0].mxu0 %v7517
        %v7590 = vpop.f32.mrb[0].mxu0
        %v7591 = vadd.f32 %v7510, %v7590
        %v7592 = vpop.f32.mrb[0].mxu0
        %7593 = vdwg.mxu0
        %v7594 = vadd.f32 %v7401, %v7586
        %v7595 = vadd.f32 %v7402, %v7591
        %v7596 = vsel %vm1037, %v7594, 0.0
        %7597 = vadd.xlane.f32.xlu0 %v7596
        %v7598 = vpop.xlane.xlu0 %7597
        %v7599 = vsel %vm1037, %v7595, 0.0
        %7600 = vadd.xlane.f32.xlu0 %v7599
        %v7601 = vpop.xlane.xlu0 %7600
        %v7602 = vmul.f32 %v7598, %v3864
        %v7603 = vmul.f32 %v7601, %v3864
        %v7604 = vsub.f32 %v7594, %v7602
        %v7605 = vsub.f32 %v7595, %v7603
        %v7606 = vmul.f32 %v7604, %v7604
        %v7607 = vmul.f32 %v7605, %v7605
        %v7608 = vsel %vm1037, %v7606, 0.0
        %7609 = vadd.xlane.f32.xlu0 %v7608
        %v7610 = vpop.xlane.xlu0 %7609
        %v7611 = vsel %vm1037, %v7607, 0.0
        %7612 = vadd.xlane.f32.xlu0 %v7611
        %v7613 = vpop.xlane.xlu0 %7612
        %v7614 = vmul.f32 %v7610, %v3864
        %v7615 = vmul.f32 %v7613, %v3864
        %v7616 = vadd.f32 %v7614, 1e-05
        %v7617 = vadd.f32 %v7615, 1e-05
        %v7618 = vrsqrt.pop %v7616
        %v7619 = vrsqrt.pop %v7617
        %v7620 = vmul.f32 %v7604, %v7618
        %v7621 = vmul.f32 %v7605, %v7619
        %v7622 = vlaneseq
        %v7623 = vshrl.u32 %v7622, 7
        %v7624 = vsub.s32 2, %v7623
        %v7625 = vrot.slane %v1024, %v7624
        %v7626 = vmul.f32 %v7620, %v7625
        %v7627 = vmul.f32 %v7621, %v7625
        %v7628 = vlaneseq
        %v7629 = vshrl.u32 %v7628, 7
        %v7630 = vsub.s32 2, %v7629
        %v7631 = vrot.slane %v1025, %v7630
        %v7632 = vadd.f32 %v7626, %v7631
        %v7633 = vadd.f32 %v7627, %v7631
        %7634 = vst.msk [vmem:[#allocation2] sm:$0xff] %vm1037, %v7632
        %7635 = vst.msk [vmem:[#allocation2 + $0x8] sm:$0xff] %vm1037, %v7633
        %p7636 = scmp.eq.s32.totalorder %s37, 1
        // Predicated region
        $region141: #{tpu_custom_call.1} parent=91 // pred_check
          %p7637 = pneg %p7636
        $region142: #{tpu_custom_call.1} parent=91 // pred_check_branch
          %7639 = sbr.rel (%p7637) target = $region144
        $region143: #{tpu_custom_call.1} parent=91 // pred_region
          %v7640 = vld [vmem:[%s16] sm:$0x1]
          %v7641 = vld [vmem:[%s17] sm:$0x1]
          %v7642 = vsel %vm1037, %v7632, 0.0
          %7643 = vadd.xlane.f32.xlu0 %v7642
          %v7644 = vpop.xlane.xlu0 %7643
          %v7645 = vsel %vm1037, %v7633, 0.0
          %7646 = vadd.xlane.f32.xlu0 %v7645
          %v7647 = vpop.xlane.xlu0 %7646
          %v7648 = vmul.f32 %v7644, %v3864
          %v7649 = vmul.f32 %v7647, %v3864
          %v7650 = vsub.f32 %v7632, %v7648
          %v7651 = vsub.f32 %v7633, %v7649
          %v7652 = vmul.f32 %v7650, %v7650
          %v7653 = vmul.f32 %v7651, %v7651
          %v7654 = vsel %vm1037, %v7652, 0.0
          %7655 = vadd.xlane.f32.xlu0 %v7654
          %v7656 = vpop.xlane.xlu0 %7655
          %v7657 = vsel %vm1037, %v7653, 0.0
          %7658 = vadd.xlane.f32.xlu0 %v7657
          %v7659 = vpop.xlane.xlu0 %7658
          %v7660 = vmul.f32 %v7656, %v3864
          %v7661 = vmul.f32 %v7659, %v3864
          %v7662 = vadd.f32 %v7660, 1e-05
          %v7663 = vadd.f32 %v7661, 1e-05
          %v7664 = vrsqrt.pop %v7662
          %v7665 = vrsqrt.pop %v7663
          %v7666 = vmul.f32 %v7650, %v7664
          %v7667 = vmul.f32 %v7651, %v7665
          %v7669 = vlaneseq
          %v7670 = vshrl.u32 %v7669, 7
          %v7671 = vsub.s32 0, %v7670
          %v7672 = vrot.slane %v7640, %v7671
          %v7674 = vmul.f32 %v7666, %v7672
          %v7675 = vmul.f32 %v7667, %v7672
          %v7677 = vlaneseq
          %v7678 = vshrl.u32 %v7677, 7
          %v7679 = vsub.s32 0, %v7678
          %v7680 = vrot.slane %v7641, %v7679
          %v7682 = vadd.f32 %v7674, %v7680
          %v7683 = vadd.f32 %v7675, %v7680
          %7684 = vst.msk [vmem:[#allocation17] sm:$0xff] %vm1037, %v7682
          %7685 = vst.msk [vmem:[#allocation17 + $0x8] sm:$0xff] %vm1037, %v7683
        $region144: #{tpu_custom_call.1} parent=91 // pred_fallthru
          _
        // Predicated region
        $region145: #{tpu_custom_call.1} parent=91 // pred_check
          %p7686 = pneg %p520
        $region146: #{tpu_custom_call.1} parent=91 // pred_check_branch
          %7688 = sbr.rel (%p7686) target = $region148
        $region147: #{tpu_custom_call.1} parent=91 // pred_region
          %s7689 = smul.u32 2, %s36
          %s7691 = ssub.s32 256, 256
          %7692 = vsyncadd [#allocation5], %s7691
          %s7693 = smul.addr %s7689, 128
          %s7694 = scalar_lea.hbm %s18, %s7693
          %s7695 = sshll.u32 [#allocation17], 4
          %s7696 = int_to_ptr.vmem [resolvable:$true] %s7695
          %7701 = dma.vmem_to_hbm [thread:$0]  %s7696, 256, %s7694, [#allocation5], 128, 128, 8
        $region148: #{tpu_custom_call.1} parent=91 // pred_fallthru
          _
        // Predicated region
        $region149: #{tpu_custom_call.1} parent=91 // pred_check
          %p7702 = pneg %p520
        $region150: #{tpu_custom_call.1} parent=91 // pred_check_branch
          %7704 = sbr.rel (%p7702) target = $region152
        $region151: #{tpu_custom_call.1} parent=91 // pred_region
          %7705 = dma.done [#allocation5], 256
        $region152: #{tpu_custom_call.1} parent=91 // pred_fallthru
          _
      $region92: #{tpu_custom_call.1} parent=5 // pred_fallthru
        _
      %p7706 = scmp.le.s32.totalorder 2, %s27
      // Predicated region
      $region153: #{tpu_custom_call.1} parent=5 // pred_check
        %p7707 = pneg %p7706
      $region154: #{tpu_custom_call.1} parent=5 // pred_check_branch
        %7709 = sbr.rel (%p7707) target = $region156
      $region155: #{tpu_custom_call.1} parent=5 // pred_region
        %s7710 = ssub.s32 %s27, 2
      $region156: #{tpu_custom_call.1} parent=5 // pred_fallthru
        _
    $region6: #{tpu_custom_call.1} parent=1 // loop_footer
      %s31 = sadd.s32 1, %s27
    $region7: #{tpu_custom_call.1} parent=1 // loop_footer_branch
      %26 = sbr.rel target = $region3
    $region8: #{tpu_custom_call.1} parent=1 // loop_exit
      _
    %7711 = vsyncpa [#allocation4], 1
    %s7712 = scalar_lea.sflag [#allocation4], 1
    %7713 = vsyncpa %s7712, 1
    %7714 = vsyncpa [#allocation7], 1
    %7715 = vsyncpa [#allocation5], 1
    %s7716 = scalar_lea.sflag [#allocation5], 1
    %7717 = vsyncpa %s7716, 1

</llo_original>
